<compile_context>
chip_gen: v7x
topology: tpu7x:2x2x1
jax: 0.10.0
libtpu: 0.0.40
codegen_flags: <defaults>
</compile_context>

<pallas_src>
import functools

import jax
import jax.numpy as jnp
from jax.experimental import pallas as pl
from jax.experimental.pallas import tpu as pltpu


# ------------------------------ Pallas kernel -------------------------------

def _simplenet_kernel(x_ref, w1_ref, b1_ref, w2_ref, b2_ref, w3_ref, b3_ref,
                      fw1_ref, fb1_ref, fw2_ref, fb2_ref, o_ref,
                      in2_scr, in3_scr, *, H, W):
    """One batch element per grid step.  All refs are VMEM-resident.

    x_ref:   ((H+2)*(W+2), Cin) bf16 — zero-padded NHWC image, spatially
             flattened with row index r*(W+2)+c.
    wN_ref:  (9, Cin, Cout) bf16 — 3x3 conv weights (BN scale folded),
             tap index = kh*3+kw.
    bN_ref:  (1, Cout) f32 — folded conv+BN bias.
    fw*/fb*: 1x1-conv head weights/biases.
    o_ref:   (1, num_classes) f32 logits.
    inN_scr: flattened zero-padded input buffers for blocks 2/3 (bf16).
    """
    f32 = jnp.float32
    bf16 = jnp.bfloat16

    def conv_bn_relu(xflat_ref, w_ref, b_ref, h, w):
        # 3x3 conv (stride 1, pad 1) + folded-BN bias + ReLU.
        # Returns flat rows y[h*(w+2)+c] for c in [0, w) (the 2 extra columns
        # per row are junk that the pooling stage never reads).
        wc = w + 2
        nrows = (h - 1) * wc + w
        acc = None
        for kh in range(3):
            for kw in range(3):
                xs = xflat_ref[pl.ds(kh * wc + kw, nrows), :]
                d = jnp.dot(xs, w_ref[kh * 3 + kw],
                            preferred_element_type=f32)
                acc = d if acc is None else acc + d
        return jnp.maximum(acc + b_ref[...], 0.0)              # f32

    def pooled_row(y, h, w, oh):
        # Row `oh` of MaxPool2d(kernel=3, stride=2, padding=1) over the conv
        # output y (flat rows h*(w+2)+c).  Window clipping is equivalent to
        # the implicit -inf padding because y >= 0 (post-ReLU).
        wc = w + 2
        wo = (w + 1) // 2
        rmax = None
        for r in range(max(2 * oh - 1, 0), min(2 * oh + 2, h)):
            sl = y[r * wc:r * wc + w, :]
            rmax = sl if rmax is None else jnp.maximum(rmax, sl)
        pieces = []
        for ow in range(wo):
            c0 = max(2 * ow - 1, 0)
            c1 = min(2 * ow + 2, w)
            pieces.append(jnp.max(rmax[c0:c1, :], axis=0, keepdims=True))
        return jnp.concatenate(pieces, axis=0)                  # (wo, Cout) f32

    # Fresh zero padding for the inter-block buffers on every grid step
    # (grid axis is "parallel": no ordering / first-iteration assumptions).
    in2_scr[...] = jnp.zeros_like(in2_scr)
    in3_scr[...] = jnp.zeros_like(in3_scr)

    H1, W1 = H, W
    H2, W2 = (H1 + 1) // 2, (W1 + 1) // 2
    H3, W3 = (H2 + 1) // 2, (W2 + 1) // 2
    H4, W4 = (H3 + 1) // 2, (W3 + 1) // 2

    # ---- block 1: conv+BN+ReLU, maxpool ->  written into block2's buffer ----
    y1 = conv_bn_relu(x_ref, w1_ref, b1_ref, H1, W1)
    for oh in range(H2):
        row = pooled_row(y1, H1, W1, oh)                        # (W2, C1)
        in2_scr[pl.ds((oh + 1) * (W2 + 2) + 1, W2), :] = row.astype(bf16)

    # ---- block 2 ----
    y2 = conv_bn_relu(in2_scr, w2_ref, b2_ref, H2, W2)
    for oh in range(H3):
        row = pooled_row(y2, H2, W2, oh)                        # (W3, C2)
        in3_scr[pl.ds((oh + 1) * (W3 + 2) + 1, W3), :] = row.astype(bf16)

    # ---- block 3 + classify head + global average pool ----
    y3 = conv_bn_relu(in3_scr, w3_ref, b3_ref, H3, W3)
    # TODO(synk): nn.Dropout(0.5) is identity at inference; training-mode RNG
    # masking (pltpu.prng_seed / prng_random_bits) is not replicated.
    hsum = None
    for oh in range(H4):
        row = pooled_row(y3, H3, W3, oh).astype(bf16)           # (W4, C3)
        h = jnp.dot(row, fw1_ref[...], preferred_element_type=f32)
        h = jnp.maximum(h + fb1_ref[...], 0.0)                  # 1x1 conv + ReLU
        s = jnp.sum(h, axis=0, keepdims=True)
        hsum = s if hsum is None else hsum + s
    # AdaptiveAvgPool2d(1) commutes with the final linear 1x1 conv:
    # mean(h @ W + b) == mean(h) @ W + b.
    hmean = hsum * (1.0 / float(H4 * W4))                       # (1, 64) f32
    logits = jnp.dot(hmean.astype(bf16), fw2_ref[...],
                     preferred_element_type=f32) + fb2_ref[...]
    o_ref[...] = logits


# -------------------------------- forward -----------------------------------

@jax.jit
def simplenet_forward(params, x_nchw):
    B, Cin, H, W = x_nchw.shape
    nc = params["fc2_w"].shape[1]
    c1 = params["w1"].shape[-1]
    c2 = params["w2"].shape[-1]
    c3 = params["w3"].shape[-1]
    d1 = params["fc1_w"].shape[-1]

    H2, W2 = (H + 1) // 2, (W + 1) // 2
    H3, W3 = (H2 + 1) // 2, (W2 + 1) // 2

    # NCHW -> NHWC, bf16, zero-pad spatially by 1, flatten (H+2, W+2) rows.
    x = jnp.transpose(x_nchw, (0, 2, 3, 1)).astype(jnp.bfloat16)
    xp = jnp.pad(x, ((0, 0), (1, 1), (1, 1), (0, 0)))
    xflat = xp.reshape(B, (H + 2) * (W + 2), Cin)

    kernel = functools.partial(_simplenet_kernel, H=H, W=W)
    full = lambda *shape: (lambda b: tuple(0 for _ in shape))

    out = pl.pallas_call(
        kernel,
        out_shape=jax.ShapeDtypeStruct((B, 1, nc), jnp.float32),
        grid=(B,),
        in_specs=[
            pl.BlockSpec((None, (H + 2) * (W + 2), Cin), lambda b: (b, 0, 0)),
            pl.BlockSpec((9, Cin, c1), lambda b: (0, 0, 0)),
            pl.BlockSpec((1, c1), lambda b: (0, 0)),
            pl.BlockSpec((9, c1, c2), lambda b: (0, 0, 0)),
            pl.BlockSpec((1, c2), lambda b: (0, 0)),
            pl.BlockSpec((9, c2, c3), lambda b: (0, 0, 0)),
            pl.BlockSpec((1, c3), lambda b: (0, 0)),
            pl.BlockSpec((c3, d1), lambda b: (0, 0)),
            pl.BlockSpec((1, d1), lambda b: (0, 0)),
            pl.BlockSpec((d1, nc), lambda b: (0, 0)),
            pl.BlockSpec((1, nc), lambda b: (0, 0)),
        ],
        out_specs=pl.BlockSpec((None, 1, nc), lambda b: (b, 0, 0)),
        scratch_shapes=[
            pltpu.VMEM(((H2 + 2) * (W2 + 2), c1), jnp.bfloat16),  # block2 input
            pltpu.VMEM(((H3 + 2) * (W3 + 2), c2), jnp.bfloat16),  # block3 input
        ],
        compiler_params=pltpu.CompilerParams(
            dimension_semantics=("parallel",)),
    )(xflat, params["w1"], params["b1"], params["w2"], params["b2"],
      params["w3"], params["b3"], params["fc1_w"], params["fc1_b"],
      params["fc2_w"], params["fc2_b"])
    return out.reshape(B, nc)


# ------------------------------- parameters ----------------------------------

def _kaiming_normal_fan_out(key, shape):
    # torch kaiming_normal_(mode='fan_out'): std = sqrt(2 / (Cout*KH*KW))
    fan_out = shape[0] * shape[2] * shape[3]
    std = (2.0 / fan_out) ** 0.5
    return std * jax.random.normal(key, shape, dtype=jnp.float32)


def _conv_bias(key, cout, fan_in):
    bound = 1.0 / (fan_in ** 0.5)
    return jax.random.uniform(key, (cout,), jnp.float32, -bound, bound)


def init_params(key, in_channels=3, num_classes=10):
    keys = jax.random.split(key, 10)
    params = {}
    chans = [(in_channels, 32), (32, 64), (64, 128)]
    for idx, (cin, cout) in enumerate(chans):
        wk, bk = keys[2 * idx], keys[2 * idx + 1]
        params[f"block{idx + 1}"] = dict(
            w=_kaiming_normal_fan_out(wk, (cout, cin, 3, 3)),
            b=_conv_bias(bk, cout, cin * 9),
            gamma=jnp.ones((cout,), jnp.float32),   # BN weight.fill_(1)
            beta=jnp.zeros((cout,), jnp.float32),   # BN bias.zero_()
            mean=jnp.zeros((cout,), jnp.float32),   # running_mean (eval)
            var=jnp.ones((cout,), jnp.float32),     # running_var (eval)
        )
    # classify_block: Conv2d(128, 64, 1) -> ReLU -> Conv2d(64, num_classes, 1)
    w_fc1 = _kaiming_normal_fan_out(keys[6], (64, 128, 1, 1))
    w_fc2 = _kaiming_normal_fan_out(keys[8], (num_classes, 64, 1, 1))
    params["fc1"] = dict(w=w_fc1.reshape(64, 128).T,          # (128, 64)
                         b=_conv_bias(keys[7], 64, 128))
    params["fc2"] = dict(w=w_fc2.reshape(num_classes, 64).T,  # (64, nc)
                         b=_conv_bias(keys[9], num_classes, 64))
    return params


def prepare_params(raw, eps=1e-5):
    """One-time packing: fold eval-mode BN into conv weights/bias, transpose
    torch (Cout,Cin,3,3) weights to (9, Cin, Cout) tap-major, cast matmul
    operands to bf16 (accumulation stays f32 in the kernel)."""
    prep = {}
    for i in (1, 2, 3):
        blk = raw[f"block{i}"]
        cout = blk["w"].shape[0]
        cin = blk["w"].shape[1]
        scale = blk["gamma"] / jnp.sqrt(blk["var"] + eps)           # (Cout,)
        w = jnp.transpose(blk["w"], (2, 3, 1, 0)).reshape(9, cin, cout)
        prep[f"w{i}"] = (w * scale[None, None, :]).astype(jnp.bfloat16)
        bias = blk["beta"] + scale * (blk["b"] - blk["mean"])
        prep[f"b{i}"] = bias[None, :].astype(jnp.float32)
    prep["fc1_w"] = raw["fc1"]["w"].astype(jnp.bfloat16)            # (128, 64)
    prep["fc1_b"] = raw["fc1"]["b"][None, :].astype(jnp.float32)
    prep["fc2_w"] = raw["fc2"]["w"].astype(jnp.bfloat16)            # (64, nc)
    prep["fc2_b"] = raw["fc2"]["b"][None, :].astype(jnp.float32)
    return prep


# ----------------------------------- main ------------------------------------

if __name__ == "__main__":
    root = jax.random.PRNGKey(0)
    pkey, xkey = jax.random.split(root)
    raw = init_params(pkey, in_channels=3, num_classes=10)
    params = prepare_params(raw)

    x = jax.random.normal(xkey, (2, 3, 16, 16), dtype=jnp.float32)

    out = simplenet_forward(params, x)
    out = jax.block_until_ready(out)

    assert out.shape == (2, 10), out.shape
    assert bool(jnp.all(jnp.isfinite(out))), "non-finite output"
    print("KERNEL_OK")
</pallas_src>

<mosaic_0001>
module attributes {stable_mosaic.version = 11 : i64} {
  func.func @_simplenet_kernel(%arg0: i32, %arg1: memref<1x324x3xbf16, #tpu.memory_space<vmem>>, %arg2: memref<9x3x32xbf16, #tpu.memory_space<vmem>>, %arg3: memref<1x32xf32, #tpu.memory_space<vmem>>, %arg4: memref<9x32x64xbf16, #tpu.memory_space<vmem>>, %arg5: memref<1x64xf32, #tpu.memory_space<vmem>>, %arg6: memref<9x64x128xbf16, #tpu.memory_space<vmem>>, %arg7: memref<1x128xf32, #tpu.memory_space<vmem>>, %arg8: memref<128x64xbf16, #tpu.memory_space<vmem>>, %arg9: memref<1x64xf32, #tpu.memory_space<vmem>>, %arg10: memref<64x10xbf16, #tpu.memory_space<vmem>>, %arg11: memref<1x10xf32, #tpu.memory_space<vmem>>, %arg12: memref<1x1x10xf32, #tpu.memory_space<vmem>>, %arg13: memref<100x32xbf16, #tpu.memory_space<vmem>>, %arg14: memref<36x64xbf16, #tpu.memory_space<vmem>>) attributes {dimension_semantics = [#tpu.dimension_semantics<parallel>], iteration_bounds = array<i64: 2>, scalar_prefetch = 0 : i64, scratch_operands = 2 : i64, tpu.core_type = #tpu.core_type<tc>, window_params = [{transform_indices = @transform_0, window_bounds = array<i64: 1, 324, 3>}, {pipeline_mode = #tpu.pipeline_mode<synchronous>, transform_indices = @transform_1, window_bounds = array<i64: 9, 3, 32>}, {pipeline_mode = #tpu.pipeline_mode<synchronous>, transform_indices = @transform_2, window_bounds = array<i64: 1, 32>}, {pipeline_mode = #tpu.pipeline_mode<synchronous>, transform_indices = @transform_3, window_bounds = array<i64: 9, 32, 64>}, {pipeline_mode = #tpu.pipeline_mode<synchronous>, transform_indices = @transform_4, window_bounds = array<i64: 1, 64>}, {pipeline_mode = #tpu.pipeline_mode<synchronous>, transform_indices = @transform_5, window_bounds = array<i64: 9, 64, 128>}, {pipeline_mode = #tpu.pipeline_mode<synchronous>, transform_indices = @transform_6, window_bounds = array<i64: 1, 128>}, {pipeline_mode = #tpu.pipeline_mode<synchronous>, transform_indices = @transform_7, window_bounds = array<i64: 128, 64>}, {pipeline_mode = #tpu.pipeline_mode<synchronous>, transform_indices = @transform_8, window_bounds = array<i64: 1, 64>}, {pipeline_mode = #tpu.pipeline_mode<synchronous>, transform_indices = @transform_9, window_bounds = array<i64: 64, 10>}, {pipeline_mode = #tpu.pipeline_mode<synchronous>, transform_indices = @transform_10, window_bounds = array<i64: 1, 10>}, {transform_indices = @transform_11, window_bounds = array<i64: 1, 1, 10>}]} {
    %cst = arith.constant 0.000000e+00 : bf16
    %0 = vector.broadcast %cst : bf16 to vector<100x32xbf16>
    %c0 = arith.constant 0 : index
    %c0_0 = arith.constant 0 : index
    %1 = vector.load %arg13[%c0, %c0_0] : memref<100x32xbf16, #tpu.memory_space<vmem>>, vector<100x32xbf16>
    tpu.vector_store %arg13[%c0, %c0_0], %0 {strides = array<i32>} : memref<100x32xbf16, #tpu.memory_space<vmem>>, vector<100x32xbf16>,
    %cst_1 = arith.constant 0.000000e+00 : bf16
    %2 = vector.broadcast %cst_1 : bf16 to vector<36x64xbf16>
    %c0_2 = arith.constant 0 : index
    %c0_3 = arith.constant 0 : index
    %3 = vector.load %arg14[%c0_2, %c0_3] : memref<36x64xbf16, #tpu.memory_space<vmem>>, vector<36x64xbf16>
    tpu.vector_store %arg14[%c0_2, %c0_3], %2 {strides = array<i32>} : memref<36x64xbf16, #tpu.memory_space<vmem>>, vector<36x64xbf16>,
    %c0_4 = arith.constant 0 : index
    %c0_5 = arith.constant 0 : index
    %c0_6 = arith.constant 0 : index
    %4 = vector.load %arg1[%c0_4, %c0_5, %c0_6] : memref<1x324x3xbf16, #tpu.memory_space<vmem>>, vector<1x286x3xbf16>
    %5 = vector.shape_cast %4 : vector<1x286x3xbf16> to vector<286x3xbf16>
    %c0_7 = arith.constant 0 : index
    %c0_8 = arith.constant 0 : index
    %c0_9 = arith.constant 0 : index
    %6 = vector.load %arg2[%c0_7, %c0_8, %c0_9] : memref<9x3x32xbf16, #tpu.memory_space<vmem>>, vector<1x3x32xbf16>
    %7 = vector.shape_cast %6 : vector<1x3x32xbf16> to vector<3x32xbf16>
    %cst_10 = arith.constant dense<0.000000e+00> : vector<286x32xf32>
    %8 = tpu.matmul %5, %7, %cst_10 {dimension_numbers = #tpu.dot_dimension_numbers<[1], [0], [0], [1], [0, 0, 1, 1], [], []>} : vector<286x3xbf16>, vector<3x32xbf16>, vector<286x32xf32> -> vector<286x32xf32>
    %c0_11 = arith.constant 0 : index
    %c1 = arith.constant 1 : index
    %c0_12 = arith.constant 0 : index
    %9 = vector.load %arg1[%c0_11, %c1, %c0_12] : memref<1x324x3xbf16, #tpu.memory_space<vmem>>, vector<1x286x3xbf16>
    %10 = vector.shape_cast %9 : vector<1x286x3xbf16> to vector<286x3xbf16>
    %c1_13 = arith.constant 1 : index
    %c0_14 = arith.constant 0 : index
    %c0_15 = arith.constant 0 : index
    %11 = vector.load %arg2[%c1_13, %c0_14, %c0_15] : memref<9x3x32xbf16, #tpu.memory_space<vmem>>, vector<1x3x32xbf16>
    %12 = vector.shape_cast %11 : vector<1x3x32xbf16> to vector<3x32xbf16>
    %cst_16 = arith.constant dense<0.000000e+00> : vector<286x32xf32>
    %13 = tpu.matmul %10, %12, %cst_16 {dimension_numbers = #tpu.dot_dimension_numbers<[1], [0], [0], [1], [0, 0, 1, 1], [], []>} : vector<286x3xbf16>, vector<3x32xbf16>, vector<286x32xf32> -> vector<286x32xf32>
    %14 = arith.addf %8, %13 : vector<286x32xf32>
    %c0_17 = arith.constant 0 : index
    %c2 = arith.constant 2 : index
    %c0_18 = arith.constant 0 : index
    %15 = vector.load %arg1[%c0_17, %c2, %c0_18] : memref<1x324x3xbf16, #tpu.memory_space<vmem>>, vector<1x286x3xbf16>
    %16 = vector.shape_cast %15 : vector<1x286x3xbf16> to vector<286x3xbf16>
    %c2_19 = arith.constant 2 : index
    %c0_20 = arith.constant 0 : index
    %c0_21 = arith.constant 0 : index
    %17 = vector.load %arg2[%c2_19, %c0_20, %c0_21] : memref<9x3x32xbf16, #tpu.memory_space<vmem>>, vector<1x3x32xbf16>
    %18 = vector.shape_cast %17 : vector<1x3x32xbf16> to vector<3x32xbf16>
    %cst_22 = arith.constant dense<0.000000e+00> : vector<286x32xf32>
    %19 = tpu.matmul %16, %18, %cst_22 {dimension_numbers = #tpu.dot_dimension_numbers<[1], [0], [0], [1], [0, 0, 1, 1], [], []>} : vector<286x3xbf16>, vector<3x32xbf16>, vector<286x32xf32> -> vector<286x32xf32>
    %20 = arith.addf %14, %19 : vector<286x32xf32>
    %c0_23 = arith.constant 0 : index
    %c18 = arith.constant 18 : index
    %c0_24 = arith.constant 0 : index
    %21 = vector.load %arg1[%c0_23, %c18, %c0_24] : memref<1x324x3xbf16, #tpu.memory_space<vmem>>, vector<1x286x3xbf16>
    %22 = vector.shape_cast %21 : vector<1x286x3xbf16> to vector<286x3xbf16>
    %c3 = arith.constant 3 : index
    %c0_25 = arith.constant 0 : index
    %c0_26 = arith.constant 0 : index
    %23 = vector.load %arg2[%c3, %c0_25, %c0_26] : memref<9x3x32xbf16, #tpu.memory_space<vmem>>, vector<1x3x32xbf16>
    %24 = vector.shape_cast %23 : vector<1x3x32xbf16> to vector<3x32xbf16>
    %cst_27 = arith.constant dense<0.000000e+00> : vector<286x32xf32>
    %25 = tpu.matmul %22, %24, %cst_27 {dimension_numbers = #tpu.dot_dimension_numbers<[1], [0], [0], [1], [0, 0, 1, 1], [], []>} : vector<286x3xbf16>, vector<3x32xbf16>, vector<286x32xf32> -> vector<286x32xf32>
    %26 = arith.addf %20, %25 : vector<286x32xf32>
    %c0_28 = arith.constant 0 : index
    %c19 = arith.constant 19 : index
    %c0_29 = arith.constant 0 : index
    %27 = vector.load %arg1[%c0_28, %c19, %c0_29] : memref<1x324x3xbf16, #tpu.memory_space<vmem>>, vector<1x286x3xbf16>
    %28 = vector.shape_cast %27 : vector<1x286x3xbf16> to vector<286x3xbf16>
    %c4 = arith.constant 4 : index
    %c0_30 = arith.constant 0 : index
    %c0_31 = arith.constant 0 : index
    %29 = vector.load %arg2[%c4, %c0_30, %c0_31] : memref<9x3x32xbf16, #tpu.memory_space<vmem>>, vector<1x3x32xbf16>
    %30 = vector.shape_cast %29 : vector<1x3x32xbf16> to vector<3x32xbf16>
    %cst_32 = arith.constant dense<0.000000e+00> : vector<286x32xf32>
    %31 = tpu.matmul %28, %30, %cst_32 {dimension_numbers = #tpu.dot_dimension_numbers<[1], [0], [0], [1], [0, 0, 1, 1], [], []>} : vector<286x3xbf16>, vector<3x32xbf16>, vector<286x32xf32> -> vector<286x32xf32>
    %32 = arith.addf %26, %31 : vector<286x32xf32>
    %c0_33 = arith.constant 0 : index
    %c20 = arith.constant 20 : index
    %c0_34 = arith.constant 0 : index
    %33 = vector.load %arg1[%c0_33, %c20, %c0_34] : memref<1x324x3xbf16, #tpu.memory_space<vmem>>, vector<1x286x3xbf16>
    %34 = vector.shape_cast %33 : vector<1x286x3xbf16> to vector<286x3xbf16>
    %c5 = arith.constant 5 : index
    %c0_35 = arith.constant 0 : index
    %c0_36 = arith.constant 0 : index
    %35 = vector.load %arg2[%c5, %c0_35, %c0_36] : memref<9x3x32xbf16, #tpu.memory_space<vmem>>, vector<1x3x32xbf16>
    %36 = vector.shape_cast %35 : vector<1x3x32xbf16> to vector<3x32xbf16>
    %cst_37 = arith.constant dense<0.000000e+00> : vector<286x32xf32>
    %37 = tpu.matmul %34, %36, %cst_37 {dimension_numbers = #tpu.dot_dimension_numbers<[1], [0], [0], [1], [0, 0, 1, 1], [], []>} : vector<286x3xbf16>, vector<3x32xbf16>, vector<286x32xf32> -> vector<286x32xf32>
    %38 = arith.addf %32, %37 : vector<286x32xf32>
    %c0_38 = arith.constant 0 : index
    %c36 = arith.constant 36 : index
    %c0_39 = arith.constant 0 : index
    %39 = vector.load %arg1[%c0_38, %c36, %c0_39] : memref<1x324x3xbf16, #tpu.memory_space<vmem>>, vector<1x286x3xbf16>
    %40 = vector.shape_cast %39 : vector<1x286x3xbf16> to vector<286x3xbf16>
    %c6 = arith.constant 6 : index
    %c0_40 = arith.constant 0 : index
    %c0_41 = arith.constant 0 : index
    %41 = vector.load %arg2[%c6, %c0_40, %c0_41] : memref<9x3x32xbf16, #tpu.memory_space<vmem>>, vector<1x3x32xbf16>
    %42 = vector.shape_cast %41 : vector<1x3x32xbf16> to vector<3x32xbf16>
    %cst_42 = arith.constant dense<0.000000e+00> : vector<286x32xf32>
    %43 = tpu.matmul %40, %42, %cst_42 {dimension_numbers = #tpu.dot_dimension_numbers<[1], [0], [0], [1], [0, 0, 1, 1], [], []>} : vector<286x3xbf16>, vector<3x32xbf16>, vector<286x32xf32> -> vector<286x32xf32>
    %44 = arith.addf %38, %43 : vector<286x32xf32>
    %c0_43 = arith.constant 0 : index
    %c37 = arith.constant 37 : index
    %c0_44 = arith.constant 0 : index
    %45 = vector.load %arg1[%c0_43, %c37, %c0_44] : memref<1x324x3xbf16, #tpu.memory_space<vmem>>, vector<1x286x3xbf16>
    %46 = vector.shape_cast %45 : vector<1x286x3xbf16> to vector<286x3xbf16>
    %c7 = arith.constant 7 : index
    %c0_45 = arith.constant 0 : index
    %c0_46 = arith.constant 0 : index
    %47 = vector.load %arg2[%c7, %c0_45, %c0_46] : memref<9x3x32xbf16, #tpu.memory_space<vmem>>, vector<1x3x32xbf16>
    %48 = vector.shape_cast %47 : vector<1x3x32xbf16> to vector<3x32xbf16>
    %cst_47 = arith.constant dense<0.000000e+00> : vector<286x32xf32>
    %49 = tpu.matmul %46, %48, %cst_47 {dimension_numbers = #tpu.dot_dimension_numbers<[1], [0], [0], [1], [0, 0, 1, 1], [], []>} : vector<286x3xbf16>, vector<3x32xbf16>, vector<286x32xf32> -> vector<286x32xf32>
    %50 = arith.addf %44, %49 : vector<286x32xf32>
    %c0_48 = arith.constant 0 : index
    %c38 = arith.constant 38 : index
    %c0_49 = arith.constant 0 : index
    %51 = vector.load %arg1[%c0_48, %c38, %c0_49] : memref<1x324x3xbf16, #tpu.memory_space<vmem>>, vector<1x286x3xbf16>
    %52 = vector.shape_cast %51 : vector<1x286x3xbf16> to vector<286x3xbf16>
    %c8 = arith.constant 8 : index
    %c0_50 = arith.constant 0 : index
    %c0_51 = arith.constant 0 : index
    %53 = vector.load %arg2[%c8, %c0_50, %c0_51] : memref<9x3x32xbf16, #tpu.memory_space<vmem>>, vector<1x3x32xbf16>
    %54 = vector.shape_cast %53 : vector<1x3x32xbf16> to vector<3x32xbf16>
    %cst_52 = arith.constant dense<0.000000e+00> : vector<286x32xf32>
    %55 = tpu.matmul %52, %54, %cst_52 {dimension_numbers = #tpu.dot_dimension_numbers<[1], [0], [0], [1], [0, 0, 1, 1], [], []>} : vector<286x3xbf16>, vector<3x32xbf16>, vector<286x32xf32> -> vector<286x32xf32>
    %56 = arith.addf %50, %55 : vector<286x32xf32>
    %c0_53 = arith.constant 0 : index
    %c0_54 = arith.constant 0 : index
    %57 = vector.load %arg3[%c0_53, %c0_54] : memref<1x32xf32, #tpu.memory_space<vmem>>, vector<1x32xf32>
    %58 = vector.broadcast %57 : vector<1x32xf32> to vector<286x32xf32>
    %59 = arith.addf %56, %58 : vector<286x32xf32>
    %cst_55 = arith.constant 0.000000e+00 : f32
    %60 = vector.broadcast %cst_55 : f32 to vector<286x32xf32>
    %61 = arith.maximumf %59, %60 : vector<286x32xf32>
    %62 = vector.extract_strided_slice %61 {offsets = [0, 0], sizes = [16, 32], strides = [1, 1]} : vector<286x32xf32> to vector<16x32xf32>
    %63 = vector.extract_strided_slice %61 {offsets = [18, 0], sizes = [16, 32], strides = [1, 1]} : vector<286x32xf32> to vector<16x32xf32>
    %64 = arith.maximumf %62, %63 : vector<16x32xf32>
    %65 = vector.extract_strided_slice %64 {offsets = [0, 0], sizes = [2, 32], strides = [1, 1]} : vector<16x32xf32> to vector<2x32xf32>
    %cst_56 = arith.constant dense<0xFF800000> : vector<32xf32>
    %66 = vector.multi_reduction <maximumf>, %65, %cst_56 [0] : vector<2x32xf32> to vector<32xf32>
    %67 = vector.shape_cast %66 : vector<32xf32> to vector<1x32xf32>
    %68 = vector.extract_strided_slice %64 {offsets = [1, 0], sizes = [3, 32], strides = [1, 1]} : vector<16x32xf32> to vector<3x32xf32>
    %cst_57 = arith.constant dense<0xFF800000> : vector<32xf32>
    %69 = vector.multi_reduction <maximumf>, %68, %cst_57 [0] : vector<3x32xf32> to vector<32xf32>
    %70 = vector.shape_cast %69 : vector<32xf32> to vector<1x32xf32>
    %71 = vector.extract_strided_slice %64 {offsets = [3, 0], sizes = [3, 32], strides = [1, 1]} : vector<16x32xf32> to vector<3x32xf32>
    %cst_58 = arith.constant dense<0xFF800000> : vector<32xf32>
    %72 = vector.multi_reduction <maximumf>, %71, %cst_58 [0] : vector<3x32xf32> to vector<32xf32>
    %73 = vector.shape_cast %72 : vector<32xf32> to vector<1x32xf32>
    %74 = vector.extract_strided_slice %64 {offsets = [5, 0], sizes = [3, 32], strides = [1, 1]} : vector<16x32xf32> to vector<3x32xf32>
    %cst_59 = arith.constant dense<0xFF800000> : vector<32xf32>
    %75 = vector.multi_reduction <maximumf>, %74, %cst_59 [0] : vector<3x32xf32> to vector<32xf32>
    %76 = vector.shape_cast %75 : vector<32xf32> to vector<1x32xf32>
    %77 = vector.extract_strided_slice %64 {offsets = [7, 0], sizes = [3, 32], strides = [1, 1]} : vector<16x32xf32> to vector<3x32xf32>
    %cst_60 = arith.constant dense<0xFF800000> : vector<32xf32>
    %78 = vector.multi_reduction <maximumf>, %77, %cst_60 [0] : vector<3x32xf32> to vector<32xf32>
    %79 = vector.shape_cast %78 : vector<32xf32> to vector<1x32xf32>
    %80 = vector.extract_strided_slice %64 {offsets = [9, 0], sizes = [3, 32], strides = [1, 1]} : vector<16x32xf32> to vector<3x32xf32>
    %cst_61 = arith.constant dense<0xFF800000> : vector<32xf32>
    %81 = vector.multi_reduction <maximumf>, %80, %cst_61 [0] : vector<3x32xf32> to vector<32xf32>
    %82 = vector.shape_cast %81 : vector<32xf32> to vector<1x32xf32>
    %83 = vector.extract_strided_slice %64 {offsets = [11, 0], sizes = [3, 32], strides = [1, 1]} : vector<16x32xf32> to vector<3x32xf32>
    %cst_62 = arith.constant dense<0xFF800000> : vector<32xf32>
    %84 = vector.multi_reduction <maximumf>, %83, %cst_62 [0] : vector<3x32xf32> to vector<32xf32>
    %85 = vector.shape_cast %84 : vector<32xf32> to vector<1x32xf32>
    %86 = vector.extract_strided_slice %64 {offsets = [13, 0], sizes = [3, 32], strides = [1, 1]} : vector<16x32xf32> to vector<3x32xf32>
    %cst_63 = arith.constant dense<0xFF800000> : vector<32xf32>
    %87 = vector.multi_reduction <maximumf>, %86, %cst_63 [0] : vector<3x32xf32> to vector<32xf32>
    %88 = vector.shape_cast %87 : vector<32xf32> to vector<1x32xf32>
    %89 = tpu.concatenate %67, %70, %73, %76, %79, %82, %85, %88 in 0 : vector<1x32xf32>, vector<1x32xf32>, vector<1x32xf32>, vector<1x32xf32>, vector<1x32xf32>, vector<1x32xf32>, vector<1x32xf32>, vector<1x32xf32> -> vector<8x32xf32>
    %90 = arith.truncf %89 : vector<8x32xf32> to vector<8x32xbf16>
    %c11 = arith.constant 11 : index
    %c0_64 = arith.constant 0 : index
    %91 = vector.load %arg13[%c11, %c0_64] : memref<100x32xbf16, #tpu.memory_space<vmem>>, vector<8x32xbf16>
    tpu.vector_store %arg13[%c11, %c0_64], %90 {strides = array<i32>} : memref<100x32xbf16, #tpu.memory_space<vmem>>, vector<8x32xbf16>,
    %92 = vector.extract_strided_slice %61 {offsets = [18, 0], sizes = [16, 32], strides = [1, 1]} : vector<286x32xf32> to vector<16x32xf32>
    %93 = vector.extract_strided_slice %61 {offsets = [36, 0], sizes = [16, 32], strides = [1, 1]} : vector<286x32xf32> to vector<16x32xf32>
    %94 = arith.maximumf %92, %93 : vector<16x32xf32>
    %95 = vector.extract_strided_slice %61 {offsets = [54, 0], sizes = [16, 32], strides = [1, 1]} : vector<286x32xf32> to vector<16x32xf32>
    %96 = arith.maximumf %94, %95 : vector<16x32xf32>
    %97 = vector.extract_strided_slice %96 {offsets = [0, 0], sizes = [2, 32], strides = [1, 1]} : vector<16x32xf32> to vector<2x32xf32>
    %cst_65 = arith.constant dense<0xFF800000> : vector<32xf32>
    %98 = vector.multi_reduction <maximumf>, %97, %cst_65 [0] : vector<2x32xf32> to vector<32xf32>
    %99 = vector.shape_cast %98 : vector<32xf32> to vector<1x32xf32>
    %100 = vector.extract_strided_slice %96 {offsets = [1, 0], sizes = [3, 32], strides = [1, 1]} : vector<16x32xf32> to vector<3x32xf32>
    %cst_66 = arith.constant dense<0xFF800000> : vector<32xf32>
    %101 = vector.multi_reduction <maximumf>, %100, %cst_66 [0] : vector<3x32xf32> to vector<32xf32>
    %102 = vector.shape_cast %101 : vector<32xf32> to vector<1x32xf32>
    %103 = vector.extract_strided_slice %96 {offsets = [3, 0], sizes = [3, 32], strides = [1, 1]} : vector<16x32xf32> to vector<3x32xf32>
    %cst_67 = arith.constant dense<0xFF800000> : vector<32xf32>
    %104 = vector.multi_reduction <maximumf>, %103, %cst_67 [0] : vector<3x32xf32> to vector<32xf32>
    %105 = vector.shape_cast %104 : vector<32xf32> to vector<1x32xf32>
    %106 = vector.extract_strided_slice %96 {offsets = [5, 0], sizes = [3, 32], strides = [1, 1]} : vector<16x32xf32> to vector<3x32xf32>
    %cst_68 = arith.constant dense<0xFF800000> : vector<32xf32>
    %107 = vector.multi_reduction <maximumf>, %106, %cst_68 [0] : vector<3x32xf32> to vector<32xf32>
    %108 = vector.shape_cast %107 : vector<32xf32> to vector<1x32xf32>
    %109 = vector.extract_strided_slice %96 {offsets = [7, 0], sizes = [3, 32], strides = [1, 1]} : vector<16x32xf32> to vector<3x32xf32>
    %cst_69 = arith.constant dense<0xFF800000> : vector<32xf32>
    %110 = vector.multi_reduction <maximumf>, %109, %cst_69 [0] : vector<3x32xf32> to vector<32xf32>
    %111 = vector.shape_cast %110 : vector<32xf32> to vector<1x32xf32>
    %112 = vector.extract_strided_slice %96 {offsets = [9, 0], sizes = [3, 32], strides = [1, 1]} : vector<16x32xf32> to vector<3x32xf32>
    %cst_70 = arith.constant dense<0xFF800000> : vector<32xf32>
    %113 = vector.multi_reduction <maximumf>, %112, %cst_70 [0] : vector<3x32xf32> to vector<32xf32>
    %114 = vector.shape_cast %113 : vector<32xf32> to vector<1x32xf32>
    %115 = vector.extract_strided_slice %96 {offsets = [11, 0], sizes = [3, 32], strides = [1, 1]} : vector<16x32xf32> to vector<3x32xf32>
    %cst_71 = arith.constant dense<0xFF800000> : vector<32xf32>
    %116 = vector.multi_reduction <maximumf>, %115, %cst_71 [0] : vector<3x32xf32> to vector<32xf32>
    %117 = vector.shape_cast %116 : vector<32xf32> to vector<1x32xf32>
    %118 = vector.extract_strided_slice %96 {offsets = [13, 0], sizes = [3, 32], strides = [1, 1]} : vector<16x32xf32> to vector<3x32xf32>
    %cst_72 = arith.constant dense<0xFF800000> : vector<32xf32>
    %119 = vector.multi_reduction <maximumf>, %118, %cst_72 [0] : vector<3x32xf32> to vector<32xf32>
    %120 = vector.shape_cast %119 : vector<32xf32> to vector<1x32xf32>
    %121 = tpu.concatenate %99, %102, %105, %108, %111, %114, %117, %120 in 0 : vector<1x32xf32>, vector<1x32xf32>, vector<1x32xf32>, vector<1x32xf32>, vector<1x32xf32>, vector<1x32xf32>, vector<1x32xf32>, vector<1x32xf32> -> vector<8x32xf32>
    %122 = arith.truncf %121 : vector<8x32xf32> to vector<8x32xbf16>
    %c21 = arith.constant 21 : index
    %c0_73 = arith.constant 0 : index
    %123 = vector.load %arg13[%c21, %c0_73] : memref<100x32xbf16, #tpu.memory_space<vmem>>, vector<8x32xbf16>
    tpu.vector_store %arg13[%c21, %c0_73], %122 {strides = array<i32>} : memref<100x32xbf16, #tpu.memory_space<vmem>>, vector<8x32xbf16>,
    %124 = vector.extract_strided_slice %61 {offsets = [54, 0], sizes = [16, 32], strides = [1, 1]} : vector<286x32xf32> to vector<16x32xf32>
    %125 = vector.extract_strided_slice %61 {offsets = [72, 0], sizes = [16, 32], strides = [1, 1]} : vector<286x32xf32> to vector<16x32xf32>
    %126 = arith.maximumf %124, %125 : vector<16x32xf32>
    %127 = vector.extract_strided_slice %61 {offsets = [90, 0], sizes = [16, 32], strides = [1, 1]} : vector<286x32xf32> to vector<16x32xf32>
    %128 = arith.maximumf %126, %127 : vector<16x32xf32>
    %129 = vector.extract_strided_slice %128 {offsets = [0, 0], sizes = [2, 32], strides = [1, 1]} : vector<16x32xf32> to vector<2x32xf32>
    %cst_74 = arith.constant dense<0xFF800000> : vector<32xf32>
    %130 = vector.multi_reduction <maximumf>, %129, %cst_74 [0] : vector<2x32xf32> to vector<32xf32>
    %131 = vector.shape_cast %130 : vector<32xf32> to vector<1x32xf32>
    %132 = vector.extract_strided_slice %128 {offsets = [1, 0], sizes = [3, 32], strides = [1, 1]} : vector<16x32xf32> to vector<3x32xf32>
    %cst_75 = arith.constant dense<0xFF800000> : vector<32xf32>
    %133 = vector.multi_reduction <maximumf>, %132, %cst_75 [0] : vector<3x32xf32> to vector<32xf32>
    %134 = vector.shape_cast %133 : vector<32xf32> to vector<1x32xf32>
    %135 = vector.extract_strided_slice %128 {offsets = [3, 0], sizes = [3, 32], strides = [1, 1]} : vector<16x32xf32> to vector<3x32xf32>
    %cst_76 = arith.constant dense<0xFF800000> : vector<32xf32>
    %136 = vector.multi_reduction <maximumf>, %135, %cst_76 [0] : vector<3x32xf32> to vector<32xf32>
    %137 = vector.shape_cast %136 : vector<32xf32> to vector<1x32xf32>
    %138 = vector.extract_strided_slice %128 {offsets = [5, 0], sizes = [3, 32], strides = [1, 1]} : vector<16x32xf32> to vector<3x32xf32>
    %cst_77 = arith.constant dense<0xFF800000> : vector<32xf32>
    %139 = vector.multi_reduction <maximumf>, %138, %cst_77 [0] : vector<3x32xf32> to vector<32xf32>
    %140 = vector.shape_cast %139 : vector<32xf32> to vector<1x32xf32>
    %141 = vector.extract_strided_slice %128 {offsets = [7, 0], sizes = [3, 32], strides = [1, 1]} : vector<16x32xf32> to vector<3x32xf32>
    %cst_78 = arith.constant dense<0xFF800000> : vector<32xf32>
    %142 = vector.multi_reduction <maximumf>, %141, %cst_78 [0] : vector<3x32xf32> to vector<32xf32>
    %143 = vector.shape_cast %142 : vector<32xf32> to vector<1x32xf32>
    %144 = vector.extract_strided_slice %128 {offsets = [9, 0], sizes = [3, 32], strides = [1, 1]} : vector<16x32xf32> to vector<3x32xf32>
    %cst_79 = arith.constant dense<0xFF800000> : vector<32xf32>
    %145 = vector.multi_reduction <maximumf>, %144, %cst_79 [0] : vector<3x32xf32> to vector<32xf32>
    %146 = vector.shape_cast %145 : vector<32xf32> to vector<1x32xf32>
    %147 = vector.extract_strided_slice %128 {offsets = [11, 0], sizes = [3, 32], strides = [1, 1]} : vector<16x32xf32> to vector<3x32xf32>
    %cst_80 = arith.constant dense<0xFF800000> : vector<32xf32>
    %148 = vector.multi_reduction <maximumf>, %147, %cst_80 [0] : vector<3x32xf32> to vector<32xf32>
    %149 = vector.shape_cast %148 : vector<32xf32> to vector<1x32xf32>
    %150 = vector.extract_strided_slice %128 {offsets = [13, 0], sizes = [3, 32], strides = [1, 1]} : vector<16x32xf32> to vector<3x32xf32>
    %cst_81 = arith.constant dense<0xFF800000> : vector<32xf32>
    %151 = vector.multi_reduction <maximumf>, %150, %cst_81 [0] : vector<3x32xf32> to vector<32xf32>
    %152 = vector.shape_cast %151 : vector<32xf32> to vector<1x32xf32>
    %153 = tpu.concatenate %131, %134, %137, %140, %143, %146, %149, %152 in 0 : vector<1x32xf32>, vector<1x32xf32>, vector<1x32xf32>, vector<1x32xf32>, vector<1x32xf32>, vector<1x32xf32>, vector<1x32xf32>, vector<1x32xf32> -> vector<8x32xf32>
    %154 = arith.truncf %153 : vector<8x32xf32> to vector<8x32xbf16>
    %c31 = arith.constant 31 : index
    %c0_82 = arith.constant 0 : index
    %155 = vector.load %arg13[%c31, %c0_82] : memref<100x32xbf16, #tpu.memory_space<vmem>>, vector<8x32xbf16>
    tpu.vector_store %arg13[%c31, %c0_82], %154 {strides = array<i32>} : memref<100x32xbf16, #tpu.memory_space<vmem>>, vector<8x32xbf16>,
    %156 = vector.extract_strided_slice %61 {offsets = [90, 0], sizes = [16, 32], strides = [1, 1]} : vector<286x32xf32> to vector<16x32xf32>
    %157 = vector.extract_strided_slice %61 {offsets = [108, 0], sizes = [16, 32], strides = [1, 1]} : vector<286x32xf32> to vector<16x32xf32>
    %158 = arith.maximumf %156, %157 : vector<16x32xf32>
    %159 = vector.extract_strided_slice %61 {offsets = [126, 0], sizes = [16, 32], strides = [1, 1]} : vector<286x32xf32> to vector<16x32xf32>
    %160 = arith.maximumf %158, %159 : vector<16x32xf32>
    %161 = vector.extract_strided_slice %160 {offsets = [0, 0], sizes = [2, 32], strides = [1, 1]} : vector<16x32xf32> to vector<2x32xf32>
    %cst_83 = arith.constant dense<0xFF800000> : vector<32xf32>
    %162 = vector.multi_reduction <maximumf>, %161, %cst_83 [0] : vector<2x32xf32> to vector<32xf32>
    %163 = vector.shape_cast %162 : vector<32xf32> to vector<1x32xf32>
    %164 = vector.extract_strided_slice %160 {offsets = [1, 0], sizes = [3, 32], strides = [1, 1]} : vector<16x32xf32> to vector<3x32xf32>
    %cst_84 = arith.constant dense<0xFF800000> : vector<32xf32>
    %165 = vector.multi_reduction <maximumf>, %164, %cst_84 [0] : vector<3x32xf32> to vector<32xf32>
    %166 = vector.shape_cast %165 : vector<32xf32> to vector<1x32xf32>
    %167 = vector.extract_strided_slice %160 {offsets = [3, 0], sizes = [3, 32], strides = [1, 1]} : vector<16x32xf32> to vector<3x32xf32>
    %cst_85 = arith.constant dense<0xFF800000> : vector<32xf32>
    %168 = vector.multi_reduction <maximumf>, %167, %cst_85 [0] : vector<3x32xf32> to vector<32xf32>
    %169 = vector.shape_cast %168 : vector<32xf32> to vector<1x32xf32>
    %170 = vector.extract_strided_slice %160 {offsets = [5, 0], sizes = [3, 32], strides = [1, 1]} : vector<16x32xf32> to vector<3x32xf32>
    %cst_86 = arith.constant dense<0xFF800000> : vector<32xf32>
    %171 = vector.multi_reduction <maximumf>, %170, %cst_86 [0] : vector<3x32xf32> to vector<32xf32>
    %172 = vector.shape_cast %171 : vector<32xf32> to vector<1x32xf32>
    %173 = vector.extract_strided_slice %160 {offsets = [7, 0], sizes = [3, 32], strides = [1, 1]} : vector<16x32xf32> to vector<3x32xf32>
    %cst_87 = arith.constant dense<0xFF800000> : vector<32xf32>
    %174 = vector.multi_reduction <maximumf>, %173, %cst_87 [0] : vector<3x32xf32> to vector<32xf32>
    %175 = vector.shape_cast %174 : vector<32xf32> to vector<1x32xf32>
    %176 = vector.extract_strided_slice %160 {offsets = [9, 0], sizes = [3, 32], strides = [1, 1]} : vector<16x32xf32> to vector<3x32xf32>
    %cst_88 = arith.constant dense<0xFF800000> : vector<32xf32>
    %177 = vector.multi_reduction <maximumf>, %176, %cst_88 [0] : vector<3x32xf32> to vector<32xf32>
    %178 = vector.shape_cast %177 : vector<32xf32> to vector<1x32xf32>
    %179 = vector.extract_strided_slice %160 {offsets = [11, 0], sizes = [3, 32], strides = [1, 1]} : vector<16x32xf32> to vector<3x32xf32>
    %cst_89 = arith.constant dense<0xFF800000> : vector<32xf32>
    %180 = vector.multi_reduction <maximumf>, %179, %cst_89 [0] : vector<3x32xf32> to vector<32xf32>
    %181 = vector.shape_cast %180 : vector<32xf32> to vector<1x32xf32>
    %182 = vector.extract_strided_slice %160 {offsets = [13, 0], sizes = [3, 32], strides = [1, 1]} : vector<16x32xf32> to vector<3x32xf32>
    %cst_90 = arith.constant dense<0xFF800000> : vector<32xf32>
    %183 = vector.multi_reduction <maximumf>, %182, %cst_90 [0] : vector<3x32xf32> to vector<32xf32>
    %184 = vector.shape_cast %183 : vector<32xf32> to vector<1x32xf32>
    %185 = tpu.concatenate %163, %166, %169, %172, %175, %178, %181, %184 in 0 : vector<1x32xf32>, vector<1x32xf32>, vector<1x32xf32>, vector<1x32xf32>, vector<1x32xf32>, vector<1x32xf32>, vector<1x32xf32>, vector<1x32xf32> -> vector<8x32xf32>
    %186 = arith.truncf %185 : vector<8x32xf32> to vector<8x32xbf16>
    %c41 = arith.constant 41 : index
    %c0_91 = arith.constant 0 : index
    %187 = vector.load %arg13[%c41, %c0_91] : memref<100x32xbf16, #tpu.memory_space<vmem>>, vector<8x32xbf16>
    tpu.vector_store %arg13[%c41, %c0_91], %186 {strides = array<i32>} : memref<100x32xbf16, #tpu.memory_space<vmem>>, vector<8x32xbf16>,
    %188 = vector.extract_strided_slice %61 {offsets = [126, 0], sizes = [16, 32], strides = [1, 1]} : vector<286x32xf32> to vector<16x32xf32>
    %189 = vector.extract_strided_slice %61 {offsets = [144, 0], sizes = [16, 32], strides = [1, 1]} : vector<286x32xf32> to vector<16x32xf32>
    %190 = arith.maximumf %188, %189 : vector<16x32xf32>
    %191 = vector.extract_strided_slice %61 {offsets = [162, 0], sizes = [16, 32], strides = [1, 1]} : vector<286x32xf32> to vector<16x32xf32>
    %192 = arith.maximumf %190, %191 : vector<16x32xf32>
    %193 = vector.extract_strided_slice %192 {offsets = [0, 0], sizes = [2, 32], strides = [1, 1]} : vector<16x32xf32> to vector<2x32xf32>
    %cst_92 = arith.constant dense<0xFF800000> : vector<32xf32>
    %194 = vector.multi_reduction <maximumf>, %193, %cst_92 [0] : vector<2x32xf32> to vector<32xf32>
    %195 = vector.shape_cast %194 : vector<32xf32> to vector<1x32xf32>
    %196 = vector.extract_strided_slice %192 {offsets = [1, 0], sizes = [3, 32], strides = [1, 1]} : vector<16x32xf32> to vector<3x32xf32>
    %cst_93 = arith.constant dense<0xFF800000> : vector<32xf32>
    %197 = vector.multi_reduction <maximumf>, %196, %cst_93 [0] : vector<3x32xf32> to vector<32xf32>
    %198 = vector.shape_cast %197 : vector<32xf32> to vector<1x32xf32>
    %199 = vector.extract_strided_slice %192 {offsets = [3, 0], sizes = [3, 32], strides = [1, 1]} : vector<16x32xf32> to vector<3x32xf32>
    %cst_94 = arith.constant dense<0xFF800000> : vector<32xf32>
    %200 = vector.multi_reduction <maximumf>, %199, %cst_94 [0] : vector<3x32xf32> to vector<32xf32>
    %201 = vector.shape_cast %200 : vector<32xf32> to vector<1x32xf32>
    %202 = vector.extract_strided_slice %192 {offsets = [5, 0], sizes = [3, 32], strides = [1, 1]} : vector<16x32xf32> to vector<3x32xf32>
    %cst_95 = arith.constant dense<0xFF800000> : vector<32xf32>
    %203 = vector.multi_reduction <maximumf>, %202, %cst_95 [0] : vector<3x32xf32> to vector<32xf32>
    %204 = vector.shape_cast %203 : vector<32xf32> to vector<1x32xf32>
    %205 = vector.extract_strided_slice %192 {offsets = [7, 0], sizes = [3, 32], strides = [1, 1]} : vector<16x32xf32> to vector<3x32xf32>
    %cst_96 = arith.constant dense<0xFF800000> : vector<32xf32>
    %206 = vector.multi_reduction <maximumf>, %205, %cst_96 [0] : vector<3x32xf32> to vector<32xf32>
    %207 = vector.shape_cast %206 : vector<32xf32> to vector<1x32xf32>
    %208 = vector.extract_strided_slice %192 {offsets = [9, 0], sizes = [3, 32], strides = [1, 1]} : vector<16x32xf32> to vector<3x32xf32>
    %cst_97 = arith.constant dense<0xFF800000> : vector<32xf32>
    %209 = vector.multi_reduction <maximumf>, %208, %cst_97 [0] : vector<3x32xf32> to vector<32xf32>
    %210 = vector.shape_cast %209 : vector<32xf32> to vector<1x32xf32>
    %211 = vector.extract_strided_slice %192 {offsets = [11, 0], sizes = [3, 32], strides = [1, 1]} : vector<16x32xf32> to vector<3x32xf32>
    %cst_98 = arith.constant dense<0xFF800000> : vector<32xf32>
    %212 = vector.multi_reduction <maximumf>, %211, %cst_98 [0] : vector<3x32xf32> to vector<32xf32>
    %213 = vector.shape_cast %212 : vector<32xf32> to vector<1x32xf32>
    %214 = vector.extract_strided_slice %192 {offsets = [13, 0], sizes = [3, 32], strides = [1, 1]} : vector<16x32xf32> to vector<3x32xf32>
    %cst_99 = arith.constant dense<0xFF800000> : vector<32xf32>
    %215 = vector.multi_reduction <maximumf>, %214, %cst_99 [0] : vector<3x32xf32> to vector<32xf32>
    %216 = vector.shape_cast %215 : vector<32xf32> to vector<1x32xf32>
    %217 = tpu.concatenate %195, %198, %201, %204, %207, %210, %213, %216 in 0 : vector<1x32xf32>, vector<1x32xf32>, vector<1x32xf32>, vector<1x32xf32>, vector<1x32xf32>, vector<1x32xf32>, vector<1x32xf32>, vector<1x32xf32> -> vector<8x32xf32>
    %218 = arith.truncf %217 : vector<8x32xf32> to vector<8x32xbf16>
    %c51 = arith.constant 51 : index
    %c0_100 = arith.constant 0 : index
    %219 = vector.load %arg13[%c51, %c0_100] : memref<100x32xbf16, #tpu.memory_space<vmem>>, vector<8x32xbf16>
    tpu.vector_store %arg13[%c51, %c0_100], %218 {strides = array<i32>} : memref<100x32xbf16, #tpu.memory_space<vmem>>, vector<8x32xbf16>,
    %220 = vector.extract_strided_slice %61 {offsets = [162, 0], sizes = [16, 32], strides = [1, 1]} : vector<286x32xf32> to vector<16x32xf32>
    %221 = vector.extract_strided_slice %61 {offsets = [180, 0], sizes = [16, 32], strides = [1, 1]} : vector<286x32xf32> to vector<16x32xf32>
    %222 = arith.maximumf %220, %221 : vector<16x32xf32>
    %223 = vector.extract_strided_slice %61 {offsets = [198, 0], sizes = [16, 32], strides = [1, 1]} : vector<286x32xf32> to vector<16x32xf32>
    %224 = arith.maximumf %222, %223 : vector<16x32xf32>
    %225 = vector.extract_strided_slice %224 {offsets = [0, 0], sizes = [2, 32], strides = [1, 1]} : vector<16x32xf32> to vector<2x32xf32>
    %cst_101 = arith.constant dense<0xFF800000> : vector<32xf32>
    %226 = vector.multi_reduction <maximumf>, %225, %cst_101 [0] : vector<2x32xf32> to vector<32xf32>
    %227 = vector.shape_cast %226 : vector<32xf32> to vector<1x32xf32>
    %228 = vector.extract_strided_slice %224 {offsets = [1, 0], sizes = [3, 32], strides = [1, 1]} : vector<16x32xf32> to vector<3x32xf32>
    %cst_102 = arith.constant dense<0xFF800000> : vector<32xf32>
    %229 = vector.multi_reduction <maximumf>, %228, %cst_102 [0] : vector<3x32xf32> to vector<32xf32>
    %230 = vector.shape_cast %229 : vector<32xf32> to vector<1x32xf32>
    %231 = vector.extract_strided_slice %224 {offsets = [3, 0], sizes = [3, 32], strides = [1, 1]} : vector<16x32xf32> to vector<3x32xf32>
    %cst_103 = arith.constant dense<0xFF800000> : vector<32xf32>
    %232 = vector.multi_reduction <maximumf>, %231, %cst_103 [0] : vector<3x32xf32> to vector<32xf32>
    %233 = vector.shape_cast %232 : vector<32xf32> to vector<1x32xf32>
    %234 = vector.extract_strided_slice %224 {offsets = [5, 0], sizes = [3, 32], strides = [1, 1]} : vector<16x32xf32> to vector<3x32xf32>
    %cst_104 = arith.constant dense<0xFF800000> : vector<32xf32>
    %235 = vector.multi_reduction <maximumf>, %234, %cst_104 [0] : vector<3x32xf32> to vector<32xf32>
    %236 = vector.shape_cast %235 : vector<32xf32> to vector<1x32xf32>
    %237 = vector.extract_strided_slice %224 {offsets = [7, 0], sizes = [3, 32], strides = [1, 1]} : vector<16x32xf32> to vector<3x32xf32>
    %cst_105 = arith.constant dense<0xFF800000> : vector<32xf32>
    %238 = vector.multi_reduction <maximumf>, %237, %cst_105 [0] : vector<3x32xf32> to vector<32xf32>
    %239 = vector.shape_cast %238 : vector<32xf32> to vector<1x32xf32>
    %240 = vector.extract_strided_slice %224 {offsets = [9, 0], sizes = [3, 32], strides = [1, 1]} : vector<16x32xf32> to vector<3x32xf32>
    %cst_106 = arith.constant dense<0xFF800000> : vector<32xf32>
    %241 = vector.multi_reduction <maximumf>, %240, %cst_106 [0] : vector<3x32xf32> to vector<32xf32>
    %242 = vector.shape_cast %241 : vector<32xf32> to vector<1x32xf32>
    %243 = vector.extract_strided_slice %224 {offsets = [11, 0], sizes = [3, 32], strides = [1, 1]} : vector<16x32xf32> to vector<3x32xf32>
    %cst_107 = arith.constant dense<0xFF800000> : vector<32xf32>
    %244 = vector.multi_reduction <maximumf>, %243, %cst_107 [0] : vector<3x32xf32> to vector<32xf32>
    %245 = vector.shape_cast %244 : vector<32xf32> to vector<1x32xf32>
    %246 = vector.extract_strided_slice %224 {offsets = [13, 0], sizes = [3, 32], strides = [1, 1]} : vector<16x32xf32> to vector<3x32xf32>
    %cst_108 = arith.constant dense<0xFF800000> : vector<32xf32>
    %247 = vector.multi_reduction <maximumf>, %246, %cst_108 [0] : vector<3x32xf32> to vector<32xf32>
    %248 = vector.shape_cast %247 : vector<32xf32> to vector<1x32xf32>
    %249 = tpu.concatenate %227, %230, %233, %236, %239, %242, %245, %248 in 0 : vector<1x32xf32>, vector<1x32xf32>, vector<1x32xf32>, vector<1x32xf32>, vector<1x32xf32>, vector<1x32xf32>, vector<1x32xf32>, vector<1x32xf32> -> vector<8x32xf32>
    %250 = arith.truncf %249 : vector<8x32xf32> to vector<8x32xbf16>
    %c61 = arith.constant 61 : index
    %c0_109 = arith.constant 0 : index
    %251 = vector.load %arg13[%c61, %c0_109] : memref<100x32xbf16, #tpu.memory_space<vmem>>, vector<8x32xbf16>
    tpu.vector_store %arg13[%c61, %c0_109], %250 {strides = array<i32>} : memref<100x32xbf16, #tpu.memory_space<vmem>>, vector<8x32xbf16>,
    %252 = vector.extract_strided_slice %61 {offsets = [198, 0], sizes = [16, 32], strides = [1, 1]} : vector<286x32xf32> to vector<16x32xf32>
    %253 = vector.extract_strided_slice %61 {offsets = [216, 0], sizes = [16, 32], strides = [1, 1]} : vector<286x32xf32> to vector<16x32xf32>
    %254 = arith.maximumf %252, %253 : vector<16x32xf32>
    %255 = vector.extract_strided_slice %61 {offsets = [234, 0], sizes = [16, 32], strides = [1, 1]} : vector<286x32xf32> to vector<16x32xf32>
    %256 = arith.maximumf %254, %255 : vector<16x32xf32>
    %257 = vector.extract_strided_slice %256 {offsets = [0, 0], sizes = [2, 32], strides = [1, 1]} : vector<16x32xf32> to vector<2x32xf32>
    %cst_110 = arith.constant dense<0xFF800000> : vector<32xf32>
    %258 = vector.multi_reduction <maximumf>, %257, %cst_110 [0] : vector<2x32xf32> to vector<32xf32>
    %259 = vector.shape_cast %258 : vector<32xf32> to vector<1x32xf32>
    %260 = vector.extract_strided_slice %256 {offsets = [1, 0], sizes = [3, 32], strides = [1, 1]} : vector<16x32xf32> to vector<3x32xf32>
    %cst_111 = arith.constant dense<0xFF800000> : vector<32xf32>
    %261 = vector.multi_reduction <maximumf>, %260, %cst_111 [0] : vector<3x32xf32> to vector<32xf32>
    %262 = vector.shape_cast %261 : vector<32xf32> to vector<1x32xf32>
    %263 = vector.extract_strided_slice %256 {offsets = [3, 0], sizes = [3, 32], strides = [1, 1]} : vector<16x32xf32> to vector<3x32xf32>
    %cst_112 = arith.constant dense<0xFF800000> : vector<32xf32>
    %264 = vector.multi_reduction <maximumf>, %263, %cst_112 [0] : vector<3x32xf32> to vector<32xf32>
    %265 = vector.shape_cast %264 : vector<32xf32> to vector<1x32xf32>
    %266 = vector.extract_strided_slice %256 {offsets = [5, 0], sizes = [3, 32], strides = [1, 1]} : vector<16x32xf32> to vector<3x32xf32>
    %cst_113 = arith.constant dense<0xFF800000> : vector<32xf32>
    %267 = vector.multi_reduction <maximumf>, %266, %cst_113 [0] : vector<3x32xf32> to vector<32xf32>
    %268 = vector.shape_cast %267 : vector<32xf32> to vector<1x32xf32>
    %269 = vector.extract_strided_slice %256 {offsets = [7, 0], sizes = [3, 32], strides = [1, 1]} : vector<16x32xf32> to vector<3x32xf32>
    %cst_114 = arith.constant dense<0xFF800000> : vector<32xf32>
    %270 = vector.multi_reduction <maximumf>, %269, %cst_114 [0] : vector<3x32xf32> to vector<32xf32>
    %271 = vector.shape_cast %270 : vector<32xf32> to vector<1x32xf32>
    %272 = vector.extract_strided_slice %256 {offsets = [9, 0], sizes = [3, 32], strides = [1, 1]} : vector<16x32xf32> to vector<3x32xf32>
    %cst_115 = arith.constant dense<0xFF800000> : vector<32xf32>
    %273 = vector.multi_reduction <maximumf>, %272, %cst_115 [0] : vector<3x32xf32> to vector<32xf32>
    %274 = vector.shape_cast %273 : vector<32xf32> to vector<1x32xf32>
    %275 = vector.extract_strided_slice %256 {offsets = [11, 0], sizes = [3, 32], strides = [1, 1]} : vector<16x32xf32> to vector<3x32xf32>
    %cst_116 = arith.constant dense<0xFF800000> : vector<32xf32>
    %276 = vector.multi_reduction <maximumf>, %275, %cst_116 [0] : vector<3x32xf32> to vector<32xf32>
    %277 = vector.shape_cast %276 : vector<32xf32> to vector<1x32xf32>
    %278 = vector.extract_strided_slice %256 {offsets = [13, 0], sizes = [3, 32], strides = [1, 1]} : vector<16x32xf32> to vector<3x32xf32>
    %cst_117 = arith.constant dense<0xFF800000> : vector<32xf32>
    %279 = vector.multi_reduction <maximumf>, %278, %cst_117 [0] : vector<3x32xf32> to vector<32xf32>
    %280 = vector.shape_cast %279 : vector<32xf32> to vector<1x32xf32>
    %281 = tpu.concatenate %259, %262, %265, %268, %271, %274, %277, %280 in 0 : vector<1x32xf32>, vector<1x32xf32>, vector<1x32xf32>, vector<1x32xf32>, vector<1x32xf32>, vector<1x32xf32>, vector<1x32xf32>, vector<1x32xf32> -> vector<8x32xf32>
    %282 = arith.truncf %281 : vector<8x32xf32> to vector<8x32xbf16>
    %c71 = arith.constant 71 : index
    %c0_118 = arith.constant 0 : index
    %283 = vector.load %arg13[%c71, %c0_118] : memref<100x32xbf16, #tpu.memory_space<vmem>>, vector<8x32xbf16>
    tpu.vector_store %arg13[%c71, %c0_118], %282 {strides = array<i32>} : memref<100x32xbf16, #tpu.memory_space<vmem>>, vector<8x32xbf16>,
    %284 = vector.extract_strided_slice %61 {offsets = [234, 0], sizes = [16, 32], strides = [1, 1]} : vector<286x32xf32> to vector<16x32xf32>
    %285 = vector.extract_strided_slice %61 {offsets = [252, 0], sizes = [16, 32], strides = [1, 1]} : vector<286x32xf32> to vector<16x32xf32>
    %286 = arith.maximumf %284, %285 : vector<16x32xf32>
    %287 = vector.extract_strided_slice %61 {offsets = [270, 0], sizes = [16, 32], strides = [1, 1]} : vector<286x32xf32> to vector<16x32xf32>
    %288 = arith.maximumf %286, %287 : vector<16x32xf32>
    %289 = vector.extract_strided_slice %288 {offsets = [0, 0], sizes = [2, 32], strides = [1, 1]} : vector<16x32xf32> to vector<2x32xf32>
    %cst_119 = arith.constant dense<0xFF800000> : vector<32xf32>
    %290 = vector.multi_reduction <maximumf>, %289, %cst_119 [0] : vector<2x32xf32> to vector<32xf32>
    %291 = vector.shape_cast %290 : vector<32xf32> to vector<1x32xf32>
    %292 = vector.extract_strided_slice %288 {offsets = [1, 0], sizes = [3, 32], strides = [1, 1]} : vector<16x32xf32> to vector<3x32xf32>
    %cst_120 = arith.constant dense<0xFF800000> : vector<32xf32>
    %293 = vector.multi_reduction <maximumf>, %292, %cst_120 [0] : vector<3x32xf32> to vector<32xf32>
    %294 = vector.shape_cast %293 : vector<32xf32> to vector<1x32xf32>
    %295 = vector.extract_strided_slice %288 {offsets = [3, 0], sizes = [3, 32], strides = [1, 1]} : vector<16x32xf32> to vector<3x32xf32>
    %cst_121 = arith.constant dense<0xFF800000> : vector<32xf32>
    %296 = vector.multi_reduction <maximumf>, %295, %cst_121 [0] : vector<3x32xf32> to vector<32xf32>
    %297 = vector.shape_cast %296 : vector<32xf32> to vector<1x32xf32>
    %298 = vector.extract_strided_slice %288 {offsets = [5, 0], sizes = [3, 32], strides = [1, 1]} : vector<16x32xf32> to vector<3x32xf32>
    %cst_122 = arith.constant dense<0xFF800000> : vector<32xf32>
    %299 = vector.multi_reduction <maximumf>, %298, %cst_122 [0] : vector<3x32xf32> to vector<32xf32>
    %300 = vector.shape_cast %299 : vector<32xf32> to vector<1x32xf32>
    %301 = vector.extract_strided_slice %288 {offsets = [7, 0], sizes = [3, 32], strides = [1, 1]} : vector<16x32xf32> to vector<3x32xf32>
    %cst_123 = arith.constant dense<0xFF800000> : vector<32xf32>
    %302 = vector.multi_reduction <maximumf>, %301, %cst_123 [0] : vector<3x32xf32> to vector<32xf32>
    %303 = vector.shape_cast %302 : vector<32xf32> to vector<1x32xf32>
    %304 = vector.extract_strided_slice %288 {offsets = [9, 0], sizes = [3, 32], strides = [1, 1]} : vector<16x32xf32> to vector<3x32xf32>
    %cst_124 = arith.constant dense<0xFF800000> : vector<32xf32>
    %305 = vector.multi_reduction <maximumf>, %304, %cst_124 [0] : vector<3x32xf32> to vector<32xf32>
    %306 = vector.shape_cast %305 : vector<32xf32> to vector<1x32xf32>
    %307 = vector.extract_strided_slice %288 {offsets = [11, 0], sizes = [3, 32], strides = [1, 1]} : vector<16x32xf32> to vector<3x32xf32>
    %cst_125 = arith.constant dense<0xFF800000> : vector<32xf32>
    %308 = vector.multi_reduction <maximumf>, %307, %cst_125 [0] : vector<3x32xf32> to vector<32xf32>
    %309 = vector.shape_cast %308 : vector<32xf32> to vector<1x32xf32>
    %310 = vector.extract_strided_slice %288 {offsets = [13, 0], sizes = [3, 32], strides = [1, 1]} : vector<16x32xf32> to vector<3x32xf32>
    %cst_126 = arith.constant dense<0xFF800000> : vector<32xf32>
    %311 = vector.multi_reduction <maximumf>, %310, %cst_126 [0] : vector<3x32xf32> to vector<32xf32>
    %312 = vector.shape_cast %311 : vector<32xf32> to vector<1x32xf32>
    %313 = tpu.concatenate %291, %294, %297, %300, %303, %306, %309, %312 in 0 : vector<1x32xf32>, vector<1x32xf32>, vector<1x32xf32>, vector<1x32xf32>, vector<1x32xf32>, vector<1x32xf32>, vector<1x32xf32>, vector<1x32xf32> -> vector<8x32xf32>
    %314 = arith.truncf %313 : vector<8x32xf32> to vector<8x32xbf16>
    %c81 = arith.constant 81 : index
    %c0_127 = arith.constant 0 : index
    %315 = vector.load %arg13[%c81, %c0_127] : memref<100x32xbf16, #tpu.memory_space<vmem>>, vector<8x32xbf16>
    tpu.vector_store %arg13[%c81, %c0_127], %314 {strides = array<i32>} : memref<100x32xbf16, #tpu.memory_space<vmem>>, vector<8x32xbf16>,
    %c0_128 = arith.constant 0 : index
    %c0_129 = arith.constant 0 : index
    %316 = vector.load %arg13[%c0_128, %c0_129] : memref<100x32xbf16, #tpu.memory_space<vmem>>, vector<78x32xbf16>
    %c0_130 = arith.constant 0 : index
    %c0_131 = arith.constant 0 : index
    %c0_132 = arith.constant 0 : index
    %317 = vector.load %arg4[%c0_130, %c0_131, %c0_132] : memref<9x32x64xbf16, #tpu.memory_space<vmem>>, vector<1x32x64xbf16>
    %318 = vector.shape_cast %317 : vector<1x32x64xbf16> to vector<32x64xbf16>
    %cst_133 = arith.constant dense<0.000000e+00> : vector<78x64xf32>
    %319 = tpu.matmul %316, %318, %cst_133 {dimension_numbers = #tpu.dot_dimension_numbers<[1], [0], [0], [1], [0, 0, 1, 1], [], []>} : vector<78x32xbf16>, vector<32x64xbf16>, vector<78x64xf32> -> vector<78x64xf32>
    %c1_134 = arith.constant 1 : index
    %c0_135 = arith.constant 0 : index
    %320 = vector.load %arg13[%c1_134, %c0_135] : memref<100x32xbf16, #tpu.memory_space<vmem>>, vector<78x32xbf16>
    %c1_136 = arith.constant 1 : index
    %c0_137 = arith.constant 0 : index
    %c0_138 = arith.constant 0 : index
    %321 = vector.load %arg4[%c1_136, %c0_137, %c0_138] : memref<9x32x64xbf16, #tpu.memory_space<vmem>>, vector<1x32x64xbf16>
    %322 = vector.shape_cast %321 : vector<1x32x64xbf16> to vector<32x64xbf16>
    %cst_139 = arith.constant dense<0.000000e+00> : vector<78x64xf32>
    %323 = tpu.matmul %320, %322, %cst_139 {dimension_numbers = #tpu.dot_dimension_numbers<[1], [0], [0], [1], [0, 0, 1, 1], [], []>} : vector<78x32xbf16>, vector<32x64xbf16>, vector<78x64xf32> -> vector<78x64xf32>
    %324 = arith.addf %319, %323 : vector<78x64xf32>
    %c2_140 = arith.constant 2 : index
    %c0_141 = arith.constant 0 : index
    %325 = vector.load %arg13[%c2_140, %c0_141] : memref<100x32xbf16, #tpu.memory_space<vmem>>, vector<78x32xbf16>
    %c2_142 = arith.constant 2 : index
    %c0_143 = arith.constant 0 : index
    %c0_144 = arith.constant 0 : index
    %326 = vector.load %arg4[%c2_142, %c0_143, %c0_144] : memref<9x32x64xbf16, #tpu.memory_space<vmem>>, vector<1x32x64xbf16>
    %327 = vector.shape_cast %326 : vector<1x32x64xbf16> to vector<32x64xbf16>
    %cst_145 = arith.constant dense<0.000000e+00> : vector<78x64xf32>
    %328 = tpu.matmul %325, %327, %cst_145 {dimension_numbers = #tpu.dot_dimension_numbers<[1], [0], [0], [1], [0, 0, 1, 1], [], []>} : vector<78x32xbf16>, vector<32x64xbf16>, vector<78x64xf32> -> vector<78x64xf32>
    %329 = arith.addf %324, %328 : vector<78x64xf32>
    %c10 = arith.constant 10 : index
    %c0_146 = arith.constant 0 : index
    %330 = vector.load %arg13[%c10, %c0_146] : memref<100x32xbf16, #tpu.memory_space<vmem>>, vector<78x32xbf16>
    %c3_147 = arith.constant 3 : index
    %c0_148 = arith.constant 0 : index
    %c0_149 = arith.constant 0 : index
    %331 = vector.load %arg4[%c3_147, %c0_148, %c0_149] : memref<9x32x64xbf16, #tpu.memory_space<vmem>>, vector<1x32x64xbf16>
    %332 = vector.shape_cast %331 : vector<1x32x64xbf16> to vector<32x64xbf16>
    %cst_150 = arith.constant dense<0.000000e+00> : vector<78x64xf32>
    %333 = tpu.matmul %330, %332, %cst_150 {dimension_numbers = #tpu.dot_dimension_numbers<[1], [0], [0], [1], [0, 0, 1, 1], [], []>} : vector<78x32xbf16>, vector<32x64xbf16>, vector<78x64xf32> -> vector<78x64xf32>
    %334 = arith.addf %329, %333 : vector<78x64xf32>
    %c11_151 = arith.constant 11 : index
    %c0_152 = arith.constant 0 : index
    %335 = vector.load %arg13[%c11_151, %c0_152] : memref<100x32xbf16, #tpu.memory_space<vmem>>, vector<78x32xbf16>
    %c4_153 = arith.constant 4 : index
    %c0_154 = arith.constant 0 : index
    %c0_155 = arith.constant 0 : index
    %336 = vector.load %arg4[%c4_153, %c0_154, %c0_155] : memref<9x32x64xbf16, #tpu.memory_space<vmem>>, vector<1x32x64xbf16>
    %337 = vector.shape_cast %336 : vector<1x32x64xbf16> to vector<32x64xbf16>
    %cst_156 = arith.constant dense<0.000000e+00> : vector<78x64xf32>
    %338 = tpu.matmul %335, %337, %cst_156 {dimension_numbers = #tpu.dot_dimension_numbers<[1], [0], [0], [1], [0, 0, 1, 1], [], []>} : vector<78x32xbf16>, vector<32x64xbf16>, vector<78x64xf32> -> vector<78x64xf32>
    %339 = arith.addf %334, %338 : vector<78x64xf32>
    %c12 = arith.constant 12 : index
    %c0_157 = arith.constant 0 : index
    %340 = vector.load %arg13[%c12, %c0_157] : memref<100x32xbf16, #tpu.memory_space<vmem>>, vector<78x32xbf16>
    %c5_158 = arith.constant 5 : index
    %c0_159 = arith.constant 0 : index
    %c0_160 = arith.constant 0 : index
    %341 = vector.load %arg4[%c5_158, %c0_159, %c0_160] : memref<9x32x64xbf16, #tpu.memory_space<vmem>>, vector<1x32x64xbf16>
    %342 = vector.shape_cast %341 : vector<1x32x64xbf16> to vector<32x64xbf16>
    %cst_161 = arith.constant dense<0.000000e+00> : vector<78x64xf32>
    %343 = tpu.matmul %340, %342, %cst_161 {dimension_numbers = #tpu.dot_dimension_numbers<[1], [0], [0], [1], [0, 0, 1, 1], [], []>} : vector<78x32xbf16>, vector<32x64xbf16>, vector<78x64xf32> -> vector<78x64xf32>
    %344 = arith.addf %339, %343 : vector<78x64xf32>
    %c20_162 = arith.constant 20 : index
    %c0_163 = arith.constant 0 : index
    %345 = vector.load %arg13[%c20_162, %c0_163] : memref<100x32xbf16, #tpu.memory_space<vmem>>, vector<78x32xbf16>
    %c6_164 = arith.constant 6 : index
    %c0_165 = arith.constant 0 : index
    %c0_166 = arith.constant 0 : index
    %346 = vector.load %arg4[%c6_164, %c0_165, %c0_166] : memref<9x32x64xbf16, #tpu.memory_space<vmem>>, vector<1x32x64xbf16>
    %347 = vector.shape_cast %346 : vector<1x32x64xbf16> to vector<32x64xbf16>
    %cst_167 = arith.constant dense<0.000000e+00> : vector<78x64xf32>
    %348 = tpu.matmul %345, %347, %cst_167 {dimension_numbers = #tpu.dot_dimension_numbers<[1], [0], [0], [1], [0, 0, 1, 1], [], []>} : vector<78x32xbf16>, vector<32x64xbf16>, vector<78x64xf32> -> vector<78x64xf32>
    %349 = arith.addf %344, %348 : vector<78x64xf32>
    %c21_168 = arith.constant 21 : index
    %c0_169 = arith.constant 0 : index
    %350 = vector.load %arg13[%c21_168, %c0_169] : memref<100x32xbf16, #tpu.memory_space<vmem>>, vector<78x32xbf16>
    %c7_170 = arith.constant 7 : index
    %c0_171 = arith.constant 0 : index
    %c0_172 = arith.constant 0 : index
    %351 = vector.load %arg4[%c7_170, %c0_171, %c0_172] : memref<9x32x64xbf16, #tpu.memory_space<vmem>>, vector<1x32x64xbf16>
    %352 = vector.shape_cast %351 : vector<1x32x64xbf16> to vector<32x64xbf16>
    %cst_173 = arith.constant dense<0.000000e+00> : vector<78x64xf32>
    %353 = tpu.matmul %350, %352, %cst_173 {dimension_numbers = #tpu.dot_dimension_numbers<[1], [0], [0], [1], [0, 0, 1, 1], [], []>} : vector<78x32xbf16>, vector<32x64xbf16>, vector<78x64xf32> -> vector<78x64xf32>
    %354 = arith.addf %349, %353 : vector<78x64xf32>
    %c22 = arith.constant 22 : index
    %c0_174 = arith.constant 0 : index
    %355 = vector.load %arg13[%c22, %c0_174] : memref<100x32xbf16, #tpu.memory_space<vmem>>, vector<78x32xbf16>
    %c8_175 = arith.constant 8 : index
    %c0_176 = arith.constant 0 : index
    %c0_177 = arith.constant 0 : index
    %356 = vector.load %arg4[%c8_175, %c0_176, %c0_177] : memref<9x32x64xbf16, #tpu.memory_space<vmem>>, vector<1x32x64xbf16>
    %357 = vector.shape_cast %356 : vector<1x32x64xbf16> to vector<32x64xbf16>
    %cst_178 = arith.constant dense<0.000000e+00> : vector<78x64xf32>
    %358 = tpu.matmul %355, %357, %cst_178 {dimension_numbers = #tpu.dot_dimension_numbers<[1], [0], [0], [1], [0, 0, 1, 1], [], []>} : vector<78x32xbf16>, vector<32x64xbf16>, vector<78x64xf32> -> vector<78x64xf32>
    %359 = arith.addf %354, %358 : vector<78x64xf32>
    %c0_179 = arith.constant 0 : index
    %c0_180 = arith.constant 0 : index
    %360 = vector.load %arg5[%c0_179, %c0_180] : memref<1x64xf32, #tpu.memory_space<vmem>>, vector<1x64xf32>
    %361 = vector.broadcast %360 : vector<1x64xf32> to vector<78x64xf32>
    %362 = arith.addf %359, %361 : vector<78x64xf32>
    %cst_181 = arith.constant 0.000000e+00 : f32
    %363 = vector.broadcast %cst_181 : f32 to vector<78x64xf32>
    %364 = arith.maximumf %362, %363 : vector<78x64xf32>
    %365 = vector.extract_strided_slice %364 {offsets = [0, 0], sizes = [8, 64], strides = [1, 1]} : vector<78x64xf32> to vector<8x64xf32>
    %366 = vector.extract_strided_slice %364 {offsets = [10, 0], sizes = [8, 64], strides = [1, 1]} : vector<78x64xf32> to vector<8x64xf32>
    %367 = arith.maximumf %365, %366 : vector<8x64xf32>
    %368 = vector.extract_strided_slice %367 {offsets = [0, 0], sizes = [2, 64], strides = [1, 1]} : vector<8x64xf32> to vector<2x64xf32>
    %cst_182 = arith.constant dense<0xFF800000> : vector<64xf32>
    %369 = vector.multi_reduction <maximumf>, %368, %cst_182 [0] : vector<2x64xf32> to vector<64xf32>
    %370 = vector.shape_cast %369 : vector<64xf32> to vector<1x64xf32>
    %371 = vector.extract_strided_slice %367 {offsets = [1, 0], sizes = [3, 64], strides = [1, 1]} : vector<8x64xf32> to vector<3x64xf32>
    %cst_183 = arith.constant dense<0xFF800000> : vector<64xf32>
    %372 = vector.multi_reduction <maximumf>, %371, %cst_183 [0] : vector<3x64xf32> to vector<64xf32>
    %373 = vector.shape_cast %372 : vector<64xf32> to vector<1x64xf32>
    %374 = vector.extract_strided_slice %367 {offsets = [3, 0], sizes = [3, 64], strides = [1, 1]} : vector<8x64xf32> to vector<3x64xf32>
    %cst_184 = arith.constant dense<0xFF800000> : vector<64xf32>
    %375 = vector.multi_reduction <maximumf>, %374, %cst_184 [0] : vector<3x64xf32> to vector<64xf32>
    %376 = vector.shape_cast %375 : vector<64xf32> to vector<1x64xf32>
    %377 = vector.extract_strided_slice %367 {offsets = [5, 0], sizes = [3, 64], strides = [1, 1]} : vector<8x64xf32> to vector<3x64xf32>
    %cst_185 = arith.constant dense<0xFF800000> : vector<64xf32>
    %378 = vector.multi_reduction <maximumf>, %377, %cst_185 [0] : vector<3x64xf32> to vector<64xf32>
    %379 = vector.shape_cast %378 : vector<64xf32> to vector<1x64xf32>
    %380 = tpu.concatenate %370, %373, %376, %379 in 0 : vector<1x64xf32>, vector<1x64xf32>, vector<1x64xf32>, vector<1x64xf32> -> vector<4x64xf32>
    %381 = arith.truncf %380 : vector<4x64xf32> to vector<4x64xbf16>
    %c7_186 = arith.constant 7 : index
    %c0_187 = arith.constant 0 : index
    %382 = vector.load %arg14[%c7_186, %c0_187] : memref<36x64xbf16, #tpu.memory_space<vmem>>, vector<4x64xbf16>
    tpu.vector_store %arg14[%c7_186, %c0_187], %381 {strides = array<i32>} : memref<36x64xbf16, #tpu.memory_space<vmem>>, vector<4x64xbf16>,
    %383 = vector.extract_strided_slice %364 {offsets = [10, 0], sizes = [8, 64], strides = [1, 1]} : vector<78x64xf32> to vector<8x64xf32>
    %384 = vector.extract_strided_slice %364 {offsets = [20, 0], sizes = [8, 64], strides = [1, 1]} : vector<78x64xf32> to vector<8x64xf32>
    %385 = arith.maximumf %383, %384 : vector<8x64xf32>
    %386 = vector.extract_strided_slice %364 {offsets = [30, 0], sizes = [8, 64], strides = [1, 1]} : vector<78x64xf32> to vector<8x64xf32>
    %387 = arith.maximumf %385, %386 : vector<8x64xf32>
    %388 = vector.extract_strided_slice %387 {offsets = [0, 0], sizes = [2, 64], strides = [1, 1]} : vector<8x64xf32> to vector<2x64xf32>
    %cst_188 = arith.constant dense<0xFF800000> : vector<64xf32>
    %389 = vector.multi_reduction <maximumf>, %388, %cst_188 [0] : vector<2x64xf32> to vector<64xf32>
    %390 = vector.shape_cast %389 : vector<64xf32> to vector<1x64xf32>
    %391 = vector.extract_strided_slice %387 {offsets = [1, 0], sizes = [3, 64], strides = [1, 1]} : vector<8x64xf32> to vector<3x64xf32>
    %cst_189 = arith.constant dense<0xFF800000> : vector<64xf32>
    %392 = vector.multi_reduction <maximumf>, %391, %cst_189 [0] : vector<3x64xf32> to vector<64xf32>
    %393 = vector.shape_cast %392 : vector<64xf32> to vector<1x64xf32>
    %394 = vector.extract_strided_slice %387 {offsets = [3, 0], sizes = [3, 64], strides = [1, 1]} : vector<8x64xf32> to vector<3x64xf32>
    %cst_190 = arith.constant dense<0xFF800000> : vector<64xf32>
    %395 = vector.multi_reduction <maximumf>, %394, %cst_190 [0] : vector<3x64xf32> to vector<64xf32>
    %396 = vector.shape_cast %395 : vector<64xf32> to vector<1x64xf32>
    %397 = vector.extract_strided_slice %387 {offsets = [5, 0], sizes = [3, 64], strides = [1, 1]} : vector<8x64xf32> to vector<3x64xf32>
    %cst_191 = arith.constant dense<0xFF800000> : vector<64xf32>
    %398 = vector.multi_reduction <maximumf>, %397, %cst_191 [0] : vector<3x64xf32> to vector<64xf32>
    %399 = vector.shape_cast %398 : vector<64xf32> to vector<1x64xf32>
    %400 = tpu.concatenate %390, %393, %396, %399 in 0 : vector<1x64xf32>, vector<1x64xf32>, vector<1x64xf32>, vector<1x64xf32> -> vector<4x64xf32>
    %401 = arith.truncf %400 : vector<4x64xf32> to vector<4x64xbf16>
    %c13 = arith.constant 13 : index
    %c0_192 = arith.constant 0 : index
    %402 = vector.load %arg14[%c13, %c0_192] : memref<36x64xbf16, #tpu.memory_space<vmem>>, vector<4x64xbf16>
    tpu.vector_store %arg14[%c13, %c0_192], %401 {strides = array<i32>} : memref<36x64xbf16, #tpu.memory_space<vmem>>, vector<4x64xbf16>,
    %403 = vector.extract_strided_slice %364 {offsets = [30, 0], sizes = [8, 64], strides = [1, 1]} : vector<78x64xf32> to vector<8x64xf32>
    %404 = vector.extract_strided_slice %364 {offsets = [40, 0], sizes = [8, 64], strides = [1, 1]} : vector<78x64xf32> to vector<8x64xf32>
    %405 = arith.maximumf %403, %404 : vector<8x64xf32>
    %406 = vector.extract_strided_slice %364 {offsets = [50, 0], sizes = [8, 64], strides = [1, 1]} : vector<78x64xf32> to vector<8x64xf32>
    %407 = arith.maximumf %405, %406 : vector<8x64xf32>
    %408 = vector.extract_strided_slice %407 {offsets = [0, 0], sizes = [2, 64], strides = [1, 1]} : vector<8x64xf32> to vector<2x64xf32>
    %cst_193 = arith.constant dense<0xFF800000> : vector<64xf32>
    %409 = vector.multi_reduction <maximumf>, %408, %cst_193 [0] : vector<2x64xf32> to vector<64xf32>
    %410 = vector.shape_cast %409 : vector<64xf32> to vector<1x64xf32>
    %411 = vector.extract_strided_slice %407 {offsets = [1, 0], sizes = [3, 64], strides = [1, 1]} : vector<8x64xf32> to vector<3x64xf32>
    %cst_194 = arith.constant dense<0xFF800000> : vector<64xf32>
    %412 = vector.multi_reduction <maximumf>, %411, %cst_194 [0] : vector<3x64xf32> to vector<64xf32>
    %413 = vector.shape_cast %412 : vector<64xf32> to vector<1x64xf32>
    %414 = vector.extract_strided_slice %407 {offsets = [3, 0], sizes = [3, 64], strides = [1, 1]} : vector<8x64xf32> to vector<3x64xf32>
    %cst_195 = arith.constant dense<0xFF800000> : vector<64xf32>
    %415 = vector.multi_reduction <maximumf>, %414, %cst_195 [0] : vector<3x64xf32> to vector<64xf32>
    %416 = vector.shape_cast %415 : vector<64xf32> to vector<1x64xf32>
    %417 = vector.extract_strided_slice %407 {offsets = [5, 0], sizes = [3, 64], strides = [1, 1]} : vector<8x64xf32> to vector<3x64xf32>
    %cst_196 = arith.constant dense<0xFF800000> : vector<64xf32>
    %418 = vector.multi_reduction <maximumf>, %417, %cst_196 [0] : vector<3x64xf32> to vector<64xf32>
    %419 = vector.shape_cast %418 : vector<64xf32> to vector<1x64xf32>
    %420 = tpu.concatenate %410, %413, %416, %419 in 0 : vector<1x64xf32>, vector<1x64xf32>, vector<1x64xf32>, vector<1x64xf32> -> vector<4x64xf32>
    %421 = arith.truncf %420 : vector<4x64xf32> to vector<4x64xbf16>
    %c19_197 = arith.constant 19 : index
    %c0_198 = arith.constant 0 : index
    %422 = vector.load %arg14[%c19_197, %c0_198] : memref<36x64xbf16, #tpu.memory_space<vmem>>, vector<4x64xbf16>
    tpu.vector_store %arg14[%c19_197, %c0_198], %421 {strides = array<i32>} : memref<36x64xbf16, #tpu.memory_space<vmem>>, vector<4x64xbf16>,
    %423 = vector.extract_strided_slice %364 {offsets = [50, 0], sizes = [8, 64], strides = [1, 1]} : vector<78x64xf32> to vector<8x64xf32>
    %424 = vector.extract_strided_slice %364 {offsets = [60, 0], sizes = [8, 64], strides = [1, 1]} : vector<78x64xf32> to vector<8x64xf32>
    %425 = arith.maximumf %423, %424 : vector<8x64xf32>
    %426 = vector.extract_strided_slice %364 {offsets = [70, 0], sizes = [8, 64], strides = [1, 1]} : vector<78x64xf32> to vector<8x64xf32>
    %427 = arith.maximumf %425, %426 : vector<8x64xf32>
    %428 = vector.extract_strided_slice %427 {offsets = [0, 0], sizes = [2, 64], strides = [1, 1]} : vector<8x64xf32> to vector<2x64xf32>
    %cst_199 = arith.constant dense<0xFF800000> : vector<64xf32>
    %429 = vector.multi_reduction <maximumf>, %428, %cst_199 [0] : vector<2x64xf32> to vector<64xf32>
    %430 = vector.shape_cast %429 : vector<64xf32> to vector<1x64xf32>
    %431 = vector.extract_strided_slice %427 {offsets = [1, 0], sizes = [3, 64], strides = [1, 1]} : vector<8x64xf32> to vector<3x64xf32>
    %cst_200 = arith.constant dense<0xFF800000> : vector<64xf32>
    %432 = vector.multi_reduction <maximumf>, %431, %cst_200 [0] : vector<3x64xf32> to vector<64xf32>
    %433 = vector.shape_cast %432 : vector<64xf32> to vector<1x64xf32>
    %434 = vector.extract_strided_slice %427 {offsets = [3, 0], sizes = [3, 64], strides = [1, 1]} : vector<8x64xf32> to vector<3x64xf32>
    %cst_201 = arith.constant dense<0xFF800000> : vector<64xf32>
    %435 = vector.multi_reduction <maximumf>, %434, %cst_201 [0] : vector<3x64xf32> to vector<64xf32>
    %436 = vector.shape_cast %435 : vector<64xf32> to vector<1x64xf32>
    %437 = vector.extract_strided_slice %427 {offsets = [5, 0], sizes = [3, 64], strides = [1, 1]} : vector<8x64xf32> to vector<3x64xf32>
    %cst_202 = arith.constant dense<0xFF800000> : vector<64xf32>
    %438 = vector.multi_reduction <maximumf>, %437, %cst_202 [0] : vector<3x64xf32> to vector<64xf32>
    %439 = vector.shape_cast %438 : vector<64xf32> to vector<1x64xf32>
    %440 = tpu.concatenate %430, %433, %436, %439 in 0 : vector<1x64xf32>, vector<1x64xf32>, vector<1x64xf32>, vector<1x64xf32> -> vector<4x64xf32>
    %441 = arith.truncf %440 : vector<4x64xf32> to vector<4x64xbf16>
    %c25 = arith.constant 25 : index
    %c0_203 = arith.constant 0 : index
    %442 = vector.load %arg14[%c25, %c0_203] : memref<36x64xbf16, #tpu.memory_space<vmem>>, vector<4x64xbf16>
    tpu.vector_store %arg14[%c25, %c0_203], %441 {strides = array<i32>} : memref<36x64xbf16, #tpu.memory_space<vmem>>, vector<4x64xbf16>,
    %c0_204 = arith.constant 0 : index
    %c0_205 = arith.constant 0 : index
    %443 = vector.load %arg14[%c0_204, %c0_205] : memref<36x64xbf16, #tpu.memory_space<vmem>>, vector<22x64xbf16>
    %c0_206 = arith.constant 0 : index
    %c0_207 = arith.constant 0 : index
    %c0_208 = arith.constant 0 : index
    %444 = vector.load %arg6[%c0_206, %c0_207, %c0_208] : memref<9x64x128xbf16, #tpu.memory_space<vmem>>, vector<1x64x128xbf16>
    %445 = vector.shape_cast %444 : vector<1x64x128xbf16> to vector<64x128xbf16>
    %cst_209 = arith.constant dense<0.000000e+00> : vector<22x128xf32>
    %446 = tpu.matmul %443, %445, %cst_209 {dimension_numbers = #tpu.dot_dimension_numbers<[1], [0], [0], [1], [0, 0, 1, 1], [], []>} : vector<22x64xbf16>, vector<64x128xbf16>, vector<22x128xf32> -> vector<22x128xf32>
    %c1_210 = arith.constant 1 : index
    %c0_211 = arith.constant 0 : index
    %447 = vector.load %arg14[%c1_210, %c0_211] : memref<36x64xbf16, #tpu.memory_space<vmem>>, vector<22x64xbf16>
    %c1_212 = arith.constant 1 : index
    %c0_213 = arith.constant 0 : index
    %c0_214 = arith.constant 0 : index
    %448 = vector.load %arg6[%c1_212, %c0_213, %c0_214] : memref<9x64x128xbf16, #tpu.memory_space<vmem>>, vector<1x64x128xbf16>
    %449 = vector.shape_cast %448 : vector<1x64x128xbf16> to vector<64x128xbf16>
    %cst_215 = arith.constant dense<0.000000e+00> : vector<22x128xf32>
    %450 = tpu.matmul %447, %449, %cst_215 {dimension_numbers = #tpu.dot_dimension_numbers<[1], [0], [0], [1], [0, 0, 1, 1], [], []>} : vector<22x64xbf16>, vector<64x128xbf16>, vector<22x128xf32> -> vector<22x128xf32>
    %451 = arith.addf %446, %450 : vector<22x128xf32>
    %c2_216 = arith.constant 2 : index
    %c0_217 = arith.constant 0 : index
    %452 = vector.load %arg14[%c2_216, %c0_217] : memref<36x64xbf16, #tpu.memory_space<vmem>>, vector<22x64xbf16>
    %c2_218 = arith.constant 2 : index
    %c0_219 = arith.constant 0 : index
    %c0_220 = arith.constant 0 : index
    %453 = vector.load %arg6[%c2_218, %c0_219, %c0_220] : memref<9x64x128xbf16, #tpu.memory_space<vmem>>, vector<1x64x128xbf16>
    %454 = vector.shape_cast %453 : vector<1x64x128xbf16> to vector<64x128xbf16>
    %cst_221 = arith.constant dense<0.000000e+00> : vector<22x128xf32>
    %455 = tpu.matmul %452, %454, %cst_221 {dimension_numbers = #tpu.dot_dimension_numbers<[1], [0], [0], [1], [0, 0, 1, 1], [], []>} : vector<22x64xbf16>, vector<64x128xbf16>, vector<22x128xf32> -> vector<22x128xf32>
    %456 = arith.addf %451, %455 : vector<22x128xf32>
    %c6_222 = arith.constant 6 : index
    %c0_223 = arith.constant 0 : index
    %457 = vector.load %arg14[%c6_222, %c0_223] : memref<36x64xbf16, #tpu.memory_space<vmem>>, vector<22x64xbf16>
    %c3_224 = arith.constant 3 : index
    %c0_225 = arith.constant 0 : index
    %c0_226 = arith.constant 0 : index
    %458 = vector.load %arg6[%c3_224, %c0_225, %c0_226] : memref<9x64x128xbf16, #tpu.memory_space<vmem>>, vector<1x64x128xbf16>
    %459 = vector.shape_cast %458 : vector<1x64x128xbf16> to vector<64x128xbf16>
    %cst_227 = arith.constant dense<0.000000e+00> : vector<22x128xf32>
    %460 = tpu.matmul %457, %459, %cst_227 {dimension_numbers = #tpu.dot_dimension_numbers<[1], [0], [0], [1], [0, 0, 1, 1], [], []>} : vector<22x64xbf16>, vector<64x128xbf16>, vector<22x128xf32> -> vector<22x128xf32>
    %461 = arith.addf %456, %460 : vector<22x128xf32>
    %c7_228 = arith.constant 7 : index
    %c0_229 = arith.constant 0 : index
    %462 = vector.load %arg14[%c7_228, %c0_229] : memref<36x64xbf16, #tpu.memory_space<vmem>>, vector<22x64xbf16>
    %c4_230 = arith.constant 4 : index
    %c0_231 = arith.constant 0 : index
    %c0_232 = arith.constant 0 : index
    %463 = vector.load %arg6[%c4_230, %c0_231, %c0_232] : memref<9x64x128xbf16, #tpu.memory_space<vmem>>, vector<1x64x128xbf16>
    %464 = vector.shape_cast %463 : vector<1x64x128xbf16> to vector<64x128xbf16>
    %cst_233 = arith.constant dense<0.000000e+00> : vector<22x128xf32>
    %465 = tpu.matmul %462, %464, %cst_233 {dimension_numbers = #tpu.dot_dimension_numbers<[1], [0], [0], [1], [0, 0, 1, 1], [], []>} : vector<22x64xbf16>, vector<64x128xbf16>, vector<22x128xf32> -> vector<22x128xf32>
    %466 = arith.addf %461, %465 : vector<22x128xf32>
    %c8_234 = arith.constant 8 : index
    %c0_235 = arith.constant 0 : index
    %467 = vector.load %arg14[%c8_234, %c0_235] : memref<36x64xbf16, #tpu.memory_space<vmem>>, vector<22x64xbf16>
    %c5_236 = arith.constant 5 : index
    %c0_237 = arith.constant 0 : index
    %c0_238 = arith.constant 0 : index
    %468 = vector.load %arg6[%c5_236, %c0_237, %c0_238] : memref<9x64x128xbf16, #tpu.memory_space<vmem>>, vector<1x64x128xbf16>
    %469 = vector.shape_cast %468 : vector<1x64x128xbf16> to vector<64x128xbf16>
    %cst_239 = arith.constant dense<0.000000e+00> : vector<22x128xf32>
    %470 = tpu.matmul %467, %469, %cst_239 {dimension_numbers = #tpu.dot_dimension_numbers<[1], [0], [0], [1], [0, 0, 1, 1], [], []>} : vector<22x64xbf16>, vector<64x128xbf16>, vector<22x128xf32> -> vector<22x128xf32>
    %471 = arith.addf %466, %470 : vector<22x128xf32>
    %c12_240 = arith.constant 12 : index
    %c0_241 = arith.constant 0 : index
    %472 = vector.load %arg14[%c12_240, %c0_241] : memref<36x64xbf16, #tpu.memory_space<vmem>>, vector<22x64xbf16>
    %c6_242 = arith.constant 6 : index
    %c0_243 = arith.constant 0 : index
    %c0_244 = arith.constant 0 : index
    %473 = vector.load %arg6[%c6_242, %c0_243, %c0_244] : memref<9x64x128xbf16, #tpu.memory_space<vmem>>, vector<1x64x128xbf16>
    %474 = vector.shape_cast %473 : vector<1x64x128xbf16> to vector<64x128xbf16>
    %cst_245 = arith.constant dense<0.000000e+00> : vector<22x128xf32>
    %475 = tpu.matmul %472, %474, %cst_245 {dimension_numbers = #tpu.dot_dimension_numbers<[1], [0], [0], [1], [0, 0, 1, 1], [], []>} : vector<22x64xbf16>, vector<64x128xbf16>, vector<22x128xf32> -> vector<22x128xf32>
    %476 = arith.addf %471, %475 : vector<22x128xf32>
    %c13_246 = arith.constant 13 : index
    %c0_247 = arith.constant 0 : index
    %477 = vector.load %arg14[%c13_246, %c0_247] : memref<36x64xbf16, #tpu.memory_space<vmem>>, vector<22x64xbf16>
    %c7_248 = arith.constant 7 : index
    %c0_249 = arith.constant 0 : index
    %c0_250 = arith.constant 0 : index
    %478 = vector.load %arg6[%c7_248, %c0_249, %c0_250] : memref<9x64x128xbf16, #tpu.memory_space<vmem>>, vector<1x64x128xbf16>
    %479 = vector.shape_cast %478 : vector<1x64x128xbf16> to vector<64x128xbf16>
    %cst_251 = arith.constant dense<0.000000e+00> : vector<22x128xf32>
    %480 = tpu.matmul %477, %479, %cst_251 {dimension_numbers = #tpu.dot_dimension_numbers<[1], [0], [0], [1], [0, 0, 1, 1], [], []>} : vector<22x64xbf16>, vector<64x128xbf16>, vector<22x128xf32> -> vector<22x128xf32>
    %481 = arith.addf %476, %480 : vector<22x128xf32>
    %c14 = arith.constant 14 : index
    %c0_252 = arith.constant 0 : index
    %482 = vector.load %arg14[%c14, %c0_252] : memref<36x64xbf16, #tpu.memory_space<vmem>>, vector<22x64xbf16>
    %c8_253 = arith.constant 8 : index
    %c0_254 = arith.constant 0 : index
    %c0_255 = arith.constant 0 : index
    %483 = vector.load %arg6[%c8_253, %c0_254, %c0_255] : memref<9x64x128xbf16, #tpu.memory_space<vmem>>, vector<1x64x128xbf16>
    %484 = vector.shape_cast %483 : vector<1x64x128xbf16> to vector<64x128xbf16>
    %cst_256 = arith.constant dense<0.000000e+00> : vector<22x128xf32>
    %485 = tpu.matmul %482, %484, %cst_256 {dimension_numbers = #tpu.dot_dimension_numbers<[1], [0], [0], [1], [0, 0, 1, 1], [], []>} : vector<22x64xbf16>, vector<64x128xbf16>, vector<22x128xf32> -> vector<22x128xf32>
    %486 = arith.addf %481, %485 : vector<22x128xf32>
    %c0_257 = arith.constant 0 : index
    %c0_258 = arith.constant 0 : index
    %487 = vector.load %arg7[%c0_257, %c0_258] : memref<1x128xf32, #tpu.memory_space<vmem>>, vector<1x128xf32>
    %488 = vector.broadcast %487 : vector<1x128xf32> to vector<22x128xf32>
    %489 = arith.addf %486, %488 : vector<22x128xf32>
    %cst_259 = arith.constant 0.000000e+00 : f32
    %490 = vector.broadcast %cst_259 : f32 to vector<22x128xf32>
    %491 = arith.maximumf %489, %490 : vector<22x128xf32>
    %492 = vector.extract_strided_slice %491 {offsets = [0, 0], sizes = [4, 128], strides = [1, 1]} : vector<22x128xf32> to vector<4x128xf32>
    %493 = vector.extract_strided_slice %491 {offsets = [6, 0], sizes = [4, 128], strides = [1, 1]} : vector<22x128xf32> to vector<4x128xf32>
    %494 = arith.maximumf %492, %493 : vector<4x128xf32>
    %495 = vector.extract_strided_slice %494 {offsets = [0, 0], sizes = [2, 128], strides = [1, 1]} : vector<4x128xf32> to vector<2x128xf32>
    %cst_260 = arith.constant dense<0xFF800000> : vector<128xf32>
    %496 = vector.multi_reduction <maximumf>, %495, %cst_260 [0] : vector<2x128xf32> to vector<128xf32>
    %497 = vector.shape_cast %496 : vector<128xf32> to vector<1x128xf32>
    %498 = vector.extract_strided_slice %494 {offsets = [1, 0], sizes = [3, 128], strides = [1, 1]} : vector<4x128xf32> to vector<3x128xf32>
    %cst_261 = arith.constant dense<0xFF800000> : vector<128xf32>
    %499 = vector.multi_reduction <maximumf>, %498, %cst_261 [0] : vector<3x128xf32> to vector<128xf32>
    %500 = vector.shape_cast %499 : vector<128xf32> to vector<1x128xf32>
    %501 = tpu.concatenate %497, %500 in 0 : vector<1x128xf32>, vector<1x128xf32> -> vector<2x128xf32>
    %502 = arith.truncf %501 : vector<2x128xf32> to vector<2x128xbf16>
    %c0_262 = arith.constant 0 : index
    %c0_263 = arith.constant 0 : index
    %503 = vector.load %arg8[%c0_262, %c0_263] : memref<128x64xbf16, #tpu.memory_space<vmem>>, vector<128x64xbf16>
    %cst_264 = arith.constant dense<0.000000e+00> : vector<2x64xf32>
    %504 = tpu.matmul %502, %503, %cst_264 {dimension_numbers = #tpu.dot_dimension_numbers<[1], [0], [0], [1], [0, 0, 1, 1], [], []>} : vector<2x128xbf16>, vector<128x64xbf16>, vector<2x64xf32> -> vector<2x64xf32>
    %c0_265 = arith.constant 0 : index
    %c0_266 = arith.constant 0 : index
    %505 = vector.load %arg9[%c0_265, %c0_266] : memref<1x64xf32, #tpu.memory_space<vmem>>, vector<1x64xf32>
    %506 = vector.broadcast %505 : vector<1x64xf32> to vector<2x64xf32>
    %507 = arith.addf %504, %506 : vector<2x64xf32>
    %cst_267 = arith.constant 0.000000e+00 : f32
    %508 = vector.broadcast %cst_267 : f32 to vector<2x64xf32>
    %509 = arith.maximumf %507, %508 : vector<2x64xf32>
    %cst_268 = arith.constant dense<0.000000e+00> : vector<64xf32>
    %510 = vector.multi_reduction <add>, %509, %cst_268 [0] : vector<2x64xf32> to vector<64xf32>
    %511 = vector.shape_cast %510 : vector<64xf32> to vector<1x64xf32>
    %512 = vector.extract_strided_slice %491 {offsets = [6, 0], sizes = [4, 128], strides = [1, 1]} : vector<22x128xf32> to vector<4x128xf32>
    %513 = vector.extract_strided_slice %491 {offsets = [12, 0], sizes = [4, 128], strides = [1, 1]} : vector<22x128xf32> to vector<4x128xf32>
    %514 = arith.maximumf %512, %513 : vector<4x128xf32>
    %515 = vector.extract_strided_slice %491 {offsets = [18, 0], sizes = [4, 128], strides = [1, 1]} : vector<22x128xf32> to vector<4x128xf32>
    %516 = arith.maximumf %514, %515 : vector<4x128xf32>
    %517 = vector.extract_strided_slice %516 {offsets = [0, 0], sizes = [2, 128], strides = [1, 1]} : vector<4x128xf32> to vector<2x128xf32>
    %cst_269 = arith.constant dense<0xFF800000> : vector<128xf32>
    %518 = vector.multi_reduction <maximumf>, %517, %cst_269 [0] : vector<2x128xf32> to vector<128xf32>
    %519 = vector.shape_cast %518 : vector<128xf32> to vector<1x128xf32>
    %520 = vector.extract_strided_slice %516 {offsets = [1, 0], sizes = [3, 128], strides = [1, 1]} : vector<4x128xf32> to vector<3x128xf32>
    %cst_270 = arith.constant dense<0xFF800000> : vector<128xf32>
    %521 = vector.multi_reduction <maximumf>, %520, %cst_270 [0] : vector<3x128xf32> to vector<128xf32>
    %522 = vector.shape_cast %521 : vector<128xf32> to vector<1x128xf32>
    %523 = tpu.concatenate %519, %522 in 0 : vector<1x128xf32>, vector<1x128xf32> -> vector<2x128xf32>
    %524 = arith.truncf %523 : vector<2x128xf32> to vector<2x128xbf16>
    %c0_271 = arith.constant 0 : index
    %c0_272 = arith.constant 0 : index
    %525 = vector.load %arg8[%c0_271, %c0_272] : memref<128x64xbf16, #tpu.memory_space<vmem>>, vector<128x64xbf16>
    %cst_273 = arith.constant dense<0.000000e+00> : vector<2x64xf32>
    %526 = tpu.matmul %524, %525, %cst_273 {dimension_numbers = #tpu.dot_dimension_numbers<[1], [0], [0], [1], [0, 0, 1, 1], [], []>} : vector<2x128xbf16>, vector<128x64xbf16>, vector<2x64xf32> -> vector<2x64xf32>
    %c0_274 = arith.constant 0 : index
    %c0_275 = arith.constant 0 : index
    %527 = vector.load %arg9[%c0_274, %c0_275] : memref<1x64xf32, #tpu.memory_space<vmem>>, vector<1x64xf32>
    %528 = vector.broadcast %527 : vector<1x64xf32> to vector<2x64xf32>
    %529 = arith.addf %526, %528 : vector<2x64xf32>
    %cst_276 = arith.constant 0.000000e+00 : f32
    %530 = vector.broadcast %cst_276 : f32 to vector<2x64xf32>
    %531 = arith.maximumf %529, %530 : vector<2x64xf32>
    %cst_277 = arith.constant dense<0.000000e+00> : vector<64xf32>
    %532 = vector.multi_reduction <add>, %531, %cst_277 [0] : vector<2x64xf32> to vector<64xf32>
    %533 = vector.shape_cast %532 : vector<64xf32> to vector<1x64xf32>
    %534 = arith.addf %511, %533 : vector<1x64xf32>
    %cst_278 = arith.constant 2.500000e-01 : f32
    %535 = vector.broadcast %cst_278 : f32 to vector<1x64xf32>
    %536 = arith.mulf %534, %535 : vector<1x64xf32>
    %537 = arith.truncf %536 : vector<1x64xf32> to vector<1x64xbf16>
    %c0_279 = arith.constant 0 : index
    %c0_280 = arith.constant 0 : index
    %538 = vector.load %arg10[%c0_279, %c0_280] : memref<64x10xbf16, #tpu.memory_space<vmem>>, vector<64x10xbf16>
    %cst_281 = arith.constant dense<0.000000e+00> : vector<1x10xf32>
    %539 = tpu.matmul %537, %538, %cst_281 {dimension_numbers = #tpu.dot_dimension_numbers<[1], [0], [0], [1], [0, 0, 1, 1], [], []>} : vector<1x64xbf16>, vector<64x10xbf16>, vector<1x10xf32> -> vector<1x10xf32>
    %c0_282 = arith.constant 0 : index
    %c0_283 = arith.constant 0 : index
    %540 = vector.load %arg11[%c0_282, %c0_283] : memref<1x10xf32, #tpu.memory_space<vmem>>, vector<1x10xf32>
    %541 = arith.addf %539, %540 : vector<1x10xf32>
    %c0_284 = arith.constant 0 : index
    %c0_285 = arith.constant 0 : index
    %c0_286 = arith.constant 0 : index
    %542 = vector.load %arg12[%c0_284, %c0_285, %c0_286] : memref<1x1x10xf32, #tpu.memory_space<vmem>>, vector<1x1x10xf32>
    %543 = vector.shape_cast %542 : vector<1x1x10xf32> to vector<1x10xf32>
    %544 = vector.shape_cast %541 : vector<1x10xf32> to vector<1x1x10xf32>
    tpu.vector_store %arg12[%c0_284, %c0_285, %c0_286], %544 {strides = array<i32>} : memref<1x1x10xf32, #tpu.memory_space<vmem>>, vector<1x1x10xf32>,
    return
  }
  func.func @transform_0(%arg0: i32) -> (i32, i32, i32) {
    %c0_i32 = arith.constant 0 : i32
    %c0_i32_0 = arith.constant 0 : i32
    %c0_i32_1 = arith.constant 0 : i32
    return %arg0, %c0_i32, %c0_i32_0 : i32, i32, i32
  }
  func.func @transform_1(%arg0: i32) -> (i32, i32, i32) {
    %c0_i32 = arith.constant 0 : i32
    %c0_i32_0 = arith.constant 0 : i32
    %c0_i32_1 = arith.constant 0 : i32
    %c0_i32_2 = arith.constant 0 : i32
    return %c0_i32, %c0_i32_0, %c0_i32_1 : i32, i32, i32
  }
  func.func @transform_2(%arg0: i32) -> (i32, i32) {
    %c0_i32 = arith.constant 0 : i32
    %c0_i32_0 = arith.constant 0 : i32
    %c0_i32_1 = arith.constant 0 : i32
    return %c0_i32, %c0_i32_0 : i32, i32
  }
  func.func @transform_3(%arg0: i32) -> (i32, i32, i32) {
    %c0_i32 = arith.constant 0 : i32
    %c0_i32_0 = arith.constant 0 : i32
    %c0_i32_1 = arith.constant 0 : i32
    %c0_i32_2 = arith.constant 0 : i32
    return %c0_i32, %c0_i32_0, %c0_i32_1 : i32, i32, i32
  }
  func.func @transform_4(%arg0: i32) -> (i32, i32) {
    %c0_i32 = arith.constant 0 : i32
    %c0_i32_0 = arith.constant 0 : i32
    %c0_i32_1 = arith.constant 0 : i32
    return %c0_i32, %c0_i32_0 : i32, i32
  }
  func.func @transform_5(%arg0: i32) -> (i32, i32, i32) {
    %c0_i32 = arith.constant 0 : i32
    %c0_i32_0 = arith.constant 0 : i32
    %c0_i32_1 = arith.constant 0 : i32
    %c0_i32_2 = arith.constant 0 : i32
    return %c0_i32, %c0_i32_0, %c0_i32_1 : i32, i32, i32
  }
  func.func @transform_6(%arg0: i32) -> (i32, i32) {
    %c0_i32 = arith.constant 0 : i32
    %c0_i32_0 = arith.constant 0 : i32
    %c0_i32_1 = arith.constant 0 : i32
    return %c0_i32, %c0_i32_0 : i32, i32
  }
  func.func @transform_7(%arg0: i32) -> (i32, i32) {
    %c0_i32 = arith.constant 0 : i32
    %c0_i32_0 = arith.constant 0 : i32
    %c0_i32_1 = arith.constant 0 : i32
    return %c0_i32, %c0_i32_0 : i32, i32
  }
  func.func @transform_8(%arg0: i32) -> (i32, i32) {
    %c0_i32 = arith.constant 0 : i32
    %c0_i32_0 = arith.constant 0 : i32
    %c0_i32_1 = arith.constant 0 : i32
    return %c0_i32, %c0_i32_0 : i32, i32
  }
  func.func @transform_9(%arg0: i32) -> (i32, i32) {
    %c0_i32 = arith.constant 0 : i32
    %c0_i32_0 = arith.constant 0 : i32
    %c0_i32_1 = arith.constant 0 : i32
    return %c0_i32, %c0_i32_0 : i32, i32
  }
  func.func @transform_10(%arg0: i32) -> (i32, i32) {
    %c0_i32 = arith.constant 0 : i32
    %c0_i32_0 = arith.constant 0 : i32
    %c0_i32_1 = arith.constant 0 : i32
    return %c0_i32, %c0_i32_0 : i32, i32
  }
  func.func @transform_11(%arg0: i32) -> (i32, i32, i32) {
    %c0_i32 = arith.constant 0 : i32
    %c0_i32_0 = arith.constant 0 : i32
    %c0_i32_1 = arith.constant 0 : i32
    return %arg0, %c0_i32, %c0_i32_0 : i32, i32, i32
  }
}

</mosaic_0001>

<llo_original>
// kernel: simplenet_forward.1
$region0: #{simplenet_forward.1}
  #allocation0 [shape = 'u32[]', space=smem, size = 0x4, offset = 0x4, fixed_abs, tag = 'smem constant byte address 0x4 - core index']
  #allocation1 [shape = 'u32[144,128]{1,0:T(1,128)}', space=vmem, size = 0x12000, scoped, tag = 'internal scratch']
  #allocation2 [shape = 'bf16[100,32]{1,0:T(8,128)(2,1)}', space=vmem, size = 0x6800, scoped, tag = 'scratch operand']
  #allocation3 [shape = 'bf16[36,64]{1,0:T(8,128)(2,1)}', space=vmem, size = 0x2800, scoped, tag = 'scratch operand']
  %s0 = inlined_call_operand.vmem [shape: bf16[2,324,3], index: 0, kind: input, shape index: {}]
  %s1 = inlined_call_operand.vmem [shape: bf16[9,3,32], index: 1, kind: input, shape index: {}]
  %s2 = inlined_call_operand.vmem [shape: f32[1,32], index: 2, kind: input, shape index: {}]
  %s3 = inlined_call_operand.vmem [shape: bf16[9,32,64], index: 3, kind: input, shape index: {}]
  %s4 = inlined_call_operand.vmem [shape: f32[1,64], index: 4, kind: input, shape index: {}]
  %s5 = inlined_call_operand.vmem [shape: bf16[9,64,128], index: 5, kind: input, shape index: {}]
  %s6 = inlined_call_operand.vmem [shape: f32[1,128], index: 6, kind: input, shape index: {}]
  %s7 = inlined_call_operand.vmem [shape: bf16[128,64], index: 7, kind: input, shape index: {}]
  %s8 = inlined_call_operand.vmem [shape: f32[1,64], index: 8, kind: input, shape index: {}]
  %s9 = inlined_call_operand.vmem [shape: bf16[64,10], index: 9, kind: input, shape index: {}]
  %s10 = inlined_call_operand.vmem [shape: f32[1,10], index: 10, kind: input, shape index: {}]
  %s11 = inlined_call_operand.hbm [shape: f32[2,1,10], index: 11, kind: output, shape index: {}]
  %s12 = sld [smem:[#allocation0]]
  $region77: #{simplenet_forward.1} parent=0
    _
  %s14 = ssub.s32 1, %s12
  %s15 = scalar_select 0, %s14, %s12
  $region1: #{simplenet_forward.1} parent=0
    #allocation4 [shape = 'u8[1024]{0}', space=vmem, size = 0x400, scoped, tag = 'output window, operand 0']
    #allocation5 [shape = 's32[2]{0}', space=sflag, size = 0x8, scoped, tag = 'scoped memory for simplenet_forward.1']
    %16 = vsyncpa [#allocation5], 0
    %s17 = scalar_lea.sflag [#allocation5], 1
    %18 = vsyncpa %s17, 0
    loop: start=0, step=1, limit=4
    $region2: #{simplenet_forward.1} parent=1 // loop_pre_header
      _
    $region3: #{simplenet_forward.1} parent=1 // loop_header
      %s20 = sphi 0, %s24
      %p21 = scmp.ge.s32.totalorder %s20, 4
      %s30 = sphi 0, %s32
      %s33 = sphi 0, %s30
      %s34 = sphi 0, %s33
      %s50 = sphi 0, %s34
      %s54 = sphi 0, %s54
      %s56 = sphi 0, %s54
      %s57 = sphi 0, %s56
      %s71 = sphi 0, %s57
      %s75 = sphi 0, %s75
      %s77 = sphi 0, %s75
      %s78 = sphi 0, %s77
      %s92 = sphi 0, %s78
      %s96 = sphi 0, %s96
      %s98 = sphi 0, %s96
      %s99 = sphi 0, %s98
      %s113 = sphi 0, %s99
      %s117 = sphi 0, %s117
      %s119 = sphi 0, %s117
      %s120 = sphi 0, %s119
      %s134 = sphi 0, %s120
      %s138 = sphi 0, %s138
      %s140 = sphi 0, %s138
      %s141 = sphi 0, %s140
      %s155 = sphi 0, %s141
      %s159 = sphi 0, %s159
      %s161 = sphi 0, %s159
      %s162 = sphi 0, %s161
      %s176 = sphi 0, %s162
      %s180 = sphi 0, %s180
      %s182 = sphi 0, %s180
      %s183 = sphi 0, %s182
      %s197 = sphi 0, %s183
      %s201 = sphi 0, %s201
      %s203 = sphi 0, %s201
      %s204 = sphi 0, %s203
      %s218 = sphi 0, %s204
      %s222 = sphi 0, %s222
      %s224 = sphi 0, %s222
      %s225 = sphi 0, %s224
      %s239 = sphi 0, %s225
      %s243 = sphi 0, %s243
      %s245 = sphi 0, %s243
      %s246 = sphi 0, %s245
      %s260 = sphi 0, %s246
      %s266 = sphi 0, %s268
      %s269 = sphi 0, %s266
      %s270 = sphi 0, %s269
      %s286 = sphi 0, %s270
    $region4: #{simplenet_forward.1} parent=1 // loop_header_branch
      %23 = sbr.rel (%p21) target = $region8
    $region5: #{simplenet_forward.1} parent=1 // loop_body
      %s25 = ssub.s32 %s20, 1
      %s26 = ssub.s32 %s20, 2
      %s27 = sadd.s32 %s20, 1
      %s28 = ssub.s32 %s20, %s27
      %p29 = scmp.eq.s32.totalorder %s28, 0
      %s31 = sadd.s32 %s30, 1
      %s32 = scalar_select %p29, %s30, %s31
      %p35 = pneg %p29
      %p36 = scmp.eq.s32.totalorder %s20, 1
      %p37 = por %p35, %p36
      %p38 = scmp.ne.s32.totalorder %s30, %s33
      %p39 = scmp.eq.s32.totalorder %s20, 0
      %p40 = por %p38, %p39
      %p41 = scmp.ne.s32.totalorder %s30, %s33
      %p42 = scmp.eq.s32.totalorder %s25, 1
      %p43 = por %p41, %p42
      %p44 = scmp.ne.s32.totalorder %s33, %s34
      %p45 = scmp.eq.s32.totalorder %s25, 0
      %p46 = por %p44, %p45
      %p47 = scmp.ne.s32.totalorder %s33, %s34
      %p48 = scmp.eq.s32.totalorder %s26, 1
      %p49 = por %p47, %p48
      %p51 = scmp.ne.s32.totalorder %s34, %s50
      %p52 = scmp.eq.s32.totalorder %s26, 0
      %p53 = por %p51, %p52
      %s55 = sadd.s32 %s54, 1
      %p58 = scmp.eq.s32.totalorder %s20, 1
      %p59 = scmp.ne.s32.totalorder %s54, %s56
      %p60 = scmp.eq.s32.totalorder %s20, 0
      %p61 = por %p59, %p60
      %p62 = scmp.ne.s32.totalorder %s54, %s56
      %p63 = scmp.eq.s32.totalorder %s25, 1
      %p64 = por %p62, %p63
      %p65 = scmp.ne.s32.totalorder %s56, %s57
      %p66 = scmp.eq.s32.totalorder %s25, 0
      %p67 = por %p65, %p66
      %p68 = scmp.ne.s32.totalorder %s56, %s57
      %p69 = scmp.eq.s32.totalorder %s26, 1
      %p70 = por %p68, %p69
      %p72 = scmp.ne.s32.totalorder %s57, %s71
      %p73 = scmp.eq.s32.totalorder %s26, 0
      %p74 = por %p72, %p73
      %s76 = sadd.s32 %s75, 1
      %p79 = scmp.eq.s32.totalorder %s20, 1
      %p80 = scmp.ne.s32.totalorder %s75, %s77
      %p81 = scmp.eq.s32.totalorder %s20, 0
      %p82 = por %p80, %p81
      %p83 = scmp.ne.s32.totalorder %s75, %s77
      %p84 = scmp.eq.s32.totalorder %s25, 1
      %p85 = por %p83, %p84
      %p86 = scmp.ne.s32.totalorder %s77, %s78
      %p87 = scmp.eq.s32.totalorder %s25, 0
      %p88 = por %p86, %p87
      %p89 = scmp.ne.s32.totalorder %s77, %s78
      %p90 = scmp.eq.s32.totalorder %s26, 1
      %p91 = por %p89, %p90
      %p93 = scmp.ne.s32.totalorder %s78, %s92
      %p94 = scmp.eq.s32.totalorder %s26, 0
      %p95 = por %p93, %p94
      %s97 = sadd.s32 %s96, 1
      %p100 = scmp.eq.s32.totalorder %s20, 1
      %p101 = scmp.ne.s32.totalorder %s96, %s98
      %p102 = scmp.eq.s32.totalorder %s20, 0
      %p103 = por %p101, %p102
      %p104 = scmp.ne.s32.totalorder %s96, %s98
      %p105 = scmp.eq.s32.totalorder %s25, 1
      %p106 = por %p104, %p105
      %p107 = scmp.ne.s32.totalorder %s98, %s99
      %p108 = scmp.eq.s32.totalorder %s25, 0
      %p109 = por %p107, %p108
      %p110 = scmp.ne.s32.totalorder %s98, %s99
      %p111 = scmp.eq.s32.totalorder %s26, 1
      %p112 = por %p110, %p111
      %p114 = scmp.ne.s32.totalorder %s99, %s113
      %p115 = scmp.eq.s32.totalorder %s26, 0
      %p116 = por %p114, %p115
      %s118 = sadd.s32 %s117, 1
      %p121 = scmp.eq.s32.totalorder %s20, 1
      %p122 = scmp.ne.s32.totalorder %s117, %s119
      %p123 = scmp.eq.s32.totalorder %s20, 0
      %p124 = por %p122, %p123
      %p125 = scmp.ne.s32.totalorder %s117, %s119
      %p126 = scmp.eq.s32.totalorder %s25, 1
      %p127 = por %p125, %p126
      %p128 = scmp.ne.s32.totalorder %s119, %s120
      %p129 = scmp.eq.s32.totalorder %s25, 0
      %p130 = por %p128, %p129
      %p131 = scmp.ne.s32.totalorder %s119, %s120
      %p132 = scmp.eq.s32.totalorder %s26, 1
      %p133 = por %p131, %p132
      %p135 = scmp.ne.s32.totalorder %s120, %s134
      %p136 = scmp.eq.s32.totalorder %s26, 0
      %p137 = por %p135, %p136
      %s139 = sadd.s32 %s138, 1
      %p142 = scmp.eq.s32.totalorder %s20, 1
      %p143 = scmp.ne.s32.totalorder %s138, %s140
      %p144 = scmp.eq.s32.totalorder %s20, 0
      %p145 = por %p143, %p144
      %p146 = scmp.ne.s32.totalorder %s138, %s140
      %p147 = scmp.eq.s32.totalorder %s25, 1
      %p148 = por %p146, %p147
      %p149 = scmp.ne.s32.totalorder %s140, %s141
      %p150 = scmp.eq.s32.totalorder %s25, 0
      %p151 = por %p149, %p150
      %p152 = scmp.ne.s32.totalorder %s140, %s141
      %p153 = scmp.eq.s32.totalorder %s26, 1
      %p154 = por %p152, %p153
      %p156 = scmp.ne.s32.totalorder %s141, %s155
      %p157 = scmp.eq.s32.totalorder %s26, 0
      %p158 = por %p156, %p157
      %s160 = sadd.s32 %s159, 1
      %p163 = scmp.eq.s32.totalorder %s20, 1
      %p164 = scmp.ne.s32.totalorder %s159, %s161
      %p165 = scmp.eq.s32.totalorder %s20, 0
      %p166 = por %p164, %p165
      %p167 = scmp.ne.s32.totalorder %s159, %s161
      %p168 = scmp.eq.s32.totalorder %s25, 1
      %p169 = por %p167, %p168
      %p170 = scmp.ne.s32.totalorder %s161, %s162
      %p171 = scmp.eq.s32.totalorder %s25, 0
      %p172 = por %p170, %p171
      %p173 = scmp.ne.s32.totalorder %s161, %s162
      %p174 = scmp.eq.s32.totalorder %s26, 1
      %p175 = por %p173, %p174
      %p177 = scmp.ne.s32.totalorder %s162, %s176
      %p178 = scmp.eq.s32.totalorder %s26, 0
      %p179 = por %p177, %p178
      %s181 = sadd.s32 %s180, 1
      %p184 = scmp.eq.s32.totalorder %s20, 1
      %p185 = scmp.ne.s32.totalorder %s180, %s182
      %p186 = scmp.eq.s32.totalorder %s20, 0
      %p187 = por %p185, %p186
      %p188 = scmp.ne.s32.totalorder %s180, %s182
      %p189 = scmp.eq.s32.totalorder %s25, 1
      %p190 = por %p188, %p189
      %p191 = scmp.ne.s32.totalorder %s182, %s183
      %p192 = scmp.eq.s32.totalorder %s25, 0
      %p193 = por %p191, %p192
      %p194 = scmp.ne.s32.totalorder %s182, %s183
      %p195 = scmp.eq.s32.totalorder %s26, 1
      %p196 = por %p194, %p195
      %p198 = scmp.ne.s32.totalorder %s183, %s197
      %p199 = scmp.eq.s32.totalorder %s26, 0
      %p200 = por %p198, %p199
      %s202 = sadd.s32 %s201, 1
      %p205 = scmp.eq.s32.totalorder %s20, 1
      %p206 = scmp.ne.s32.totalorder %s201, %s203
      %p207 = scmp.eq.s32.totalorder %s20, 0
      %p208 = por %p206, %p207
      %p209 = scmp.ne.s32.totalorder %s201, %s203
      %p210 = scmp.eq.s32.totalorder %s25, 1
      %p211 = por %p209, %p210
      %p212 = scmp.ne.s32.totalorder %s203, %s204
      %p213 = scmp.eq.s32.totalorder %s25, 0
      %p214 = por %p212, %p213
      %p215 = scmp.ne.s32.totalorder %s203, %s204
      %p216 = scmp.eq.s32.totalorder %s26, 1
      %p217 = por %p215, %p216
      %p219 = scmp.ne.s32.totalorder %s204, %s218
      %p220 = scmp.eq.s32.totalorder %s26, 0
      %p221 = por %p219, %p220
      %s223 = sadd.s32 %s222, 1
      %p226 = scmp.eq.s32.totalorder %s20, 1
      %p227 = scmp.ne.s32.totalorder %s222, %s224
      %p228 = scmp.eq.s32.totalorder %s20, 0
      %p229 = por %p227, %p228
      %p230 = scmp.ne.s32.totalorder %s222, %s224
      %p231 = scmp.eq.s32.totalorder %s25, 1
      %p232 = por %p230, %p231
      %p233 = scmp.ne.s32.totalorder %s224, %s225
      %p234 = scmp.eq.s32.totalorder %s25, 0
      %p235 = por %p233, %p234
      %p236 = scmp.ne.s32.totalorder %s224, %s225
      %p237 = scmp.eq.s32.totalorder %s26, 1
      %p238 = por %p236, %p237
      %p240 = scmp.ne.s32.totalorder %s225, %s239
      %p241 = scmp.eq.s32.totalorder %s26, 0
      %p242 = por %p240, %p241
      %s244 = sadd.s32 %s243, 1
      %p247 = scmp.eq.s32.totalorder %s20, 1
      %p248 = scmp.ne.s32.totalorder %s243, %s245
      %p249 = scmp.eq.s32.totalorder %s20, 0
      %p250 = por %p248, %p249
      %p251 = scmp.ne.s32.totalorder %s243, %s245
      %p252 = scmp.eq.s32.totalorder %s25, 1
      %p253 = por %p251, %p252
      %p254 = scmp.ne.s32.totalorder %s245, %s246
      %p255 = scmp.eq.s32.totalorder %s25, 0
      %p256 = por %p254, %p255
      %p257 = scmp.ne.s32.totalorder %s245, %s246
      %p258 = scmp.eq.s32.totalorder %s26, 1
      %p259 = por %p257, %p258
      %p261 = scmp.ne.s32.totalorder %s246, %s260
      %p262 = scmp.eq.s32.totalorder %s26, 0
      %p263 = por %p261, %p262
      %s264 = ssub.s32 %s20, %s27
      %p265 = scmp.eq.s32.totalorder %s264, 0
      %s267 = sadd.s32 %s266, 1
      %s268 = scalar_select %p265, %s266, %s267
      %p271 = pneg %p265
      %p272 = scmp.eq.s32.totalorder %s20, 1
      %p273 = por %p271, %p272
      %p274 = scmp.ne.s32.totalorder %s266, %s269
      %p275 = scmp.eq.s32.totalorder %s20, 0
      %p276 = por %p274, %p275
      %p277 = scmp.ne.s32.totalorder %s266, %s269
      %p278 = scmp.eq.s32.totalorder %s25, 1
      %p279 = por %p277, %p278
      %p280 = scmp.ne.s32.totalorder %s269, %s270
      %p281 = scmp.eq.s32.totalorder %s25, 0
      %p282 = por %p280, %p281
      %p283 = scmp.ne.s32.totalorder %s269, %s270
      %p284 = scmp.eq.s32.totalorder %s26, 1
      %p285 = por %p283, %p284
      %p287 = scmp.ne.s32.totalorder %s270, %s286
      %p288 = scmp.eq.s32.totalorder %s26, 0
      %p289 = por %p287, %p288
      %p290 = scmp.le.s32.totalorder 1, %s20
      %p291 = scmp.lt.s32.totalorder %s20, 3
      %p292 = pnand %p290, %p291
      %p293 = pneg %p292
      // Predicated region
      $region9: #{simplenet_forward.1} parent=5 // pred_check
        _
      $region10: #{simplenet_forward.1} parent=5 // pred_check_branch
        %295 = sbr.rel (%p292) target = $region12
      $region11: #{simplenet_forward.1} parent=5 // pred_region
        %s296 = ssub.s32 %s20, 1
        // Predicated region
        $region13: #{simplenet_forward.1} parent=11 // pred_check
          %p297 = pneg %p67
        $region14: #{simplenet_forward.1} parent=11 // pred_check_branch
          %299 = sbr.rel (%p297) target = $region16
        $region15: #{simplenet_forward.1} parent=11 // pred_region
          _
        $region16: #{simplenet_forward.1} parent=11 // pred_fallthru
          _
        // Predicated region
        $region17: #{simplenet_forward.1} parent=11 // pred_check
          %p300 = pneg %p88
        $region18: #{simplenet_forward.1} parent=11 // pred_check_branch
          %302 = sbr.rel (%p300) target = $region20
        $region19: #{simplenet_forward.1} parent=11 // pred_region
          _
        $region20: #{simplenet_forward.1} parent=11 // pred_fallthru
          _
        // Predicated region
        $region21: #{simplenet_forward.1} parent=11 // pred_check
          %p303 = pneg %p109
        $region22: #{simplenet_forward.1} parent=11 // pred_check_branch
          %305 = sbr.rel (%p303) target = $region24
        $region23: #{simplenet_forward.1} parent=11 // pred_region
          _
        $region24: #{simplenet_forward.1} parent=11 // pred_fallthru
          _
        // Predicated region
        $region25: #{simplenet_forward.1} parent=11 // pred_check
          %p306 = pneg %p130
        $region26: #{simplenet_forward.1} parent=11 // pred_check_branch
          %308 = sbr.rel (%p306) target = $region28
        $region27: #{simplenet_forward.1} parent=11 // pred_region
          _
        $region28: #{simplenet_forward.1} parent=11 // pred_fallthru
          _
        // Predicated region
        $region29: #{simplenet_forward.1} parent=11 // pred_check
          %p309 = pneg %p151
        $region30: #{simplenet_forward.1} parent=11 // pred_check_branch
          %311 = sbr.rel (%p309) target = $region32
        $region31: #{simplenet_forward.1} parent=11 // pred_region
          _
        $region32: #{simplenet_forward.1} parent=11 // pred_fallthru
          _
        // Predicated region
        $region33: #{simplenet_forward.1} parent=11 // pred_check
          %p312 = pneg %p172
        $region34: #{simplenet_forward.1} parent=11 // pred_check_branch
          %314 = sbr.rel (%p312) target = $region36
        $region35: #{simplenet_forward.1} parent=11 // pred_region
          _
        $region36: #{simplenet_forward.1} parent=11 // pred_fallthru
          _
        // Predicated region
        $region37: #{simplenet_forward.1} parent=11 // pred_check
          %p315 = pneg %p193
        $region38: #{simplenet_forward.1} parent=11 // pred_check_branch
          %317 = sbr.rel (%p315) target = $region40
        $region39: #{simplenet_forward.1} parent=11 // pred_region
          _
        $region40: #{simplenet_forward.1} parent=11 // pred_fallthru
          _
        // Predicated region
        $region41: #{simplenet_forward.1} parent=11 // pred_check
          %p318 = pneg %p214
        $region42: #{simplenet_forward.1} parent=11 // pred_check_branch
          %320 = sbr.rel (%p318) target = $region44
        $region43: #{simplenet_forward.1} parent=11 // pred_region
          _
        $region44: #{simplenet_forward.1} parent=11 // pred_fallthru
          _
        // Predicated region
        $region45: #{simplenet_forward.1} parent=11 // pred_check
          %p321 = pneg %p235
        $region46: #{simplenet_forward.1} parent=11 // pred_check_branch
          %323 = sbr.rel (%p321) target = $region48
        $region47: #{simplenet_forward.1} parent=11 // pred_region
          _
        $region48: #{simplenet_forward.1} parent=11 // pred_fallthru
          _
        // Predicated region
        $region49: #{simplenet_forward.1} parent=11 // pred_check
          %p324 = pneg %p256
        $region50: #{simplenet_forward.1} parent=11 // pred_check_branch
          %326 = sbr.rel (%p324) target = $region52
        $region51: #{simplenet_forward.1} parent=11 // pred_region
          _
        $region52: #{simplenet_forward.1} parent=11 // pred_fallthru
          _
      $region12: #{simplenet_forward.1} parent=5 // pred_fallthru
        _
      %p327 = scmp.lt.s32.totalorder %s20, 2
      // Predicated region
      $region53: #{simplenet_forward.1} parent=5 // pred_check
        %p328 = pneg %p327
      $region54: #{simplenet_forward.1} parent=5 // pred_check_branch
        %330 = sbr.rel (%p328) target = $region56
      $region55: #{simplenet_forward.1} parent=5 // pred_region
        // Predicated region
        $region57: #{simplenet_forward.1} parent=55 // pred_check
          %p331 = pneg %p40
        $region58: #{simplenet_forward.1} parent=55 // pred_check_branch
          %333 = sbr.rel (%p331) target = $region60
        $region59: #{simplenet_forward.1} parent=55 // pred_region
          %p334 = scmp.lt.s32.totalorder %s20, 1
          %s335 = scalar_select %p334, %s20, 1
          %s336 = smul.addr %s335, 41
          %s337 = smul.addr %s336, 4
          %s338 = scalar_lea.vmem %s0, %s337
        $region60: #{simplenet_forward.1} parent=55 // pred_fallthru
          _
      $region56: #{simplenet_forward.1} parent=5 // pred_fallthru
        _
      %p339 = scmp.le.s32.totalorder 1, %s20
      %p340 = scmp.lt.s32.totalorder %s20, 3
      %p341 = pnand %p339, %p340
      %p342 = pneg %p341
      // Predicated region
      $region61: #{simplenet_forward.1} parent=5 // pred_check
        _
      $region62: #{simplenet_forward.1} parent=5 // pred_check_branch
        %344 = sbr.rel (%p341) target = $region64
      $region63: #{simplenet_forward.1} parent=5 // pred_region
        %s345 = ssub.s32 %s20, 1
        %p346 = scmp.lt.s32.totalorder %s25, 1
        %s347 = scalar_select %p346, %s25, 1
        %s348 = smul.addr %s347, 41
        %s349 = smul.addr %s348, 4
        %s350 = scalar_lea.vmem %s0, %s349
        %p351 = pneg %p46
        %p352 = pneg %p43
        %p353 = pneg %p67
        %p354 = pneg %p64
        %p355 = pneg %p88
        %p356 = pneg %p85
        %p357 = pneg %p109
        %p358 = pneg %p106
        %p359 = pneg %p130
        %p360 = pneg %p127
        %p361 = pneg %p151
        %p362 = pneg %p148
        %p363 = pneg %p172
        %p364 = pneg %p169
        %p365 = pneg %p193
        %p366 = pneg %p190
        %p367 = pneg %p214
        %p368 = pneg %p211
        %p369 = pneg %p235
        %p370 = pneg %p232
        %p371 = pneg %p256
        %p372 = pneg %p253
        %p373 = pneg %p282
        %p374 = pneg %p279
        %s375 = sand.u32 %s269, 1
        %s376 = scalar_lea.sflag [#allocation5], %s375
        %s377 = sand.u32 %s269, 1
        %s378 = scalar_lea.vmem [#allocation4], %s377
        %p379 = scmp.lt.s32.totalorder %s25, 1
        %s380 = scalar_select %p379, %s25, 1
        %s381 = smul.addr %s380, 41
        %s382 = smul.addr %s381, 4
        %s383 = scalar_lea.vmem %s0, %s382
        %vm385 = vcmask 257024
        %386 = vst.msk [vmem:[#allocation2] sm:$0xf] %vm385, 0
        %387 = vst.msk [vmem:[#allocation2 + $0x4] sm:$0xf] %vm385, 0
        %388 = vst.msk [vmem:[#allocation2 + $0x8] sm:$0xf] %vm385, 0
        %389 = vst.msk [vmem:[#allocation2 + $0xc] sm:$0xf] %vm385, 0
        %390 = vst.msk [vmem:[#allocation2 + $0x10] sm:$0xf] %vm385, 0
        %391 = vst.msk [vmem:[#allocation2 + $0x14] sm:$0xf] %vm385, 0
        %392 = vst.msk [vmem:[#allocation2 + $0x18] sm:$0xf] %vm385, 0
        %393 = vst.msk [vmem:[#allocation2 + $0x1c] sm:$0xf] %vm385, 0
        %394 = vst.msk [vmem:[#allocation2 + $0x20] sm:$0xf] %vm385, 0
        %395 = vst.msk [vmem:[#allocation2 + $0x24] sm:$0xf] %vm385, 0
        %396 = vst.msk [vmem:[#allocation2 + $0x28] sm:$0xf] %vm385, 0
        %397 = vst.msk [vmem:[#allocation2 + $0x2c] sm:$0xf] %vm385, 0
        %vm398 = vcmask 254976
        %399 = vst.msk [vmem:[#allocation2 + $0x30] sm:$0x3] %vm398, 0
        %vm400 = vcmask 519168
        %401 = vst.msk [vmem:[#allocation3] sm:$0xf] %vm400, 0
        %402 = vst.msk [vmem:[#allocation3 + $0x4] sm:$0xf] %vm400, 0
        %403 = vst.msk [vmem:[#allocation3 + $0x8] sm:$0xf] %vm400, 0
        %404 = vst.msk [vmem:[#allocation3 + $0xc] sm:$0xf] %vm400, 0
        %vm405 = vcmask 517120
        %406 = vst.msk [vmem:[#allocation3 + $0x10] sm:$0x3] %vm405, 0
        %v407 = vld [vmem:[%s383] sm:$0xf]
        %v408 = vld [vmem:[%s383 + $0x4] sm:$0xf]
        %v409 = vld [vmem:[%s383 + $0x8] sm:$0xf]
        %v410 = vld [vmem:[%s383 + $0xc] sm:$0xf]
        %v411 = vld [vmem:[%s383 + $0x10] sm:$0xf]
        %v412 = vld [vmem:[%s383 + $0x14] sm:$0xf]
        %v413 = vld [vmem:[%s383 + $0x18] sm:$0xf]
        %v414 = vld [vmem:[%s383 + $0x1c] sm:$0xf]
        %v415 = vld [vmem:[%s383 + $0x20] sm:$0xf]
        %v416 = vld [vmem:[%s383 + $0x24] sm:$0xf]
        %v417 = vld [vmem:[%s383 + $0x28] sm:$0xf]
        %v418 = vld [vmem:[%s383 + $0x2c] sm:$0xf]
        %v419 = vld [vmem:[%s383 + $0x30] sm:$0xf]
        %v420 = vld [vmem:[%s383 + $0x34] sm:$0xf]
        %v421 = vld [vmem:[%s383 + $0x38] sm:$0xf]
        %v422 = vld [vmem:[%s383 + $0x3c] sm:$0xf]
        %v423 = vld [vmem:[%s383 + $0x40] sm:$0xf]
        %v424 = vld [vmem:[%s383 + $0x44] sm:$0xf]
        %v425 = vld [vmem:[%s383 + $0x48] sm:$0xf]
        %v426 = vld [vmem:[%s383 + $0x4c] sm:$0xf]
        %v427 = vld [vmem:[%s383 + $0x50] sm:$0xf]
        %v428 = vld [vmem:[%s383 + $0x54] sm:$0xf]
        %v429 = vld [vmem:[%s383 + $0x58] sm:$0xf]
        %v430 = vld [vmem:[%s383 + $0x5c] sm:$0xf]
        %v431 = vld [vmem:[%s383 + $0x60] sm:$0xf]
        %v432 = vld [vmem:[%s383 + $0x64] sm:$0xf]
        %v433 = vld [vmem:[%s383 + $0x68] sm:$0xf]
        %v434 = vld [vmem:[%s383 + $0x6c] sm:$0xf]
        %v435 = vld [vmem:[%s383 + $0x70] sm:$0xf]
        %v436 = vld [vmem:[%s383 + $0x74] sm:$0xf]
        %v437 = vld [vmem:[%s383 + $0x78] sm:$0xf]
        %v438 = vld [vmem:[%s383 + $0x7c] sm:$0xf]
        %v439 = vld [vmem:[%s383 + $0x80] sm:$0xf]
        %v440 = vld [vmem:[%s383 + $0x84] sm:$0xf]
        %v441 = vld [vmem:[%s383 + $0x88] sm:$0xf]
        %v442 = vld [vmem:[%s383 + $0x8c] sm:$0x7]
        %v443 = vld [vmem:[%s1] sm:$0x3]
        %v444 = vld [vmem:[%s383 + $0x8c] sm:$0xf]
        %s445 = scalar_lea.vmem %s1, 2
        %v446 = vld [vmem:[%s445] sm:$0x3]
        %v483 = vunpack.c.l.b16 %v407
        %v484 = vunpack.c.l.b16 %v408
        %v485 = vunpack.c.l.b16 %v409
        %v486 = vunpack.c.l.b16 %v410
        %v487 = vunpack.c.l.b16 %v411
        %v488 = vunpack.c.l.b16 %v412
        %v489 = vunpack.c.l.b16 %v413
        %v490 = vunpack.c.l.b16 %v414
        %v491 = vunpack.c.l.b16 %v415
        %v492 = vunpack.c.l.b16 %v416
        %v493 = vunpack.c.l.b16 %v417
        %v494 = vunpack.c.l.b16 %v418
        %v495 = vunpack.c.l.b16 %v419
        %v496 = vunpack.c.l.b16 %v420
        %v497 = vunpack.c.l.b16 %v421
        %v498 = vunpack.c.l.b16 %v422
        %v499 = vunpack.c.l.b16 %v423
        %v500 = vunpack.c.l.b16 %v424
        %v501 = vunpack.c.l.b16 %v425
        %v502 = vunpack.c.l.b16 %v426
        %v503 = vunpack.c.l.b16 %v427
        %v504 = vunpack.c.l.b16 %v428
        %v505 = vunpack.c.l.b16 %v429
        %v506 = vunpack.c.l.b16 %v430
        %v507 = vunpack.c.l.b16 %v431
        %v508 = vunpack.c.l.b16 %v432
        %v509 = vunpack.c.l.b16 %v433
        %v510 = vunpack.c.l.b16 %v434
        %v511 = vunpack.c.l.b16 %v435
        %v512 = vunpack.c.l.b16 %v436
        %v513 = vunpack.c.l.b16 %v437
        %v514 = vunpack.c.l.b16 %v438
        %v515 = vunpack.c.l.b16 %v439
        %v516 = vunpack.c.l.b16 %v440
        %v517 = vunpack.c.l.b16 %v441
        %v518 = vunpack.c.l.b16 %v444
        %v519 = vpack.c.b16 %v484, %v483
        %v520 = vpack.c.b16 %v486, %v485
        %v521 = vpack.c.b16 %v488, %v487
        %v522 = vpack.c.b16 %v490, %v489
        %v523 = vpack.c.b16 %v492, %v491
        %v524 = vpack.c.b16 %v494, %v493
        %v525 = vpack.c.b16 %v496, %v495
        %v526 = vpack.c.b16 %v498, %v497
        %v527 = vpack.c.b16 %v500, %v499
        %v528 = vpack.c.b16 %v502, %v501
        %v529 = vpack.c.b16 %v504, %v503
        %v530 = vpack.c.b16 %v506, %v505
        %v531 = vpack.c.b16 %v508, %v507
        %v532 = vpack.c.b16 %v510, %v509
        %v533 = vpack.c.b16 %v512, %v511
        %v534 = vpack.c.b16 %v514, %v513
        %v535 = vpack.c.b16 %v516, %v515
        %v536 = vpack.c.b16 %v518, %v517
        %vm537 = vsmask.f32 7424
        %v539 = vshrl.u32 %v519, 16
        %v541 = vshll.u32 %v519, 16
        %v543 = vrot.slane %v541, 1
        %v544 = vor.u32 %v539, %v543
        %v546 = vshll.u32 %v520, 16
        %v548 = vrot.slane %v546, 1
        %v549 = vsel %vm537, %v544, %v548
        %v550 = vshrl.u32 %v520, 16
        %v552 = vor.u32 %v550, %v548
        %v554 = vshll.u32 %v521, 16
        %v556 = vrot.slane %v554, 1
        %v557 = vsel %vm537, %v552, %v556
        %v558 = vshrl.u32 %v521, 16
        %v560 = vor.u32 %v558, %v556
        %v562 = vshll.u32 %v522, 16
        %v564 = vrot.slane %v562, 1
        %v565 = vsel %vm537, %v560, %v564
        %v566 = vshrl.u32 %v522, 16
        %v568 = vor.u32 %v566, %v564
        %v570 = vshll.u32 %v523, 16
        %v572 = vrot.slane %v570, 1
        %v573 = vsel %vm537, %v568, %v572
        %v574 = vshrl.u32 %v523, 16
        %v576 = vor.u32 %v574, %v572
        %v578 = vshll.u32 %v524, 16
        %v580 = vrot.slane %v578, 1
        %v581 = vsel %vm537, %v576, %v580
        %v582 = vshrl.u32 %v524, 16
        %v584 = vor.u32 %v582, %v580
        %v586 = vshll.u32 %v525, 16
        %v588 = vrot.slane %v586, 1
        %v589 = vsel %vm537, %v584, %v588
        %v590 = vshrl.u32 %v525, 16
        %v592 = vor.u32 %v590, %v588
        %v594 = vshll.u32 %v526, 16
        %v596 = vrot.slane %v594, 1
        %v597 = vsel %vm537, %v592, %v596
        %v598 = vshrl.u32 %v526, 16
        %v600 = vor.u32 %v598, %v596
        %v602 = vshll.u32 %v527, 16
        %v604 = vrot.slane %v602, 1
        %v605 = vsel %vm537, %v600, %v604
        %v606 = vshrl.u32 %v527, 16
        %v608 = vor.u32 %v606, %v604
        %v610 = vshll.u32 %v528, 16
        %v612 = vrot.slane %v610, 1
        %v613 = vsel %vm537, %v608, %v612
        %v614 = vshrl.u32 %v528, 16
        %v616 = vor.u32 %v614, %v612
        %v618 = vshll.u32 %v529, 16
        %v620 = vrot.slane %v618, 1
        %v621 = vsel %vm537, %v616, %v620
        %v622 = vshrl.u32 %v529, 16
        %v624 = vor.u32 %v622, %v620
        %v626 = vshll.u32 %v530, 16
        %v628 = vrot.slane %v626, 1
        %v629 = vsel %vm537, %v624, %v628
        %v630 = vshrl.u32 %v530, 16
        %v632 = vor.u32 %v630, %v628
        %v634 = vshll.u32 %v531, 16
        %v636 = vrot.slane %v634, 1
        %v637 = vsel %vm537, %v632, %v636
        %v638 = vshrl.u32 %v531, 16
        %v640 = vor.u32 %v638, %v636
        %v642 = vshll.u32 %v532, 16
        %v644 = vrot.slane %v642, 1
        %v645 = vsel %vm537, %v640, %v644
        %v646 = vshrl.u32 %v532, 16
        %v648 = vor.u32 %v646, %v644
        %v650 = vshll.u32 %v533, 16
        %v652 = vrot.slane %v650, 1
        %v653 = vsel %vm537, %v648, %v652
        %v654 = vshrl.u32 %v533, 16
        %v656 = vor.u32 %v654, %v652
        %v658 = vshll.u32 %v534, 16
        %v660 = vrot.slane %v658, 1
        %v661 = vsel %vm537, %v656, %v660
        %v662 = vshrl.u32 %v534, 16
        %v664 = vor.u32 %v662, %v660
        %v666 = vshll.u32 %v535, 16
        %v668 = vrot.slane %v666, 1
        %v669 = vsel %vm537, %v664, %v668
        %v670 = vshrl.u32 %v535, 16
        %v672 = vor.u32 %v670, %v668
        %v674 = vshll.u32 %v536, 16
        %v676 = vrot.slane %v674, 1
        %v677 = vsel %vm537, %v672, %v676
        %v678 = vshrl.u32 %v536, 16
        %v680 = vor.u32 %v678, %v676
        %vm681 = vcmask 23552
        %v683 = vsel %vm681, %v549, 0
        %v686 = vsel %vm681, %v557, 0
        %v689 = vsel %vm681, %v565, 0
        %v692 = vsel %vm681, %v573, 0
        %v695 = vsel %vm681, %v581, 0
        %v698 = vsel %vm681, %v589, 0
        %v701 = vsel %vm681, %v597, 0
        %v704 = vsel %vm681, %v605, 0
        %v707 = vsel %vm681, %v613, 0
        %v710 = vsel %vm681, %v621, 0
        %v713 = vsel %vm681, %v629, 0
        %v716 = vsel %vm681, %v637, 0
        %v719 = vsel %vm681, %v645, 0
        %v722 = vsel %vm681, %v653, 0
        %v725 = vsel %vm681, %v661, 0
        %v728 = vsel %vm681, %v669, 0
        %v731 = vsel %vm681, %v677, 0
        %v734 = vsel %vm681, %v680, 0
        %vm736 = vcmask 1040384
        %vm737 = vcmask 1041408
        %v738 = vsel %vm736, 4294967295, 65535
        %v739 = vsel %vm737, %v738, 0
        %v741 = vand.u32 %v446, %v739
        %743 = vmatprep.subr.bf16.mxu0 0
        %744 = vmatpush1.bf16.msra.mxu0 %v741
        %745 = vmatprep.subr.bf16.mxu0 0
        %746 = vmatpush1.bf16.msra.mxu0 0
        %747 = vmatprep.subr.bf16.mxu0 0
        %748 = vmatpush1.bf16.msra.mxu0 0
        %749 = vmatprep.subr.bf16.mxu0 0
        %750 = vmatpush1.bf16.msra.mxu0 0
        %751 = vmatprep.subr.bf16.mxu0 0
        %752 = vmatpush1.bf16.msra.mxu0 0
        %753 = vmatprep.subr.bf16.mxu0 0
        %754 = vmatpush1.bf16.msra.mxu0 0
        %755 = vmatprep.subr.bf16.mxu0 0
        %756 = vmatpush1.bf16.msra.mxu0 0
        %757 = vmatprep.subr.bf16.mxu0 0
        %758 = vmatpush1.bf16.msra.mxu0 0
        %759 = vmatprep.subr.bf16.mxu0 0
        %760 = vmatpush1.bf16.msra.mxu0 0
        %761 = vmatprep.subr.bf16.mxu0 0
        %762 = vmatpush1.bf16.msra.mxu0 0
        %763 = vmatprep.subr.bf16.mxu0 0
        %764 = vmatpush1.bf16.msra.mxu0 0
        %765 = vmatprep.subr.bf16.mxu0 0
        %766 = vmatpush1.bf16.msra.mxu0 0
        %767 = vmatprep.subr.bf16.mxu0 0
        %768 = vmatpush1.bf16.msra.mxu0 0
        %769 = vmatprep.subr.bf16.mxu0 0
        %770 = vmatpush1.bf16.msra.mxu0 0
        %771 = vmatprep.subr.bf16.mxu0 0
        %772 = vmatpush1.bf16.msra.mxu0 0
        %773 = vmatprep.subr.bf16.mxu0 0
        %774 = vmatpush1.bf16.msra.mxu0 0
        %775 = vmatprep.mubr.bf16.mxu0 0
        %776 = vmatmul.mubr.bf16.gmra.mrb[0].mxu0 %v683
        %v777 = vpop.f32.mrb[0].mxu0
        %v778 = vadd.f32 0.0, %v777
        %v779 = vpop.f32.mrb[0].mxu0
        %v780 = vpop.f32.mrb[0].mxu0
        %v781 = vadd.f32 0.0, %v780
        %v782 = vpop.f32.mrb[0].mxu0
        %783 = vmatprep.mubr.bf16.mxu0 0
        %784 = vmatmul.mubr.bf16.gmra.mrb[0].mxu0 %v686
        %v785 = vpop.f32.mrb[0].mxu0
        %v786 = vadd.f32 0.0, %v785
        %v787 = vpop.f32.mrb[0].mxu0
        %v788 = vpop.f32.mrb[0].mxu0
        %v789 = vadd.f32 0.0, %v788
        %v790 = vpop.f32.mrb[0].mxu0
        %791 = vmatprep.mubr.bf16.mxu0 0
        %792 = vmatmul.mubr.bf16.gmra.mrb[0].mxu0 %v689
        %v793 = vpop.f32.mrb[0].mxu0
        %v794 = vadd.f32 0.0, %v793
        %v795 = vpop.f32.mrb[0].mxu0
        %v796 = vpop.f32.mrb[0].mxu0
        %v797 = vadd.f32 0.0, %v796
        %v798 = vpop.f32.mrb[0].mxu0
        %799 = vmatprep.mubr.bf16.mxu0 0
        %800 = vmatmul.mubr.bf16.gmra.mrb[0].mxu0 %v692
        %v801 = vpop.f32.mrb[0].mxu0
        %v802 = vadd.f32 0.0, %v801
        %v803 = vpop.f32.mrb[0].mxu0
        %v804 = vpop.f32.mrb[0].mxu0
        %v805 = vadd.f32 0.0, %v804
        %v806 = vpop.f32.mrb[0].mxu0
        %807 = vmatprep.mubr.bf16.mxu0 0
        %808 = vmatmul.mubr.bf16.gmra.mrb[0].mxu0 %v695
        %v809 = vpop.f32.mrb[0].mxu0
        %v810 = vadd.f32 0.0, %v809
        %v811 = vpop.f32.mrb[0].mxu0
        %v812 = vpop.f32.mrb[0].mxu0
        %v813 = vadd.f32 0.0, %v812
        %v814 = vpop.f32.mrb[0].mxu0
        %815 = vmatprep.mubr.bf16.mxu0 0
        %816 = vmatmul.mubr.bf16.gmra.mrb[0].mxu0 %v698
        %v817 = vpop.f32.mrb[0].mxu0
        %v818 = vadd.f32 0.0, %v817
        %v819 = vpop.f32.mrb[0].mxu0
        %v820 = vpop.f32.mrb[0].mxu0
        %v821 = vadd.f32 0.0, %v820
        %v822 = vpop.f32.mrb[0].mxu0
        %823 = vmatprep.mubr.bf16.mxu0 0
        %824 = vmatmul.mubr.bf16.gmra.mrb[0].mxu0 %v701
        %v825 = vpop.f32.mrb[0].mxu0
        %v826 = vadd.f32 0.0, %v825
        %v827 = vpop.f32.mrb[0].mxu0
        %v828 = vpop.f32.mrb[0].mxu0
        %v829 = vadd.f32 0.0, %v828
        %v830 = vpop.f32.mrb[0].mxu0
        %831 = vmatprep.mubr.bf16.mxu0 0
        %832 = vmatmul.mubr.bf16.gmra.mrb[0].mxu0 %v704
        %v833 = vpop.f32.mrb[0].mxu0
        %v834 = vadd.f32 0.0, %v833
        %v835 = vpop.f32.mrb[0].mxu0
        %v836 = vpop.f32.mrb[0].mxu0
        %v837 = vadd.f32 0.0, %v836
        %v838 = vpop.f32.mrb[0].mxu0
        %839 = vmatprep.mubr.bf16.mxu0 0
        %840 = vmatmul.mubr.bf16.gmra.mrb[0].mxu0 %v707
        %v841 = vpop.f32.mrb[0].mxu0
        %v842 = vadd.f32 0.0, %v841
        %v843 = vpop.f32.mrb[0].mxu0
        %v844 = vpop.f32.mrb[0].mxu0
        %v845 = vadd.f32 0.0, %v844
        %v846 = vpop.f32.mrb[0].mxu0
        %847 = vmatprep.mubr.bf16.mxu0 0
        %848 = vmatmul.mubr.bf16.gmra.mrb[0].mxu0 %v710
        %v849 = vpop.f32.mrb[0].mxu0
        %v850 = vadd.f32 0.0, %v849
        %v851 = vpop.f32.mrb[0].mxu0
        %v852 = vpop.f32.mrb[0].mxu0
        %v853 = vadd.f32 0.0, %v852
        %v854 = vpop.f32.mrb[0].mxu0
        %855 = vmatprep.mubr.bf16.mxu0 0
        %856 = vmatmul.mubr.bf16.gmra.mrb[0].mxu0 %v713
        %v857 = vpop.f32.mrb[0].mxu0
        %v858 = vadd.f32 0.0, %v857
        %v859 = vpop.f32.mrb[0].mxu0
        %v860 = vpop.f32.mrb[0].mxu0
        %v861 = vadd.f32 0.0, %v860
        %v862 = vpop.f32.mrb[0].mxu0
        %863 = vmatprep.mubr.bf16.mxu0 0
        %864 = vmatmul.mubr.bf16.gmra.mrb[0].mxu0 %v716
        %v865 = vpop.f32.mrb[0].mxu0
        %v866 = vadd.f32 0.0, %v865
        %v867 = vpop.f32.mrb[0].mxu0
        %v868 = vpop.f32.mrb[0].mxu0
        %v869 = vadd.f32 0.0, %v868
        %v870 = vpop.f32.mrb[0].mxu0
        %871 = vmatprep.mubr.bf16.mxu0 0
        %872 = vmatmul.mubr.bf16.gmra.mrb[0].mxu0 %v719
        %v873 = vpop.f32.mrb[0].mxu0
        %v874 = vadd.f32 0.0, %v873
        %v875 = vpop.f32.mrb[0].mxu0
        %v876 = vpop.f32.mrb[0].mxu0
        %v877 = vadd.f32 0.0, %v876
        %v878 = vpop.f32.mrb[0].mxu0
        %879 = vmatprep.mubr.bf16.mxu0 0
        %880 = vmatmul.mubr.bf16.gmra.mrb[0].mxu0 %v722
        %v881 = vpop.f32.mrb[0].mxu0
        %v882 = vadd.f32 0.0, %v881
        %v883 = vpop.f32.mrb[0].mxu0
        %v884 = vpop.f32.mrb[0].mxu0
        %v885 = vadd.f32 0.0, %v884
        %v886 = vpop.f32.mrb[0].mxu0
        %887 = vmatprep.mubr.bf16.mxu0 0
        %888 = vmatmul.mubr.bf16.gmra.mrb[0].mxu0 %v725
        %v889 = vpop.f32.mrb[0].mxu0
        %v890 = vadd.f32 0.0, %v889
        %v891 = vpop.f32.mrb[0].mxu0
        %v892 = vpop.f32.mrb[0].mxu0
        %v893 = vadd.f32 0.0, %v892
        %v894 = vpop.f32.mrb[0].mxu0
        %895 = vmatprep.mubr.bf16.mxu0 0
        %896 = vmatmul.mubr.bf16.gmra.mrb[0].mxu0 %v728
        %v897 = vpop.f32.mrb[0].mxu0
        %v898 = vadd.f32 0.0, %v897
        %v899 = vpop.f32.mrb[0].mxu0
        %v900 = vpop.f32.mrb[0].mxu0
        %v901 = vadd.f32 0.0, %v900
        %v902 = vpop.f32.mrb[0].mxu0
        %903 = vmatprep.mubr.bf16.mxu0 0
        %904 = vmatmul.mubr.bf16.gmra.mrb[0].mxu0 %v731
        %v905 = vpop.f32.mrb[0].mxu0
        %v906 = vadd.f32 0.0, %v905
        %v907 = vpop.f32.mrb[0].mxu0
        %v908 = vpop.f32.mrb[0].mxu0
        %v909 = vadd.f32 0.0, %v908
        %v910 = vpop.f32.mrb[0].mxu0
        %911 = vmatprep.mubr.bf16.mxu0 0
        %912 = vmatmul.mubr.bf16.gmra.mrb[0].mxu0 %v734
        %v913 = vpop.f32.mrb[0].mxu0
        %v914 = vadd.f32 0.0, %v913
        %v915 = vpop.f32.mrb[0].mxu0
        %v916 = vpop.f32.mrb[0].mxu0
        %v917 = vadd.f32 0.0, %v916
        %v918 = vpop.f32.mrb[0].mxu0
        %919 = vdwg.mxu0
        %v921 = vunpack.c.l.b16 %v442
        %v922 = vpack.c.b16 %v921, %v517
        %v923 = vsel %vm681, %v519, 0
        %v925 = vsel %vm681, %v520, 0
        %v927 = vsel %vm681, %v521, 0
        %v929 = vsel %vm681, %v522, 0
        %v931 = vsel %vm681, %v523, 0
        %v933 = vsel %vm681, %v524, 0
        %v935 = vsel %vm681, %v525, 0
        %v937 = vsel %vm681, %v526, 0
        %v939 = vsel %vm681, %v527, 0
        %v941 = vsel %vm681, %v528, 0
        %v943 = vsel %vm681, %v529, 0
        %v945 = vsel %vm681, %v530, 0
        %v947 = vsel %vm681, %v531, 0
        %v949 = vsel %vm681, %v532, 0
        %v951 = vsel %vm681, %v533, 0
        %v953 = vsel %vm681, %v534, 0
        %v955 = vsel %vm681, %v535, 0
        %v958 = vsel %vm681, %v922, 0
        %v961 = vand.u32 %v443, %v739
        %963 = vmatprep.subr.bf16.mxu0 0
        %964 = vmatpush1.bf16.msra.mxu0 %v961
        %965 = vmatprep.subr.bf16.mxu0 0
        %966 = vmatpush1.bf16.msra.mxu0 0
        %967 = vmatprep.subr.bf16.mxu0 0
        %968 = vmatpush1.bf16.msra.mxu0 0
        %969 = vmatprep.subr.bf16.mxu0 0
        %970 = vmatpush1.bf16.msra.mxu0 0
        %971 = vmatprep.subr.bf16.mxu0 0
        %972 = vmatpush1.bf16.msra.mxu0 0
        %973 = vmatprep.subr.bf16.mxu0 0
        %974 = vmatpush1.bf16.msra.mxu0 0
        %975 = vmatprep.subr.bf16.mxu0 0
        %976 = vmatpush1.bf16.msra.mxu0 0
        %977 = vmatprep.subr.bf16.mxu0 0
        %978 = vmatpush1.bf16.msra.mxu0 0
        %979 = vmatprep.subr.bf16.mxu0 0
        %980 = vmatpush1.bf16.msra.mxu0 0
        %981 = vmatprep.subr.bf16.mxu0 0
        %982 = vmatpush1.bf16.msra.mxu0 0
        %983 = vmatprep.subr.bf16.mxu0 0
        %984 = vmatpush1.bf16.msra.mxu0 0
        %985 = vmatprep.subr.bf16.mxu0 0
        %986 = vmatpush1.bf16.msra.mxu0 0
        %987 = vmatprep.subr.bf16.mxu0 0
        %988 = vmatpush1.bf16.msra.mxu0 0
        %989 = vmatprep.subr.bf16.mxu0 0
        %990 = vmatpush1.bf16.msra.mxu0 0
        %991 = vmatprep.subr.bf16.mxu0 0
        %992 = vmatpush1.bf16.msra.mxu0 0
        %993 = vmatprep.subr.bf16.mxu0 0
        %994 = vmatpush1.bf16.msra.mxu0 0
        %995 = vmatprep.mubr.bf16.mxu0 0
        %996 = vmatmul.mubr.bf16.gmra.mrb[0].mxu0 %v923
        %v997 = vpop.f32.mrb[0].mxu0
        %v998 = vadd.f32 %v778, %v997
        %v999 = vpop.f32.mrb[0].mxu0
        %v1000 = vpop.f32.mrb[0].mxu0
        %v1001 = vadd.f32 %v781, %v1000
        %v1002 = vpop.f32.mrb[0].mxu0
        %1003 = vmatprep.mubr.bf16.mxu0 0
        %1004 = vmatmul.mubr.bf16.gmra.mrb[0].mxu0 %v925
        %v1005 = vpop.f32.mrb[0].mxu0
        %v1006 = vadd.f32 %v786, %v1005
        %v1007 = vpop.f32.mrb[0].mxu0
        %v1008 = vpop.f32.mrb[0].mxu0
        %v1009 = vadd.f32 %v789, %v1008
        %v1010 = vpop.f32.mrb[0].mxu0
        %1011 = vmatprep.mubr.bf16.mxu0 0
        %1012 = vmatmul.mubr.bf16.gmra.mrb[0].mxu0 %v927
        %v1013 = vpop.f32.mrb[0].mxu0
        %v1014 = vadd.f32 %v794, %v1013
        %v1015 = vpop.f32.mrb[0].mxu0
        %v1016 = vpop.f32.mrb[0].mxu0
        %v1017 = vadd.f32 %v797, %v1016
        %v1018 = vpop.f32.mrb[0].mxu0
        %1019 = vmatprep.mubr.bf16.mxu0 0
        %1020 = vmatmul.mubr.bf16.gmra.mrb[0].mxu0 %v929
        %v1021 = vpop.f32.mrb[0].mxu0
        %v1022 = vadd.f32 %v802, %v1021
        %v1023 = vpop.f32.mrb[0].mxu0
        %v1024 = vpop.f32.mrb[0].mxu0
        %v1025 = vadd.f32 %v805, %v1024
        %v1026 = vpop.f32.mrb[0].mxu0
        %1027 = vmatprep.mubr.bf16.mxu0 0
        %1028 = vmatmul.mubr.bf16.gmra.mrb[0].mxu0 %v931
        %v1029 = vpop.f32.mrb[0].mxu0
        %v1030 = vadd.f32 %v810, %v1029
        %v1031 = vpop.f32.mrb[0].mxu0
        %v1032 = vpop.f32.mrb[0].mxu0
        %v1033 = vadd.f32 %v813, %v1032
        %v1034 = vpop.f32.mrb[0].mxu0
        %1035 = vmatprep.mubr.bf16.mxu0 0
        %1036 = vmatmul.mubr.bf16.gmra.mrb[0].mxu0 %v933
        %v1037 = vpop.f32.mrb[0].mxu0
        %v1038 = vadd.f32 %v818, %v1037
        %v1039 = vpop.f32.mrb[0].mxu0
        %v1040 = vpop.f32.mrb[0].mxu0
        %v1041 = vadd.f32 %v821, %v1040
        %v1042 = vpop.f32.mrb[0].mxu0
        %1043 = vmatprep.mubr.bf16.mxu0 0
        %1044 = vmatmul.mubr.bf16.gmra.mrb[0].mxu0 %v935
        %v1045 = vpop.f32.mrb[0].mxu0
        %v1046 = vadd.f32 %v826, %v1045
        %v1047 = vpop.f32.mrb[0].mxu0
        %v1048 = vpop.f32.mrb[0].mxu0
        %v1049 = vadd.f32 %v829, %v1048
        %v1050 = vpop.f32.mrb[0].mxu0
        %1051 = vmatprep.mubr.bf16.mxu0 0
        %1052 = vmatmul.mubr.bf16.gmra.mrb[0].mxu0 %v937
        %v1053 = vpop.f32.mrb[0].mxu0
        %v1054 = vadd.f32 %v834, %v1053
        %v1055 = vpop.f32.mrb[0].mxu0
        %v1056 = vpop.f32.mrb[0].mxu0
        %v1057 = vadd.f32 %v837, %v1056
        %v1058 = vpop.f32.mrb[0].mxu0
        %1059 = vmatprep.mubr.bf16.mxu0 0
        %1060 = vmatmul.mubr.bf16.gmra.mrb[0].mxu0 %v939
        %v1061 = vpop.f32.mrb[0].mxu0
        %v1062 = vadd.f32 %v842, %v1061
        %v1063 = vpop.f32.mrb[0].mxu0
        %v1064 = vpop.f32.mrb[0].mxu0
        %v1065 = vadd.f32 %v845, %v1064
        %v1066 = vpop.f32.mrb[0].mxu0
        %1067 = vmatprep.mubr.bf16.mxu0 0
        %1068 = vmatmul.mubr.bf16.gmra.mrb[0].mxu0 %v941
        %v1069 = vpop.f32.mrb[0].mxu0
        %v1070 = vadd.f32 %v850, %v1069
        %v1071 = vpop.f32.mrb[0].mxu0
        %v1072 = vpop.f32.mrb[0].mxu0
        %v1073 = vadd.f32 %v853, %v1072
        %v1074 = vpop.f32.mrb[0].mxu0
        %1075 = vmatprep.mubr.bf16.mxu0 0
        %1076 = vmatmul.mubr.bf16.gmra.mrb[0].mxu0 %v943
        %v1077 = vpop.f32.mrb[0].mxu0
        %v1078 = vadd.f32 %v858, %v1077
        %v1079 = vpop.f32.mrb[0].mxu0
        %v1080 = vpop.f32.mrb[0].mxu0
        %v1081 = vadd.f32 %v861, %v1080
        %v1082 = vpop.f32.mrb[0].mxu0
        %1083 = vmatprep.mubr.bf16.mxu0 0
        %1084 = vmatmul.mubr.bf16.gmra.mrb[0].mxu0 %v945
        %v1085 = vpop.f32.mrb[0].mxu0
        %v1086 = vadd.f32 %v866, %v1085
        %v1087 = vpop.f32.mrb[0].mxu0
        %v1088 = vpop.f32.mrb[0].mxu0
        %v1089 = vadd.f32 %v869, %v1088
        %v1090 = vpop.f32.mrb[0].mxu0
        %1091 = vmatprep.mubr.bf16.mxu0 0
        %1092 = vmatmul.mubr.bf16.gmra.mrb[0].mxu0 %v947
        %v1093 = vpop.f32.mrb[0].mxu0
        %v1094 = vadd.f32 %v874, %v1093
        %v1095 = vpop.f32.mrb[0].mxu0
        %v1096 = vpop.f32.mrb[0].mxu0
        %v1097 = vadd.f32 %v877, %v1096
        %v1098 = vpop.f32.mrb[0].mxu0
        %1099 = vmatprep.mubr.bf16.mxu0 0
        %1100 = vmatmul.mubr.bf16.gmra.mrb[0].mxu0 %v949
        %v1101 = vpop.f32.mrb[0].mxu0
        %v1102 = vadd.f32 %v882, %v1101
        %v1103 = vpop.f32.mrb[0].mxu0
        %v1104 = vpop.f32.mrb[0].mxu0
        %v1105 = vadd.f32 %v885, %v1104
        %v1106 = vpop.f32.mrb[0].mxu0
        %1107 = vmatprep.mubr.bf16.mxu0 0
        %1108 = vmatmul.mubr.bf16.gmra.mrb[0].mxu0 %v951
        %v1109 = vpop.f32.mrb[0].mxu0
        %v1110 = vadd.f32 %v890, %v1109
        %v1111 = vpop.f32.mrb[0].mxu0
        %v1112 = vpop.f32.mrb[0].mxu0
        %v1113 = vadd.f32 %v893, %v1112
        %v1114 = vpop.f32.mrb[0].mxu0
        %1115 = vmatprep.mubr.bf16.mxu0 0
        %1116 = vmatmul.mubr.bf16.gmra.mrb[0].mxu0 %v953
        %v1117 = vpop.f32.mrb[0].mxu0
        %v1118 = vadd.f32 %v898, %v1117
        %v1119 = vpop.f32.mrb[0].mxu0
        %v1120 = vpop.f32.mrb[0].mxu0
        %v1121 = vadd.f32 %v901, %v1120
        %v1122 = vpop.f32.mrb[0].mxu0
        %1123 = vmatprep.mubr.bf16.mxu0 0
        %1124 = vmatmul.mubr.bf16.gmra.mrb[0].mxu0 %v955
        %v1125 = vpop.f32.mrb[0].mxu0
        %v1126 = vadd.f32 %v906, %v1125
        %v1127 = vpop.f32.mrb[0].mxu0
        %v1128 = vpop.f32.mrb[0].mxu0
        %v1129 = vadd.f32 %v909, %v1128
        %v1130 = vpop.f32.mrb[0].mxu0
        %1131 = vmatprep.mubr.bf16.mxu0 0
        %1132 = vmatmul.mubr.bf16.gmra.mrb[0].mxu0 %v958
        %v1133 = vpop.f32.mrb[0].mxu0
        %v1134 = vadd.f32 %v914, %v1133
        %v1135 = vpop.f32.mrb[0].mxu0
        %v1136 = vpop.f32.mrb[0].mxu0
        %v1137 = vadd.f32 %v917, %v1136
        %v1138 = vpop.f32.mrb[0].mxu0
        %1139 = vdwg.mxu0
        %v1140 = vld [vmem:[%s383] sm:$0xe]
        %s1141 = scalar_lea.vmem %s1, 4
        %v1142 = vld [vmem:[%s1141] sm:$0x3]
        %v1144 = vunpack.c.l.b16 %v1140
        %v1145 = vpack.c.b16 %v484, %v1144
        %vm1146 = vcmask 1046528
        %v1147 = vrot.slane %v1145, 1
        %v1148 = vrot.slane %v520, 1
        %v1149 = vsel %vm1146, %v1147, %v1148
        %v1150 = vrot.slane %v521, 1
        %v1151 = vsel %vm1146, %v1148, %v1150
        %v1152 = vrot.slane %v522, 1
        %v1153 = vsel %vm1146, %v1150, %v1152
        %v1154 = vrot.slane %v523, 1
        %v1155 = vsel %vm1146, %v1152, %v1154
        %v1156 = vrot.slane %v524, 1
        %v1157 = vsel %vm1146, %v1154, %v1156
        %v1158 = vrot.slane %v525, 1
        %v1159 = vsel %vm1146, %v1156, %v1158
        %v1160 = vrot.slane %v526, 1
        %v1161 = vsel %vm1146, %v1158, %v1160
        %v1162 = vrot.slane %v527, 1
        %v1163 = vsel %vm1146, %v1160, %v1162
        %v1164 = vrot.slane %v528, 1
        %v1165 = vsel %vm1146, %v1162, %v1164
        %v1166 = vrot.slane %v529, 1
        %v1167 = vsel %vm1146, %v1164, %v1166
        %v1168 = vrot.slane %v530, 1
        %v1169 = vsel %vm1146, %v1166, %v1168
        %v1170 = vrot.slane %v531, 1
        %v1171 = vsel %vm1146, %v1168, %v1170
        %v1172 = vrot.slane %v532, 1
        %v1173 = vsel %vm1146, %v1170, %v1172
        %v1174 = vrot.slane %v533, 1
        %v1175 = vsel %vm1146, %v1172, %v1174
        %v1176 = vrot.slane %v534, 1
        %v1177 = vsel %vm1146, %v1174, %v1176
        %v1178 = vrot.slane %v535, 1
        %v1179 = vsel %vm1146, %v1176, %v1178
        %v1180 = vrot.slane %v536, 1
        %v1181 = vsel %vm1146, %v1178, %v1180
        %v1183 = vsel %vm681, %v1149, 0
        %v1186 = vsel %vm681, %v1151, 0
        %v1189 = vsel %vm681, %v1153, 0
        %v1192 = vsel %vm681, %v1155, 0
        %v1195 = vsel %vm681, %v1157, 0
        %v1198 = vsel %vm681, %v1159, 0
        %v1201 = vsel %vm681, %v1161, 0
        %v1204 = vsel %vm681, %v1163, 0
        %v1207 = vsel %vm681, %v1165, 0
        %v1210 = vsel %vm681, %v1167, 0
        %v1213 = vsel %vm681, %v1169, 0
        %v1216 = vsel %vm681, %v1171, 0
        %v1219 = vsel %vm681, %v1173, 0
        %v1222 = vsel %vm681, %v1175, 0
        %v1225 = vsel %vm681, %v1177, 0
        %v1228 = vsel %vm681, %v1179, 0
        %v1231 = vsel %vm681, %v1181, 0
        %v1234 = vsel %vm681, %v1180, 0
        %v1237 = vand.u32 %v1142, %v739
        %1239 = vmatprep.subr.bf16.mxu0 0
        %1240 = vmatpush1.bf16.msra.mxu0 %v1237
        %1241 = vmatprep.subr.bf16.mxu0 0
        %1242 = vmatpush1.bf16.msra.mxu0 0
        %1243 = vmatprep.subr.bf16.mxu0 0
        %1244 = vmatpush1.bf16.msra.mxu0 0
        %1245 = vmatprep.subr.bf16.mxu0 0
        %1246 = vmatpush1.bf16.msra.mxu0 0
        %1247 = vmatprep.subr.bf16.mxu0 0
        %1248 = vmatpush1.bf16.msra.mxu0 0
        %1249 = vmatprep.subr.bf16.mxu0 0
        %1250 = vmatpush1.bf16.msra.mxu0 0
        %1251 = vmatprep.subr.bf16.mxu0 0
        %1252 = vmatpush1.bf16.msra.mxu0 0
        %1253 = vmatprep.subr.bf16.mxu0 0
        %1254 = vmatpush1.bf16.msra.mxu0 0
        %1255 = vmatprep.subr.bf16.mxu0 0
        %1256 = vmatpush1.bf16.msra.mxu0 0
        %1257 = vmatprep.subr.bf16.mxu0 0
        %1258 = vmatpush1.bf16.msra.mxu0 0
        %1259 = vmatprep.subr.bf16.mxu0 0
        %1260 = vmatpush1.bf16.msra.mxu0 0
        %1261 = vmatprep.subr.bf16.mxu0 0
        %1262 = vmatpush1.bf16.msra.mxu0 0
        %1263 = vmatprep.subr.bf16.mxu0 0
        %1264 = vmatpush1.bf16.msra.mxu0 0
        %1265 = vmatprep.subr.bf16.mxu0 0
        %1266 = vmatpush1.bf16.msra.mxu0 0
        %1267 = vmatprep.subr.bf16.mxu0 0
        %1268 = vmatpush1.bf16.msra.mxu0 0
        %1269 = vmatprep.subr.bf16.mxu0 0
        %1270 = vmatpush1.bf16.msra.mxu0 0
        %1271 = vmatprep.mubr.bf16.mxu0 0
        %1272 = vmatmul.mubr.bf16.gmra.mrb[0].mxu0 %v1183
        %v1273 = vpop.f32.mrb[0].mxu0
        %v1274 = vadd.f32 0.0, %v1273
        %v1275 = vpop.f32.mrb[0].mxu0
        %v1276 = vpop.f32.mrb[0].mxu0
        %v1277 = vadd.f32 0.0, %v1276
        %v1278 = vpop.f32.mrb[0].mxu0
        %1279 = vmatprep.mubr.bf16.mxu0 0
        %1280 = vmatmul.mubr.bf16.gmra.mrb[0].mxu0 %v1186
        %v1281 = vpop.f32.mrb[0].mxu0
        %v1282 = vadd.f32 0.0, %v1281
        %v1283 = vpop.f32.mrb[0].mxu0
        %v1284 = vpop.f32.mrb[0].mxu0
        %v1285 = vadd.f32 0.0, %v1284
        %v1286 = vpop.f32.mrb[0].mxu0
        %1287 = vmatprep.mubr.bf16.mxu0 0
        %1288 = vmatmul.mubr.bf16.gmra.mrb[0].mxu0 %v1189
        %v1289 = vpop.f32.mrb[0].mxu0
        %v1290 = vadd.f32 0.0, %v1289
        %v1291 = vpop.f32.mrb[0].mxu0
        %v1292 = vpop.f32.mrb[0].mxu0
        %v1293 = vadd.f32 0.0, %v1292
        %v1294 = vpop.f32.mrb[0].mxu0
        %1295 = vmatprep.mubr.bf16.mxu0 0
        %1296 = vmatmul.mubr.bf16.gmra.mrb[0].mxu0 %v1192
        %v1297 = vpop.f32.mrb[0].mxu0
        %v1298 = vadd.f32 0.0, %v1297
        %v1299 = vpop.f32.mrb[0].mxu0
        %v1300 = vpop.f32.mrb[0].mxu0
        %v1301 = vadd.f32 0.0, %v1300
        %v1302 = vpop.f32.mrb[0].mxu0
        %1303 = vmatprep.mubr.bf16.mxu0 0
        %1304 = vmatmul.mubr.bf16.gmra.mrb[0].mxu0 %v1195
        %v1305 = vpop.f32.mrb[0].mxu0
        %v1306 = vadd.f32 0.0, %v1305
        %v1307 = vpop.f32.mrb[0].mxu0
        %v1308 = vpop.f32.mrb[0].mxu0
        %v1309 = vadd.f32 0.0, %v1308
        %v1310 = vpop.f32.mrb[0].mxu0
        %1311 = vmatprep.mubr.bf16.mxu0 0
        %1312 = vmatmul.mubr.bf16.gmra.mrb[0].mxu0 %v1198
        %v1313 = vpop.f32.mrb[0].mxu0
        %v1314 = vadd.f32 0.0, %v1313
        %v1315 = vpop.f32.mrb[0].mxu0
        %v1316 = vpop.f32.mrb[0].mxu0
        %v1317 = vadd.f32 0.0, %v1316
        %v1318 = vpop.f32.mrb[0].mxu0
        %1319 = vmatprep.mubr.bf16.mxu0 0
        %1320 = vmatmul.mubr.bf16.gmra.mrb[0].mxu0 %v1201
        %v1321 = vpop.f32.mrb[0].mxu0
        %v1322 = vadd.f32 0.0, %v1321
        %v1323 = vpop.f32.mrb[0].mxu0
        %v1324 = vpop.f32.mrb[0].mxu0
        %v1325 = vadd.f32 0.0, %v1324
        %v1326 = vpop.f32.mrb[0].mxu0
        %1327 = vmatprep.mubr.bf16.mxu0 0
        %1328 = vmatmul.mubr.bf16.gmra.mrb[0].mxu0 %v1204
        %v1329 = vpop.f32.mrb[0].mxu0
        %v1330 = vadd.f32 0.0, %v1329
        %v1331 = vpop.f32.mrb[0].mxu0
        %v1332 = vpop.f32.mrb[0].mxu0
        %v1333 = vadd.f32 0.0, %v1332
        %v1334 = vpop.f32.mrb[0].mxu0
        %1335 = vmatprep.mubr.bf16.mxu0 0
        %1336 = vmatmul.mubr.bf16.gmra.mrb[0].mxu0 %v1207
        %v1337 = vpop.f32.mrb[0].mxu0
        %v1338 = vadd.f32 0.0, %v1337
        %v1339 = vpop.f32.mrb[0].mxu0
        %v1340 = vpop.f32.mrb[0].mxu0
        %v1341 = vadd.f32 0.0, %v1340
        %v1342 = vpop.f32.mrb[0].mxu0
        %1343 = vmatprep.mubr.bf16.mxu0 0
        %1344 = vmatmul.mubr.bf16.gmra.mrb[0].mxu0 %v1210
        %v1345 = vpop.f32.mrb[0].mxu0
        %v1346 = vadd.f32 0.0, %v1345
        %v1347 = vpop.f32.mrb[0].mxu0
        %v1348 = vpop.f32.mrb[0].mxu0
        %v1349 = vadd.f32 0.0, %v1348
        %v1350 = vpop.f32.mrb[0].mxu0
        %1351 = vmatprep.mubr.bf16.mxu0 0
        %1352 = vmatmul.mubr.bf16.gmra.mrb[0].mxu0 %v1213
        %v1353 = vpop.f32.mrb[0].mxu0
        %v1354 = vadd.f32 0.0, %v1353
        %v1355 = vpop.f32.mrb[0].mxu0
        %v1356 = vpop.f32.mrb[0].mxu0
        %v1357 = vadd.f32 0.0, %v1356
        %v1358 = vpop.f32.mrb[0].mxu0
        %1359 = vmatprep.mubr.bf16.mxu0 0
        %1360 = vmatmul.mubr.bf16.gmra.mrb[0].mxu0 %v1216
        %v1361 = vpop.f32.mrb[0].mxu0
        %v1362 = vadd.f32 0.0, %v1361
        %v1363 = vpop.f32.mrb[0].mxu0
        %v1364 = vpop.f32.mrb[0].mxu0
        %v1365 = vadd.f32 0.0, %v1364
        %v1366 = vpop.f32.mrb[0].mxu0
        %1367 = vmatprep.mubr.bf16.mxu0 0
        %1368 = vmatmul.mubr.bf16.gmra.mrb[0].mxu0 %v1219
        %v1369 = vpop.f32.mrb[0].mxu0
        %v1370 = vadd.f32 0.0, %v1369
        %v1371 = vpop.f32.mrb[0].mxu0
        %v1372 = vpop.f32.mrb[0].mxu0
        %v1373 = vadd.f32 0.0, %v1372
        %v1374 = vpop.f32.mrb[0].mxu0
        %1375 = vmatprep.mubr.bf16.mxu0 0
        %1376 = vmatmul.mubr.bf16.gmra.mrb[0].mxu0 %v1222
        %v1377 = vpop.f32.mrb[0].mxu0
        %v1378 = vadd.f32 0.0, %v1377
        %v1379 = vpop.f32.mrb[0].mxu0
        %v1380 = vpop.f32.mrb[0].mxu0
        %v1381 = vadd.f32 0.0, %v1380
        %v1382 = vpop.f32.mrb[0].mxu0
        %1383 = vmatprep.mubr.bf16.mxu0 0
        %1384 = vmatmul.mubr.bf16.gmra.mrb[0].mxu0 %v1225
        %v1385 = vpop.f32.mrb[0].mxu0
        %v1386 = vadd.f32 0.0, %v1385
        %v1387 = vpop.f32.mrb[0].mxu0
        %v1388 = vpop.f32.mrb[0].mxu0
        %v1389 = vadd.f32 0.0, %v1388
        %v1390 = vpop.f32.mrb[0].mxu0
        %1391 = vmatprep.mubr.bf16.mxu0 0
        %1392 = vmatmul.mubr.bf16.gmra.mrb[0].mxu0 %v1228
        %v1393 = vpop.f32.mrb[0].mxu0
        %v1394 = vadd.f32 0.0, %v1393
        %v1395 = vpop.f32.mrb[0].mxu0
        %v1396 = vpop.f32.mrb[0].mxu0
        %v1397 = vadd.f32 0.0, %v1396
        %v1398 = vpop.f32.mrb[0].mxu0
        %1399 = vmatprep.mubr.bf16.mxu0 0
        %1400 = vmatmul.mubr.bf16.gmra.mrb[0].mxu0 %v1231
        %v1401 = vpop.f32.mrb[0].mxu0
        %v1402 = vadd.f32 0.0, %v1401
        %v1403 = vpop.f32.mrb[0].mxu0
        %v1404 = vpop.f32.mrb[0].mxu0
        %v1405 = vadd.f32 0.0, %v1404
        %v1406 = vpop.f32.mrb[0].mxu0
        %1407 = vmatprep.mubr.bf16.mxu0 0
        %1408 = vmatmul.mubr.bf16.gmra.mrb[0].mxu0 %v1234
        %v1409 = vpop.f32.mrb[0].mxu0
        %v1410 = vadd.f32 0.0, %v1409
        %v1411 = vpop.f32.mrb[0].mxu0
        %v1412 = vpop.f32.mrb[0].mxu0
        %v1413 = vadd.f32 0.0, %v1412
        %v1414 = vpop.f32.mrb[0].mxu0
        %1415 = vdwg.mxu0
        %v1416 = vadd.f32 %v998, %v1274
        %v1417 = vadd.f32 %v1001, %v1277
        %v1418 = vadd.f32 %v1006, %v1282
        %v1419 = vadd.f32 %v1009, %v1285
        %v1420 = vadd.f32 %v1014, %v1290
        %v1421 = vadd.f32 %v1017, %v1293
        %v1422 = vadd.f32 %v1022, %v1298
        %v1423 = vadd.f32 %v1025, %v1301
        %v1424 = vadd.f32 %v1030, %v1306
        %v1425 = vadd.f32 %v1033, %v1309
        %v1426 = vadd.f32 %v1038, %v1314
        %v1427 = vadd.f32 %v1041, %v1317
        %v1428 = vadd.f32 %v1046, %v1322
        %v1429 = vadd.f32 %v1049, %v1325
        %v1430 = vadd.f32 %v1054, %v1330
        %v1431 = vadd.f32 %v1057, %v1333
        %v1432 = vadd.f32 %v1062, %v1338
        %v1433 = vadd.f32 %v1065, %v1341
        %v1434 = vadd.f32 %v1070, %v1346
        %v1435 = vadd.f32 %v1073, %v1349
        %v1436 = vadd.f32 %v1078, %v1354
        %v1437 = vadd.f32 %v1081, %v1357
        %v1438 = vadd.f32 %v1086, %v1362
        %v1439 = vadd.f32 %v1089, %v1365
        %v1440 = vadd.f32 %v1094, %v1370
        %v1441 = vadd.f32 %v1097, %v1373
        %v1442 = vadd.f32 %v1102, %v1378
        %v1443 = vadd.f32 %v1105, %v1381
        %v1444 = vadd.f32 %v1110, %v1386
        %v1445 = vadd.f32 %v1113, %v1389
        %v1446 = vadd.f32 %v1118, %v1394
        %v1447 = vadd.f32 %v1121, %v1397
        %v1448 = vadd.f32 %v1126, %v1402
        %v1449 = vadd.f32 %v1129, %v1405
        %v1450 = vadd.f32 %v1134, %v1410
        %v1451 = vadd.f32 %v1137, %v1413
        %v1452 = vld [vmem:[%s383 + $0x8] sm:$0xe]
        %v1453 = vld [vmem:[%s383 + $0xc] sm:$0xf]
        %v1454 = vld [vmem:[%s383 + $0x10] sm:$0xf]
        %v1455 = vld [vmem:[%s383 + $0x14] sm:$0xf]
        %v1456 = vld [vmem:[%s383 + $0x18] sm:$0xf]
        %v1457 = vld [vmem:[%s383 + $0x1c] sm:$0xf]
        %v1458 = vld [vmem:[%s383 + $0x20] sm:$0xf]
        %v1459 = vld [vmem:[%s383 + $0x24] sm:$0xf]
        %v1460 = vld [vmem:[%s383 + $0x28] sm:$0xf]
        %v1461 = vld [vmem:[%s383 + $0x2c] sm:$0xf]
        %v1462 = vld [vmem:[%s383 + $0x30] sm:$0xf]
        %v1463 = vld [vmem:[%s383 + $0x34] sm:$0xf]
        %v1464 = vld [vmem:[%s383 + $0x38] sm:$0xf]
        %v1465 = vld [vmem:[%s383 + $0x3c] sm:$0xf]
        %v1466 = vld [vmem:[%s383 + $0x40] sm:$0xf]
        %v1467 = vld [vmem:[%s383 + $0x44] sm:$0xf]
        %v1468 = vld [vmem:[%s383 + $0x48] sm:$0xf]
        %v1469 = vld [vmem:[%s383 + $0x4c] sm:$0xf]
        %v1470 = vld [vmem:[%s383 + $0x50] sm:$0xf]
        %v1471 = vld [vmem:[%s383 + $0x54] sm:$0xf]
        %v1472 = vld [vmem:[%s383 + $0x58] sm:$0xf]
        %v1473 = vld [vmem:[%s383 + $0x5c] sm:$0xf]
        %v1474 = vld [vmem:[%s383 + $0x60] sm:$0xf]
        %v1475 = vld [vmem:[%s383 + $0x64] sm:$0xf]
        %v1476 = vld [vmem:[%s383 + $0x68] sm:$0xf]
        %v1477 = vld [vmem:[%s383 + $0x6c] sm:$0xf]
        %v1478 = vld [vmem:[%s383 + $0x70] sm:$0xf]
        %v1479 = vld [vmem:[%s383 + $0x74] sm:$0xf]
        %v1480 = vld [vmem:[%s383 + $0x78] sm:$0xf]
        %v1481 = vld [vmem:[%s383 + $0x7c] sm:$0xf]
        %v1482 = vld [vmem:[%s383 + $0x80] sm:$0xf]
        %v1483 = vld [vmem:[%s383 + $0x84] sm:$0xf]
        %v1484 = vld [vmem:[%s383 + $0x88] sm:$0xf]
        %v1485 = vld [vmem:[%s383 + $0x8c] sm:$0xf]
        %v1486 = vld [vmem:[%s383 + $0x90] sm:$0xf]
        %v1487 = vld [vmem:[%s383 + $0x94] sm:$0xf]
        %s1488 = scalar_lea.vmem %s1, 6
        %v1489 = vld [vmem:[%s1488] sm:$0x3]
        %v1526 = vunpack.c.l.b16 %v1452
        %v1527 = vunpack.c.l.b16 %v1453
        %v1528 = vunpack.c.l.b16 %v1454
        %v1529 = vunpack.c.l.b16 %v1455
        %v1530 = vunpack.c.l.b16 %v1456
        %v1531 = vunpack.c.l.b16 %v1457
        %v1532 = vunpack.c.l.b16 %v1458
        %v1533 = vunpack.c.l.b16 %v1459
        %v1534 = vunpack.c.l.b16 %v1460
        %v1535 = vunpack.c.l.b16 %v1461
        %v1536 = vunpack.c.l.b16 %v1462
        %v1537 = vunpack.c.l.b16 %v1463
        %v1538 = vunpack.c.l.b16 %v1464
        %v1539 = vunpack.c.l.b16 %v1465
        %v1540 = vunpack.c.l.b16 %v1466
        %v1541 = vunpack.c.l.b16 %v1467
        %v1542 = vunpack.c.l.b16 %v1468
        %v1543 = vunpack.c.l.b16 %v1469
        %v1544 = vunpack.c.l.b16 %v1470
        %v1545 = vunpack.c.l.b16 %v1471
        %v1546 = vunpack.c.l.b16 %v1472
        %v1547 = vunpack.c.l.b16 %v1473
        %v1548 = vunpack.c.l.b16 %v1474
        %v1549 = vunpack.c.l.b16 %v1475
        %v1550 = vunpack.c.l.b16 %v1476
        %v1551 = vunpack.c.l.b16 %v1477
        %v1552 = vunpack.c.l.b16 %v1478
        %v1553 = vunpack.c.l.b16 %v1479
        %v1554 = vunpack.c.l.b16 %v1480
        %v1555 = vunpack.c.l.b16 %v1481
        %v1556 = vunpack.c.l.b16 %v1482
        %v1557 = vunpack.c.l.b16 %v1483
        %v1558 = vunpack.c.l.b16 %v1484
        %v1559 = vunpack.c.l.b16 %v1485
        %v1560 = vunpack.c.l.b16 %v1486
        %v1561 = vunpack.c.l.b16 %v1487
        %v1562 = vpack.c.b16 %v1527, %v1526
        %v1563 = vpack.c.b16 %v1529, %v1528
        %v1564 = vpack.c.b16 %v1531, %v1530
        %v1565 = vpack.c.b16 %v1533, %v1532
        %v1566 = vpack.c.b16 %v1535, %v1534
        %v1567 = vpack.c.b16 %v1537, %v1536
        %v1568 = vpack.c.b16 %v1539, %v1538
        %v1569 = vpack.c.b16 %v1541, %v1540
        %v1570 = vpack.c.b16 %v1543, %v1542
        %v1571 = vpack.c.b16 %v1545, %v1544
        %v1572 = vpack.c.b16 %v1547, %v1546
        %v1573 = vpack.c.b16 %v1549, %v1548
        %v1574 = vpack.c.b16 %v1551, %v1550
        %v1575 = vpack.c.b16 %v1553, %v1552
        %v1576 = vpack.c.b16 %v1555, %v1554
        %v1577 = vpack.c.b16 %v1557, %v1556
        %v1578 = vpack.c.b16 %v1559, %v1558
        %v1579 = vpack.c.b16 %v1561, %v1560
        %v1580 = vrot.slane %v1562, 1
        %v1581 = vrot.slane %v1563, 1
        %v1582 = vsel %vm1146, %v1580, %v1581
        %v1583 = vrot.slane %v1564, 1
        %v1584 = vsel %vm1146, %v1581, %v1583
        %v1585 = vrot.slane %v1565, 1
        %v1586 = vsel %vm1146, %v1583, %v1585
        %v1587 = vrot.slane %v1566, 1
        %v1588 = vsel %vm1146, %v1585, %v1587
        %v1589 = vrot.slane %v1567, 1
        %v1590 = vsel %vm1146, %v1587, %v1589
        %v1591 = vrot.slane %v1568, 1
        %v1592 = vsel %vm1146, %v1589, %v1591
        %v1593 = vrot.slane %v1569, 1
        %v1594 = vsel %vm1146, %v1591, %v1593
        %v1595 = vrot.slane %v1570, 1
        %v1596 = vsel %vm1146, %v1593, %v1595
        %v1597 = vrot.slane %v1571, 1
        %v1598 = vsel %vm1146, %v1595, %v1597
        %v1599 = vrot.slane %v1572, 1
        %v1600 = vsel %vm1146, %v1597, %v1599
        %v1601 = vrot.slane %v1573, 1
        %v1602 = vsel %vm1146, %v1599, %v1601
        %v1603 = vrot.slane %v1574, 1
        %v1604 = vsel %vm1146, %v1601, %v1603
        %v1605 = vrot.slane %v1575, 1
        %v1606 = vsel %vm1146, %v1603, %v1605
        %v1607 = vrot.slane %v1576, 1
        %v1608 = vsel %vm1146, %v1605, %v1607
        %v1609 = vrot.slane %v1577, 1
        %v1610 = vsel %vm1146, %v1607, %v1609
        %v1611 = vrot.slane %v1578, 1
        %v1612 = vsel %vm1146, %v1609, %v1611
        %v1613 = vrot.slane %v1579, 1
        %v1614 = vsel %vm1146, %v1611, %v1613
        %v1616 = vsel %vm681, %v1582, 0
        %v1619 = vsel %vm681, %v1584, 0
        %v1622 = vsel %vm681, %v1586, 0
        %v1625 = vsel %vm681, %v1588, 0
        %v1628 = vsel %vm681, %v1590, 0
        %v1631 = vsel %vm681, %v1592, 0
        %v1634 = vsel %vm681, %v1594, 0
        %v1637 = vsel %vm681, %v1596, 0
        %v1640 = vsel %vm681, %v1598, 0
        %v1643 = vsel %vm681, %v1600, 0
        %v1646 = vsel %vm681, %v1602, 0
        %v1649 = vsel %vm681, %v1604, 0
        %v1652 = vsel %vm681, %v1606, 0
        %v1655 = vsel %vm681, %v1608, 0
        %v1658 = vsel %vm681, %v1610, 0
        %v1661 = vsel %vm681, %v1612, 0
        %v1664 = vsel %vm681, %v1614, 0
        %v1667 = vsel %vm681, %v1613, 0
        %v1670 = vand.u32 %v1489, %v739
        %1672 = vmatprep.subr.bf16.mxu0 0
        %1673 = vmatpush1.bf16.msra.mxu0 %v1670
        %1674 = vmatprep.subr.bf16.mxu0 0
        %1675 = vmatpush1.bf16.msra.mxu0 0
        %1676 = vmatprep.subr.bf16.mxu0 0
        %1677 = vmatpush1.bf16.msra.mxu0 0
        %1678 = vmatprep.subr.bf16.mxu0 0
        %1679 = vmatpush1.bf16.msra.mxu0 0
        %1680 = vmatprep.subr.bf16.mxu0 0
        %1681 = vmatpush1.bf16.msra.mxu0 0
        %1682 = vmatprep.subr.bf16.mxu0 0
        %1683 = vmatpush1.bf16.msra.mxu0 0
        %1684 = vmatprep.subr.bf16.mxu0 0
        %1685 = vmatpush1.bf16.msra.mxu0 0
        %1686 = vmatprep.subr.bf16.mxu0 0
        %1687 = vmatpush1.bf16.msra.mxu0 0
        %1688 = vmatprep.subr.bf16.mxu0 0
        %1689 = vmatpush1.bf16.msra.mxu0 0
        %1690 = vmatprep.subr.bf16.mxu0 0
        %1691 = vmatpush1.bf16.msra.mxu0 0
        %1692 = vmatprep.subr.bf16.mxu0 0
        %1693 = vmatpush1.bf16.msra.mxu0 0
        %1694 = vmatprep.subr.bf16.mxu0 0
        %1695 = vmatpush1.bf16.msra.mxu0 0
        %1696 = vmatprep.subr.bf16.mxu0 0
        %1697 = vmatpush1.bf16.msra.mxu0 0
        %1698 = vmatprep.subr.bf16.mxu0 0
        %1699 = vmatpush1.bf16.msra.mxu0 0
        %1700 = vmatprep.subr.bf16.mxu0 0
        %1701 = vmatpush1.bf16.msra.mxu0 0
        %1702 = vmatprep.subr.bf16.mxu0 0
        %1703 = vmatpush1.bf16.msra.mxu0 0
        %1704 = vmatprep.mubr.bf16.mxu0 0
        %1705 = vmatmul.mubr.bf16.gmra.mrb[0].mxu0 %v1616
        %v1706 = vpop.f32.mrb[0].mxu0
        %v1707 = vadd.f32 0.0, %v1706
        %v1708 = vpop.f32.mrb[0].mxu0
        %v1709 = vpop.f32.mrb[0].mxu0
        %v1710 = vadd.f32 0.0, %v1709
        %v1711 = vpop.f32.mrb[0].mxu0
        %1712 = vmatprep.mubr.bf16.mxu0 0
        %1713 = vmatmul.mubr.bf16.gmra.mrb[0].mxu0 %v1619
        %v1714 = vpop.f32.mrb[0].mxu0
        %v1715 = vadd.f32 0.0, %v1714
        %v1716 = vpop.f32.mrb[0].mxu0
        %v1717 = vpop.f32.mrb[0].mxu0
        %v1718 = vadd.f32 0.0, %v1717
        %v1719 = vpop.f32.mrb[0].mxu0
        %1720 = vmatprep.mubr.bf16.mxu0 0
        %1721 = vmatmul.mubr.bf16.gmra.mrb[0].mxu0 %v1622
        %v1722 = vpop.f32.mrb[0].mxu0
        %v1723 = vadd.f32 0.0, %v1722
        %v1724 = vpop.f32.mrb[0].mxu0
        %v1725 = vpop.f32.mrb[0].mxu0
        %v1726 = vadd.f32 0.0, %v1725
        %v1727 = vpop.f32.mrb[0].mxu0
        %1728 = vmatprep.mubr.bf16.mxu0 0
        %1729 = vmatmul.mubr.bf16.gmra.mrb[0].mxu0 %v1625
        %v1730 = vpop.f32.mrb[0].mxu0
        %v1731 = vadd.f32 0.0, %v1730
        %v1732 = vpop.f32.mrb[0].mxu0
        %v1733 = vpop.f32.mrb[0].mxu0
        %v1734 = vadd.f32 0.0, %v1733
        %v1735 = vpop.f32.mrb[0].mxu0
        %1736 = vmatprep.mubr.bf16.mxu0 0
        %1737 = vmatmul.mubr.bf16.gmra.mrb[0].mxu0 %v1628
        %v1738 = vpop.f32.mrb[0].mxu0
        %v1739 = vadd.f32 0.0, %v1738
        %v1740 = vpop.f32.mrb[0].mxu0
        %v1741 = vpop.f32.mrb[0].mxu0
        %v1742 = vadd.f32 0.0, %v1741
        %v1743 = vpop.f32.mrb[0].mxu0
        %1744 = vmatprep.mubr.bf16.mxu0 0
        %1745 = vmatmul.mubr.bf16.gmra.mrb[0].mxu0 %v1631
        %v1746 = vpop.f32.mrb[0].mxu0
        %v1747 = vadd.f32 0.0, %v1746
        %v1748 = vpop.f32.mrb[0].mxu0
        %v1749 = vpop.f32.mrb[0].mxu0
        %v1750 = vadd.f32 0.0, %v1749
        %v1751 = vpop.f32.mrb[0].mxu0
        %1752 = vmatprep.mubr.bf16.mxu0 0
        %1753 = vmatmul.mubr.bf16.gmra.mrb[0].mxu0 %v1634
        %v1754 = vpop.f32.mrb[0].mxu0
        %v1755 = vadd.f32 0.0, %v1754
        %v1756 = vpop.f32.mrb[0].mxu0
        %v1757 = vpop.f32.mrb[0].mxu0
        %v1758 = vadd.f32 0.0, %v1757
        %v1759 = vpop.f32.mrb[0].mxu0
        %1760 = vmatprep.mubr.bf16.mxu0 0
        %1761 = vmatmul.mubr.bf16.gmra.mrb[0].mxu0 %v1637
        %v1762 = vpop.f32.mrb[0].mxu0
        %v1763 = vadd.f32 0.0, %v1762
        %v1764 = vpop.f32.mrb[0].mxu0
        %v1765 = vpop.f32.mrb[0].mxu0
        %v1766 = vadd.f32 0.0, %v1765
        %v1767 = vpop.f32.mrb[0].mxu0
        %1768 = vmatprep.mubr.bf16.mxu0 0
        %1769 = vmatmul.mubr.bf16.gmra.mrb[0].mxu0 %v1640
        %v1770 = vpop.f32.mrb[0].mxu0
        %v1771 = vadd.f32 0.0, %v1770
        %v1772 = vpop.f32.mrb[0].mxu0
        %v1773 = vpop.f32.mrb[0].mxu0
        %v1774 = vadd.f32 0.0, %v1773
        %v1775 = vpop.f32.mrb[0].mxu0
        %1776 = vmatprep.mubr.bf16.mxu0 0
        %1777 = vmatmul.mubr.bf16.gmra.mrb[0].mxu0 %v1643
        %v1778 = vpop.f32.mrb[0].mxu0
        %v1779 = vadd.f32 0.0, %v1778
        %v1780 = vpop.f32.mrb[0].mxu0
        %v1781 = vpop.f32.mrb[0].mxu0
        %v1782 = vadd.f32 0.0, %v1781
        %v1783 = vpop.f32.mrb[0].mxu0
        %1784 = vmatprep.mubr.bf16.mxu0 0
        %1785 = vmatmul.mubr.bf16.gmra.mrb[0].mxu0 %v1646
        %v1786 = vpop.f32.mrb[0].mxu0
        %v1787 = vadd.f32 0.0, %v1786
        %v1788 = vpop.f32.mrb[0].mxu0
        %v1789 = vpop.f32.mrb[0].mxu0
        %v1790 = vadd.f32 0.0, %v1789
        %v1791 = vpop.f32.mrb[0].mxu0
        %1792 = vmatprep.mubr.bf16.mxu0 0
        %1793 = vmatmul.mubr.bf16.gmra.mrb[0].mxu0 %v1649
        %v1794 = vpop.f32.mrb[0].mxu0
        %v1795 = vadd.f32 0.0, %v1794
        %v1796 = vpop.f32.mrb[0].mxu0
        %v1797 = vpop.f32.mrb[0].mxu0
        %v1798 = vadd.f32 0.0, %v1797
        %v1799 = vpop.f32.mrb[0].mxu0
        %1800 = vmatprep.mubr.bf16.mxu0 0
        %1801 = vmatmul.mubr.bf16.gmra.mrb[0].mxu0 %v1652
        %v1802 = vpop.f32.mrb[0].mxu0
        %v1803 = vadd.f32 0.0, %v1802
        %v1804 = vpop.f32.mrb[0].mxu0
        %v1805 = vpop.f32.mrb[0].mxu0
        %v1806 = vadd.f32 0.0, %v1805
        %v1807 = vpop.f32.mrb[0].mxu0
        %1808 = vmatprep.mubr.bf16.mxu0 0
        %1809 = vmatmul.mubr.bf16.gmra.mrb[0].mxu0 %v1655
        %v1810 = vpop.f32.mrb[0].mxu0
        %v1811 = vadd.f32 0.0, %v1810
        %v1812 = vpop.f32.mrb[0].mxu0
        %v1813 = vpop.f32.mrb[0].mxu0
        %v1814 = vadd.f32 0.0, %v1813
        %v1815 = vpop.f32.mrb[0].mxu0
        %1816 = vmatprep.mubr.bf16.mxu0 0
        %1817 = vmatmul.mubr.bf16.gmra.mrb[0].mxu0 %v1658
        %v1818 = vpop.f32.mrb[0].mxu0
        %v1819 = vadd.f32 0.0, %v1818
        %v1820 = vpop.f32.mrb[0].mxu0
        %v1821 = vpop.f32.mrb[0].mxu0
        %v1822 = vadd.f32 0.0, %v1821
        %v1823 = vpop.f32.mrb[0].mxu0
        %1824 = vmatprep.mubr.bf16.mxu0 0
        %1825 = vmatmul.mubr.bf16.gmra.mrb[0].mxu0 %v1661
        %v1826 = vpop.f32.mrb[0].mxu0
        %v1827 = vadd.f32 0.0, %v1826
        %v1828 = vpop.f32.mrb[0].mxu0
        %v1829 = vpop.f32.mrb[0].mxu0
        %v1830 = vadd.f32 0.0, %v1829
        %v1831 = vpop.f32.mrb[0].mxu0
        %1832 = vmatprep.mubr.bf16.mxu0 0
        %1833 = vmatmul.mubr.bf16.gmra.mrb[0].mxu0 %v1664
        %v1834 = vpop.f32.mrb[0].mxu0
        %v1835 = vadd.f32 0.0, %v1834
        %v1836 = vpop.f32.mrb[0].mxu0
        %v1837 = vpop.f32.mrb[0].mxu0
        %v1838 = vadd.f32 0.0, %v1837
        %v1839 = vpop.f32.mrb[0].mxu0
        %1840 = vmatprep.mubr.bf16.mxu0 0
        %1841 = vmatmul.mubr.bf16.gmra.mrb[0].mxu0 %v1667
        %v1842 = vpop.f32.mrb[0].mxu0
        %v1843 = vadd.f32 0.0, %v1842
        %v1844 = vpop.f32.mrb[0].mxu0
        %v1845 = vpop.f32.mrb[0].mxu0
        %v1846 = vadd.f32 0.0, %v1845
        %v1847 = vpop.f32.mrb[0].mxu0
        %1848 = vdwg.mxu0
        %v1849 = vadd.f32 %v1416, %v1707
        %v1850 = vadd.f32 %v1417, %v1710
        %v1851 = vadd.f32 %v1418, %v1715
        %v1852 = vadd.f32 %v1419, %v1718
        %v1853 = vadd.f32 %v1420, %v1723
        %v1854 = vadd.f32 %v1421, %v1726
        %v1855 = vadd.f32 %v1422, %v1731
        %v1856 = vadd.f32 %v1423, %v1734
        %v1857 = vadd.f32 %v1424, %v1739
        %v1858 = vadd.f32 %v1425, %v1742
        %v1859 = vadd.f32 %v1426, %v1747
        %v1860 = vadd.f32 %v1427, %v1750
        %v1861 = vadd.f32 %v1428, %v1755
        %v1862 = vadd.f32 %v1429, %v1758
        %v1863 = vadd.f32 %v1430, %v1763
        %v1864 = vadd.f32 %v1431, %v1766
        %v1865 = vadd.f32 %v1432, %v1771
        %v1866 = vadd.f32 %v1433, %v1774
        %v1867 = vadd.f32 %v1434, %v1779
        %v1868 = vadd.f32 %v1435, %v1782
        %v1869 = vadd.f32 %v1436, %v1787
        %v1870 = vadd.f32 %v1437, %v1790
        %v1871 = vadd.f32 %v1438, %v1795
        %v1872 = vadd.f32 %v1439, %v1798
        %v1873 = vadd.f32 %v1440, %v1803
        %v1874 = vadd.f32 %v1441, %v1806
        %v1875 = vadd.f32 %v1442, %v1811
        %v1876 = vadd.f32 %v1443, %v1814
        %v1877 = vadd.f32 %v1444, %v1819
        %v1878 = vadd.f32 %v1445, %v1822
        %v1879 = vadd.f32 %v1446, %v1827
        %v1880 = vadd.f32 %v1447, %v1830
        %v1881 = vadd.f32 %v1448, %v1835
        %v1882 = vadd.f32 %v1449, %v1838
        %v1883 = vadd.f32 %v1450, %v1843
        %v1884 = vadd.f32 %v1451, %v1846
        %v1885 = vld [vmem:[%s383 + $0x8] sm:$0xe]
        %v1886 = vld [vmem:[%s383 + $0xc] sm:$0xf]
        %v1887 = vld [vmem:[%s383 + $0x10] sm:$0xf]
        %v1888 = vld [vmem:[%s383 + $0x14] sm:$0xf]
        %v1889 = vld [vmem:[%s383 + $0x18] sm:$0xf]
        %v1890 = vld [vmem:[%s383 + $0x1c] sm:$0xf]
        %v1891 = vld [vmem:[%s383 + $0x20] sm:$0xf]
        %v1892 = vld [vmem:[%s383 + $0x24] sm:$0xf]
        %v1893 = vld [vmem:[%s383 + $0x28] sm:$0xf]
        %v1894 = vld [vmem:[%s383 + $0x2c] sm:$0xf]
        %v1895 = vld [vmem:[%s383 + $0x30] sm:$0xf]
        %v1896 = vld [vmem:[%s383 + $0x34] sm:$0xf]
        %v1897 = vld [vmem:[%s383 + $0x38] sm:$0xf]
        %v1898 = vld [vmem:[%s383 + $0x3c] sm:$0xf]
        %v1899 = vld [vmem:[%s383 + $0x40] sm:$0xf]
        %v1900 = vld [vmem:[%s383 + $0x44] sm:$0xf]
        %v1901 = vld [vmem:[%s383 + $0x48] sm:$0xf]
        %v1902 = vld [vmem:[%s383 + $0x4c] sm:$0xf]
        %v1903 = vld [vmem:[%s383 + $0x50] sm:$0xf]
        %v1904 = vld [vmem:[%s383 + $0x54] sm:$0xf]
        %v1905 = vld [vmem:[%s383 + $0x58] sm:$0xf]
        %v1906 = vld [vmem:[%s383 + $0x5c] sm:$0xf]
        %v1907 = vld [vmem:[%s383 + $0x60] sm:$0xf]
        %v1908 = vld [vmem:[%s383 + $0x64] sm:$0xf]
        %v1909 = vld [vmem:[%s383 + $0x68] sm:$0xf]
        %v1910 = vld [vmem:[%s383 + $0x6c] sm:$0xf]
        %v1911 = vld [vmem:[%s383 + $0x70] sm:$0xf]
        %v1912 = vld [vmem:[%s383 + $0x74] sm:$0xf]
        %v1913 = vld [vmem:[%s383 + $0x78] sm:$0xf]
        %v1914 = vld [vmem:[%s383 + $0x7c] sm:$0xf]
        %v1915 = vld [vmem:[%s383 + $0x80] sm:$0xf]
        %v1916 = vld [vmem:[%s383 + $0x84] sm:$0xf]
        %v1917 = vld [vmem:[%s383 + $0x88] sm:$0xf]
        %v1918 = vld [vmem:[%s383 + $0x8c] sm:$0xf]
        %v1919 = vld [vmem:[%s383 + $0x90] sm:$0xf]
        %v1920 = vld [vmem:[%s383 + $0x94] sm:$0xf]
        %v1921 = vld [vmem:[%s383 + $0x98] sm:$0x1]
        %s1922 = scalar_lea.vmem %s1, 8
        %v1923 = vld [vmem:[%s1922] sm:$0x3]
        %v1961 = vunpack.c.l.b16 %v1885
        %v1962 = vunpack.c.l.b16 %v1886
        %v1963 = vunpack.c.l.b16 %v1887
        %v1964 = vunpack.c.l.b16 %v1888
        %v1965 = vunpack.c.l.b16 %v1889
        %v1966 = vunpack.c.l.b16 %v1890
        %v1967 = vunpack.c.l.b16 %v1891
        %v1968 = vunpack.c.l.b16 %v1892
        %v1969 = vunpack.c.l.b16 %v1893
        %v1970 = vunpack.c.l.b16 %v1894
        %v1971 = vunpack.c.l.b16 %v1895
        %v1972 = vunpack.c.l.b16 %v1896
        %v1973 = vunpack.c.l.b16 %v1897
        %v1974 = vunpack.c.l.b16 %v1898
        %v1975 = vunpack.c.l.b16 %v1899
        %v1976 = vunpack.c.l.b16 %v1900
        %v1977 = vunpack.c.l.b16 %v1901
        %v1978 = vunpack.c.l.b16 %v1902
        %v1979 = vunpack.c.l.b16 %v1903
        %v1980 = vunpack.c.l.b16 %v1904
        %v1981 = vunpack.c.l.b16 %v1905
        %v1982 = vunpack.c.l.b16 %v1906
        %v1983 = vunpack.c.l.b16 %v1907
        %v1984 = vunpack.c.l.b16 %v1908
        %v1985 = vunpack.c.l.b16 %v1909
        %v1986 = vunpack.c.l.b16 %v1910
        %v1987 = vunpack.c.l.b16 %v1911
        %v1988 = vunpack.c.l.b16 %v1912
        %v1989 = vunpack.c.l.b16 %v1913
        %v1990 = vunpack.c.l.b16 %v1914
        %v1991 = vunpack.c.l.b16 %v1915
        %v1992 = vunpack.c.l.b16 %v1916
        %v1993 = vunpack.c.l.b16 %v1917
        %v1994 = vunpack.c.l.b16 %v1918
        %v1995 = vunpack.c.l.b16 %v1919
        %v1996 = vunpack.c.l.b16 %v1920
        %v1997 = vunpack.c.l.b16 %v1921
        %v1998 = vpack.c.b16 %v1962, %v1961
        %v1999 = vpack.c.b16 %v1964, %v1963
        %v2000 = vpack.c.b16 %v1966, %v1965
        %v2001 = vpack.c.b16 %v1968, %v1967
        %v2002 = vpack.c.b16 %v1970, %v1969
        %v2003 = vpack.c.b16 %v1972, %v1971
        %v2004 = vpack.c.b16 %v1974, %v1973
        %v2005 = vpack.c.b16 %v1976, %v1975
        %v2006 = vpack.c.b16 %v1978, %v1977
        %v2007 = vpack.c.b16 %v1980, %v1979
        %v2008 = vpack.c.b16 %v1982, %v1981
        %v2009 = vpack.c.b16 %v1984, %v1983
        %v2010 = vpack.c.b16 %v1986, %v1985
        %v2011 = vpack.c.b16 %v1988, %v1987
        %v2012 = vpack.c.b16 %v1990, %v1989
        %v2013 = vpack.c.b16 %v1992, %v1991
        %v2014 = vpack.c.b16 %v1994, %v1993
        %v2015 = vpack.c.b16 %v1996, %v1995
        %v2016 = vpack.c.b16 %v1997, %v1997
        %vm2017 = vsmask.f32 6400
        %v2019 = vshrl.u32 %v1998, 16
        %v2021 = vrot.slane %v2019, 1
        %v2022 = vshll.u32 %v1998, 16
        %v2024 = vrot.slane %v2022, 2
        %v2025 = vor.u32 %v2021, %v2024
        %v2027 = vshrl.u32 %v1999, 16
        %v2029 = vrot.slane %v2027, 1
        %v2030 = vshll.u32 %v1999, 16
        %v2032 = vrot.slane %v2030, 2
        %v2033 = vor.u32 %v2029, %v2032
        %v2034 = vsel %vm2017, %v2025, %v2033
        %v2036 = vshrl.u32 %v2000, 16
        %v2038 = vrot.slane %v2036, 1
        %v2039 = vshll.u32 %v2000, 16
        %v2041 = vrot.slane %v2039, 2
        %v2042 = vor.u32 %v2038, %v2041
        %v2043 = vsel %vm2017, %v2033, %v2042
        %v2045 = vshrl.u32 %v2001, 16
        %v2047 = vrot.slane %v2045, 1
        %v2048 = vshll.u32 %v2001, 16
        %v2050 = vrot.slane %v2048, 2
        %v2051 = vor.u32 %v2047, %v2050
        %v2052 = vsel %vm2017, %v2042, %v2051
        %v2054 = vshrl.u32 %v2002, 16
        %v2056 = vrot.slane %v2054, 1
        %v2057 = vshll.u32 %v2002, 16
        %v2059 = vrot.slane %v2057, 2
        %v2060 = vor.u32 %v2056, %v2059
        %v2061 = vsel %vm2017, %v2051, %v2060
        %v2063 = vshrl.u32 %v2003, 16
        %v2065 = vrot.slane %v2063, 1
        %v2066 = vshll.u32 %v2003, 16
        %v2068 = vrot.slane %v2066, 2
        %v2069 = vor.u32 %v2065, %v2068
        %v2070 = vsel %vm2017, %v2060, %v2069
        %v2072 = vshrl.u32 %v2004, 16
        %v2074 = vrot.slane %v2072, 1
        %v2075 = vshll.u32 %v2004, 16
        %v2077 = vrot.slane %v2075, 2
        %v2078 = vor.u32 %v2074, %v2077
        %v2079 = vsel %vm2017, %v2069, %v2078
        %v2081 = vshrl.u32 %v2005, 16
        %v2083 = vrot.slane %v2081, 1
        %v2084 = vshll.u32 %v2005, 16
        %v2086 = vrot.slane %v2084, 2
        %v2087 = vor.u32 %v2083, %v2086
        %v2088 = vsel %vm2017, %v2078, %v2087
        %v2090 = vshrl.u32 %v2006, 16
        %v2092 = vrot.slane %v2090, 1
        %v2093 = vshll.u32 %v2006, 16
        %v2095 = vrot.slane %v2093, 2
        %v2096 = vor.u32 %v2092, %v2095
        %v2097 = vsel %vm2017, %v2087, %v2096
        %v2099 = vshrl.u32 %v2007, 16
        %v2101 = vrot.slane %v2099, 1
        %v2102 = vshll.u32 %v2007, 16
        %v2104 = vrot.slane %v2102, 2
        %v2105 = vor.u32 %v2101, %v2104
        %v2106 = vsel %vm2017, %v2096, %v2105
        %v2108 = vshrl.u32 %v2008, 16
        %v2110 = vrot.slane %v2108, 1
        %v2111 = vshll.u32 %v2008, 16
        %v2113 = vrot.slane %v2111, 2
        %v2114 = vor.u32 %v2110, %v2113
        %v2115 = vsel %vm2017, %v2105, %v2114
        %v2117 = vshrl.u32 %v2009, 16
        %v2119 = vrot.slane %v2117, 1
        %v2120 = vshll.u32 %v2009, 16
        %v2122 = vrot.slane %v2120, 2
        %v2123 = vor.u32 %v2119, %v2122
        %v2124 = vsel %vm2017, %v2114, %v2123
        %v2126 = vshrl.u32 %v2010, 16
        %v2128 = vrot.slane %v2126, 1
        %v2129 = vshll.u32 %v2010, 16
        %v2131 = vrot.slane %v2129, 2
        %v2132 = vor.u32 %v2128, %v2131
        %v2133 = vsel %vm2017, %v2123, %v2132
        %v2135 = vshrl.u32 %v2011, 16
        %v2137 = vrot.slane %v2135, 1
        %v2138 = vshll.u32 %v2011, 16
        %v2140 = vrot.slane %v2138, 2
        %v2141 = vor.u32 %v2137, %v2140
        %v2142 = vsel %vm2017, %v2132, %v2141
        %v2144 = vshrl.u32 %v2012, 16
        %v2146 = vrot.slane %v2144, 1
        %v2147 = vshll.u32 %v2012, 16
        %v2149 = vrot.slane %v2147, 2
        %v2150 = vor.u32 %v2146, %v2149
        %v2151 = vsel %vm2017, %v2141, %v2150
        %v2153 = vshrl.u32 %v2013, 16
        %v2155 = vrot.slane %v2153, 1
        %v2156 = vshll.u32 %v2013, 16
        %v2158 = vrot.slane %v2156, 2
        %v2159 = vor.u32 %v2155, %v2158
        %v2160 = vsel %vm2017, %v2150, %v2159
        %v2162 = vshrl.u32 %v2014, 16
        %v2164 = vrot.slane %v2162, 1
        %v2165 = vshll.u32 %v2014, 16
        %v2167 = vrot.slane %v2165, 2
        %v2168 = vor.u32 %v2164, %v2167
        %v2169 = vsel %vm2017, %v2159, %v2168
        %v2171 = vshrl.u32 %v2015, 16
        %v2173 = vrot.slane %v2171, 1
        %v2174 = vshll.u32 %v2015, 16
        %v2176 = vrot.slane %v2174, 2
        %v2177 = vor.u32 %v2173, %v2176
        %v2178 = vsel %vm2017, %v2168, %v2177
        %v2180 = vshll.u32 %v2016, 16
        %v2182 = vrot.slane %v2180, 2
        %v2183 = vsel %vm2017, %v2177, %v2182
        %v2185 = vsel %vm681, %v2034, 0
        %v2188 = vsel %vm681, %v2043, 0
        %v2191 = vsel %vm681, %v2052, 0
        %v2194 = vsel %vm681, %v2061, 0
        %v2197 = vsel %vm681, %v2070, 0
        %v2200 = vsel %vm681, %v2079, 0
        %v2203 = vsel %vm681, %v2088, 0
        %v2206 = vsel %vm681, %v2097, 0
        %v2209 = vsel %vm681, %v2106, 0
        %v2212 = vsel %vm681, %v2115, 0
        %v2215 = vsel %vm681, %v2124, 0
        %v2218 = vsel %vm681, %v2133, 0
        %v2221 = vsel %vm681, %v2142, 0
        %v2224 = vsel %vm681, %v2151, 0
        %v2227 = vsel %vm681, %v2160, 0
        %v2230 = vsel %vm681, %v2169, 0
        %v2233 = vsel %vm681, %v2178, 0
        %v2236 = vsel %vm681, %v2183, 0
        %v2239 = vand.u32 %v1923, %v739
        %2241 = vmatprep.subr.bf16.mxu0 0
        %2242 = vmatpush1.bf16.msra.mxu0 %v2239
        %2243 = vmatprep.subr.bf16.mxu0 0
        %2244 = vmatpush1.bf16.msra.mxu0 0
        %2245 = vmatprep.subr.bf16.mxu0 0
        %2246 = vmatpush1.bf16.msra.mxu0 0
        %2247 = vmatprep.subr.bf16.mxu0 0
        %2248 = vmatpush1.bf16.msra.mxu0 0
        %2249 = vmatprep.subr.bf16.mxu0 0
        %2250 = vmatpush1.bf16.msra.mxu0 0
        %2251 = vmatprep.subr.bf16.mxu0 0
        %2252 = vmatpush1.bf16.msra.mxu0 0
        %2253 = vmatprep.subr.bf16.mxu0 0
        %2254 = vmatpush1.bf16.msra.mxu0 0
        %2255 = vmatprep.subr.bf16.mxu0 0
        %2256 = vmatpush1.bf16.msra.mxu0 0
        %2257 = vmatprep.subr.bf16.mxu0 0
        %2258 = vmatpush1.bf16.msra.mxu0 0
        %2259 = vmatprep.subr.bf16.mxu0 0
        %2260 = vmatpush1.bf16.msra.mxu0 0
        %2261 = vmatprep.subr.bf16.mxu0 0
        %2262 = vmatpush1.bf16.msra.mxu0 0
        %2263 = vmatprep.subr.bf16.mxu0 0
        %2264 = vmatpush1.bf16.msra.mxu0 0
        %2265 = vmatprep.subr.bf16.mxu0 0
        %2266 = vmatpush1.bf16.msra.mxu0 0
        %2267 = vmatprep.subr.bf16.mxu0 0
        %2268 = vmatpush1.bf16.msra.mxu0 0
        %2269 = vmatprep.subr.bf16.mxu0 0
        %2270 = vmatpush1.bf16.msra.mxu0 0
        %2271 = vmatprep.subr.bf16.mxu0 0
        %2272 = vmatpush1.bf16.msra.mxu0 0
        %2273 = vmatprep.mubr.bf16.mxu0 0
        %2274 = vmatmul.mubr.bf16.gmra.mrb[0].mxu0 %v2185
        %v2275 = vpop.f32.mrb[0].mxu0
        %v2276 = vadd.f32 0.0, %v2275
        %v2277 = vpop.f32.mrb[0].mxu0
        %v2278 = vpop.f32.mrb[0].mxu0
        %v2279 = vadd.f32 0.0, %v2278
        %v2280 = vpop.f32.mrb[0].mxu0
        %2281 = vmatprep.mubr.bf16.mxu0 0
        %2282 = vmatmul.mubr.bf16.gmra.mrb[0].mxu0 %v2188
        %v2283 = vpop.f32.mrb[0].mxu0
        %v2284 = vadd.f32 0.0, %v2283
        %v2285 = vpop.f32.mrb[0].mxu0
        %v2286 = vpop.f32.mrb[0].mxu0
        %v2287 = vadd.f32 0.0, %v2286
        %v2288 = vpop.f32.mrb[0].mxu0
        %2289 = vmatprep.mubr.bf16.mxu0 0
        %2290 = vmatmul.mubr.bf16.gmra.mrb[0].mxu0 %v2191
        %v2291 = vpop.f32.mrb[0].mxu0
        %v2292 = vadd.f32 0.0, %v2291
        %v2293 = vpop.f32.mrb[0].mxu0
        %v2294 = vpop.f32.mrb[0].mxu0
        %v2295 = vadd.f32 0.0, %v2294
        %v2296 = vpop.f32.mrb[0].mxu0
        %2297 = vmatprep.mubr.bf16.mxu0 0
        %2298 = vmatmul.mubr.bf16.gmra.mrb[0].mxu0 %v2194
        %v2299 = vpop.f32.mrb[0].mxu0
        %v2300 = vadd.f32 0.0, %v2299
        %v2301 = vpop.f32.mrb[0].mxu0
        %v2302 = vpop.f32.mrb[0].mxu0
        %v2303 = vadd.f32 0.0, %v2302
        %v2304 = vpop.f32.mrb[0].mxu0
        %2305 = vmatprep.mubr.bf16.mxu0 0
        %2306 = vmatmul.mubr.bf16.gmra.mrb[0].mxu0 %v2197
        %v2307 = vpop.f32.mrb[0].mxu0
        %v2308 = vadd.f32 0.0, %v2307
        %v2309 = vpop.f32.mrb[0].mxu0
        %v2310 = vpop.f32.mrb[0].mxu0
        %v2311 = vadd.f32 0.0, %v2310
        %v2312 = vpop.f32.mrb[0].mxu0
        %2313 = vmatprep.mubr.bf16.mxu0 0
        %2314 = vmatmul.mubr.bf16.gmra.mrb[0].mxu0 %v2200
        %v2315 = vpop.f32.mrb[0].mxu0
        %v2316 = vadd.f32 0.0, %v2315
        %v2317 = vpop.f32.mrb[0].mxu0
        %v2318 = vpop.f32.mrb[0].mxu0
        %v2319 = vadd.f32 0.0, %v2318
        %v2320 = vpop.f32.mrb[0].mxu0
        %2321 = vmatprep.mubr.bf16.mxu0 0
        %2322 = vmatmul.mubr.bf16.gmra.mrb[0].mxu0 %v2203
        %v2323 = vpop.f32.mrb[0].mxu0
        %v2324 = vadd.f32 0.0, %v2323
        %v2325 = vpop.f32.mrb[0].mxu0
        %v2326 = vpop.f32.mrb[0].mxu0
        %v2327 = vadd.f32 0.0, %v2326
        %v2328 = vpop.f32.mrb[0].mxu0
        %2329 = vmatprep.mubr.bf16.mxu0 0
        %2330 = vmatmul.mubr.bf16.gmra.mrb[0].mxu0 %v2206
        %v2331 = vpop.f32.mrb[0].mxu0
        %v2332 = vadd.f32 0.0, %v2331
        %v2333 = vpop.f32.mrb[0].mxu0
        %v2334 = vpop.f32.mrb[0].mxu0
        %v2335 = vadd.f32 0.0, %v2334
        %v2336 = vpop.f32.mrb[0].mxu0
        %2337 = vmatprep.mubr.bf16.mxu0 0
        %2338 = vmatmul.mubr.bf16.gmra.mrb[0].mxu0 %v2209
        %v2339 = vpop.f32.mrb[0].mxu0
        %v2340 = vadd.f32 0.0, %v2339
        %v2341 = vpop.f32.mrb[0].mxu0
        %v2342 = vpop.f32.mrb[0].mxu0
        %v2343 = vadd.f32 0.0, %v2342
        %v2344 = vpop.f32.mrb[0].mxu0
        %2345 = vmatprep.mubr.bf16.mxu0 0
        %2346 = vmatmul.mubr.bf16.gmra.mrb[0].mxu0 %v2212
        %v2347 = vpop.f32.mrb[0].mxu0
        %v2348 = vadd.f32 0.0, %v2347
        %v2349 = vpop.f32.mrb[0].mxu0
        %v2350 = vpop.f32.mrb[0].mxu0
        %v2351 = vadd.f32 0.0, %v2350
        %v2352 = vpop.f32.mrb[0].mxu0
        %2353 = vmatprep.mubr.bf16.mxu0 0
        %2354 = vmatmul.mubr.bf16.gmra.mrb[0].mxu0 %v2215
        %v2355 = vpop.f32.mrb[0].mxu0
        %v2356 = vadd.f32 0.0, %v2355
        %v2357 = vpop.f32.mrb[0].mxu0
        %v2358 = vpop.f32.mrb[0].mxu0
        %v2359 = vadd.f32 0.0, %v2358
        %v2360 = vpop.f32.mrb[0].mxu0
        %2361 = vmatprep.mubr.bf16.mxu0 0
        %2362 = vmatmul.mubr.bf16.gmra.mrb[0].mxu0 %v2218
        %v2363 = vpop.f32.mrb[0].mxu0
        %v2364 = vadd.f32 0.0, %v2363
        %v2365 = vpop.f32.mrb[0].mxu0
        %v2366 = vpop.f32.mrb[0].mxu0
        %v2367 = vadd.f32 0.0, %v2366
        %v2368 = vpop.f32.mrb[0].mxu0
        %2369 = vmatprep.mubr.bf16.mxu0 0
        %2370 = vmatmul.mubr.bf16.gmra.mrb[0].mxu0 %v2221
        %v2371 = vpop.f32.mrb[0].mxu0
        %v2372 = vadd.f32 0.0, %v2371
        %v2373 = vpop.f32.mrb[0].mxu0
        %v2374 = vpop.f32.mrb[0].mxu0
        %v2375 = vadd.f32 0.0, %v2374
        %v2376 = vpop.f32.mrb[0].mxu0
        %2377 = vmatprep.mubr.bf16.mxu0 0
        %2378 = vmatmul.mubr.bf16.gmra.mrb[0].mxu0 %v2224
        %v2379 = vpop.f32.mrb[0].mxu0
        %v2380 = vadd.f32 0.0, %v2379
        %v2381 = vpop.f32.mrb[0].mxu0
        %v2382 = vpop.f32.mrb[0].mxu0
        %v2383 = vadd.f32 0.0, %v2382
        %v2384 = vpop.f32.mrb[0].mxu0
        %2385 = vmatprep.mubr.bf16.mxu0 0
        %2386 = vmatmul.mubr.bf16.gmra.mrb[0].mxu0 %v2227
        %v2387 = vpop.f32.mrb[0].mxu0
        %v2388 = vadd.f32 0.0, %v2387
        %v2389 = vpop.f32.mrb[0].mxu0
        %v2390 = vpop.f32.mrb[0].mxu0
        %v2391 = vadd.f32 0.0, %v2390
        %v2392 = vpop.f32.mrb[0].mxu0
        %2393 = vmatprep.mubr.bf16.mxu0 0
        %2394 = vmatmul.mubr.bf16.gmra.mrb[0].mxu0 %v2230
        %v2395 = vpop.f32.mrb[0].mxu0
        %v2396 = vadd.f32 0.0, %v2395
        %v2397 = vpop.f32.mrb[0].mxu0
        %v2398 = vpop.f32.mrb[0].mxu0
        %v2399 = vadd.f32 0.0, %v2398
        %v2400 = vpop.f32.mrb[0].mxu0
        %2401 = vmatprep.mubr.bf16.mxu0 0
        %2402 = vmatmul.mubr.bf16.gmra.mrb[0].mxu0 %v2233
        %v2403 = vpop.f32.mrb[0].mxu0
        %v2404 = vadd.f32 0.0, %v2403
        %v2405 = vpop.f32.mrb[0].mxu0
        %v2406 = vpop.f32.mrb[0].mxu0
        %v2407 = vadd.f32 0.0, %v2406
        %v2408 = vpop.f32.mrb[0].mxu0
        %2409 = vmatprep.mubr.bf16.mxu0 0
        %2410 = vmatmul.mubr.bf16.gmra.mrb[0].mxu0 %v2236
        %v2411 = vpop.f32.mrb[0].mxu0
        %v2412 = vadd.f32 0.0, %v2411
        %v2413 = vpop.f32.mrb[0].mxu0
        %v2414 = vpop.f32.mrb[0].mxu0
        %v2415 = vadd.f32 0.0, %v2414
        %v2416 = vpop.f32.mrb[0].mxu0
        %2417 = vdwg.mxu0
        %v2418 = vadd.f32 %v1849, %v2276
        %v2419 = vadd.f32 %v1850, %v2279
        %v2420 = vadd.f32 %v1851, %v2284
        %v2421 = vadd.f32 %v1852, %v2287
        %v2422 = vadd.f32 %v1853, %v2292
        %v2423 = vadd.f32 %v1854, %v2295
        %v2424 = vadd.f32 %v1855, %v2300
        %v2425 = vadd.f32 %v1856, %v2303
        %v2426 = vadd.f32 %v1857, %v2308
        %v2427 = vadd.f32 %v1858, %v2311
        %v2428 = vadd.f32 %v1859, %v2316
        %v2429 = vadd.f32 %v1860, %v2319
        %v2430 = vadd.f32 %v1861, %v2324
        %v2431 = vadd.f32 %v1862, %v2327
        %v2432 = vadd.f32 %v1863, %v2332
        %v2433 = vadd.f32 %v1864, %v2335
        %v2434 = vadd.f32 %v1865, %v2340
        %v2435 = vadd.f32 %v1866, %v2343
        %v2436 = vadd.f32 %v1867, %v2348
        %v2437 = vadd.f32 %v1868, %v2351
        %v2438 = vadd.f32 %v1869, %v2356
        %v2439 = vadd.f32 %v1870, %v2359
        %v2440 = vadd.f32 %v1871, %v2364
        %v2441 = vadd.f32 %v1872, %v2367
        %v2442 = vadd.f32 %v1873, %v2372
        %v2443 = vadd.f32 %v1874, %v2375
        %v2444 = vadd.f32 %v1875, %v2380
        %v2445 = vadd.f32 %v1876, %v2383
        %v2446 = vadd.f32 %v1877, %v2388
        %v2447 = vadd.f32 %v1878, %v2391
        %v2448 = vadd.f32 %v1879, %v2396
        %v2449 = vadd.f32 %v1880, %v2399
        %v2450 = vadd.f32 %v1881, %v2404
        %v2451 = vadd.f32 %v1882, %v2407
        %v2452 = vadd.f32 %v1883, %v2412
        %v2453 = vadd.f32 %v1884, %v2415
        %v2454 = vld [vmem:[%s383 + $0x8] sm:$0xc]
        %s2455 = scalar_lea.vmem %s1, 10
        %v2456 = vld [vmem:[%s2455] sm:$0x3]
        %v2458 = vunpack.c.l.b16 %v2454
        %v2459 = vpack.c.b16 %v1962, %v2458
        %vm2460 = vcmask 1045504
        %v2461 = vrot.slane %v2459, 2
        %v2462 = vrot.slane %v1999, 2
        %v2463 = vsel %vm2460, %v2461, %v2462
        %v2464 = vrot.slane %v2000, 2
        %v2465 = vsel %vm2460, %v2462, %v2464
        %v2466 = vrot.slane %v2001, 2
        %v2467 = vsel %vm2460, %v2464, %v2466
        %v2468 = vrot.slane %v2002, 2
        %v2469 = vsel %vm2460, %v2466, %v2468
        %v2470 = vrot.slane %v2003, 2
        %v2471 = vsel %vm2460, %v2468, %v2470
        %v2472 = vrot.slane %v2004, 2
        %v2473 = vsel %vm2460, %v2470, %v2472
        %v2474 = vrot.slane %v2005, 2
        %v2475 = vsel %vm2460, %v2472, %v2474
        %v2476 = vrot.slane %v2006, 2
        %v2477 = vsel %vm2460, %v2474, %v2476
        %v2478 = vrot.slane %v2007, 2
        %v2479 = vsel %vm2460, %v2476, %v2478
        %v2480 = vrot.slane %v2008, 2
        %v2481 = vsel %vm2460, %v2478, %v2480
        %v2482 = vrot.slane %v2009, 2
        %v2483 = vsel %vm2460, %v2480, %v2482
        %v2484 = vrot.slane %v2010, 2
        %v2485 = vsel %vm2460, %v2482, %v2484
        %v2486 = vrot.slane %v2011, 2
        %v2487 = vsel %vm2460, %v2484, %v2486
        %v2488 = vrot.slane %v2012, 2
        %v2489 = vsel %vm2460, %v2486, %v2488
        %v2490 = vrot.slane %v2013, 2
        %v2491 = vsel %vm2460, %v2488, %v2490
        %v2492 = vrot.slane %v2014, 2
        %v2493 = vsel %vm2460, %v2490, %v2492
        %v2494 = vrot.slane %v2015, 2
        %v2495 = vsel %vm2460, %v2492, %v2494
        %v2496 = vrot.slane %v2016, 2
        %v2497 = vsel %vm2460, %v2494, %v2496
        %v2499 = vsel %vm681, %v2463, 0
        %v2502 = vsel %vm681, %v2465, 0
        %v2505 = vsel %vm681, %v2467, 0
        %v2508 = vsel %vm681, %v2469, 0
        %v2511 = vsel %vm681, %v2471, 0
        %v2514 = vsel %vm681, %v2473, 0
        %v2517 = vsel %vm681, %v2475, 0
        %v2520 = vsel %vm681, %v2477, 0
        %v2523 = vsel %vm681, %v2479, 0
        %v2526 = vsel %vm681, %v2481, 0
        %v2529 = vsel %vm681, %v2483, 0
        %v2532 = vsel %vm681, %v2485, 0
        %v2535 = vsel %vm681, %v2487, 0
        %v2538 = vsel %vm681, %v2489, 0
        %v2541 = vsel %vm681, %v2491, 0
        %v2544 = vsel %vm681, %v2493, 0
        %v2547 = vsel %vm681, %v2495, 0
        %v2550 = vsel %vm681, %v2497, 0
        %v2553 = vand.u32 %v2456, %v739
        %2555 = vmatprep.subr.bf16.mxu0 0
        %2556 = vmatpush1.bf16.msra.mxu0 %v2553
        %2557 = vmatprep.subr.bf16.mxu0 0
        %2558 = vmatpush1.bf16.msra.mxu0 0
        %2559 = vmatprep.subr.bf16.mxu0 0
        %2560 = vmatpush1.bf16.msra.mxu0 0
        %2561 = vmatprep.subr.bf16.mxu0 0
        %2562 = vmatpush1.bf16.msra.mxu0 0
        %2563 = vmatprep.subr.bf16.mxu0 0
        %2564 = vmatpush1.bf16.msra.mxu0 0
        %2565 = vmatprep.subr.bf16.mxu0 0
        %2566 = vmatpush1.bf16.msra.mxu0 0
        %2567 = vmatprep.subr.bf16.mxu0 0
        %2568 = vmatpush1.bf16.msra.mxu0 0
        %2569 = vmatprep.subr.bf16.mxu0 0
        %2570 = vmatpush1.bf16.msra.mxu0 0
        %2571 = vmatprep.subr.bf16.mxu0 0
        %2572 = vmatpush1.bf16.msra.mxu0 0
        %2573 = vmatprep.subr.bf16.mxu0 0
        %2574 = vmatpush1.bf16.msra.mxu0 0
        %2575 = vmatprep.subr.bf16.mxu0 0
        %2576 = vmatpush1.bf16.msra.mxu0 0
        %2577 = vmatprep.subr.bf16.mxu0 0
        %2578 = vmatpush1.bf16.msra.mxu0 0
        %2579 = vmatprep.subr.bf16.mxu0 0
        %2580 = vmatpush1.bf16.msra.mxu0 0
        %2581 = vmatprep.subr.bf16.mxu0 0
        %2582 = vmatpush1.bf16.msra.mxu0 0
        %2583 = vmatprep.subr.bf16.mxu0 0
        %2584 = vmatpush1.bf16.msra.mxu0 0
        %2585 = vmatprep.subr.bf16.mxu0 0
        %2586 = vmatpush1.bf16.msra.mxu0 0
        %2587 = vmatprep.mubr.bf16.mxu0 0
        %2588 = vmatmul.mubr.bf16.gmra.mrb[0].mxu0 %v2499
        %v2589 = vpop.f32.mrb[0].mxu0
        %v2590 = vadd.f32 0.0, %v2589
        %v2591 = vpop.f32.mrb[0].mxu0
        %v2592 = vpop.f32.mrb[0].mxu0
        %v2593 = vadd.f32 0.0, %v2592
        %v2594 = vpop.f32.mrb[0].mxu0
        %2595 = vmatprep.mubr.bf16.mxu0 0
        %2596 = vmatmul.mubr.bf16.gmra.mrb[0].mxu0 %v2502
        %v2597 = vpop.f32.mrb[0].mxu0
        %v2598 = vadd.f32 0.0, %v2597
        %v2599 = vpop.f32.mrb[0].mxu0
        %v2600 = vpop.f32.mrb[0].mxu0
        %v2601 = vadd.f32 0.0, %v2600
        %v2602 = vpop.f32.mrb[0].mxu0
        %2603 = vmatprep.mubr.bf16.mxu0 0
        %2604 = vmatmul.mubr.bf16.gmra.mrb[0].mxu0 %v2505
        %v2605 = vpop.f32.mrb[0].mxu0
        %v2606 = vadd.f32 0.0, %v2605
        %v2607 = vpop.f32.mrb[0].mxu0
        %v2608 = vpop.f32.mrb[0].mxu0
        %v2609 = vadd.f32 0.0, %v2608
        %v2610 = vpop.f32.mrb[0].mxu0
        %2611 = vmatprep.mubr.bf16.mxu0 0
        %2612 = vmatmul.mubr.bf16.gmra.mrb[0].mxu0 %v2508
        %v2613 = vpop.f32.mrb[0].mxu0
        %v2614 = vadd.f32 0.0, %v2613
        %v2615 = vpop.f32.mrb[0].mxu0
        %v2616 = vpop.f32.mrb[0].mxu0
        %v2617 = vadd.f32 0.0, %v2616
        %v2618 = vpop.f32.mrb[0].mxu0
        %2619 = vmatprep.mubr.bf16.mxu0 0
        %2620 = vmatmul.mubr.bf16.gmra.mrb[0].mxu0 %v2511
        %v2621 = vpop.f32.mrb[0].mxu0
        %v2622 = vadd.f32 0.0, %v2621
        %v2623 = vpop.f32.mrb[0].mxu0
        %v2624 = vpop.f32.mrb[0].mxu0
        %v2625 = vadd.f32 0.0, %v2624
        %v2626 = vpop.f32.mrb[0].mxu0
        %2627 = vmatprep.mubr.bf16.mxu0 0
        %2628 = vmatmul.mubr.bf16.gmra.mrb[0].mxu0 %v2514
        %v2629 = vpop.f32.mrb[0].mxu0
        %v2630 = vadd.f32 0.0, %v2629
        %v2631 = vpop.f32.mrb[0].mxu0
        %v2632 = vpop.f32.mrb[0].mxu0
        %v2633 = vadd.f32 0.0, %v2632
        %v2634 = vpop.f32.mrb[0].mxu0
        %2635 = vmatprep.mubr.bf16.mxu0 0
        %2636 = vmatmul.mubr.bf16.gmra.mrb[0].mxu0 %v2517
        %v2637 = vpop.f32.mrb[0].mxu0
        %v2638 = vadd.f32 0.0, %v2637
        %v2639 = vpop.f32.mrb[0].mxu0
        %v2640 = vpop.f32.mrb[0].mxu0
        %v2641 = vadd.f32 0.0, %v2640
        %v2642 = vpop.f32.mrb[0].mxu0
        %2643 = vmatprep.mubr.bf16.mxu0 0
        %2644 = vmatmul.mubr.bf16.gmra.mrb[0].mxu0 %v2520
        %v2645 = vpop.f32.mrb[0].mxu0
        %v2646 = vadd.f32 0.0, %v2645
        %v2647 = vpop.f32.mrb[0].mxu0
        %v2648 = vpop.f32.mrb[0].mxu0
        %v2649 = vadd.f32 0.0, %v2648
        %v2650 = vpop.f32.mrb[0].mxu0
        %2651 = vmatprep.mubr.bf16.mxu0 0
        %2652 = vmatmul.mubr.bf16.gmra.mrb[0].mxu0 %v2523
        %v2653 = vpop.f32.mrb[0].mxu0
        %v2654 = vadd.f32 0.0, %v2653
        %v2655 = vpop.f32.mrb[0].mxu0
        %v2656 = vpop.f32.mrb[0].mxu0
        %v2657 = vadd.f32 0.0, %v2656
        %v2658 = vpop.f32.mrb[0].mxu0
        %2659 = vmatprep.mubr.bf16.mxu0 0
        %2660 = vmatmul.mubr.bf16.gmra.mrb[0].mxu0 %v2526
        %v2661 = vpop.f32.mrb[0].mxu0
        %v2662 = vadd.f32 0.0, %v2661
        %v2663 = vpop.f32.mrb[0].mxu0
        %v2664 = vpop.f32.mrb[0].mxu0
        %v2665 = vadd.f32 0.0, %v2664
        %v2666 = vpop.f32.mrb[0].mxu0
        %2667 = vmatprep.mubr.bf16.mxu0 0
        %2668 = vmatmul.mubr.bf16.gmra.mrb[0].mxu0 %v2529
        %v2669 = vpop.f32.mrb[0].mxu0
        %v2670 = vadd.f32 0.0, %v2669
        %v2671 = vpop.f32.mrb[0].mxu0
        %v2672 = vpop.f32.mrb[0].mxu0
        %v2673 = vadd.f32 0.0, %v2672
        %v2674 = vpop.f32.mrb[0].mxu0
        %2675 = vmatprep.mubr.bf16.mxu0 0
        %2676 = vmatmul.mubr.bf16.gmra.mrb[0].mxu0 %v2532
        %v2677 = vpop.f32.mrb[0].mxu0
        %v2678 = vadd.f32 0.0, %v2677
        %v2679 = vpop.f32.mrb[0].mxu0
        %v2680 = vpop.f32.mrb[0].mxu0
        %v2681 = vadd.f32 0.0, %v2680
        %v2682 = vpop.f32.mrb[0].mxu0
        %2683 = vmatprep.mubr.bf16.mxu0 0
        %2684 = vmatmul.mubr.bf16.gmra.mrb[0].mxu0 %v2535
        %v2685 = vpop.f32.mrb[0].mxu0
        %v2686 = vadd.f32 0.0, %v2685
        %v2687 = vpop.f32.mrb[0].mxu0
        %v2688 = vpop.f32.mrb[0].mxu0
        %v2689 = vadd.f32 0.0, %v2688
        %v2690 = vpop.f32.mrb[0].mxu0
        %2691 = vmatprep.mubr.bf16.mxu0 0
        %2692 = vmatmul.mubr.bf16.gmra.mrb[0].mxu0 %v2538
        %v2693 = vpop.f32.mrb[0].mxu0
        %v2694 = vadd.f32 0.0, %v2693
        %v2695 = vpop.f32.mrb[0].mxu0
        %v2696 = vpop.f32.mrb[0].mxu0
        %v2697 = vadd.f32 0.0, %v2696
        %v2698 = vpop.f32.mrb[0].mxu0
        %2699 = vmatprep.mubr.bf16.mxu0 0
        %2700 = vmatmul.mubr.bf16.gmra.mrb[0].mxu0 %v2541
        %v2701 = vpop.f32.mrb[0].mxu0
        %v2702 = vadd.f32 0.0, %v2701
        %v2703 = vpop.f32.mrb[0].mxu0
        %v2704 = vpop.f32.mrb[0].mxu0
        %v2705 = vadd.f32 0.0, %v2704
        %v2706 = vpop.f32.mrb[0].mxu0
        %2707 = vmatprep.mubr.bf16.mxu0 0
        %2708 = vmatmul.mubr.bf16.gmra.mrb[0].mxu0 %v2544
        %v2709 = vpop.f32.mrb[0].mxu0
        %v2710 = vadd.f32 0.0, %v2709
        %v2711 = vpop.f32.mrb[0].mxu0
        %v2712 = vpop.f32.mrb[0].mxu0
        %v2713 = vadd.f32 0.0, %v2712
        %v2714 = vpop.f32.mrb[0].mxu0
        %2715 = vmatprep.mubr.bf16.mxu0 0
        %2716 = vmatmul.mubr.bf16.gmra.mrb[0].mxu0 %v2547
        %v2717 = vpop.f32.mrb[0].mxu0
        %v2718 = vadd.f32 0.0, %v2717
        %v2719 = vpop.f32.mrb[0].mxu0
        %v2720 = vpop.f32.mrb[0].mxu0
        %v2721 = vadd.f32 0.0, %v2720
        %v2722 = vpop.f32.mrb[0].mxu0
        %2723 = vmatprep.mubr.bf16.mxu0 0
        %2724 = vmatmul.mubr.bf16.gmra.mrb[0].mxu0 %v2550
        %v2725 = vpop.f32.mrb[0].mxu0
        %v2726 = vadd.f32 0.0, %v2725
        %v2727 = vpop.f32.mrb[0].mxu0
        %v2728 = vpop.f32.mrb[0].mxu0
        %v2729 = vadd.f32 0.0, %v2728
        %v2730 = vpop.f32.mrb[0].mxu0
        %2731 = vdwg.mxu0
        %v2732 = vadd.f32 %v2418, %v2590
        %v2733 = vadd.f32 %v2419, %v2593
        %v2734 = vadd.f32 %v2420, %v2598
        %v2735 = vadd.f32 %v2421, %v2601
        %v2736 = vadd.f32 %v2422, %v2606
        %v2737 = vadd.f32 %v2423, %v2609
        %v2738 = vadd.f32 %v2424, %v2614
        %v2739 = vadd.f32 %v2425, %v2617
        %v2740 = vadd.f32 %v2426, %v2622
        %v2741 = vadd.f32 %v2427, %v2625
        %v2742 = vadd.f32 %v2428, %v2630
        %v2743 = vadd.f32 %v2429, %v2633
        %v2744 = vadd.f32 %v2430, %v2638
        %v2745 = vadd.f32 %v2431, %v2641
        %v2746 = vadd.f32 %v2432, %v2646
        %v2747 = vadd.f32 %v2433, %v2649
        %v2748 = vadd.f32 %v2434, %v2654
        %v2749 = vadd.f32 %v2435, %v2657
        %v2750 = vadd.f32 %v2436, %v2662
        %v2751 = vadd.f32 %v2437, %v2665
        %v2752 = vadd.f32 %v2438, %v2670
        %v2753 = vadd.f32 %v2439, %v2673
        %v2754 = vadd.f32 %v2440, %v2678
        %v2755 = vadd.f32 %v2441, %v2681
        %v2756 = vadd.f32 %v2442, %v2686
        %v2757 = vadd.f32 %v2443, %v2689
        %v2758 = vadd.f32 %v2444, %v2694
        %v2759 = vadd.f32 %v2445, %v2697
        %v2760 = vadd.f32 %v2446, %v2702
        %v2761 = vadd.f32 %v2447, %v2705
        %v2762 = vadd.f32 %v2448, %v2710
        %v2763 = vadd.f32 %v2449, %v2713
        %v2764 = vadd.f32 %v2450, %v2718
        %v2765 = vadd.f32 %v2451, %v2721
        %v2766 = vadd.f32 %v2452, %v2726
        %v2767 = vadd.f32 %v2453, %v2729
        %v2768 = vld [vmem:[%s383 + $0x10] sm:$0xc]
        %v2769 = vld [vmem:[%s383 + $0x14] sm:$0xf]
        %v2770 = vld [vmem:[%s383 + $0x18] sm:$0xf]
        %v2771 = vld [vmem:[%s383 + $0x1c] sm:$0xf]
        %v2772 = vld [vmem:[%s383 + $0x20] sm:$0xf]
        %v2773 = vld [vmem:[%s383 + $0x24] sm:$0xf]
        %v2774 = vld [vmem:[%s383 + $0x28] sm:$0xf]
        %v2775 = vld [vmem:[%s383 + $0x2c] sm:$0xf]
        %v2776 = vld [vmem:[%s383 + $0x30] sm:$0xf]
        %v2777 = vld [vmem:[%s383 + $0x34] sm:$0xf]
        %v2778 = vld [vmem:[%s383 + $0x38] sm:$0xf]
        %v2779 = vld [vmem:[%s383 + $0x3c] sm:$0xf]
        %v2780 = vld [vmem:[%s383 + $0x40] sm:$0xf]
        %v2781 = vld [vmem:[%s383 + $0x44] sm:$0xf]
        %v2782 = vld [vmem:[%s383 + $0x48] sm:$0xf]
        %v2783 = vld [vmem:[%s383 + $0x4c] sm:$0xf]
        %v2784 = vld [vmem:[%s383 + $0x50] sm:$0xf]
        %v2785 = vld [vmem:[%s383 + $0x54] sm:$0xf]
        %v2786 = vld [vmem:[%s383 + $0x58] sm:$0xf]
        %v2787 = vld [vmem:[%s383 + $0x5c] sm:$0xf]
        %v2788 = vld [vmem:[%s383 + $0x60] sm:$0xf]
        %v2789 = vld [vmem:[%s383 + $0x64] sm:$0xf]
        %v2790 = vld [vmem:[%s383 + $0x68] sm:$0xf]
        %v2791 = vld [vmem:[%s383 + $0x6c] sm:$0xf]
        %v2792 = vld [vmem:[%s383 + $0x70] sm:$0xf]
        %v2793 = vld [vmem:[%s383 + $0x74] sm:$0xf]
        %v2794 = vld [vmem:[%s383 + $0x78] sm:$0xf]
        %v2795 = vld [vmem:[%s383 + $0x7c] sm:$0xf]
        %v2796 = vld [vmem:[%s383 + $0x80] sm:$0xf]
        %v2797 = vld [vmem:[%s383 + $0x84] sm:$0xf]
        %v2798 = vld [vmem:[%s383 + $0x88] sm:$0xf]
        %v2799 = vld [vmem:[%s383 + $0x8c] sm:$0xf]
        %v2800 = vld [vmem:[%s383 + $0x90] sm:$0xf]
        %v2801 = vld [vmem:[%s383 + $0x94] sm:$0xf]
        %v2802 = vld [vmem:[%s383 + $0x98] sm:$0xf]
        %v2803 = vld [vmem:[%s383 + $0x9c] sm:$0xf]
        %v2804 = vld [vmem:[%s383 + $0xa0] sm:$0x1]
        %s2805 = scalar_lea.vmem %s1, 12
        %v2806 = vld [vmem:[%s2805] sm:$0x3]
        %v2844 = vunpack.c.l.b16 %v2768
        %v2845 = vunpack.c.l.b16 %v2769
        %v2846 = vunpack.c.l.b16 %v2770
        %v2847 = vunpack.c.l.b16 %v2771
        %v2848 = vunpack.c.l.b16 %v2772
        %v2849 = vunpack.c.l.b16 %v2773
        %v2850 = vunpack.c.l.b16 %v2774
        %v2851 = vunpack.c.l.b16 %v2775
        %v2852 = vunpack.c.l.b16 %v2776
        %v2853 = vunpack.c.l.b16 %v2777
        %v2854 = vunpack.c.l.b16 %v2778
        %v2855 = vunpack.c.l.b16 %v2779
        %v2856 = vunpack.c.l.b16 %v2780
        %v2857 = vunpack.c.l.b16 %v2781
        %v2858 = vunpack.c.l.b16 %v2782
        %v2859 = vunpack.c.l.b16 %v2783
        %v2860 = vunpack.c.l.b16 %v2784
        %v2861 = vunpack.c.l.b16 %v2785
        %v2862 = vunpack.c.l.b16 %v2786
        %v2863 = vunpack.c.l.b16 %v2787
        %v2864 = vunpack.c.l.b16 %v2788
        %v2865 = vunpack.c.l.b16 %v2789
        %v2866 = vunpack.c.l.b16 %v2790
        %v2867 = vunpack.c.l.b16 %v2791
        %v2868 = vunpack.c.l.b16 %v2792
        %v2869 = vunpack.c.l.b16 %v2793
        %v2870 = vunpack.c.l.b16 %v2794
        %v2871 = vunpack.c.l.b16 %v2795
        %v2872 = vunpack.c.l.b16 %v2796
        %v2873 = vunpack.c.l.b16 %v2797
        %v2874 = vunpack.c.l.b16 %v2798
        %v2875 = vunpack.c.l.b16 %v2799
        %v2876 = vunpack.c.l.b16 %v2800
        %v2877 = vunpack.c.l.b16 %v2801
        %v2878 = vunpack.c.l.b16 %v2802
        %v2879 = vunpack.c.l.b16 %v2803
        %v2880 = vunpack.c.l.b16 %v2804
        %v2881 = vpack.c.b16 %v2845, %v2844
        %v2882 = vpack.c.b16 %v2847, %v2846
        %v2883 = vpack.c.b16 %v2849, %v2848
        %v2884 = vpack.c.b16 %v2851, %v2850
        %v2885 = vpack.c.b16 %v2853, %v2852
        %v2886 = vpack.c.b16 %v2855, %v2854
        %v2887 = vpack.c.b16 %v2857, %v2856
        %v2888 = vpack.c.b16 %v2859, %v2858
        %v2889 = vpack.c.b16 %v2861, %v2860
        %v2890 = vpack.c.b16 %v2863, %v2862
        %v2891 = vpack.c.b16 %v2865, %v2864
        %v2892 = vpack.c.b16 %v2867, %v2866
        %v2893 = vpack.c.b16 %v2869, %v2868
        %v2894 = vpack.c.b16 %v2871, %v2870
        %v2895 = vpack.c.b16 %v2873, %v2872
        %v2896 = vpack.c.b16 %v2875, %v2874
        %v2897 = vpack.c.b16 %v2877, %v2876
        %v2898 = vpack.c.b16 %v2879, %v2878
        %v2899 = vpack.c.b16 %v2880, %v2880
        %v2900 = vrot.slane %v2881, 2
        %v2901 = vrot.slane %v2882, 2
        %v2902 = vsel %vm2460, %v2900, %v2901
        %v2903 = vrot.slane %v2883, 2
        %v2904 = vsel %vm2460, %v2901, %v2903
        %v2905 = vrot.slane %v2884, 2
        %v2906 = vsel %vm2460, %v2903, %v2905
        %v2907 = vrot.slane %v2885, 2
        %v2908 = vsel %vm2460, %v2905, %v2907
        %v2909 = vrot.slane %v2886, 2
        %v2910 = vsel %vm2460, %v2907, %v2909
        %v2911 = vrot.slane %v2887, 2
        %v2912 = vsel %vm2460, %v2909, %v2911
        %v2913 = vrot.slane %v2888, 2
        %v2914 = vsel %vm2460, %v2911, %v2913
        %v2915 = vrot.slane %v2889, 2
        %v2916 = vsel %vm2460, %v2913, %v2915
        %v2917 = vrot.slane %v2890, 2
        %v2918 = vsel %vm2460, %v2915, %v2917
        %v2919 = vrot.slane %v2891, 2
        %v2920 = vsel %vm2460, %v2917, %v2919
        %v2921 = vrot.slane %v2892, 2
        %v2922 = vsel %vm2460, %v2919, %v2921
        %v2923 = vrot.slane %v2893, 2
        %v2924 = vsel %vm2460, %v2921, %v2923
        %v2925 = vrot.slane %v2894, 2
        %v2926 = vsel %vm2460, %v2923, %v2925
        %v2927 = vrot.slane %v2895, 2
        %v2928 = vsel %vm2460, %v2925, %v2927
        %v2929 = vrot.slane %v2896, 2
        %v2930 = vsel %vm2460, %v2927, %v2929
        %v2931 = vrot.slane %v2897, 2
        %v2932 = vsel %vm2460, %v2929, %v2931
        %v2933 = vrot.slane %v2898, 2
        %v2934 = vsel %vm2460, %v2931, %v2933
        %v2935 = vrot.slane %v2899, 2
        %v2936 = vsel %vm2460, %v2933, %v2935
        %v2938 = vsel %vm681, %v2902, 0
        %v2941 = vsel %vm681, %v2904, 0
        %v2944 = vsel %vm681, %v2906, 0
        %v2947 = vsel %vm681, %v2908, 0
        %v2950 = vsel %vm681, %v2910, 0
        %v2953 = vsel %vm681, %v2912, 0
        %v2956 = vsel %vm681, %v2914, 0
        %v2959 = vsel %vm681, %v2916, 0
        %v2962 = vsel %vm681, %v2918, 0
        %v2965 = vsel %vm681, %v2920, 0
        %v2968 = vsel %vm681, %v2922, 0
        %v2971 = vsel %vm681, %v2924, 0
        %v2974 = vsel %vm681, %v2926, 0
        %v2977 = vsel %vm681, %v2928, 0
        %v2980 = vsel %vm681, %v2930, 0
        %v2983 = vsel %vm681, %v2932, 0
        %v2986 = vsel %vm681, %v2934, 0
        %v2989 = vsel %vm681, %v2936, 0
        %v2992 = vand.u32 %v2806, %v739
        %2994 = vmatprep.subr.bf16.mxu0 0
        %2995 = vmatpush1.bf16.msra.mxu0 %v2992
        %2996 = vmatprep.subr.bf16.mxu0 0
        %2997 = vmatpush1.bf16.msra.mxu0 0
        %2998 = vmatprep.subr.bf16.mxu0 0
        %2999 = vmatpush1.bf16.msra.mxu0 0
        %3000 = vmatprep.subr.bf16.mxu0 0
        %3001 = vmatpush1.bf16.msra.mxu0 0
        %3002 = vmatprep.subr.bf16.mxu0 0
        %3003 = vmatpush1.bf16.msra.mxu0 0
        %3004 = vmatprep.subr.bf16.mxu0 0
        %3005 = vmatpush1.bf16.msra.mxu0 0
        %3006 = vmatprep.subr.bf16.mxu0 0
        %3007 = vmatpush1.bf16.msra.mxu0 0
        %3008 = vmatprep.subr.bf16.mxu0 0
        %3009 = vmatpush1.bf16.msra.mxu0 0
        %3010 = vmatprep.subr.bf16.mxu0 0
        %3011 = vmatpush1.bf16.msra.mxu0 0
        %3012 = vmatprep.subr.bf16.mxu0 0
        %3013 = vmatpush1.bf16.msra.mxu0 0
        %3014 = vmatprep.subr.bf16.mxu0 0
        %3015 = vmatpush1.bf16.msra.mxu0 0
        %3016 = vmatprep.subr.bf16.mxu0 0
        %3017 = vmatpush1.bf16.msra.mxu0 0
        %3018 = vmatprep.subr.bf16.mxu0 0
        %3019 = vmatpush1.bf16.msra.mxu0 0
        %3020 = vmatprep.subr.bf16.mxu0 0
        %3021 = vmatpush1.bf16.msra.mxu0 0
        %3022 = vmatprep.subr.bf16.mxu0 0
        %3023 = vmatpush1.bf16.msra.mxu0 0
        %3024 = vmatprep.subr.bf16.mxu0 0
        %3025 = vmatpush1.bf16.msra.mxu0 0
        %3026 = vmatprep.mubr.bf16.mxu0 0
        %3027 = vmatmul.mubr.bf16.gmra.mrb[0].mxu0 %v2938
        %v3028 = vpop.f32.mrb[0].mxu0
        %v3029 = vadd.f32 0.0, %v3028
        %v3030 = vpop.f32.mrb[0].mxu0
        %v3031 = vpop.f32.mrb[0].mxu0
        %v3032 = vadd.f32 0.0, %v3031
        %v3033 = vpop.f32.mrb[0].mxu0
        %3034 = vmatprep.mubr.bf16.mxu0 0
        %3035 = vmatmul.mubr.bf16.gmra.mrb[0].mxu0 %v2941
        %v3036 = vpop.f32.mrb[0].mxu0
        %v3037 = vadd.f32 0.0, %v3036
        %v3038 = vpop.f32.mrb[0].mxu0
        %v3039 = vpop.f32.mrb[0].mxu0
        %v3040 = vadd.f32 0.0, %v3039
        %v3041 = vpop.f32.mrb[0].mxu0
        %3042 = vmatprep.mubr.bf16.mxu0 0
        %3043 = vmatmul.mubr.bf16.gmra.mrb[0].mxu0 %v2944
        %v3044 = vpop.f32.mrb[0].mxu0
        %v3045 = vadd.f32 0.0, %v3044
        %v3046 = vpop.f32.mrb[0].mxu0
        %v3047 = vpop.f32.mrb[0].mxu0
        %v3048 = vadd.f32 0.0, %v3047
        %v3049 = vpop.f32.mrb[0].mxu0
        %3050 = vmatprep.mubr.bf16.mxu0 0
        %3051 = vmatmul.mubr.bf16.gmra.mrb[0].mxu0 %v2947
        %v3052 = vpop.f32.mrb[0].mxu0
        %v3053 = vadd.f32 0.0, %v3052
        %v3054 = vpop.f32.mrb[0].mxu0
        %v3055 = vpop.f32.mrb[0].mxu0
        %v3056 = vadd.f32 0.0, %v3055
        %v3057 = vpop.f32.mrb[0].mxu0
        %3058 = vmatprep.mubr.bf16.mxu0 0
        %3059 = vmatmul.mubr.bf16.gmra.mrb[0].mxu0 %v2950
        %v3060 = vpop.f32.mrb[0].mxu0
        %v3061 = vadd.f32 0.0, %v3060
        %v3062 = vpop.f32.mrb[0].mxu0
        %v3063 = vpop.f32.mrb[0].mxu0
        %v3064 = vadd.f32 0.0, %v3063
        %v3065 = vpop.f32.mrb[0].mxu0
        %3066 = vmatprep.mubr.bf16.mxu0 0
        %3067 = vmatmul.mubr.bf16.gmra.mrb[0].mxu0 %v2953
        %v3068 = vpop.f32.mrb[0].mxu0
        %v3069 = vadd.f32 0.0, %v3068
        %v3070 = vpop.f32.mrb[0].mxu0
        %v3071 = vpop.f32.mrb[0].mxu0
        %v3072 = vadd.f32 0.0, %v3071
        %v3073 = vpop.f32.mrb[0].mxu0
        %3074 = vmatprep.mubr.bf16.mxu0 0
        %3075 = vmatmul.mubr.bf16.gmra.mrb[0].mxu0 %v2956
        %v3076 = vpop.f32.mrb[0].mxu0
        %v3077 = vadd.f32 0.0, %v3076
        %v3078 = vpop.f32.mrb[0].mxu0
        %v3079 = vpop.f32.mrb[0].mxu0
        %v3080 = vadd.f32 0.0, %v3079
        %v3081 = vpop.f32.mrb[0].mxu0
        %3082 = vmatprep.mubr.bf16.mxu0 0
        %3083 = vmatmul.mubr.bf16.gmra.mrb[0].mxu0 %v2959
        %v3084 = vpop.f32.mrb[0].mxu0
        %v3085 = vadd.f32 0.0, %v3084
        %v3086 = vpop.f32.mrb[0].mxu0
        %v3087 = vpop.f32.mrb[0].mxu0
        %v3088 = vadd.f32 0.0, %v3087
        %v3089 = vpop.f32.mrb[0].mxu0
        %3090 = vmatprep.mubr.bf16.mxu0 0
        %3091 = vmatmul.mubr.bf16.gmra.mrb[0].mxu0 %v2962
        %v3092 = vpop.f32.mrb[0].mxu0
        %v3093 = vadd.f32 0.0, %v3092
        %v3094 = vpop.f32.mrb[0].mxu0
        %v3095 = vpop.f32.mrb[0].mxu0
        %v3096 = vadd.f32 0.0, %v3095
        %v3097 = vpop.f32.mrb[0].mxu0
        %3098 = vmatprep.mubr.bf16.mxu0 0
        %3099 = vmatmul.mubr.bf16.gmra.mrb[0].mxu0 %v2965
        %v3100 = vpop.f32.mrb[0].mxu0
        %v3101 = vadd.f32 0.0, %v3100
        %v3102 = vpop.f32.mrb[0].mxu0
        %v3103 = vpop.f32.mrb[0].mxu0
        %v3104 = vadd.f32 0.0, %v3103
        %v3105 = vpop.f32.mrb[0].mxu0
        %3106 = vmatprep.mubr.bf16.mxu0 0
        %3107 = vmatmul.mubr.bf16.gmra.mrb[0].mxu0 %v2968
        %v3108 = vpop.f32.mrb[0].mxu0
        %v3109 = vadd.f32 0.0, %v3108
        %v3110 = vpop.f32.mrb[0].mxu0
        %v3111 = vpop.f32.mrb[0].mxu0
        %v3112 = vadd.f32 0.0, %v3111
        %v3113 = vpop.f32.mrb[0].mxu0
        %3114 = vmatprep.mubr.bf16.mxu0 0
        %3115 = vmatmul.mubr.bf16.gmra.mrb[0].mxu0 %v2971
        %v3116 = vpop.f32.mrb[0].mxu0
        %v3117 = vadd.f32 0.0, %v3116
        %v3118 = vpop.f32.mrb[0].mxu0
        %v3119 = vpop.f32.mrb[0].mxu0
        %v3120 = vadd.f32 0.0, %v3119
        %v3121 = vpop.f32.mrb[0].mxu0
        %3122 = vmatprep.mubr.bf16.mxu0 0
        %3123 = vmatmul.mubr.bf16.gmra.mrb[0].mxu0 %v2974
        %v3124 = vpop.f32.mrb[0].mxu0
        %v3125 = vadd.f32 0.0, %v3124
        %v3126 = vpop.f32.mrb[0].mxu0
        %v3127 = vpop.f32.mrb[0].mxu0
        %v3128 = vadd.f32 0.0, %v3127
        %v3129 = vpop.f32.mrb[0].mxu0
        %3130 = vmatprep.mubr.bf16.mxu0 0
        %3131 = vmatmul.mubr.bf16.gmra.mrb[0].mxu0 %v2977
        %v3132 = vpop.f32.mrb[0].mxu0
        %v3133 = vadd.f32 0.0, %v3132
        %v3134 = vpop.f32.mrb[0].mxu0
        %v3135 = vpop.f32.mrb[0].mxu0
        %v3136 = vadd.f32 0.0, %v3135
        %v3137 = vpop.f32.mrb[0].mxu0
        %3138 = vmatprep.mubr.bf16.mxu0 0
        %3139 = vmatmul.mubr.bf16.gmra.mrb[0].mxu0 %v2980
        %v3140 = vpop.f32.mrb[0].mxu0
        %v3141 = vadd.f32 0.0, %v3140
        %v3142 = vpop.f32.mrb[0].mxu0
        %v3143 = vpop.f32.mrb[0].mxu0
        %v3144 = vadd.f32 0.0, %v3143
        %v3145 = vpop.f32.mrb[0].mxu0
        %3146 = vmatprep.mubr.bf16.mxu0 0
        %3147 = vmatmul.mubr.bf16.gmra.mrb[0].mxu0 %v2983
        %v3148 = vpop.f32.mrb[0].mxu0
        %v3149 = vadd.f32 0.0, %v3148
        %v3150 = vpop.f32.mrb[0].mxu0
        %v3151 = vpop.f32.mrb[0].mxu0
        %v3152 = vadd.f32 0.0, %v3151
        %v3153 = vpop.f32.mrb[0].mxu0
        %3154 = vmatprep.mubr.bf16.mxu0 0
        %3155 = vmatmul.mubr.bf16.gmra.mrb[0].mxu0 %v2986
        %v3156 = vpop.f32.mrb[0].mxu0
        %v3157 = vadd.f32 0.0, %v3156
        %v3158 = vpop.f32.mrb[0].mxu0
        %v3159 = vpop.f32.mrb[0].mxu0
        %v3160 = vadd.f32 0.0, %v3159
        %v3161 = vpop.f32.mrb[0].mxu0
        %3162 = vmatprep.mubr.bf16.mxu0 0
        %3163 = vmatmul.mubr.bf16.gmra.mrb[0].mxu0 %v2989
        %v3164 = vpop.f32.mrb[0].mxu0
        %v3165 = vadd.f32 0.0, %v3164
        %v3166 = vpop.f32.mrb[0].mxu0
        %v3167 = vpop.f32.mrb[0].mxu0
        %v3168 = vadd.f32 0.0, %v3167
        %v3169 = vpop.f32.mrb[0].mxu0
        %3170 = vdwg.mxu0
        %v3171 = vadd.f32 %v2732, %v3029
        %v3172 = vadd.f32 %v2733, %v3032
        %v3173 = vadd.f32 %v2734, %v3037
        %v3174 = vadd.f32 %v2735, %v3040
        %v3175 = vadd.f32 %v2736, %v3045
        %v3176 = vadd.f32 %v2737, %v3048
        %v3177 = vadd.f32 %v2738, %v3053
        %v3178 = vadd.f32 %v2739, %v3056
        %v3179 = vadd.f32 %v2740, %v3061
        %v3180 = vadd.f32 %v2741, %v3064
        %v3181 = vadd.f32 %v2742, %v3069
        %v3182 = vadd.f32 %v2743, %v3072
        %v3183 = vadd.f32 %v2744, %v3077
        %v3184 = vadd.f32 %v2745, %v3080
        %v3185 = vadd.f32 %v2746, %v3085
        %v3186 = vadd.f32 %v2747, %v3088
        %v3187 = vadd.f32 %v2748, %v3093
        %v3188 = vadd.f32 %v2749, %v3096
        %v3189 = vadd.f32 %v2750, %v3101
        %v3190 = vadd.f32 %v2751, %v3104
        %v3191 = vadd.f32 %v2752, %v3109
        %v3192 = vadd.f32 %v2753, %v3112
        %v3193 = vadd.f32 %v2754, %v3117
        %v3194 = vadd.f32 %v2755, %v3120
        %v3195 = vadd.f32 %v2756, %v3125
        %v3196 = vadd.f32 %v2757, %v3128
        %v3197 = vadd.f32 %v2758, %v3133
        %v3198 = vadd.f32 %v2759, %v3136
        %v3199 = vadd.f32 %v2760, %v3141
        %v3200 = vadd.f32 %v2761, %v3144
        %v3201 = vadd.f32 %v2762, %v3149
        %v3202 = vadd.f32 %v2763, %v3152
        %v3203 = vadd.f32 %v2764, %v3157
        %v3204 = vadd.f32 %v2765, %v3160
        %v3205 = vadd.f32 %v2766, %v3165
        %v3206 = vadd.f32 %v2767, %v3168
        %v3207 = vld [vmem:[%s383 + $0xa0] sm:$0x3]
        %s3208 = scalar_lea.vmem %s1, 14
        %v3209 = vld [vmem:[%s3208] sm:$0x3]
        %v3211 = vunpack.c.l.b16 %v3207
        %v3212 = vpack.c.b16 %v3211, %v3211
        %vm3213 = vsmask.f32 5376
        %v3215 = vshrl.u32 %v2881, 16
        %v3217 = vrot.slane %v3215, 2
        %v3218 = vshll.u32 %v2881, 16
        %v3220 = vrot.slane %v3218, 3
        %v3221 = vor.u32 %v3217, %v3220
        %v3223 = vshrl.u32 %v2882, 16
        %v3225 = vrot.slane %v3223, 2
        %v3226 = vshll.u32 %v2882, 16
        %v3228 = vrot.slane %v3226, 3
        %v3229 = vor.u32 %v3225, %v3228
        %v3230 = vsel %vm3213, %v3221, %v3229
        %v3232 = vshrl.u32 %v2883, 16
        %v3234 = vrot.slane %v3232, 2
        %v3235 = vshll.u32 %v2883, 16
        %v3237 = vrot.slane %v3235, 3
        %v3238 = vor.u32 %v3234, %v3237
        %v3239 = vsel %vm3213, %v3229, %v3238
        %v3241 = vshrl.u32 %v2884, 16
        %v3243 = vrot.slane %v3241, 2
        %v3244 = vshll.u32 %v2884, 16
        %v3246 = vrot.slane %v3244, 3
        %v3247 = vor.u32 %v3243, %v3246
        %v3248 = vsel %vm3213, %v3238, %v3247
        %v3250 = vshrl.u32 %v2885, 16
        %v3252 = vrot.slane %v3250, 2
        %v3253 = vshll.u32 %v2885, 16
        %v3255 = vrot.slane %v3253, 3
        %v3256 = vor.u32 %v3252, %v3255
        %v3257 = vsel %vm3213, %v3247, %v3256
        %v3259 = vshrl.u32 %v2886, 16
        %v3261 = vrot.slane %v3259, 2
        %v3262 = vshll.u32 %v2886, 16
        %v3264 = vrot.slane %v3262, 3
        %v3265 = vor.u32 %v3261, %v3264
        %v3266 = vsel %vm3213, %v3256, %v3265
        %v3268 = vshrl.u32 %v2887, 16
        %v3270 = vrot.slane %v3268, 2
        %v3271 = vshll.u32 %v2887, 16
        %v3273 = vrot.slane %v3271, 3
        %v3274 = vor.u32 %v3270, %v3273
        %v3275 = vsel %vm3213, %v3265, %v3274
        %v3277 = vshrl.u32 %v2888, 16
        %v3279 = vrot.slane %v3277, 2
        %v3280 = vshll.u32 %v2888, 16
        %v3282 = vrot.slane %v3280, 3
        %v3283 = vor.u32 %v3279, %v3282
        %v3284 = vsel %vm3213, %v3274, %v3283
        %v3286 = vshrl.u32 %v2889, 16
        %v3288 = vrot.slane %v3286, 2
        %v3289 = vshll.u32 %v2889, 16
        %v3291 = vrot.slane %v3289, 3
        %v3292 = vor.u32 %v3288, %v3291
        %v3293 = vsel %vm3213, %v3283, %v3292
        %v3295 = vshrl.u32 %v2890, 16
        %v3297 = vrot.slane %v3295, 2
        %v3298 = vshll.u32 %v2890, 16
        %v3300 = vrot.slane %v3298, 3
        %v3301 = vor.u32 %v3297, %v3300
        %v3302 = vsel %vm3213, %v3292, %v3301
        %v3304 = vshrl.u32 %v2891, 16
        %v3306 = vrot.slane %v3304, 2
        %v3307 = vshll.u32 %v2891, 16
        %v3309 = vrot.slane %v3307, 3
        %v3310 = vor.u32 %v3306, %v3309
        %v3311 = vsel %vm3213, %v3301, %v3310
        %v3313 = vshrl.u32 %v2892, 16
        %v3315 = vrot.slane %v3313, 2
        %v3316 = vshll.u32 %v2892, 16
        %v3318 = vrot.slane %v3316, 3
        %v3319 = vor.u32 %v3315, %v3318
        %v3320 = vsel %vm3213, %v3310, %v3319
        %v3322 = vshrl.u32 %v2893, 16
        %v3324 = vrot.slane %v3322, 2
        %v3325 = vshll.u32 %v2893, 16
        %v3327 = vrot.slane %v3325, 3
        %v3328 = vor.u32 %v3324, %v3327
        %v3329 = vsel %vm3213, %v3319, %v3328
        %v3331 = vshrl.u32 %v2894, 16
        %v3333 = vrot.slane %v3331, 2
        %v3334 = vshll.u32 %v2894, 16
        %v3336 = vrot.slane %v3334, 3
        %v3337 = vor.u32 %v3333, %v3336
        %v3338 = vsel %vm3213, %v3328, %v3337
        %v3340 = vshrl.u32 %v2895, 16
        %v3342 = vrot.slane %v3340, 2
        %v3343 = vshll.u32 %v2895, 16
        %v3345 = vrot.slane %v3343, 3
        %v3346 = vor.u32 %v3342, %v3345
        %v3347 = vsel %vm3213, %v3337, %v3346
        %v3349 = vshrl.u32 %v2896, 16
        %v3351 = vrot.slane %v3349, 2
        %v3352 = vshll.u32 %v2896, 16
        %v3354 = vrot.slane %v3352, 3
        %v3355 = vor.u32 %v3351, %v3354
        %v3356 = vsel %vm3213, %v3346, %v3355
        %v3358 = vshrl.u32 %v2897, 16
        %v3360 = vrot.slane %v3358, 2
        %v3361 = vshll.u32 %v2897, 16
        %v3363 = vrot.slane %v3361, 3
        %v3364 = vor.u32 %v3360, %v3363
        %v3365 = vsel %vm3213, %v3355, %v3364
        %v3367 = vshrl.u32 %v2898, 16
        %v3369 = vrot.slane %v3367, 2
        %v3370 = vshll.u32 %v2898, 16
        %v3372 = vrot.slane %v3370, 3
        %v3373 = vor.u32 %v3369, %v3372
        %v3374 = vsel %vm3213, %v3364, %v3373
        %v3376 = vshrl.u32 %v3212, 16
        %v3378 = vrot.slane %v3376, 2
        %v3379 = vshll.u32 %v3212, 16
        %v3381 = vrot.slane %v3379, 3
        %v3382 = vor.u32 %v3378, %v3381
        %v3383 = vsel %vm3213, %v3373, %v3382
        %v3385 = vsel %vm681, %v3230, 0
        %v3388 = vsel %vm681, %v3239, 0
        %v3391 = vsel %vm681, %v3248, 0
        %v3394 = vsel %vm681, %v3257, 0
        %v3397 = vsel %vm681, %v3266, 0
        %v3400 = vsel %vm681, %v3275, 0
        %v3403 = vsel %vm681, %v3284, 0
        %v3406 = vsel %vm681, %v3293, 0
        %v3409 = vsel %vm681, %v3302, 0
        %v3412 = vsel %vm681, %v3311, 0
        %v3415 = vsel %vm681, %v3320, 0
        %v3418 = vsel %vm681, %v3329, 0
        %v3421 = vsel %vm681, %v3338, 0
        %v3424 = vsel %vm681, %v3347, 0
        %v3427 = vsel %vm681, %v3356, 0
        %v3430 = vsel %vm681, %v3365, 0
        %v3433 = vsel %vm681, %v3374, 0
        %v3436 = vsel %vm681, %v3383, 0
        %v3439 = vand.u32 %v3209, %v739
        %3441 = vmatprep.subr.bf16.mxu0 0
        %3442 = vmatpush1.bf16.msra.mxu0 %v3439
        %3443 = vmatprep.subr.bf16.mxu0 0
        %3444 = vmatpush1.bf16.msra.mxu0 0
        %3445 = vmatprep.subr.bf16.mxu0 0
        %3446 = vmatpush1.bf16.msra.mxu0 0
        %3447 = vmatprep.subr.bf16.mxu0 0
        %3448 = vmatpush1.bf16.msra.mxu0 0
        %3449 = vmatprep.subr.bf16.mxu0 0
        %3450 = vmatpush1.bf16.msra.mxu0 0
        %3451 = vmatprep.subr.bf16.mxu0 0
        %3452 = vmatpush1.bf16.msra.mxu0 0
        %3453 = vmatprep.subr.bf16.mxu0 0
        %3454 = vmatpush1.bf16.msra.mxu0 0
        %3455 = vmatprep.subr.bf16.mxu0 0
        %3456 = vmatpush1.bf16.msra.mxu0 0
        %3457 = vmatprep.subr.bf16.mxu0 0
        %3458 = vmatpush1.bf16.msra.mxu0 0
        %3459 = vmatprep.subr.bf16.mxu0 0
        %3460 = vmatpush1.bf16.msra.mxu0 0
        %3461 = vmatprep.subr.bf16.mxu0 0
        %3462 = vmatpush1.bf16.msra.mxu0 0
        %3463 = vmatprep.subr.bf16.mxu0 0
        %3464 = vmatpush1.bf16.msra.mxu0 0
        %3465 = vmatprep.subr.bf16.mxu0 0
        %3466 = vmatpush1.bf16.msra.mxu0 0
        %3467 = vmatprep.subr.bf16.mxu0 0
        %3468 = vmatpush1.bf16.msra.mxu0 0
        %3469 = vmatprep.subr.bf16.mxu0 0
        %3470 = vmatpush1.bf16.msra.mxu0 0
        %3471 = vmatprep.subr.bf16.mxu0 0
        %3472 = vmatpush1.bf16.msra.mxu0 0
        %3473 = vmatprep.mubr.bf16.mxu0 0
        %3474 = vmatmul.mubr.bf16.gmra.mrb[0].mxu0 %v3385
        %v3475 = vpop.f32.mrb[0].mxu0
        %v3476 = vadd.f32 0.0, %v3475
        %v3477 = vpop.f32.mrb[0].mxu0
        %v3478 = vpop.f32.mrb[0].mxu0
        %v3479 = vadd.f32 0.0, %v3478
        %v3480 = vpop.f32.mrb[0].mxu0
        %3481 = vmatprep.mubr.bf16.mxu0 0
        %3482 = vmatmul.mubr.bf16.gmra.mrb[0].mxu0 %v3388
        %v3483 = vpop.f32.mrb[0].mxu0
        %v3484 = vadd.f32 0.0, %v3483
        %v3485 = vpop.f32.mrb[0].mxu0
        %v3486 = vpop.f32.mrb[0].mxu0
        %v3487 = vadd.f32 0.0, %v3486
        %v3488 = vpop.f32.mrb[0].mxu0
        %3489 = vmatprep.mubr.bf16.mxu0 0
        %3490 = vmatmul.mubr.bf16.gmra.mrb[0].mxu0 %v3391
        %v3491 = vpop.f32.mrb[0].mxu0
        %v3492 = vadd.f32 0.0, %v3491
        %v3493 = vpop.f32.mrb[0].mxu0
        %v3494 = vpop.f32.mrb[0].mxu0
        %v3495 = vadd.f32 0.0, %v3494
        %v3496 = vpop.f32.mrb[0].mxu0
        %3497 = vmatprep.mubr.bf16.mxu0 0
        %3498 = vmatmul.mubr.bf16.gmra.mrb[0].mxu0 %v3394
        %v3499 = vpop.f32.mrb[0].mxu0
        %v3500 = vadd.f32 0.0, %v3499
        %v3501 = vpop.f32.mrb[0].mxu0
        %v3502 = vpop.f32.mrb[0].mxu0
        %v3503 = vadd.f32 0.0, %v3502
        %v3504 = vpop.f32.mrb[0].mxu0
        %3505 = vmatprep.mubr.bf16.mxu0 0
        %3506 = vmatmul.mubr.bf16.gmra.mrb[0].mxu0 %v3397
        %v3507 = vpop.f32.mrb[0].mxu0
        %v3508 = vadd.f32 0.0, %v3507
        %v3509 = vpop.f32.mrb[0].mxu0
        %v3510 = vpop.f32.mrb[0].mxu0
        %v3511 = vadd.f32 0.0, %v3510
        %v3512 = vpop.f32.mrb[0].mxu0
        %3513 = vmatprep.mubr.bf16.mxu0 0
        %3514 = vmatmul.mubr.bf16.gmra.mrb[0].mxu0 %v3400
        %v3515 = vpop.f32.mrb[0].mxu0
        %v3516 = vadd.f32 0.0, %v3515
        %v3517 = vpop.f32.mrb[0].mxu0
        %v3518 = vpop.f32.mrb[0].mxu0
        %v3519 = vadd.f32 0.0, %v3518
        %v3520 = vpop.f32.mrb[0].mxu0
        %3521 = vmatprep.mubr.bf16.mxu0 0
        %3522 = vmatmul.mubr.bf16.gmra.mrb[0].mxu0 %v3403
        %v3523 = vpop.f32.mrb[0].mxu0
        %v3524 = vadd.f32 0.0, %v3523
        %v3525 = vpop.f32.mrb[0].mxu0
        %v3526 = vpop.f32.mrb[0].mxu0
        %v3527 = vadd.f32 0.0, %v3526
        %v3528 = vpop.f32.mrb[0].mxu0
        %3529 = vmatprep.mubr.bf16.mxu0 0
        %3530 = vmatmul.mubr.bf16.gmra.mrb[0].mxu0 %v3406
        %v3531 = vpop.f32.mrb[0].mxu0
        %v3532 = vadd.f32 0.0, %v3531
        %v3533 = vpop.f32.mrb[0].mxu0
        %v3534 = vpop.f32.mrb[0].mxu0
        %v3535 = vadd.f32 0.0, %v3534
        %v3536 = vpop.f32.mrb[0].mxu0
        %3537 = vmatprep.mubr.bf16.mxu0 0
        %3538 = vmatmul.mubr.bf16.gmra.mrb[0].mxu0 %v3409
        %v3539 = vpop.f32.mrb[0].mxu0
        %v3540 = vadd.f32 0.0, %v3539
        %v3541 = vpop.f32.mrb[0].mxu0
        %v3542 = vpop.f32.mrb[0].mxu0
        %v3543 = vadd.f32 0.0, %v3542
        %v3544 = vpop.f32.mrb[0].mxu0
        %3545 = vmatprep.mubr.bf16.mxu0 0
        %3546 = vmatmul.mubr.bf16.gmra.mrb[0].mxu0 %v3412
        %v3547 = vpop.f32.mrb[0].mxu0
        %v3548 = vadd.f32 0.0, %v3547
        %v3549 = vpop.f32.mrb[0].mxu0
        %v3550 = vpop.f32.mrb[0].mxu0
        %v3551 = vadd.f32 0.0, %v3550
        %v3552 = vpop.f32.mrb[0].mxu0
        %3553 = vmatprep.mubr.bf16.mxu0 0
        %3554 = vmatmul.mubr.bf16.gmra.mrb[0].mxu0 %v3415
        %v3555 = vpop.f32.mrb[0].mxu0
        %v3556 = vadd.f32 0.0, %v3555
        %v3557 = vpop.f32.mrb[0].mxu0
        %v3558 = vpop.f32.mrb[0].mxu0
        %v3559 = vadd.f32 0.0, %v3558
        %v3560 = vpop.f32.mrb[0].mxu0
        %3561 = vmatprep.mubr.bf16.mxu0 0
        %3562 = vmatmul.mubr.bf16.gmra.mrb[0].mxu0 %v3418
        %v3563 = vpop.f32.mrb[0].mxu0
        %v3564 = vadd.f32 0.0, %v3563
        %v3565 = vpop.f32.mrb[0].mxu0
        %v3566 = vpop.f32.mrb[0].mxu0
        %v3567 = vadd.f32 0.0, %v3566
        %v3568 = vpop.f32.mrb[0].mxu0
        %3569 = vmatprep.mubr.bf16.mxu0 0
        %3570 = vmatmul.mubr.bf16.gmra.mrb[0].mxu0 %v3421
        %v3571 = vpop.f32.mrb[0].mxu0
        %v3572 = vadd.f32 0.0, %v3571
        %v3573 = vpop.f32.mrb[0].mxu0
        %v3574 = vpop.f32.mrb[0].mxu0
        %v3575 = vadd.f32 0.0, %v3574
        %v3576 = vpop.f32.mrb[0].mxu0
        %3577 = vmatprep.mubr.bf16.mxu0 0
        %3578 = vmatmul.mubr.bf16.gmra.mrb[0].mxu0 %v3424
        %v3579 = vpop.f32.mrb[0].mxu0
        %v3580 = vadd.f32 0.0, %v3579
        %v3581 = vpop.f32.mrb[0].mxu0
        %v3582 = vpop.f32.mrb[0].mxu0
        %v3583 = vadd.f32 0.0, %v3582
        %v3584 = vpop.f32.mrb[0].mxu0
        %3585 = vmatprep.mubr.bf16.mxu0 0
        %3586 = vmatmul.mubr.bf16.gmra.mrb[0].mxu0 %v3427
        %v3587 = vpop.f32.mrb[0].mxu0
        %v3588 = vadd.f32 0.0, %v3587
        %v3589 = vpop.f32.mrb[0].mxu0
        %v3590 = vpop.f32.mrb[0].mxu0
        %v3591 = vadd.f32 0.0, %v3590
        %v3592 = vpop.f32.mrb[0].mxu0
        %3593 = vmatprep.mubr.bf16.mxu0 0
        %3594 = vmatmul.mubr.bf16.gmra.mrb[0].mxu0 %v3430
        %v3595 = vpop.f32.mrb[0].mxu0
        %v3596 = vadd.f32 0.0, %v3595
        %v3597 = vpop.f32.mrb[0].mxu0
        %v3598 = vpop.f32.mrb[0].mxu0
        %v3599 = vadd.f32 0.0, %v3598
        %v3600 = vpop.f32.mrb[0].mxu0
        %3601 = vmatprep.mubr.bf16.mxu0 0
        %3602 = vmatmul.mubr.bf16.gmra.mrb[0].mxu0 %v3433
        %v3603 = vpop.f32.mrb[0].mxu0
        %v3604 = vadd.f32 0.0, %v3603
        %v3605 = vpop.f32.mrb[0].mxu0
        %v3606 = vpop.f32.mrb[0].mxu0
        %v3607 = vadd.f32 0.0, %v3606
        %v3608 = vpop.f32.mrb[0].mxu0
        %3609 = vmatprep.mubr.bf16.mxu0 0
        %3610 = vmatmul.mubr.bf16.gmra.mrb[0].mxu0 %v3436
        %v3611 = vpop.f32.mrb[0].mxu0
        %v3612 = vadd.f32 0.0, %v3611
        %v3613 = vpop.f32.mrb[0].mxu0
        %v3614 = vpop.f32.mrb[0].mxu0
        %v3615 = vadd.f32 0.0, %v3614
        %v3616 = vpop.f32.mrb[0].mxu0
        %3617 = vdwg.mxu0
        %v3618 = vadd.f32 %v3171, %v3476
        %v3619 = vadd.f32 %v3172, %v3479
        %v3620 = vadd.f32 %v3173, %v3484
        %v3621 = vadd.f32 %v3174, %v3487
        %v3622 = vadd.f32 %v3175, %v3492
        %v3623 = vadd.f32 %v3176, %v3495
        %v3624 = vadd.f32 %v3177, %v3500
        %v3625 = vadd.f32 %v3178, %v3503
        %v3626 = vadd.f32 %v3179, %v3508
        %v3627 = vadd.f32 %v3180, %v3511
        %v3628 = vadd.f32 %v3181, %v3516
        %v3629 = vadd.f32 %v3182, %v3519
        %v3630 = vadd.f32 %v3183, %v3524
        %v3631 = vadd.f32 %v3184, %v3527
        %v3632 = vadd.f32 %v3185, %v3532
        %v3633 = vadd.f32 %v3186, %v3535
        %v3634 = vadd.f32 %v3187, %v3540
        %v3635 = vadd.f32 %v3188, %v3543
        %v3636 = vadd.f32 %v3189, %v3548
        %v3637 = vadd.f32 %v3190, %v3551
        %v3638 = vadd.f32 %v3191, %v3556
        %v3639 = vadd.f32 %v3192, %v3559
        %v3640 = vadd.f32 %v3193, %v3564
        %v3641 = vadd.f32 %v3194, %v3567
        %v3642 = vadd.f32 %v3195, %v3572
        %v3643 = vadd.f32 %v3196, %v3575
        %v3644 = vadd.f32 %v3197, %v3580
        %v3645 = vadd.f32 %v3198, %v3583
        %v3646 = vadd.f32 %v3199, %v3588
        %v3647 = vadd.f32 %v3200, %v3591
        %v3648 = vadd.f32 %v3201, %v3596
        %v3649 = vadd.f32 %v3202, %v3599
        %v3650 = vadd.f32 %v3203, %v3604
        %v3651 = vadd.f32 %v3204, %v3607
        %v3652 = vadd.f32 %v3205, %v3612
        %v3653 = vadd.f32 %v3206, %v3615
        %v3654 = vld [vmem:[%s383 + $0x10] sm:$0x8]
        %s3655 = scalar_lea.vmem %s1, 16
        %v3656 = vld [vmem:[%s3655] sm:$0x3]
        %v3658 = vunpack.c.l.b16 %v3654
        %v3659 = vpack.c.b16 %v2845, %v3658
        %vm3660 = vcmask 1044480
        %v3661 = vrot.slane %v3659, 3
        %v3662 = vrot.slane %v2882, 3
        %v3663 = vsel %vm3660, %v3661, %v3662
        %v3664 = vrot.slane %v2883, 3
        %v3665 = vsel %vm3660, %v3662, %v3664
        %v3666 = vrot.slane %v2884, 3
        %v3667 = vsel %vm3660, %v3664, %v3666
        %v3668 = vrot.slane %v2885, 3
        %v3669 = vsel %vm3660, %v3666, %v3668
        %v3670 = vrot.slane %v2886, 3
        %v3671 = vsel %vm3660, %v3668, %v3670
        %v3672 = vrot.slane %v2887, 3
        %v3673 = vsel %vm3660, %v3670, %v3672
        %v3674 = vrot.slane %v2888, 3
        %v3675 = vsel %vm3660, %v3672, %v3674
        %v3676 = vrot.slane %v2889, 3
        %v3677 = vsel %vm3660, %v3674, %v3676
        %v3678 = vrot.slane %v2890, 3
        %v3679 = vsel %vm3660, %v3676, %v3678
        %v3680 = vrot.slane %v2891, 3
        %v3681 = vsel %vm3660, %v3678, %v3680
        %v3682 = vrot.slane %v2892, 3
        %v3683 = vsel %vm3660, %v3680, %v3682
        %v3684 = vrot.slane %v2893, 3
        %v3685 = vsel %vm3660, %v3682, %v3684
        %v3686 = vrot.slane %v2894, 3
        %v3687 = vsel %vm3660, %v3684, %v3686
        %v3688 = vrot.slane %v2895, 3
        %v3689 = vsel %vm3660, %v3686, %v3688
        %v3690 = vrot.slane %v2896, 3
        %v3691 = vsel %vm3660, %v3688, %v3690
        %v3692 = vrot.slane %v2897, 3
        %v3693 = vsel %vm3660, %v3690, %v3692
        %v3694 = vrot.slane %v2898, 3
        %v3695 = vsel %vm3660, %v3692, %v3694
        %v3696 = vrot.slane %v3212, 3
        %v3697 = vsel %vm3660, %v3694, %v3696
        %v3699 = vsel %vm681, %v3663, 0
        %v3702 = vsel %vm681, %v3665, 0
        %v3705 = vsel %vm681, %v3667, 0
        %v3708 = vsel %vm681, %v3669, 0
        %v3711 = vsel %vm681, %v3671, 0
        %v3714 = vsel %vm681, %v3673, 0
        %v3717 = vsel %vm681, %v3675, 0
        %v3720 = vsel %vm681, %v3677, 0
        %v3723 = vsel %vm681, %v3679, 0
        %v3726 = vsel %vm681, %v3681, 0
        %v3729 = vsel %vm681, %v3683, 0
        %v3732 = vsel %vm681, %v3685, 0
        %v3735 = vsel %vm681, %v3687, 0
        %v3738 = vsel %vm681, %v3689, 0
        %v3741 = vsel %vm681, %v3691, 0
        %v3744 = vsel %vm681, %v3693, 0
        %v3747 = vsel %vm681, %v3695, 0
        %v3750 = vsel %vm681, %v3697, 0
        %v3753 = vand.u32 %v3656, %v739
        %3755 = vmatprep.subr.bf16.mxu0 0
        %3756 = vmatpush1.bf16.msra.mxu0 %v3753
        %3757 = vmatprep.subr.bf16.mxu0 0
        %3758 = vmatpush1.bf16.msra.mxu0 0
        %3759 = vmatprep.subr.bf16.mxu0 0
        %3760 = vmatpush1.bf16.msra.mxu0 0
        %3761 = vmatprep.subr.bf16.mxu0 0
        %3762 = vmatpush1.bf16.msra.mxu0 0
        %3763 = vmatprep.subr.bf16.mxu0 0
        %3764 = vmatpush1.bf16.msra.mxu0 0
        %3765 = vmatprep.subr.bf16.mxu0 0
        %3766 = vmatpush1.bf16.msra.mxu0 0
        %3767 = vmatprep.subr.bf16.mxu0 0
        %3768 = vmatpush1.bf16.msra.mxu0 0
        %3769 = vmatprep.subr.bf16.mxu0 0
        %3770 = vmatpush1.bf16.msra.mxu0 0
        %3771 = vmatprep.subr.bf16.mxu0 0
        %3772 = vmatpush1.bf16.msra.mxu0 0
        %3773 = vmatprep.subr.bf16.mxu0 0
        %3774 = vmatpush1.bf16.msra.mxu0 0
        %3775 = vmatprep.subr.bf16.mxu0 0
        %3776 = vmatpush1.bf16.msra.mxu0 0
        %3777 = vmatprep.subr.bf16.mxu0 0
        %3778 = vmatpush1.bf16.msra.mxu0 0
        %3779 = vmatprep.subr.bf16.mxu0 0
        %3780 = vmatpush1.bf16.msra.mxu0 0
        %3781 = vmatprep.subr.bf16.mxu0 0
        %3782 = vmatpush1.bf16.msra.mxu0 0
        %3783 = vmatprep.subr.bf16.mxu0 0
        %3784 = vmatpush1.bf16.msra.mxu0 0
        %3785 = vmatprep.subr.bf16.mxu0 0
        %3786 = vmatpush1.bf16.msra.mxu0 0
        %3787 = vmatprep.mubr.bf16.mxu0 0
        %3788 = vmatmul.mubr.bf16.gmra.mrb[0].mxu0 %v3699
        %v3789 = vpop.f32.mrb[0].mxu0
        %v3790 = vadd.f32 0.0, %v3789
        %v3791 = vpop.f32.mrb[0].mxu0
        %v3792 = vpop.f32.mrb[0].mxu0
        %v3793 = vadd.f32 0.0, %v3792
        %v3794 = vpop.f32.mrb[0].mxu0
        %3795 = vmatprep.mubr.bf16.mxu0 0
        %3796 = vmatmul.mubr.bf16.gmra.mrb[0].mxu0 %v3702
        %v3797 = vpop.f32.mrb[0].mxu0
        %v3798 = vadd.f32 0.0, %v3797
        %v3799 = vpop.f32.mrb[0].mxu0
        %v3800 = vpop.f32.mrb[0].mxu0
        %v3801 = vadd.f32 0.0, %v3800
        %v3802 = vpop.f32.mrb[0].mxu0
        %3803 = vmatprep.mubr.bf16.mxu0 0
        %3804 = vmatmul.mubr.bf16.gmra.mrb[0].mxu0 %v3705
        %v3805 = vpop.f32.mrb[0].mxu0
        %v3806 = vadd.f32 0.0, %v3805
        %v3807 = vpop.f32.mrb[0].mxu0
        %v3808 = vpop.f32.mrb[0].mxu0
        %v3809 = vadd.f32 0.0, %v3808
        %v3810 = vpop.f32.mrb[0].mxu0
        %3811 = vmatprep.mubr.bf16.mxu0 0
        %3812 = vmatmul.mubr.bf16.gmra.mrb[0].mxu0 %v3708
        %v3813 = vpop.f32.mrb[0].mxu0
        %v3814 = vadd.f32 0.0, %v3813
        %v3815 = vpop.f32.mrb[0].mxu0
        %v3816 = vpop.f32.mrb[0].mxu0
        %v3817 = vadd.f32 0.0, %v3816
        %v3818 = vpop.f32.mrb[0].mxu0
        %3819 = vmatprep.mubr.bf16.mxu0 0
        %3820 = vmatmul.mubr.bf16.gmra.mrb[0].mxu0 %v3711
        %v3821 = vpop.f32.mrb[0].mxu0
        %v3822 = vadd.f32 0.0, %v3821
        %v3823 = vpop.f32.mrb[0].mxu0
        %v3824 = vpop.f32.mrb[0].mxu0
        %v3825 = vadd.f32 0.0, %v3824
        %v3826 = vpop.f32.mrb[0].mxu0
        %3827 = vmatprep.mubr.bf16.mxu0 0
        %3828 = vmatmul.mubr.bf16.gmra.mrb[0].mxu0 %v3714
        %v3829 = vpop.f32.mrb[0].mxu0
        %v3830 = vadd.f32 0.0, %v3829
        %v3831 = vpop.f32.mrb[0].mxu0
        %v3832 = vpop.f32.mrb[0].mxu0
        %v3833 = vadd.f32 0.0, %v3832
        %v3834 = vpop.f32.mrb[0].mxu0
        %3835 = vmatprep.mubr.bf16.mxu0 0
        %3836 = vmatmul.mubr.bf16.gmra.mrb[0].mxu0 %v3717
        %v3837 = vpop.f32.mrb[0].mxu0
        %v3838 = vadd.f32 0.0, %v3837
        %v3839 = vpop.f32.mrb[0].mxu0
        %v3840 = vpop.f32.mrb[0].mxu0
        %v3841 = vadd.f32 0.0, %v3840
        %v3842 = vpop.f32.mrb[0].mxu0
        %3843 = vmatprep.mubr.bf16.mxu0 0
        %3844 = vmatmul.mubr.bf16.gmra.mrb[0].mxu0 %v3720
        %v3845 = vpop.f32.mrb[0].mxu0
        %v3846 = vadd.f32 0.0, %v3845
        %v3847 = vpop.f32.mrb[0].mxu0
        %v3848 = vpop.f32.mrb[0].mxu0
        %v3849 = vadd.f32 0.0, %v3848
        %v3850 = vpop.f32.mrb[0].mxu0
        %3851 = vmatprep.mubr.bf16.mxu0 0
        %3852 = vmatmul.mubr.bf16.gmra.mrb[0].mxu0 %v3723
        %v3853 = vpop.f32.mrb[0].mxu0
        %v3854 = vadd.f32 0.0, %v3853
        %v3855 = vpop.f32.mrb[0].mxu0
        %v3856 = vpop.f32.mrb[0].mxu0
        %v3857 = vadd.f32 0.0, %v3856
        %v3858 = vpop.f32.mrb[0].mxu0
        %3859 = vmatprep.mubr.bf16.mxu0 0
        %3860 = vmatmul.mubr.bf16.gmra.mrb[0].mxu0 %v3726
        %v3861 = vpop.f32.mrb[0].mxu0
        %v3862 = vadd.f32 0.0, %v3861
        %v3863 = vpop.f32.mrb[0].mxu0
        %v3864 = vpop.f32.mrb[0].mxu0
        %v3865 = vadd.f32 0.0, %v3864
        %v3866 = vpop.f32.mrb[0].mxu0
        %3867 = vmatprep.mubr.bf16.mxu0 0
        %3868 = vmatmul.mubr.bf16.gmra.mrb[0].mxu0 %v3729
        %v3869 = vpop.f32.mrb[0].mxu0
        %v3870 = vadd.f32 0.0, %v3869
        %v3871 = vpop.f32.mrb[0].mxu0
        %v3872 = vpop.f32.mrb[0].mxu0
        %v3873 = vadd.f32 0.0, %v3872
        %v3874 = vpop.f32.mrb[0].mxu0
        %3875 = vmatprep.mubr.bf16.mxu0 0
        %3876 = vmatmul.mubr.bf16.gmra.mrb[0].mxu0 %v3732
        %v3877 = vpop.f32.mrb[0].mxu0
        %v3878 = vadd.f32 0.0, %v3877
        %v3879 = vpop.f32.mrb[0].mxu0
        %v3880 = vpop.f32.mrb[0].mxu0
        %v3881 = vadd.f32 0.0, %v3880
        %v3882 = vpop.f32.mrb[0].mxu0
        %3883 = vmatprep.mubr.bf16.mxu0 0
        %3884 = vmatmul.mubr.bf16.gmra.mrb[0].mxu0 %v3735
        %v3885 = vpop.f32.mrb[0].mxu0
        %v3886 = vadd.f32 0.0, %v3885
        %v3887 = vpop.f32.mrb[0].mxu0
        %v3888 = vpop.f32.mrb[0].mxu0
        %v3889 = vadd.f32 0.0, %v3888
        %v3890 = vpop.f32.mrb[0].mxu0
        %3891 = vmatprep.mubr.bf16.mxu0 0
        %3892 = vmatmul.mubr.bf16.gmra.mrb[0].mxu0 %v3738
        %v3893 = vpop.f32.mrb[0].mxu0
        %v3894 = vadd.f32 0.0, %v3893
        %v3895 = vpop.f32.mrb[0].mxu0
        %v3896 = vpop.f32.mrb[0].mxu0
        %v3897 = vadd.f32 0.0, %v3896
        %v3898 = vpop.f32.mrb[0].mxu0
        %3899 = vmatprep.mubr.bf16.mxu0 0
        %3900 = vmatmul.mubr.bf16.gmra.mrb[0].mxu0 %v3741
        %v3901 = vpop.f32.mrb[0].mxu0
        %v3902 = vadd.f32 0.0, %v3901
        %v3903 = vpop.f32.mrb[0].mxu0
        %v3904 = vpop.f32.mrb[0].mxu0
        %v3905 = vadd.f32 0.0, %v3904
        %v3906 = vpop.f32.mrb[0].mxu0
        %3907 = vmatprep.mubr.bf16.mxu0 0
        %3908 = vmatmul.mubr.bf16.gmra.mrb[0].mxu0 %v3744
        %v3909 = vpop.f32.mrb[0].mxu0
        %v3910 = vadd.f32 0.0, %v3909
        %v3911 = vpop.f32.mrb[0].mxu0
        %v3912 = vpop.f32.mrb[0].mxu0
        %v3913 = vadd.f32 0.0, %v3912
        %v3914 = vpop.f32.mrb[0].mxu0
        %3915 = vmatprep.mubr.bf16.mxu0 0
        %3916 = vmatmul.mubr.bf16.gmra.mrb[0].mxu0 %v3747
        %v3917 = vpop.f32.mrb[0].mxu0
        %v3918 = vadd.f32 0.0, %v3917
        %v3919 = vpop.f32.mrb[0].mxu0
        %v3920 = vpop.f32.mrb[0].mxu0
        %v3921 = vadd.f32 0.0, %v3920
        %v3922 = vpop.f32.mrb[0].mxu0
        %3923 = vmatprep.mubr.bf16.mxu0 0
        %3924 = vmatmul.mubr.bf16.gmra.mrb[0].mxu0 %v3750
        %v3925 = vpop.f32.mrb[0].mxu0
        %v3926 = vadd.f32 0.0, %v3925
        %v3927 = vpop.f32.mrb[0].mxu0
        %v3928 = vpop.f32.mrb[0].mxu0
        %v3929 = vadd.f32 0.0, %v3928
        %v3930 = vpop.f32.mrb[0].mxu0
        %3931 = vdwg.mxu0
        %v3932 = vadd.f32 %v3618, %v3790
        %v3933 = vadd.f32 %v3619, %v3793
        %v3934 = vadd.f32 %v3620, %v3798
        %v3935 = vadd.f32 %v3621, %v3801
        %v3936 = vadd.f32 %v3622, %v3806
        %v3937 = vadd.f32 %v3623, %v3809
        %v3938 = vadd.f32 %v3624, %v3814
        %v3939 = vadd.f32 %v3625, %v3817
        %v3940 = vadd.f32 %v3626, %v3822
        %v3941 = vadd.f32 %v3627, %v3825
        %v3942 = vadd.f32 %v3628, %v3830
        %v3943 = vadd.f32 %v3629, %v3833
        %v3944 = vadd.f32 %v3630, %v3838
        %v3945 = vadd.f32 %v3631, %v3841
        %v3946 = vadd.f32 %v3632, %v3846
        %v3947 = vadd.f32 %v3633, %v3849
        %v3948 = vadd.f32 %v3634, %v3854
        %v3949 = vadd.f32 %v3635, %v3857
        %v3950 = vadd.f32 %v3636, %v3862
        %v3951 = vadd.f32 %v3637, %v3865
        %v3952 = vadd.f32 %v3638, %v3870
        %v3953 = vadd.f32 %v3639, %v3873
        %v3954 = vadd.f32 %v3640, %v3878
        %v3955 = vadd.f32 %v3641, %v3881
        %v3956 = vadd.f32 %v3642, %v3886
        %v3957 = vadd.f32 %v3643, %v3889
        %v3958 = vadd.f32 %v3644, %v3894
        %v3959 = vadd.f32 %v3645, %v3897
        %v3960 = vadd.f32 %v3646, %v3902
        %v3961 = vadd.f32 %v3647, %v3905
        %v3962 = vadd.f32 %v3648, %v3910
        %v3963 = vadd.f32 %v3649, %v3913
        %v3964 = vadd.f32 %v3650, %v3918
        %v3965 = vadd.f32 %v3651, %v3921
        %v3966 = vadd.f32 %v3652, %v3926
        %v3967 = vadd.f32 %v3653, %v3929
        %v3968 = vld [vmem:[%s2] sm:$0x1]
        %v3970 = vlaneseq
        %v3971 = vshrl.u32 %v3970, 7
        %v3972 = vsub.s32 0, %v3971
        %v3973 = vrot.slane %v3968, %v3972
        %v3975 = vadd.f32 %v3932, %v3973
        %v3976 = vadd.f32 %v3933, %v3973
        %v3977 = vadd.f32 %v3934, %v3973
        %v3978 = vadd.f32 %v3935, %v3973
        %v3979 = vadd.f32 %v3936, %v3973
        %v3980 = vadd.f32 %v3937, %v3973
        %v3981 = vadd.f32 %v3938, %v3973
        %v3982 = vadd.f32 %v3939, %v3973
        %v3983 = vadd.f32 %v3940, %v3973
        %v3984 = vadd.f32 %v3941, %v3973
        %v3985 = vadd.f32 %v3942, %v3973
        %v3986 = vadd.f32 %v3943, %v3973
        %v3987 = vadd.f32 %v3944, %v3973
        %v3988 = vadd.f32 %v3945, %v3973
        %v3989 = vadd.f32 %v3946, %v3973
        %v3990 = vadd.f32 %v3947, %v3973
        %v3991 = vadd.f32 %v3948, %v3973
        %v3992 = vadd.f32 %v3949, %v3973
        %v3993 = vadd.f32 %v3950, %v3973
        %v3994 = vadd.f32 %v3951, %v3973
        %v3995 = vadd.f32 %v3952, %v3973
        %v3996 = vadd.f32 %v3953, %v3973
        %v3997 = vadd.f32 %v3954, %v3973
        %v3998 = vadd.f32 %v3955, %v3973
        %v3999 = vadd.f32 %v3956, %v3973
        %v4000 = vadd.f32 %v3957, %v3973
        %v4001 = vadd.f32 %v3958, %v3973
        %v4002 = vadd.f32 %v3959, %v3973
        %v4003 = vadd.f32 %v3960, %v3973
        %v4004 = vadd.f32 %v3961, %v3973
        %v4005 = vadd.f32 %v3962, %v3973
        %v4006 = vadd.f32 %v3963, %v3973
        %v4007 = vadd.f32 %v3964, %v3973
        %v4008 = vadd.f32 %v3965, %v3973
        %v4009 = vadd.f32 %v3966, %v3973
        %v4010 = vadd.f32 %v3967, %v3973
        %v4011 = vmax.f32 %v3975, 0.0
        %v4012 = vmax.f32 %v3976, 0.0
        %v4013 = vmax.f32 %v3977, 0.0
        %v4014 = vmax.f32 %v3978, 0.0
        %v4015 = vmax.f32 %v3979, 0.0
        %v4016 = vmax.f32 %v3980, 0.0
        %v4017 = vmax.f32 %v3981, 0.0
        %v4018 = vmax.f32 %v3982, 0.0
        %v4019 = vmax.f32 %v3983, 0.0
        %v4020 = vmax.f32 %v3984, 0.0
        %v4021 = vmax.f32 %v3985, 0.0
        %v4022 = vmax.f32 %v3986, 0.0
        %v4023 = vmax.f32 %v3987, 0.0
        %v4024 = vmax.f32 %v3988, 0.0
        %v4025 = vmax.f32 %v3989, 0.0
        %v4026 = vmax.f32 %v3990, 0.0
        %v4027 = vmax.f32 %v3991, 0.0
        %v4028 = vmax.f32 %v3992, 0.0
        %v4029 = vmax.f32 %v3993, 0.0
        %v4030 = vmax.f32 %v3994, 0.0
        %v4031 = vmax.f32 %v3995, 0.0
        %v4032 = vmax.f32 %v3996, 0.0
        %v4033 = vmax.f32 %v3997, 0.0
        %v4034 = vmax.f32 %v3998, 0.0
        %v4035 = vmax.f32 %v3999, 0.0
        %v4036 = vmax.f32 %v4000, 0.0
        %v4037 = vmax.f32 %v4001, 0.0
        %v4038 = vmax.f32 %v4002, 0.0
        %v4039 = vmax.f32 %v4003, 0.0
        %v4040 = vmax.f32 %v4004, 0.0
        %v4041 = vmax.f32 %v4005, 0.0
        %v4042 = vmax.f32 %v4006, 0.0
        %v4043 = vmax.f32 %v4007, 0.0
        %v4044 = vmax.f32 %v4008, 0.0
        %v4045 = vmax.f32 %v4009, 0.0
        %v4046 = vmax.f32 %v4010, 0.0
        %vm4050 = vcmask 1045504
        %v4051 = vrot.slane %v4013, 2
        %v4052 = vrot.slane %v4014, 2
        %v4053 = vsel %vm4050, %v4051, %v4052
        %v4054 = vrot.slane %v4015, 2
        %v4055 = vsel %vm4050, %v4052, %v4054
        %v4058 = vmax.f32 %v4011, %v4053
        %v4059 = vmax.f32 %v4012, %v4055
        %v4060 = vsel %vm398, %v4058, -inf
        %v4061 = vrot.slane %v4060, 4
        %v4062 = vmax.f32 %v4060, %v4061
        %v4063 = vrot.slane %v4062, 2
        %v4064 = vmax.f32 %v4062, %v4063
        %v4065 = vrot.slane %v4064, 1
        %v4066 = vmax.f32 %v4064, %v4065
        %vm4067 = vcmask 257025
        %v4068 = vsel %vm4067, %v4058, -inf
        %v4069 = vrot.slane %v4068, 4
        %v4070 = vmax.f32 %v4068, %v4069
        %v4071 = vrot.slane %v4070, 2
        %v4072 = vmax.f32 %v4070, %v4071
        %v4073 = vrot.slane %v4072, 1
        %v4074 = vmax.f32 %v4072, %v4073
        %vm4075 = vcmask 259075
        %v4076 = vsel %vm4075, %v4058, -inf
        %v4077 = vrot.slane %v4076, 4
        %v4078 = vmax.f32 %v4076, %v4077
        %v4079 = vrot.slane %v4078, 2
        %v4080 = vmax.f32 %v4078, %v4079
        %v4081 = vrot.slane %v4080, 1
        %v4082 = vmax.f32 %v4080, %v4081
        %vm4083 = vcmask 261125
        %v4084 = vsel %vm4083, %v4058, -inf
        %v4085 = vrot.slane %v4084, 4
        %v4086 = vmax.f32 %v4084, %v4085
        %v4087 = vrot.slane %v4086, 2
        %v4088 = vmax.f32 %v4086, %v4087
        %v4089 = vrot.slane %v4088, 1
        %v4090 = vmax.f32 %v4088, %v4089
        %vm4091 = vcmask 261127
        %v4092 = vsel %vm4091, %v4058, -inf
        %v4093 = vsel %vm398, %v4059, -inf
        %v4094 = vmax.f32 %v4092, %v4093
        %v4095 = vrot.slane %v4094, 4
        %v4096 = vmax.f32 %v4094, %v4095
        %v4097 = vrot.slane %v4096, 2
        %v4098 = vmax.f32 %v4096, %v4097
        %v4099 = vrot.slane %v4098, 1
        %v4100 = vmax.f32 %v4098, %v4099
        %v4101 = vsel %vm4067, %v4059, -inf
        %v4102 = vrot.slane %v4101, 4
        %v4103 = vmax.f32 %v4101, %v4102
        %v4104 = vrot.slane %v4103, 2
        %v4105 = vmax.f32 %v4103, %v4104
        %v4106 = vrot.slane %v4105, 1
        %v4107 = vmax.f32 %v4105, %v4106
        %v4108 = vsel %vm4075, %v4059, -inf
        %v4109 = vrot.slane %v4108, 4
        %v4110 = vmax.f32 %v4108, %v4109
        %v4111 = vrot.slane %v4110, 2
        %v4112 = vmax.f32 %v4110, %v4111
        %v4113 = vrot.slane %v4112, 1
        %v4114 = vmax.f32 %v4112, %v4113
        %v4115 = vsel %vm4083, %v4059, -inf
        %v4116 = vrot.slane %v4115, 4
        %v4117 = vmax.f32 %v4115, %v4116
        %v4118 = vrot.slane %v4117, 2
        %v4119 = vmax.f32 %v4117, %v4118
        %v4120 = vrot.slane %v4119, 1
        %v4121 = vmax.f32 %v4119, %v4120
        %v4122 = vsel %vm736, %v4066, %v4074
        %v4123 = vsel %vm737, %v4122, %v4082
        %vm4124 = vcmask 1042432
        %v4125 = vsel %vm4124, %v4123, %v4090
        %vm4126 = vcmask 1043456
        %v4127 = vsel %vm4126, %v4125, %v4100
        %vm4128 = vcmask 1044480
        %v4129 = vsel %vm4128, %v4127, %v4107
        %v4130 = vsel %vm4050, %v4129, %v4114
        %vm4131 = vcmask 1046528
        %v4132 = vsel %vm4131, %v4130, %v4121
        %v4133 = vpack.c.bf16 %v4132, %v4132
        %v4135 = vunpack.c.l.b16 %v4133
        %v4136 = vpack.c.b16 %v4135, %v4135
        %v4138 = vshrl.u32 %v4136, 16
        %v4140 = vrot.slane %v4138, 6
        %v4141 = vshll.u32 %v4136, 16
        %v4143 = vrot.slane %v4141, 7
        %v4144 = vor.u32 %v4140, %v4143
        %v4145 = vrot.slane %v4144, 4
        %vm4148 = vcmask 257025
        %vm4149 = vsmask.f32 7942
        %vm4150 = vmand %vm4148, %vm4149
        %v4151 = vld [vmem:[#allocation2 + $0x4] sm:$0xe]
        %v4152 = vsel %vm4150, %v4144, %v4151
        %4153 = vst [vmem:[#allocation2 + $0x4] sm:$0xe] %v4152
        %vm4154 = vcmask 254976
        %vm4155 = vsmask.f32 1280
        %vm4156 = vmand %vm4154, %vm4155
        %v4157 = vld [vmem:[#allocation2 + $0x8] sm:$0x3]
        %v4158 = vsel %vm4156, %v4145, %v4157
        %4159 = vst [vmem:[#allocation2 + $0x8] sm:$0x3] %v4158
        %v4162 = vrot.slane %v4016, 2
        %v4163 = vsel %vm4050, %v4054, %v4162
        %v4164 = vrot.slane %v4017, 2
        %v4165 = vsel %vm4050, %v4162, %v4164
        %v4169 = vmax.f32 %v4013, %v4163
        %v4170 = vmax.f32 %v4014, %v4165
        %v4171 = vmax.f32 %v4015, %v4164
        %v4174 = vrot.slane %v4017, 4
        %v4175 = vrot.slane %v4018, 4
        %v4176 = vsel %vm4126, %v4174, %v4175
        %v4177 = vrot.slane %v4019, 4
        %v4178 = vsel %vm4126, %v4175, %v4177
        %v4182 = vmax.f32 %v4169, %v4176
        %v4183 = vmax.f32 %v4170, %v4178
        %v4184 = vmax.f32 %v4171, %v4177
        %vm4185 = vcmask 257026
        %v4186 = vsel %vm4185, %v4182, -inf
        %v4187 = vrot.slane %v4186, 4
        %v4188 = vmax.f32 %v4186, %v4187
        %v4189 = vrot.slane %v4188, 2
        %v4190 = vmax.f32 %v4188, %v4189
        %v4191 = vrot.slane %v4190, 1
        %v4192 = vmax.f32 %v4190, %v4191
        %v4193 = vsel %vm4075, %v4182, -inf
        %v4194 = vrot.slane %v4193, 4
        %v4195 = vmax.f32 %v4193, %v4194
        %v4196 = vrot.slane %v4195, 2
        %v4197 = vmax.f32 %v4195, %v4196
        %v4198 = vrot.slane %v4197, 1
        %v4199 = vmax.f32 %v4197, %v4198
        %v4200 = vsel %vm4083, %v4182, -inf
        %v4201 = vrot.slane %v4200, 4
        %v4202 = vmax.f32 %v4200, %v4201
        %v4203 = vrot.slane %v4202, 2
        %v4204 = vmax.f32 %v4202, %v4203
        %v4205 = vrot.slane %v4204, 1
        %v4206 = vmax.f32 %v4204, %v4205
        %v4207 = vsel %vm4091, %v4182, -inf
        %v4208 = vsel %vm398, %v4183, -inf
        %v4209 = vmax.f32 %v4207, %v4208
        %v4210 = vrot.slane %v4209, 4
        %v4211 = vmax.f32 %v4209, %v4210
        %v4212 = vrot.slane %v4211, 2
        %v4213 = vmax.f32 %v4211, %v4212
        %v4214 = vrot.slane %v4213, 1
        %v4215 = vmax.f32 %v4213, %v4214
        %v4216 = vsel %vm4067, %v4183, -inf
        %v4217 = vrot.slane %v4216, 4
        %v4218 = vmax.f32 %v4216, %v4217
        %v4219 = vrot.slane %v4218, 2
        %v4220 = vmax.f32 %v4218, %v4219
        %v4221 = vrot.slane %v4220, 1
        %v4222 = vmax.f32 %v4220, %v4221
        %v4223 = vsel %vm4075, %v4183, -inf
        %v4224 = vrot.slane %v4223, 4
        %v4225 = vmax.f32 %v4223, %v4224
        %v4226 = vrot.slane %v4225, 2
        %v4227 = vmax.f32 %v4225, %v4226
        %v4228 = vrot.slane %v4227, 1
        %v4229 = vmax.f32 %v4227, %v4228
        %v4230 = vsel %vm4083, %v4183, -inf
        %v4231 = vrot.slane %v4230, 4
        %v4232 = vmax.f32 %v4230, %v4231
        %v4233 = vrot.slane %v4232, 2
        %v4234 = vmax.f32 %v4232, %v4233
        %v4235 = vrot.slane %v4234, 1
        %v4236 = vmax.f32 %v4234, %v4235
        %v4237 = vsel %vm4091, %v4183, -inf
        %v4238 = vsel %vm398, %v4184, -inf
        %v4239 = vmax.f32 %v4237, %v4238
        %v4240 = vrot.slane %v4239, 4
        %v4241 = vmax.f32 %v4239, %v4240
        %v4242 = vrot.slane %v4241, 2
        %v4243 = vmax.f32 %v4241, %v4242
        %v4244 = vrot.slane %v4243, 1
        %v4245 = vmax.f32 %v4243, %v4244
        %v4246 = vsel %vm736, %v4192, %v4199
        %v4247 = vsel %vm737, %v4246, %v4206
        %v4248 = vsel %vm4124, %v4247, %v4215
        %v4249 = vsel %vm4126, %v4248, %v4222
        %v4250 = vsel %vm4128, %v4249, %v4229
        %v4251 = vsel %vm4050, %v4250, %v4236
        %v4252 = vsel %vm4131, %v4251, %v4245
        %v4253 = vpack.c.bf16 %v4252, %v4252
        %v4255 = vunpack.c.l.b16 %v4253
        %v4256 = vpack.c.b16 %v4255, %v4255
        %v4258 = vshrl.u32 %v4256, 16
        %v4260 = vrot.slane %v4258, 5
        %v4261 = vshll.u32 %v4256, 16
        %v4263 = vrot.slane %v4261, 6
        %v4264 = vor.u32 %v4260, %v4263
        %v4265 = vrot.slane %v4264, 4
        %vm4268 = vcmask 257026
        %vm4269 = vsmask.f32 7946
        %vm4270 = vmand %vm4268, %vm4269
        %v4271 = vld [vmem:[#allocation2 + $0x8] sm:$0xc]
        %v4272 = vsel %vm4270, %v4264, %v4271
        %4273 = vst [vmem:[#allocation2 + $0x8] sm:$0xc] %v4272
        %vm4274 = vcmask 256000
        %vm4275 = vsmask.f32 2304
        %vm4276 = vmand %vm4274, %vm4275
        %v4277 = vld [vmem:[#allocation2 + $0xc] sm:$0x7]
        %v4278 = vsel %vm4276, %v4265, %v4277
        %4279 = vst [vmem:[#allocation2 + $0xc] sm:$0x7] %v4278
        %v4282 = vrot.slane %v4020, 2
        %v4283 = vrot.slane %v4021, 2
        %v4284 = vsel %vm4050, %v4282, %v4283
        %v4288 = vmax.f32 %v4017, %v4282
        %v4289 = vmax.f32 %v4018, %v4284
        %v4290 = vmax.f32 %v4019, %v4283
        %v4294 = vrot.slane %v4022, 4
        %v4295 = vrot.slane %v4023, 4
        %v4296 = vsel %vm4126, %v4294, %v4295
        %v4297 = vrot.slane %v4024, 4
        %v4298 = vsel %vm4126, %v4295, %v4297
        %v4302 = vmax.f32 %v4288, %v4294
        %v4303 = vmax.f32 %v4289, %v4296
        %v4304 = vmax.f32 %v4290, %v4298
        %vm4305 = vcmask 261126
        %v4306 = vsel %vm4305, %v4302, -inf
        %v4307 = vrot.slane %v4306, 4
        %v4308 = vmax.f32 %v4306, %v4307
        %v4309 = vrot.slane %v4308, 2
        %v4310 = vmax.f32 %v4308, %v4309
        %v4311 = vrot.slane %v4310, 1
        %v4312 = vmax.f32 %v4310, %v4311
        %v4313 = vsel %vm4091, %v4302, -inf
        %v4314 = vsel %vm398, %v4303, -inf
        %v4315 = vmax.f32 %v4313, %v4314
        %v4316 = vrot.slane %v4315, 4
        %v4317 = vmax.f32 %v4315, %v4316
        %v4318 = vrot.slane %v4317, 2
        %v4319 = vmax.f32 %v4317, %v4318
        %v4320 = vrot.slane %v4319, 1
        %v4321 = vmax.f32 %v4319, %v4320
        %v4322 = vsel %vm4067, %v4303, -inf
        %v4323 = vrot.slane %v4322, 4
        %v4324 = vmax.f32 %v4322, %v4323
        %v4325 = vrot.slane %v4324, 2
        %v4326 = vmax.f32 %v4324, %v4325
        %v4327 = vrot.slane %v4326, 1
        %v4328 = vmax.f32 %v4326, %v4327
        %v4329 = vsel %vm4075, %v4303, -inf
        %v4330 = vrot.slane %v4329, 4
        %v4331 = vmax.f32 %v4329, %v4330
        %v4332 = vrot.slane %v4331, 2
        %v4333 = vmax.f32 %v4331, %v4332
        %v4334 = vrot.slane %v4333, 1
        %v4335 = vmax.f32 %v4333, %v4334
        %v4336 = vsel %vm4083, %v4303, -inf
        %v4337 = vrot.slane %v4336, 4
        %v4338 = vmax.f32 %v4336, %v4337
        %v4339 = vrot.slane %v4338, 2
        %v4340 = vmax.f32 %v4338, %v4339
        %v4341 = vrot.slane %v4340, 1
        %v4342 = vmax.f32 %v4340, %v4341
        %v4343 = vsel %vm4091, %v4303, -inf
        %v4344 = vsel %vm398, %v4304, -inf
        %v4345 = vmax.f32 %v4343, %v4344
        %v4346 = vrot.slane %v4345, 4
        %v4347 = vmax.f32 %v4345, %v4346
        %v4348 = vrot.slane %v4347, 2
        %v4349 = vmax.f32 %v4347, %v4348
        %v4350 = vrot.slane %v4349, 1
        %v4351 = vmax.f32 %v4349, %v4350
        %v4352 = vsel %vm4067, %v4304, -inf
        %v4353 = vrot.slane %v4352, 4
        %v4354 = vmax.f32 %v4352, %v4353
        %v4355 = vrot.slane %v4354, 2
        %v4356 = vmax.f32 %v4354, %v4355
        %v4357 = vrot.slane %v4356, 1
        %v4358 = vmax.f32 %v4356, %v4357
        %v4359 = vsel %vm4075, %v4304, -inf
        %v4360 = vrot.slane %v4359, 4
        %v4361 = vmax.f32 %v4359, %v4360
        %v4362 = vrot.slane %v4361, 2
        %v4363 = vmax.f32 %v4361, %v4362
        %v4364 = vrot.slane %v4363, 1
        %v4365 = vmax.f32 %v4363, %v4364
        %v4366 = vsel %vm736, %v4312, %v4321
        %v4367 = vsel %vm737, %v4366, %v4328
        %v4368 = vsel %vm4124, %v4367, %v4335
        %v4369 = vsel %vm4126, %v4368, %v4342
        %v4370 = vsel %vm4128, %v4369, %v4351
        %v4371 = vsel %vm4050, %v4370, %v4358
        %v4372 = vsel %vm4131, %v4371, %v4365
        %v4373 = vpack.c.bf16 %v4372, %v4372
        %v4375 = vunpack.c.l.b16 %v4373
        %v4376 = vpack.c.b16 %v4375, %v4375
        %v4378 = vshll.u32 %v4376, 16
        %v4380 = vrot.slane %v4378, 5
        %v4381 = vshrl.u32 %v4376, 16
        %v4383 = vrot.slane %v4381, 4
        %v4384 = vor.u32 %v4383, %v4380
        %v4385 = vrot.slane %v4384, 4
        %vm4388 = vcmask 257027
        %vm4389 = vsmask.f32 7950
        %vm4390 = vmand %vm4388, %vm4389
        %v4391 = vld [vmem:[#allocation2 + $0xc] sm:$0x8]
        %v4392 = vsel %vm4390, %v4380, %v4391
        %4393 = vst [vmem:[#allocation2 + $0xc] sm:$0x8] %v4392
        %vm4394 = vcmask 257024
        %vm4395 = vsmask.f32 3328
        %vm4396 = vmand %vm4394, %vm4395
        %v4397 = vld [vmem:[#allocation2 + $0x10] sm:$0xf]
        %v4398 = vsel %vm4396, %v4385, %v4397
        %4399 = vst [vmem:[#allocation2 + $0x10] sm:$0xf] %v4398
        %v4402 = vrot.slane %v4024, 2
        %v4403 = vrot.slane %v4025, 2
        %v4404 = vsel %vm4050, %v4402, %v4403
        %v4405 = vrot.slane %v4026, 2
        %v4406 = vsel %vm4050, %v4403, %v4405
        %v4410 = vmax.f32 %v4022, %v4404
        %v4411 = vmax.f32 %v4023, %v4406
        %v4412 = vmax.f32 %v4024, %v4405
        %v4415 = vrot.slane %v4026, 4
        %v4416 = vrot.slane %v4027, 4
        %v4417 = vsel %vm4126, %v4415, %v4416
        %v4418 = vrot.slane %v4028, 4
        %v4419 = vsel %vm4126, %v4416, %v4418
        %v4423 = vmax.f32 %v4410, %v4417
        %v4424 = vmax.f32 %v4411, %v4419
        %v4425 = vmax.f32 %v4412, %v4418
        %v4426 = vsel %vm4185, %v4423, -inf
        %v4427 = vrot.slane %v4426, 4
        %v4428 = vmax.f32 %v4426, %v4427
        %v4429 = vrot.slane %v4428, 2
        %v4430 = vmax.f32 %v4428, %v4429
        %v4431 = vrot.slane %v4430, 1
        %v4432 = vmax.f32 %v4430, %v4431
        %v4433 = vsel %vm4075, %v4423, -inf
        %v4434 = vrot.slane %v4433, 4
        %v4435 = vmax.f32 %v4433, %v4434
        %v4436 = vrot.slane %v4435, 2
        %v4437 = vmax.f32 %v4435, %v4436
        %v4438 = vrot.slane %v4437, 1
        %v4439 = vmax.f32 %v4437, %v4438
        %v4440 = vsel %vm4083, %v4423, -inf
        %v4441 = vrot.slane %v4440, 4
        %v4442 = vmax.f32 %v4440, %v4441
        %v4443 = vrot.slane %v4442, 2
        %v4444 = vmax.f32 %v4442, %v4443
        %v4445 = vrot.slane %v4444, 1
        %v4446 = vmax.f32 %v4444, %v4445
        %v4447 = vsel %vm4091, %v4423, -inf
        %v4448 = vsel %vm398, %v4424, -inf
        %v4449 = vmax.f32 %v4447, %v4448
        %v4450 = vrot.slane %v4449, 4
        %v4451 = vmax.f32 %v4449, %v4450
        %v4452 = vrot.slane %v4451, 2
        %v4453 = vmax.f32 %v4451, %v4452
        %v4454 = vrot.slane %v4453, 1
        %v4455 = vmax.f32 %v4453, %v4454
        %v4456 = vsel %vm4067, %v4424, -inf
        %v4457 = vrot.slane %v4456, 4
        %v4458 = vmax.f32 %v4456, %v4457
        %v4459 = vrot.slane %v4458, 2
        %v4460 = vmax.f32 %v4458, %v4459
        %v4461 = vrot.slane %v4460, 1
        %v4462 = vmax.f32 %v4460, %v4461
        %v4463 = vsel %vm4075, %v4424, -inf
        %v4464 = vrot.slane %v4463, 4
        %v4465 = vmax.f32 %v4463, %v4464
        %v4466 = vrot.slane %v4465, 2
        %v4467 = vmax.f32 %v4465, %v4466
        %v4468 = vrot.slane %v4467, 1
        %v4469 = vmax.f32 %v4467, %v4468
        %v4470 = vsel %vm4083, %v4424, -inf
        %v4471 = vrot.slane %v4470, 4
        %v4472 = vmax.f32 %v4470, %v4471
        %v4473 = vrot.slane %v4472, 2
        %v4474 = vmax.f32 %v4472, %v4473
        %v4475 = vrot.slane %v4474, 1
        %v4476 = vmax.f32 %v4474, %v4475
        %v4477 = vsel %vm4091, %v4424, -inf
        %v4478 = vsel %vm398, %v4425, -inf
        %v4479 = vmax.f32 %v4477, %v4478
        %v4480 = vrot.slane %v4479, 4
        %v4481 = vmax.f32 %v4479, %v4480
        %v4482 = vrot.slane %v4481, 2
        %v4483 = vmax.f32 %v4481, %v4482
        %v4484 = vrot.slane %v4483, 1
        %v4485 = vmax.f32 %v4483, %v4484
        %v4486 = vsel %vm736, %v4432, %v4439
        %v4487 = vsel %vm737, %v4486, %v4446
        %v4488 = vsel %vm4124, %v4487, %v4455
        %v4489 = vsel %vm4126, %v4488, %v4462
        %v4490 = vsel %vm4128, %v4489, %v4469
        %v4491 = vsel %vm4050, %v4490, %v4476
        %v4492 = vsel %vm4131, %v4491, %v4485
        %v4493 = vpack.c.bf16 %v4492, %v4492
        %v4495 = vunpack.c.l.b16 %v4493
        %v4496 = vpack.c.b16 %v4495, %v4495
        %v4498 = vshrl.u32 %v4496, 16
        %v4500 = vrot.slane %v4498, 7
        %v4501 = vshll.u32 %v4496, 16
        %v4503 = vor.u32 %v4500, %v4501
        %v4504 = vrot.slane %v4500, 4
        %vm4507 = vsmask.f32 7938
        %vm4508 = vmand %vm4394, %vm4507
        %v4509 = vld [vmem:[#allocation2 + $0x14] sm:$0xf]
        %v4510 = vsel %vm4508, %v4503, %v4509
        %4511 = vst [vmem:[#allocation2 + $0x14] sm:$0xf] %v4510
        %vm4512 = vcmask 253952
        %vm4513 = vsmask.f32 256
        %vm4514 = vmand %vm4512, %vm4513
        %v4515 = vld [vmem:[#allocation2 + $0x18] sm:$0x1]
        %v4516 = vsel %vm4514, %v4504, %v4515
        %4517 = vst [vmem:[#allocation2 + $0x18] sm:$0x1] %v4516
        %v4520 = vrot.slane %v4029, 2
        %v4521 = vrot.slane %v4030, 2
        %v4522 = vsel %vm4050, %v4520, %v4521
        %v4526 = vmax.f32 %v4026, %v4520
        %v4527 = vmax.f32 %v4027, %v4522
        %v4528 = vmax.f32 %v4028, %v4521
        %v4532 = vrot.slane %v4031, 4
        %v4533 = vrot.slane %v4032, 4
        %v4534 = vsel %vm4126, %v4532, %v4533
        %v4535 = vrot.slane %v4033, 4
        %v4536 = vsel %vm4126, %v4533, %v4535
        %v4540 = vmax.f32 %v4526, %v4532
        %v4541 = vmax.f32 %v4527, %v4534
        %v4542 = vmax.f32 %v4528, %v4536
        %v4543 = vsel %vm4305, %v4540, -inf
        %v4544 = vrot.slane %v4543, 4
        %v4545 = vmax.f32 %v4543, %v4544
        %v4546 = vrot.slane %v4545, 2
        %v4547 = vmax.f32 %v4545, %v4546
        %v4548 = vrot.slane %v4547, 1
        %v4549 = vmax.f32 %v4547, %v4548
        %v4550 = vsel %vm4091, %v4540, -inf
        %v4551 = vsel %vm398, %v4541, -inf
        %v4552 = vmax.f32 %v4550, %v4551
        %v4553 = vrot.slane %v4552, 4
        %v4554 = vmax.f32 %v4552, %v4553
        %v4555 = vrot.slane %v4554, 2
        %v4556 = vmax.f32 %v4554, %v4555
        %v4557 = vrot.slane %v4556, 1
        %v4558 = vmax.f32 %v4556, %v4557
        %v4559 = vsel %vm4067, %v4541, -inf
        %v4560 = vrot.slane %v4559, 4
        %v4561 = vmax.f32 %v4559, %v4560
        %v4562 = vrot.slane %v4561, 2
        %v4563 = vmax.f32 %v4561, %v4562
        %v4564 = vrot.slane %v4563, 1
        %v4565 = vmax.f32 %v4563, %v4564
        %v4566 = vsel %vm4075, %v4541, -inf
        %v4567 = vrot.slane %v4566, 4
        %v4568 = vmax.f32 %v4566, %v4567
        %v4569 = vrot.slane %v4568, 2
        %v4570 = vmax.f32 %v4568, %v4569
        %v4571 = vrot.slane %v4570, 1
        %v4572 = vmax.f32 %v4570, %v4571
        %v4573 = vsel %vm4083, %v4541, -inf
        %v4574 = vrot.slane %v4573, 4
        %v4575 = vmax.f32 %v4573, %v4574
        %v4576 = vrot.slane %v4575, 2
        %v4577 = vmax.f32 %v4575, %v4576
        %v4578 = vrot.slane %v4577, 1
        %v4579 = vmax.f32 %v4577, %v4578
        %v4580 = vsel %vm4091, %v4541, -inf
        %v4581 = vsel %vm398, %v4542, -inf
        %v4582 = vmax.f32 %v4580, %v4581
        %v4583 = vrot.slane %v4582, 4
        %v4584 = vmax.f32 %v4582, %v4583
        %v4585 = vrot.slane %v4584, 2
        %v4586 = vmax.f32 %v4584, %v4585
        %v4587 = vrot.slane %v4586, 1
        %v4588 = vmax.f32 %v4586, %v4587
        %v4589 = vsel %vm4067, %v4542, -inf
        %v4590 = vrot.slane %v4589, 4
        %v4591 = vmax.f32 %v4589, %v4590
        %v4592 = vrot.slane %v4591, 2
        %v4593 = vmax.f32 %v4591, %v4592
        %v4594 = vrot.slane %v4593, 1
        %v4595 = vmax.f32 %v4593, %v4594
        %v4596 = vsel %vm4075, %v4542, -inf
        %v4597 = vrot.slane %v4596, 4
        %v4598 = vmax.f32 %v4596, %v4597
        %v4599 = vrot.slane %v4598, 2
        %v4600 = vmax.f32 %v4598, %v4599
        %v4601 = vrot.slane %v4600, 1
        %v4602 = vmax.f32 %v4600, %v4601
        %v4603 = vsel %vm736, %v4549, %v4558
        %v4604 = vsel %vm737, %v4603, %v4565
        %v4605 = vsel %vm4124, %v4604, %v4572
        %v4606 = vsel %vm4126, %v4605, %v4579
        %v4607 = vsel %vm4128, %v4606, %v4588
        %v4608 = vsel %vm4050, %v4607, %v4595
        %v4609 = vsel %vm4131, %v4608, %v4602
        %v4610 = vpack.c.bf16 %v4609, %v4609
        %v4612 = vunpack.c.l.b16 %v4610
        %v4613 = vpack.c.b16 %v4612, %v4612
        %v4615 = vshrl.u32 %v4613, 16
        %v4617 = vrot.slane %v4615, 6
        %v4618 = vshll.u32 %v4613, 16
        %v4620 = vrot.slane %v4618, 7
        %v4621 = vor.u32 %v4617, %v4620
        %v4622 = vrot.slane %v4621, 4
        %v4625 = vld [vmem:[#allocation2 + $0x18] sm:$0xe]
        %v4626 = vsel %vm4150, %v4621, %v4625
        %4627 = vst [vmem:[#allocation2 + $0x18] sm:$0xe] %v4626
        %v4628 = vld [vmem:[#allocation2 + $0x1c] sm:$0x3]
        %v4629 = vsel %vm4156, %v4622, %v4628
        %4630 = vst [vmem:[#allocation2 + $0x1c] sm:$0x3] %v4629
        %v4633 = vrot.slane %v4033, 2
        %v4634 = vrot.slane %v4034, 2
        %v4635 = vsel %vm4050, %v4633, %v4634
        %v4636 = vrot.slane %v4035, 2
        %v4637 = vsel %vm4050, %v4634, %v4636
        %v4641 = vmax.f32 %v4031, %v4635
        %v4642 = vmax.f32 %v4032, %v4637
        %v4643 = vmax.f32 %v4033, %v4636
        %v4646 = vrot.slane %v4035, 4
        %v4647 = vrot.slane %v4036, 4
        %v4648 = vsel %vm4126, %v4646, %v4647
        %v4649 = vrot.slane %v4037, 4
        %v4650 = vsel %vm4126, %v4647, %v4649
        %v4654 = vmax.f32 %v4641, %v4648
        %v4655 = vmax.f32 %v4642, %v4650
        %v4656 = vmax.f32 %v4643, %v4649
        %v4657 = vsel %vm4185, %v4654, -inf
        %v4658 = vrot.slane %v4657, 4
        %v4659 = vmax.f32 %v4657, %v4658
        %v4660 = vrot.slane %v4659, 2
        %v4661 = vmax.f32 %v4659, %v4660
        %v4662 = vrot.slane %v4661, 1
        %v4663 = vmax.f32 %v4661, %v4662
        %v4664 = vsel %vm4075, %v4654, -inf
        %v4665 = vrot.slane %v4664, 4
        %v4666 = vmax.f32 %v4664, %v4665
        %v4667 = vrot.slane %v4666, 2
        %v4668 = vmax.f32 %v4666, %v4667
        %v4669 = vrot.slane %v4668, 1
        %v4670 = vmax.f32 %v4668, %v4669
        %v4671 = vsel %vm4083, %v4654, -inf
        %v4672 = vrot.slane %v4671, 4
        %v4673 = vmax.f32 %v4671, %v4672
        %v4674 = vrot.slane %v4673, 2
        %v4675 = vmax.f32 %v4673, %v4674
        %v4676 = vrot.slane %v4675, 1
        %v4677 = vmax.f32 %v4675, %v4676
        %v4678 = vsel %vm4091, %v4654, -inf
        %v4679 = vsel %vm398, %v4655, -inf
        %v4680 = vmax.f32 %v4678, %v4679
        %v4681 = vrot.slane %v4680, 4
        %v4682 = vmax.f32 %v4680, %v4681
        %v4683 = vrot.slane %v4682, 2
        %v4684 = vmax.f32 %v4682, %v4683
        %v4685 = vrot.slane %v4684, 1
        %v4686 = vmax.f32 %v4684, %v4685
        %v4687 = vsel %vm4067, %v4655, -inf
        %v4688 = vrot.slane %v4687, 4
        %v4689 = vmax.f32 %v4687, %v4688
        %v4690 = vrot.slane %v4689, 2
        %v4691 = vmax.f32 %v4689, %v4690
        %v4692 = vrot.slane %v4691, 1
        %v4693 = vmax.f32 %v4691, %v4692
        %v4694 = vsel %vm4075, %v4655, -inf
        %v4695 = vrot.slane %v4694, 4
        %v4696 = vmax.f32 %v4694, %v4695
        %v4697 = vrot.slane %v4696, 2
        %v4698 = vmax.f32 %v4696, %v4697
        %v4699 = vrot.slane %v4698, 1
        %v4700 = vmax.f32 %v4698, %v4699
        %v4701 = vsel %vm4083, %v4655, -inf
        %v4702 = vrot.slane %v4701, 4
        %v4703 = vmax.f32 %v4701, %v4702
        %v4704 = vrot.slane %v4703, 2
        %v4705 = vmax.f32 %v4703, %v4704
        %v4706 = vrot.slane %v4705, 1
        %v4707 = vmax.f32 %v4705, %v4706
        %v4708 = vsel %vm4091, %v4655, -inf
        %v4709 = vsel %vm398, %v4656, -inf
        %v4710 = vmax.f32 %v4708, %v4709
        %v4711 = vrot.slane %v4710, 4
        %v4712 = vmax.f32 %v4710, %v4711
        %v4713 = vrot.slane %v4712, 2
        %v4714 = vmax.f32 %v4712, %v4713
        %v4715 = vrot.slane %v4714, 1
        %v4716 = vmax.f32 %v4714, %v4715
        %v4717 = vsel %vm736, %v4663, %v4670
        %v4718 = vsel %vm737, %v4717, %v4677
        %v4719 = vsel %vm4124, %v4718, %v4686
        %v4720 = vsel %vm4126, %v4719, %v4693
        %v4721 = vsel %vm4128, %v4720, %v4700
        %v4722 = vsel %vm4050, %v4721, %v4707
        %v4723 = vsel %vm4131, %v4722, %v4716
        %v4724 = vpack.c.bf16 %v4723, %v4723
        %v4726 = vunpack.c.l.b16 %v4724
        %v4727 = vpack.c.b16 %v4726, %v4726
        %v4729 = vshrl.u32 %v4727, 16
        %v4731 = vrot.slane %v4729, 5
        %v4732 = vshll.u32 %v4727, 16
        %v4734 = vrot.slane %v4732, 6
        %v4735 = vor.u32 %v4731, %v4734
        %v4736 = vrot.slane %v4735, 4
        %v4739 = vld [vmem:[#allocation2 + $0x1c] sm:$0xc]
        %v4740 = vsel %vm4270, %v4735, %v4739
        %4741 = vst [vmem:[#allocation2 + $0x1c] sm:$0xc] %v4740
        %v4742 = vld [vmem:[#allocation2 + $0x20] sm:$0x7]
        %v4743 = vsel %vm4276, %v4736, %v4742
        %4744 = vst [vmem:[#allocation2 + $0x20] sm:$0x7] %v4743
        %v4747 = vrot.slane %v4038, 2
        %v4748 = vrot.slane %v4039, 2
        %v4749 = vsel %vm4050, %v4747, %v4748
        %v4753 = vmax.f32 %v4035, %v4747
        %v4754 = vmax.f32 %v4036, %v4749
        %v4755 = vmax.f32 %v4037, %v4748
        %v4759 = vrot.slane %v4040, 4
        %v4760 = vrot.slane %v4041, 4
        %v4761 = vsel %vm4126, %v4759, %v4760
        %v4762 = vrot.slane %v4042, 4
        %v4763 = vsel %vm4126, %v4760, %v4762
        %v4767 = vmax.f32 %v4753, %v4759
        %v4768 = vmax.f32 %v4754, %v4761
        %v4769 = vmax.f32 %v4755, %v4763
        %v4770 = vsel %vm4305, %v4767, -inf
        %v4771 = vrot.slane %v4770, 4
        %v4772 = vmax.f32 %v4770, %v4771
        %v4773 = vrot.slane %v4772, 2
        %v4774 = vmax.f32 %v4772, %v4773
        %v4775 = vrot.slane %v4774, 1
        %v4776 = vmax.f32 %v4774, %v4775
        %v4777 = vsel %vm4091, %v4767, -inf
        %v4778 = vsel %vm398, %v4768, -inf
        %v4779 = vmax.f32 %v4777, %v4778
        %v4780 = vrot.slane %v4779, 4
        %v4781 = vmax.f32 %v4779, %v4780
        %v4782 = vrot.slane %v4781, 2
        %v4783 = vmax.f32 %v4781, %v4782
        %v4784 = vrot.slane %v4783, 1
        %v4785 = vmax.f32 %v4783, %v4784
        %v4786 = vsel %vm4067, %v4768, -inf
        %v4787 = vrot.slane %v4786, 4
        %v4788 = vmax.f32 %v4786, %v4787
        %v4789 = vrot.slane %v4788, 2
        %v4790 = vmax.f32 %v4788, %v4789
        %v4791 = vrot.slane %v4790, 1
        %v4792 = vmax.f32 %v4790, %v4791
        %v4793 = vsel %vm4075, %v4768, -inf
        %v4794 = vrot.slane %v4793, 4
        %v4795 = vmax.f32 %v4793, %v4794
        %v4796 = vrot.slane %v4795, 2
        %v4797 = vmax.f32 %v4795, %v4796
        %v4798 = vrot.slane %v4797, 1
        %v4799 = vmax.f32 %v4797, %v4798
        %v4800 = vsel %vm4083, %v4768, -inf
        %v4801 = vrot.slane %v4800, 4
        %v4802 = vmax.f32 %v4800, %v4801
        %v4803 = vrot.slane %v4802, 2
        %v4804 = vmax.f32 %v4802, %v4803
        %v4805 = vrot.slane %v4804, 1
        %v4806 = vmax.f32 %v4804, %v4805
        %v4807 = vsel %vm4091, %v4768, -inf
        %v4808 = vsel %vm398, %v4769, -inf
        %v4809 = vmax.f32 %v4807, %v4808
        %v4810 = vrot.slane %v4809, 4
        %v4811 = vmax.f32 %v4809, %v4810
        %v4812 = vrot.slane %v4811, 2
        %v4813 = vmax.f32 %v4811, %v4812
        %v4814 = vrot.slane %v4813, 1
        %v4815 = vmax.f32 %v4813, %v4814
        %v4816 = vsel %vm4067, %v4769, -inf
        %v4817 = vrot.slane %v4816, 4
        %v4818 = vmax.f32 %v4816, %v4817
        %v4819 = vrot.slane %v4818, 2
        %v4820 = vmax.f32 %v4818, %v4819
        %v4821 = vrot.slane %v4820, 1
        %v4822 = vmax.f32 %v4820, %v4821
        %v4823 = vsel %vm4075, %v4769, -inf
        %v4824 = vrot.slane %v4823, 4
        %v4825 = vmax.f32 %v4823, %v4824
        %v4826 = vrot.slane %v4825, 2
        %v4827 = vmax.f32 %v4825, %v4826
        %v4828 = vrot.slane %v4827, 1
        %v4829 = vmax.f32 %v4827, %v4828
        %v4830 = vsel %vm736, %v4776, %v4785
        %v4831 = vsel %vm737, %v4830, %v4792
        %v4832 = vsel %vm4124, %v4831, %v4799
        %v4833 = vsel %vm4126, %v4832, %v4806
        %v4834 = vsel %vm4128, %v4833, %v4815
        %v4835 = vsel %vm4050, %v4834, %v4822
        %v4836 = vsel %vm4131, %v4835, %v4829
        %v4837 = vpack.c.bf16 %v4836, %v4836
        %v4839 = vunpack.c.l.b16 %v4837
        %v4840 = vpack.c.b16 %v4839, %v4839
        %v4842 = vshll.u32 %v4840, 16
        %v4844 = vrot.slane %v4842, 5
        %v4845 = vshrl.u32 %v4840, 16
        %v4847 = vrot.slane %v4845, 4
        %v4848 = vor.u32 %v4847, %v4844
        %v4849 = vrot.slane %v4848, 4
        %v4852 = vld [vmem:[#allocation2 + $0x20] sm:$0x8]
        %v4853 = vsel %vm4390, %v4844, %v4852
        %4854 = vst [vmem:[#allocation2 + $0x20] sm:$0x8] %v4853
        %v4855 = vld [vmem:[#allocation2 + $0x24] sm:$0xf]
        %v4856 = vsel %vm4396, %v4849, %v4855
        %4857 = vst [vmem:[#allocation2 + $0x24] sm:$0xf] %v4856
        %v4860 = vrot.slane %v4042, 2
        %v4861 = vrot.slane %v4043, 2
        %v4862 = vsel %vm4050, %v4860, %v4861
        %v4863 = vrot.slane %v4044, 2
        %v4864 = vsel %vm4050, %v4861, %v4863
        %v4868 = vmax.f32 %v4040, %v4862
        %v4869 = vmax.f32 %v4041, %v4864
        %v4870 = vmax.f32 %v4042, %v4863
        %v4873 = vrot.slane %v4044, 4
        %v4874 = vrot.slane %v4045, 4
        %v4875 = vsel %vm4126, %v4873, %v4874
        %v4876 = vrot.slane %v4046, 4
        %v4877 = vsel %vm4126, %v4874, %v4876
        %v4881 = vmax.f32 %v4868, %v4875
        %v4882 = vmax.f32 %v4869, %v4877
        %v4883 = vmax.f32 %v4870, %v4876
        %v4884 = vsel %vm4185, %v4881, -inf
        %v4885 = vrot.slane %v4884, 4
        %v4886 = vmax.f32 %v4884, %v4885
        %v4887 = vrot.slane %v4886, 2
        %v4888 = vmax.f32 %v4886, %v4887
        %v4889 = vrot.slane %v4888, 1
        %v4890 = vmax.f32 %v4888, %v4889
        %v4891 = vsel %vm4075, %v4881, -inf
        %v4892 = vrot.slane %v4891, 4
        %v4893 = vmax.f32 %v4891, %v4892
        %v4894 = vrot.slane %v4893, 2
        %v4895 = vmax.f32 %v4893, %v4894
        %v4896 = vrot.slane %v4895, 1
        %v4897 = vmax.f32 %v4895, %v4896
        %v4898 = vsel %vm4083, %v4881, -inf
        %v4899 = vrot.slane %v4898, 4
        %v4900 = vmax.f32 %v4898, %v4899
        %v4901 = vrot.slane %v4900, 2
        %v4902 = vmax.f32 %v4900, %v4901
        %v4903 = vrot.slane %v4902, 1
        %v4904 = vmax.f32 %v4902, %v4903
        %v4905 = vsel %vm4091, %v4881, -inf
        %v4906 = vsel %vm398, %v4882, -inf
        %v4907 = vmax.f32 %v4905, %v4906
        %v4908 = vrot.slane %v4907, 4
        %v4909 = vmax.f32 %v4907, %v4908
        %v4910 = vrot.slane %v4909, 2
        %v4911 = vmax.f32 %v4909, %v4910
        %v4912 = vrot.slane %v4911, 1
        %v4913 = vmax.f32 %v4911, %v4912
        %v4914 = vsel %vm4067, %v4882, -inf
        %v4915 = vrot.slane %v4914, 4
        %v4916 = vmax.f32 %v4914, %v4915
        %v4917 = vrot.slane %v4916, 2
        %v4918 = vmax.f32 %v4916, %v4917
        %v4919 = vrot.slane %v4918, 1
        %v4920 = vmax.f32 %v4918, %v4919
        %v4921 = vsel %vm4075, %v4882, -inf
        %v4922 = vrot.slane %v4921, 4
        %v4923 = vmax.f32 %v4921, %v4922
        %v4924 = vrot.slane %v4923, 2
        %v4925 = vmax.f32 %v4923, %v4924
        %v4926 = vrot.slane %v4925, 1
        %v4927 = vmax.f32 %v4925, %v4926
        %v4928 = vsel %vm4083, %v4882, -inf
        %v4929 = vrot.slane %v4928, 4
        %v4930 = vmax.f32 %v4928, %v4929
        %v4931 = vrot.slane %v4930, 2
        %v4932 = vmax.f32 %v4930, %v4931
        %v4933 = vrot.slane %v4932, 1
        %v4934 = vmax.f32 %v4932, %v4933
        %v4935 = vsel %vm4091, %v4882, -inf
        %v4936 = vsel %vm398, %v4883, -inf
        %v4937 = vmax.f32 %v4935, %v4936
        %v4938 = vrot.slane %v4937, 4
        %v4939 = vmax.f32 %v4937, %v4938
        %v4940 = vrot.slane %v4939, 2
        %v4941 = vmax.f32 %v4939, %v4940
        %v4942 = vrot.slane %v4941, 1
        %v4943 = vmax.f32 %v4941, %v4942
        %v4944 = vsel %vm736, %v4890, %v4897
        %v4945 = vsel %vm737, %v4944, %v4904
        %v4946 = vsel %vm4124, %v4945, %v4913
        %v4947 = vsel %vm4126, %v4946, %v4920
        %v4948 = vsel %vm4128, %v4947, %v4927
        %v4949 = vsel %vm4050, %v4948, %v4934
        %v4950 = vsel %vm4131, %v4949, %v4943
        %v4951 = vpack.c.bf16 %v4950, %v4950
        %v4953 = vunpack.c.l.b16 %v4951
        %v4954 = vpack.c.b16 %v4953, %v4953
        %v4956 = vshrl.u32 %v4954, 16
        %v4958 = vrot.slane %v4956, 7
        %v4959 = vshll.u32 %v4954, 16
        %v4961 = vor.u32 %v4958, %v4959
        %v4962 = vrot.slane %v4958, 4
        %v4965 = vld [vmem:[#allocation2 + $0x28] sm:$0xf]
        %v4966 = vsel %vm4508, %v4961, %v4965
        %4967 = vst [vmem:[#allocation2 + $0x28] sm:$0xf] %v4966
        %v4968 = vld [vmem:[#allocation2 + $0x2c] sm:$0x1]
        %v4969 = vsel %vm4514, %v4962, %v4968
        %4970 = vst [vmem:[#allocation2 + $0x2c] sm:$0x1] %v4969
        %v4971 = vld [vmem:[#allocation2] sm:$0xf]
        %v4972 = vld [vmem:[#allocation2 + $0x4] sm:$0xf]
        %v4973 = vld [vmem:[#allocation2 + $0x8] sm:$0xf]
        %v4974 = vld [vmem:[#allocation2 + $0xc] sm:$0xf]
        %v4975 = vld [vmem:[#allocation2 + $0x10] sm:$0xf]
        %v4976 = vld [vmem:[#allocation2 + $0x14] sm:$0xf]
        %v4977 = vld [vmem:[#allocation2 + $0x18] sm:$0xf]
        %v4978 = vld [vmem:[#allocation2 + $0x1c] sm:$0xf]
        %v4979 = vld [vmem:[#allocation2 + $0x20] sm:$0xf]
        %v4980 = vld [vmem:[#allocation2 + $0x24] sm:$0x7]
        %v4981 = vld [vmem:[%s3] sm:$0xf]
        %v4982 = vld [vmem:[%s3 + $0x4] sm:$0xf]
        %v4983 = vld [vmem:[%s3 + $0x8] sm:$0xf]
        %v4984 = vld [vmem:[%s3 + $0xc] sm:$0xf]
        %v4985 = vld [vmem:[#allocation2 + $0x24] sm:$0xf]
        %s4986 = scalar_lea.vmem %s3, 16
        %v4987 = vld [vmem:[%s4986] sm:$0xf]
        %v4988 = vld [vmem:[%s4986 + $0x4] sm:$0xf]
        %v4989 = vld [vmem:[%s4986 + $0x8] sm:$0xf]
        %v4990 = vld [vmem:[%s4986 + $0xc] sm:$0xf]
        %v5001 = vunpack.c.l.b16 %v4971
        %v5002 = vunpack.c.l.b16 %v4972
        %v5003 = vunpack.c.l.b16 %v4973
        %v5004 = vunpack.c.l.b16 %v4974
        %v5005 = vunpack.c.l.b16 %v4975
        %v5006 = vunpack.c.l.b16 %v4976
        %v5007 = vunpack.c.l.b16 %v4977
        %v5008 = vunpack.c.l.b16 %v4978
        %v5009 = vunpack.c.l.b16 %v4979
        %v5010 = vunpack.c.l.b16 %v4985
        %v5011 = vpack.c.b16 %v5002, %v5001
        %v5012 = vpack.c.b16 %v5004, %v5003
        %v5013 = vpack.c.b16 %v5006, %v5005
        %v5014 = vpack.c.b16 %v5008, %v5007
        %v5015 = vpack.c.b16 %v5010, %v5009
        %v5017 = vshrl.u32 %v5011, 16
        %v5019 = vshll.u32 %v5011, 16
        %v5021 = vrot.slane %v5019, 1
        %v5022 = vor.u32 %v5017, %v5021
        %v5024 = vshll.u32 %v5012, 16
        %v5026 = vrot.slane %v5024, 1
        %v5027 = vsel %vm537, %v5022, %v5026
        %v5028 = vshrl.u32 %v5012, 16
        %v5030 = vor.u32 %v5028, %v5026
        %v5032 = vshll.u32 %v5013, 16
        %v5034 = vrot.slane %v5032, 1
        %v5035 = vsel %vm537, %v5030, %v5034
        %v5036 = vshrl.u32 %v5013, 16
        %v5038 = vor.u32 %v5036, %v5034
        %v5040 = vshll.u32 %v5014, 16
        %v5042 = vrot.slane %v5040, 1
        %v5043 = vsel %vm537, %v5038, %v5042
        %v5044 = vshrl.u32 %v5014, 16
        %v5046 = vor.u32 %v5044, %v5042
        %v5048 = vshll.u32 %v5015, 16
        %v5050 = vrot.slane %v5048, 1
        %v5051 = vsel %vm537, %v5046, %v5050
        %v5052 = vshrl.u32 %v5015, 16
        %v5054 = vor.u32 %v5052, %v5050
        %v5059 = vunpack.c.l.b16 %v4987
        %v5060 = vunpack.c.l.b16 %v4988
        %v5061 = vunpack.c.l.b16 %v4989
        %v5062 = vunpack.c.l.b16 %v4990
        %v5063 = vpack.c.b16 %v5060, %v5059
        %v5064 = vpack.c.b16 %v5062, %v5061
        %vm5067 = vcmask 261120
        %v5069 = vsel %vm5067, %v5027, 0
        %v5072 = vsel %vm5067, %v5035, 0
        %v5075 = vsel %vm5067, %v5043, 0
        %v5078 = vsel %vm5067, %v5051, 0
        %v5081 = vsel %vm5067, %v5054, 0
        %5083 = vmatprep.subr.bf16.mxu0 0
        %5084 = vmatpush1.bf16.msra.mxu0 %v5063
        %5085 = vmatprep.subr.bf16.mxu0 0
        %5086 = vmatpush1.bf16.msra.mxu0 %v5064
        %5087 = vmatprep.subr.bf16.mxu0 0
        %5088 = vmatpush1.bf16.msra.mxu0 0
        %5089 = vmatprep.subr.bf16.mxu0 0
        %5090 = vmatpush1.bf16.msra.mxu0 0
        %5091 = vmatprep.subr.bf16.mxu0 0
        %5092 = vmatpush1.bf16.msra.mxu0 0
        %5093 = vmatprep.subr.bf16.mxu0 0
        %5094 = vmatpush1.bf16.msra.mxu0 0
        %5095 = vmatprep.subr.bf16.mxu0 0
        %5096 = vmatpush1.bf16.msra.mxu0 0
        %5097 = vmatprep.subr.bf16.mxu0 0
        %5098 = vmatpush1.bf16.msra.mxu0 0
        %5099 = vmatprep.subr.bf16.mxu0 0
        %5100 = vmatpush1.bf16.msra.mxu0 0
        %5101 = vmatprep.subr.bf16.mxu0 0
        %5102 = vmatpush1.bf16.msra.mxu0 0
        %5103 = vmatprep.subr.bf16.mxu0 0
        %5104 = vmatpush1.bf16.msra.mxu0 0
        %5105 = vmatprep.subr.bf16.mxu0 0
        %5106 = vmatpush1.bf16.msra.mxu0 0
        %5107 = vmatprep.subr.bf16.mxu0 0
        %5108 = vmatpush1.bf16.msra.mxu0 0
        %5109 = vmatprep.subr.bf16.mxu0 0
        %5110 = vmatpush1.bf16.msra.mxu0 0
        %5111 = vmatprep.subr.bf16.mxu0 0
        %5112 = vmatpush1.bf16.msra.mxu0 0
        %5113 = vmatprep.subr.bf16.mxu0 0
        %5114 = vmatpush1.bf16.msra.mxu0 0
        %5115 = vmatprep.mubr.bf16.mxu0 0
        %5116 = vmatmul.mubr.bf16.gmra.mrb[0].mxu0 %v5069
        %v5117 = vpop.f32.mrb[0].mxu0
        %v5118 = vadd.f32 0.0, %v5117
        %v5119 = vpop.f32.mrb[0].mxu0
        %v5120 = vpop.f32.mrb[0].mxu0
        %v5121 = vadd.f32 0.0, %v5120
        %v5122 = vpop.f32.mrb[0].mxu0
        %5123 = vmatprep.mubr.bf16.mxu0 0
        %5124 = vmatmul.mubr.bf16.gmra.mrb[0].mxu0 %v5072
        %v5125 = vpop.f32.mrb[0].mxu0
        %v5126 = vadd.f32 0.0, %v5125
        %v5127 = vpop.f32.mrb[0].mxu0
        %v5128 = vpop.f32.mrb[0].mxu0
        %v5129 = vadd.f32 0.0, %v5128
        %v5130 = vpop.f32.mrb[0].mxu0
        %5131 = vmatprep.mubr.bf16.mxu0 0
        %5132 = vmatmul.mubr.bf16.gmra.mrb[0].mxu0 %v5075
        %v5133 = vpop.f32.mrb[0].mxu0
        %v5134 = vadd.f32 0.0, %v5133
        %v5135 = vpop.f32.mrb[0].mxu0
        %v5136 = vpop.f32.mrb[0].mxu0
        %v5137 = vadd.f32 0.0, %v5136
        %v5138 = vpop.f32.mrb[0].mxu0
        %5139 = vmatprep.mubr.bf16.mxu0 0
        %5140 = vmatmul.mubr.bf16.gmra.mrb[0].mxu0 %v5078
        %v5141 = vpop.f32.mrb[0].mxu0
        %v5142 = vadd.f32 0.0, %v5141
        %v5143 = vpop.f32.mrb[0].mxu0
        %v5144 = vpop.f32.mrb[0].mxu0
        %v5145 = vadd.f32 0.0, %v5144
        %v5146 = vpop.f32.mrb[0].mxu0
        %5147 = vmatprep.mubr.bf16.mxu0 0
        %5148 = vmatmul.mubr.bf16.gmra.mrb[0].mxu0 %v5081
        %v5149 = vpop.f32.mrb[0].mxu0
        %v5150 = vadd.f32 0.0, %v5149
        %v5151 = vpop.f32.mrb[0].mxu0
        %v5152 = vpop.f32.mrb[0].mxu0
        %v5153 = vadd.f32 0.0, %v5152
        %v5154 = vpop.f32.mrb[0].mxu0
        %5155 = vdwg.mxu0
        %v5157 = vunpack.c.l.b16 %v4980
        %v5158 = vpack.c.b16 %v5157, %v5009
        %v5163 = vunpack.c.l.b16 %v4981
        %v5164 = vunpack.c.l.b16 %v4982
        %v5165 = vunpack.c.l.b16 %v4983
        %v5166 = vunpack.c.l.b16 %v4984
        %v5167 = vpack.c.b16 %v5164, %v5163
        %v5168 = vpack.c.b16 %v5166, %v5165
        %v5171 = vsel %vm5067, %v5011, 0
        %v5173 = vsel %vm5067, %v5012, 0
        %v5175 = vsel %vm5067, %v5013, 0
        %v5177 = vsel %vm5067, %v5014, 0
        %v5180 = vsel %vm5067, %v5158, 0
        %5182 = vmatprep.subr.bf16.mxu0 0
        %5183 = vmatpush1.bf16.msra.mxu0 %v5167
        %5184 = vmatprep.subr.bf16.mxu0 0
        %5185 = vmatpush1.bf16.msra.mxu0 %v5168
        %5186 = vmatprep.subr.bf16.mxu0 0
        %5187 = vmatpush1.bf16.msra.mxu0 0
        %5188 = vmatprep.subr.bf16.mxu0 0
        %5189 = vmatpush1.bf16.msra.mxu0 0
        %5190 = vmatprep.subr.bf16.mxu0 0
        %5191 = vmatpush1.bf16.msra.mxu0 0
        %5192 = vmatprep.subr.bf16.mxu0 0
        %5193 = vmatpush1.bf16.msra.mxu0 0
        %5194 = vmatprep.subr.bf16.mxu0 0
        %5195 = vmatpush1.bf16.msra.mxu0 0
        %5196 = vmatprep.subr.bf16.mxu0 0
        %5197 = vmatpush1.bf16.msra.mxu0 0
        %5198 = vmatprep.subr.bf16.mxu0 0
        %5199 = vmatpush1.bf16.msra.mxu0 0
        %5200 = vmatprep.subr.bf16.mxu0 0
        %5201 = vmatpush1.bf16.msra.mxu0 0
        %5202 = vmatprep.subr.bf16.mxu0 0
        %5203 = vmatpush1.bf16.msra.mxu0 0
        %5204 = vmatprep.subr.bf16.mxu0 0
        %5205 = vmatpush1.bf16.msra.mxu0 0
        %5206 = vmatprep.subr.bf16.mxu0 0
        %5207 = vmatpush1.bf16.msra.mxu0 0
        %5208 = vmatprep.subr.bf16.mxu0 0
        %5209 = vmatpush1.bf16.msra.mxu0 0
        %5210 = vmatprep.subr.bf16.mxu0 0
        %5211 = vmatpush1.bf16.msra.mxu0 0
        %5212 = vmatprep.subr.bf16.mxu0 0
        %5213 = vmatpush1.bf16.msra.mxu0 0
        %5214 = vmatprep.mubr.bf16.mxu0 0
        %5215 = vmatmul.mubr.bf16.gmra.mrb[0].mxu0 %v5171
        %v5216 = vpop.f32.mrb[0].mxu0
        %v5217 = vadd.f32 %v5118, %v5216
        %v5218 = vpop.f32.mrb[0].mxu0
        %v5219 = vpop.f32.mrb[0].mxu0
        %v5220 = vadd.f32 %v5121, %v5219
        %v5221 = vpop.f32.mrb[0].mxu0
        %5222 = vmatprep.mubr.bf16.mxu0 0
        %5223 = vmatmul.mubr.bf16.gmra.mrb[0].mxu0 %v5173
        %v5224 = vpop.f32.mrb[0].mxu0
        %v5225 = vadd.f32 %v5126, %v5224
        %v5226 = vpop.f32.mrb[0].mxu0
        %v5227 = vpop.f32.mrb[0].mxu0
        %v5228 = vadd.f32 %v5129, %v5227
        %v5229 = vpop.f32.mrb[0].mxu0
        %5230 = vmatprep.mubr.bf16.mxu0 0
        %5231 = vmatmul.mubr.bf16.gmra.mrb[0].mxu0 %v5175
        %v5232 = vpop.f32.mrb[0].mxu0
        %v5233 = vadd.f32 %v5134, %v5232
        %v5234 = vpop.f32.mrb[0].mxu0
        %v5235 = vpop.f32.mrb[0].mxu0
        %v5236 = vadd.f32 %v5137, %v5235
        %v5237 = vpop.f32.mrb[0].mxu0
        %5238 = vmatprep.mubr.bf16.mxu0 0
        %5239 = vmatmul.mubr.bf16.gmra.mrb[0].mxu0 %v5177
        %v5240 = vpop.f32.mrb[0].mxu0
        %v5241 = vadd.f32 %v5142, %v5240
        %v5242 = vpop.f32.mrb[0].mxu0
        %v5243 = vpop.f32.mrb[0].mxu0
        %v5244 = vadd.f32 %v5145, %v5243
        %v5245 = vpop.f32.mrb[0].mxu0
        %5246 = vmatprep.mubr.bf16.mxu0 0
        %5247 = vmatmul.mubr.bf16.gmra.mrb[0].mxu0 %v5180
        %v5248 = vpop.f32.mrb[0].mxu0
        %v5249 = vadd.f32 %v5150, %v5248
        %v5250 = vpop.f32.mrb[0].mxu0
        %v5251 = vpop.f32.mrb[0].mxu0
        %v5252 = vadd.f32 %v5153, %v5251
        %v5253 = vpop.f32.mrb[0].mxu0
        %5254 = vdwg.mxu0
        %v5255 = vld [vmem:[#allocation2] sm:$0xe]
        %s5256 = scalar_lea.vmem %s3, 32
        %v5257 = vld [vmem:[%s5256] sm:$0xf]
        %v5258 = vld [vmem:[%s5256 + $0x4] sm:$0xf]
        %v5259 = vld [vmem:[%s5256 + $0x8] sm:$0xf]
        %v5260 = vld [vmem:[%s5256 + $0xc] sm:$0xf]
        %v5262 = vunpack.c.l.b16 %v5255
        %v5263 = vpack.c.b16 %v5002, %v5262
        %v5264 = vrot.slane %v5263, 1
        %v5265 = vrot.slane %v5012, 1
        %v5266 = vsel %vm1146, %v5264, %v5265
        %v5267 = vrot.slane %v5013, 1
        %v5268 = vsel %vm1146, %v5265, %v5267
        %v5269 = vrot.slane %v5014, 1
        %v5270 = vsel %vm1146, %v5267, %v5269
        %v5271 = vrot.slane %v5015, 1
        %v5272 = vsel %vm1146, %v5269, %v5271
        %v5277 = vunpack.c.l.b16 %v5257
        %v5278 = vunpack.c.l.b16 %v5258
        %v5279 = vunpack.c.l.b16 %v5259
        %v5280 = vunpack.c.l.b16 %v5260
        %v5281 = vpack.c.b16 %v5278, %v5277
        %v5282 = vpack.c.b16 %v5280, %v5279
        %v5286 = vsel %vm5067, %v5266, 0
        %v5289 = vsel %vm5067, %v5268, 0
        %v5292 = vsel %vm5067, %v5270, 0
        %v5295 = vsel %vm5067, %v5272, 0
        %v5298 = vsel %vm5067, %v5271, 0
        %5300 = vmatprep.subr.bf16.mxu0 0
        %5301 = vmatpush1.bf16.msra.mxu0 %v5281
        %5302 = vmatprep.subr.bf16.mxu0 0
        %5303 = vmatpush1.bf16.msra.mxu0 %v5282
        %5304 = vmatprep.subr.bf16.mxu0 0
        %5305 = vmatpush1.bf16.msra.mxu0 0
        %5306 = vmatprep.subr.bf16.mxu0 0
        %5307 = vmatpush1.bf16.msra.mxu0 0
        %5308 = vmatprep.subr.bf16.mxu0 0
        %5309 = vmatpush1.bf16.msra.mxu0 0
        %5310 = vmatprep.subr.bf16.mxu0 0
        %5311 = vmatpush1.bf16.msra.mxu0 0
        %5312 = vmatprep.subr.bf16.mxu0 0
        %5313 = vmatpush1.bf16.msra.mxu0 0
        %5314 = vmatprep.subr.bf16.mxu0 0
        %5315 = vmatpush1.bf16.msra.mxu0 0
        %5316 = vmatprep.subr.bf16.mxu0 0
        %5317 = vmatpush1.bf16.msra.mxu0 0
        %5318 = vmatprep.subr.bf16.mxu0 0
        %5319 = vmatpush1.bf16.msra.mxu0 0
        %5320 = vmatprep.subr.bf16.mxu0 0
        %5321 = vmatpush1.bf16.msra.mxu0 0
        %5322 = vmatprep.subr.bf16.mxu0 0
        %5323 = vmatpush1.bf16.msra.mxu0 0
        %5324 = vmatprep.subr.bf16.mxu0 0
        %5325 = vmatpush1.bf16.msra.mxu0 0
        %5326 = vmatprep.subr.bf16.mxu0 0
        %5327 = vmatpush1.bf16.msra.mxu0 0
        %5328 = vmatprep.subr.bf16.mxu0 0
        %5329 = vmatpush1.bf16.msra.mxu0 0
        %5330 = vmatprep.subr.bf16.mxu0 0
        %5331 = vmatpush1.bf16.msra.mxu0 0
        %5332 = vmatprep.mubr.bf16.mxu0 0
        %5333 = vmatmul.mubr.bf16.gmra.mrb[0].mxu0 %v5286
        %v5334 = vpop.f32.mrb[0].mxu0
        %v5335 = vadd.f32 0.0, %v5334
        %v5336 = vpop.f32.mrb[0].mxu0
        %v5337 = vpop.f32.mrb[0].mxu0
        %v5338 = vadd.f32 0.0, %v5337
        %v5339 = vpop.f32.mrb[0].mxu0
        %5340 = vmatprep.mubr.bf16.mxu0 0
        %5341 = vmatmul.mubr.bf16.gmra.mrb[0].mxu0 %v5289
        %v5342 = vpop.f32.mrb[0].mxu0
        %v5343 = vadd.f32 0.0, %v5342
        %v5344 = vpop.f32.mrb[0].mxu0
        %v5345 = vpop.f32.mrb[0].mxu0
        %v5346 = vadd.f32 0.0, %v5345
        %v5347 = vpop.f32.mrb[0].mxu0
        %5348 = vmatprep.mubr.bf16.mxu0 0
        %5349 = vmatmul.mubr.bf16.gmra.mrb[0].mxu0 %v5292
        %v5350 = vpop.f32.mrb[0].mxu0
        %v5351 = vadd.f32 0.0, %v5350
        %v5352 = vpop.f32.mrb[0].mxu0
        %v5353 = vpop.f32.mrb[0].mxu0
        %v5354 = vadd.f32 0.0, %v5353
        %v5355 = vpop.f32.mrb[0].mxu0
        %5356 = vmatprep.mubr.bf16.mxu0 0
        %5357 = vmatmul.mubr.bf16.gmra.mrb[0].mxu0 %v5295
        %v5358 = vpop.f32.mrb[0].mxu0
        %v5359 = vadd.f32 0.0, %v5358
        %v5360 = vpop.f32.mrb[0].mxu0
        %v5361 = vpop.f32.mrb[0].mxu0
        %v5362 = vadd.f32 0.0, %v5361
        %v5363 = vpop.f32.mrb[0].mxu0
        %5364 = vmatprep.mubr.bf16.mxu0 0
        %5365 = vmatmul.mubr.bf16.gmra.mrb[0].mxu0 %v5298
        %v5366 = vpop.f32.mrb[0].mxu0
        %v5367 = vadd.f32 0.0, %v5366
        %v5368 = vpop.f32.mrb[0].mxu0
        %v5369 = vpop.f32.mrb[0].mxu0
        %v5370 = vadd.f32 0.0, %v5369
        %v5371 = vpop.f32.mrb[0].mxu0
        %5372 = vdwg.mxu0
        %v5373 = vadd.f32 %v5217, %v5335
        %v5374 = vadd.f32 %v5220, %v5338
        %v5375 = vadd.f32 %v5225, %v5343
        %v5376 = vadd.f32 %v5228, %v5346
        %v5377 = vadd.f32 %v5233, %v5351
        %v5378 = vadd.f32 %v5236, %v5354
        %v5379 = vadd.f32 %v5241, %v5359
        %v5380 = vadd.f32 %v5244, %v5362
        %v5381 = vadd.f32 %v5249, %v5367
        %v5382 = vadd.f32 %v5252, %v5370
        %v5383 = vld [vmem:[#allocation2 + $0x4] sm:$0xe]
        %v5384 = vld [vmem:[#allocation2 + $0x8] sm:$0xf]
        %v5385 = vld [vmem:[#allocation2 + $0xc] sm:$0xf]
        %v5386 = vld [vmem:[#allocation2 + $0x10] sm:$0xf]
        %v5387 = vld [vmem:[#allocation2 + $0x14] sm:$0xf]
        %v5388 = vld [vmem:[#allocation2 + $0x18] sm:$0xf]
        %v5389 = vld [vmem:[#allocation2 + $0x1c] sm:$0xf]
        %v5390 = vld [vmem:[#allocation2 + $0x20] sm:$0xf]
        %v5391 = vld [vmem:[#allocation2 + $0x24] sm:$0xf]
        %v5392 = vld [vmem:[#allocation2 + $0x28] sm:$0xf]
        %s5393 = scalar_lea.vmem %s3, 48
        %v5394 = vld [vmem:[%s5393] sm:$0xf]
        %v5395 = vld [vmem:[%s5393 + $0x4] sm:$0xf]
        %v5396 = vld [vmem:[%s5393 + $0x8] sm:$0xf]
        %v5397 = vld [vmem:[%s5393 + $0xc] sm:$0xf]
        %v5408 = vunpack.c.l.b16 %v5383
        %v5409 = vunpack.c.l.b16 %v5384
        %v5410 = vunpack.c.l.b16 %v5385
        %v5411 = vunpack.c.l.b16 %v5386
        %v5412 = vunpack.c.l.b16 %v5387
        %v5413 = vunpack.c.l.b16 %v5388
        %v5414 = vunpack.c.l.b16 %v5389
        %v5415 = vunpack.c.l.b16 %v5390
        %v5416 = vunpack.c.l.b16 %v5391
        %v5417 = vunpack.c.l.b16 %v5392
        %v5418 = vpack.c.b16 %v5409, %v5408
        %v5419 = vpack.c.b16 %v5411, %v5410
        %v5420 = vpack.c.b16 %v5413, %v5412
        %v5421 = vpack.c.b16 %v5415, %v5414
        %v5422 = vpack.c.b16 %v5417, %v5416
        %v5423 = vrot.slane %v5418, 1
        %v5424 = vrot.slane %v5419, 1
        %v5425 = vsel %vm1146, %v5423, %v5424
        %v5426 = vrot.slane %v5420, 1
        %v5427 = vsel %vm1146, %v5424, %v5426
        %v5428 = vrot.slane %v5421, 1
        %v5429 = vsel %vm1146, %v5426, %v5428
        %v5430 = vrot.slane %v5422, 1
        %v5431 = vsel %vm1146, %v5428, %v5430
        %v5436 = vunpack.c.l.b16 %v5394
        %v5437 = vunpack.c.l.b16 %v5395
        %v5438 = vunpack.c.l.b16 %v5396
        %v5439 = vunpack.c.l.b16 %v5397
        %v5440 = vpack.c.b16 %v5437, %v5436
        %v5441 = vpack.c.b16 %v5439, %v5438
        %v5445 = vsel %vm5067, %v5425, 0
        %v5448 = vsel %vm5067, %v5427, 0
        %v5451 = vsel %vm5067, %v5429, 0
        %v5454 = vsel %vm5067, %v5431, 0
        %v5457 = vsel %vm5067, %v5430, 0
        %5459 = vmatprep.subr.bf16.mxu0 0
        %5460 = vmatpush1.bf16.msra.mxu0 %v5440
        %5461 = vmatprep.subr.bf16.mxu0 0
        %5462 = vmatpush1.bf16.msra.mxu0 %v5441
        %5463 = vmatprep.subr.bf16.mxu0 0
        %5464 = vmatpush1.bf16.msra.mxu0 0
        %5465 = vmatprep.subr.bf16.mxu0 0
        %5466 = vmatpush1.bf16.msra.mxu0 0
        %5467 = vmatprep.subr.bf16.mxu0 0
        %5468 = vmatpush1.bf16.msra.mxu0 0
        %5469 = vmatprep.subr.bf16.mxu0 0
        %5470 = vmatpush1.bf16.msra.mxu0 0
        %5471 = vmatprep.subr.bf16.mxu0 0
        %5472 = vmatpush1.bf16.msra.mxu0 0
        %5473 = vmatprep.subr.bf16.mxu0 0
        %5474 = vmatpush1.bf16.msra.mxu0 0
        %5475 = vmatprep.subr.bf16.mxu0 0
        %5476 = vmatpush1.bf16.msra.mxu0 0
        %5477 = vmatprep.subr.bf16.mxu0 0
        %5478 = vmatpush1.bf16.msra.mxu0 0
        %5479 = vmatprep.subr.bf16.mxu0 0
        %5480 = vmatpush1.bf16.msra.mxu0 0
        %5481 = vmatprep.subr.bf16.mxu0 0
        %5482 = vmatpush1.bf16.msra.mxu0 0
        %5483 = vmatprep.subr.bf16.mxu0 0
        %5484 = vmatpush1.bf16.msra.mxu0 0
        %5485 = vmatprep.subr.bf16.mxu0 0
        %5486 = vmatpush1.bf16.msra.mxu0 0
        %5487 = vmatprep.subr.bf16.mxu0 0
        %5488 = vmatpush1.bf16.msra.mxu0 0
        %5489 = vmatprep.subr.bf16.mxu0 0
        %5490 = vmatpush1.bf16.msra.mxu0 0
        %5491 = vmatprep.mubr.bf16.mxu0 0
        %5492 = vmatmul.mubr.bf16.gmra.mrb[0].mxu0 %v5445
        %v5493 = vpop.f32.mrb[0].mxu0
        %v5494 = vadd.f32 0.0, %v5493
        %v5495 = vpop.f32.mrb[0].mxu0
        %v5496 = vpop.f32.mrb[0].mxu0
        %v5497 = vadd.f32 0.0, %v5496
        %v5498 = vpop.f32.mrb[0].mxu0
        %5499 = vmatprep.mubr.bf16.mxu0 0
        %5500 = vmatmul.mubr.bf16.gmra.mrb[0].mxu0 %v5448
        %v5501 = vpop.f32.mrb[0].mxu0
        %v5502 = vadd.f32 0.0, %v5501
        %v5503 = vpop.f32.mrb[0].mxu0
        %v5504 = vpop.f32.mrb[0].mxu0
        %v5505 = vadd.f32 0.0, %v5504
        %v5506 = vpop.f32.mrb[0].mxu0
        %5507 = vmatprep.mubr.bf16.mxu0 0
        %5508 = vmatmul.mubr.bf16.gmra.mrb[0].mxu0 %v5451
        %v5509 = vpop.f32.mrb[0].mxu0
        %v5510 = vadd.f32 0.0, %v5509
        %v5511 = vpop.f32.mrb[0].mxu0
        %v5512 = vpop.f32.mrb[0].mxu0
        %v5513 = vadd.f32 0.0, %v5512
        %v5514 = vpop.f32.mrb[0].mxu0
        %5515 = vmatprep.mubr.bf16.mxu0 0
        %5516 = vmatmul.mubr.bf16.gmra.mrb[0].mxu0 %v5454
        %v5517 = vpop.f32.mrb[0].mxu0
        %v5518 = vadd.f32 0.0, %v5517
        %v5519 = vpop.f32.mrb[0].mxu0
        %v5520 = vpop.f32.mrb[0].mxu0
        %v5521 = vadd.f32 0.0, %v5520
        %v5522 = vpop.f32.mrb[0].mxu0
        %5523 = vmatprep.mubr.bf16.mxu0 0
        %5524 = vmatmul.mubr.bf16.gmra.mrb[0].mxu0 %v5457
        %v5525 = vpop.f32.mrb[0].mxu0
        %v5526 = vadd.f32 0.0, %v5525
        %v5527 = vpop.f32.mrb[0].mxu0
        %v5528 = vpop.f32.mrb[0].mxu0
        %v5529 = vadd.f32 0.0, %v5528
        %v5530 = vpop.f32.mrb[0].mxu0
        %5531 = vdwg.mxu0
        %v5532 = vadd.f32 %v5373, %v5494
        %v5533 = vadd.f32 %v5374, %v5497
        %v5534 = vadd.f32 %v5375, %v5502
        %v5535 = vadd.f32 %v5376, %v5505
        %v5536 = vadd.f32 %v5377, %v5510
        %v5537 = vadd.f32 %v5378, %v5513
        %v5538 = vadd.f32 %v5379, %v5518
        %v5539 = vadd.f32 %v5380, %v5521
        %v5540 = vadd.f32 %v5381, %v5526
        %v5541 = vadd.f32 %v5382, %v5529
        %v5542 = vld [vmem:[#allocation2 + $0x4] sm:$0xe]
        %v5543 = vld [vmem:[#allocation2 + $0x8] sm:$0xf]
        %v5544 = vld [vmem:[#allocation2 + $0xc] sm:$0xf]
        %v5545 = vld [vmem:[#allocation2 + $0x10] sm:$0xf]
        %v5546 = vld [vmem:[#allocation2 + $0x14] sm:$0xf]
        %v5547 = vld [vmem:[#allocation2 + $0x18] sm:$0xf]
        %v5548 = vld [vmem:[#allocation2 + $0x1c] sm:$0xf]
        %v5549 = vld [vmem:[#allocation2 + $0x20] sm:$0xf]
        %v5550 = vld [vmem:[#allocation2 + $0x24] sm:$0xf]
        %v5551 = vld [vmem:[#allocation2 + $0x28] sm:$0xf]
        %v5552 = vld [vmem:[#allocation2 + $0x2c] sm:$0x1]
        %s5553 = scalar_lea.vmem %s3, 64
        %v5554 = vld [vmem:[%s5553] sm:$0xf]
        %v5555 = vld [vmem:[%s5553 + $0x4] sm:$0xf]
        %v5556 = vld [vmem:[%s5553 + $0x8] sm:$0xf]
        %v5557 = vld [vmem:[%s5553 + $0xc] sm:$0xf]
        %v5569 = vunpack.c.l.b16 %v5542
        %v5570 = vunpack.c.l.b16 %v5543
        %v5571 = vunpack.c.l.b16 %v5544
        %v5572 = vunpack.c.l.b16 %v5545
        %v5573 = vunpack.c.l.b16 %v5546
        %v5574 = vunpack.c.l.b16 %v5547
        %v5575 = vunpack.c.l.b16 %v5548
        %v5576 = vunpack.c.l.b16 %v5549
        %v5577 = vunpack.c.l.b16 %v5550
        %v5578 = vunpack.c.l.b16 %v5551
        %v5579 = vunpack.c.l.b16 %v5552
        %v5580 = vpack.c.b16 %v5570, %v5569
        %v5581 = vpack.c.b16 %v5572, %v5571
        %v5582 = vpack.c.b16 %v5574, %v5573
        %v5583 = vpack.c.b16 %v5576, %v5575
        %v5584 = vpack.c.b16 %v5578, %v5577
        %v5585 = vpack.c.b16 %v5579, %v5579
        %v5587 = vshrl.u32 %v5580, 16
        %v5589 = vrot.slane %v5587, 1
        %v5590 = vshll.u32 %v5580, 16
        %v5592 = vrot.slane %v5590, 2
        %v5593 = vor.u32 %v5589, %v5592
        %v5595 = vshrl.u32 %v5581, 16
        %v5597 = vrot.slane %v5595, 1
        %v5598 = vshll.u32 %v5581, 16
        %v5600 = vrot.slane %v5598, 2
        %v5601 = vor.u32 %v5597, %v5600
        %v5602 = vsel %vm2017, %v5593, %v5601
        %v5604 = vshrl.u32 %v5582, 16
        %v5606 = vrot.slane %v5604, 1
        %v5607 = vshll.u32 %v5582, 16
        %v5609 = vrot.slane %v5607, 2
        %v5610 = vor.u32 %v5606, %v5609
        %v5611 = vsel %vm2017, %v5601, %v5610
        %v5613 = vshrl.u32 %v5583, 16
        %v5615 = vrot.slane %v5613, 1
        %v5616 = vshll.u32 %v5583, 16
        %v5618 = vrot.slane %v5616, 2
        %v5619 = vor.u32 %v5615, %v5618
        %v5620 = vsel %vm2017, %v5610, %v5619
        %v5622 = vshrl.u32 %v5584, 16
        %v5624 = vrot.slane %v5622, 1
        %v5625 = vshll.u32 %v5584, 16
        %v5627 = vrot.slane %v5625, 2
        %v5628 = vor.u32 %v5624, %v5627
        %v5629 = vsel %vm2017, %v5619, %v5628
        %v5631 = vshll.u32 %v5585, 16
        %v5633 = vrot.slane %v5631, 2
        %v5634 = vsel %vm2017, %v5628, %v5633
        %v5639 = vunpack.c.l.b16 %v5554
        %v5640 = vunpack.c.l.b16 %v5555
        %v5641 = vunpack.c.l.b16 %v5556
        %v5642 = vunpack.c.l.b16 %v5557
        %v5643 = vpack.c.b16 %v5640, %v5639
        %v5644 = vpack.c.b16 %v5642, %v5641
        %v5648 = vsel %vm5067, %v5602, 0
        %v5651 = vsel %vm5067, %v5611, 0
        %v5654 = vsel %vm5067, %v5620, 0
        %v5657 = vsel %vm5067, %v5629, 0
        %v5660 = vsel %vm5067, %v5634, 0
        %5662 = vmatprep.subr.bf16.mxu0 0
        %5663 = vmatpush1.bf16.msra.mxu0 %v5643
        %5664 = vmatprep.subr.bf16.mxu0 0
        %5665 = vmatpush1.bf16.msra.mxu0 %v5644
        %5666 = vmatprep.subr.bf16.mxu0 0
        %5667 = vmatpush1.bf16.msra.mxu0 0
        %5668 = vmatprep.subr.bf16.mxu0 0
        %5669 = vmatpush1.bf16.msra.mxu0 0
        %5670 = vmatprep.subr.bf16.mxu0 0
        %5671 = vmatpush1.bf16.msra.mxu0 0
        %5672 = vmatprep.subr.bf16.mxu0 0
        %5673 = vmatpush1.bf16.msra.mxu0 0
        %5674 = vmatprep.subr.bf16.mxu0 0
        %5675 = vmatpush1.bf16.msra.mxu0 0
        %5676 = vmatprep.subr.bf16.mxu0 0
        %5677 = vmatpush1.bf16.msra.mxu0 0
        %5678 = vmatprep.subr.bf16.mxu0 0
        %5679 = vmatpush1.bf16.msra.mxu0 0
        %5680 = vmatprep.subr.bf16.mxu0 0
        %5681 = vmatpush1.bf16.msra.mxu0 0
        %5682 = vmatprep.subr.bf16.mxu0 0
        %5683 = vmatpush1.bf16.msra.mxu0 0
        %5684 = vmatprep.subr.bf16.mxu0 0
        %5685 = vmatpush1.bf16.msra.mxu0 0
        %5686 = vmatprep.subr.bf16.mxu0 0
        %5687 = vmatpush1.bf16.msra.mxu0 0
        %5688 = vmatprep.subr.bf16.mxu0 0
        %5689 = vmatpush1.bf16.msra.mxu0 0
        %5690 = vmatprep.subr.bf16.mxu0 0
        %5691 = vmatpush1.bf16.msra.mxu0 0
        %5692 = vmatprep.subr.bf16.mxu0 0
        %5693 = vmatpush1.bf16.msra.mxu0 0
        %5694 = vmatprep.mubr.bf16.mxu0 0
        %5695 = vmatmul.mubr.bf16.gmra.mrb[0].mxu0 %v5648
        %v5696 = vpop.f32.mrb[0].mxu0
        %v5697 = vadd.f32 0.0, %v5696
        %v5698 = vpop.f32.mrb[0].mxu0
        %v5699 = vpop.f32.mrb[0].mxu0
        %v5700 = vadd.f32 0.0, %v5699
        %v5701 = vpop.f32.mrb[0].mxu0
        %5702 = vmatprep.mubr.bf16.mxu0 0
        %5703 = vmatmul.mubr.bf16.gmra.mrb[0].mxu0 %v5651
        %v5704 = vpop.f32.mrb[0].mxu0
        %v5705 = vadd.f32 0.0, %v5704
        %v5706 = vpop.f32.mrb[0].mxu0
        %v5707 = vpop.f32.mrb[0].mxu0
        %v5708 = vadd.f32 0.0, %v5707
        %v5709 = vpop.f32.mrb[0].mxu0
        %5710 = vmatprep.mubr.bf16.mxu0 0
        %5711 = vmatmul.mubr.bf16.gmra.mrb[0].mxu0 %v5654
        %v5712 = vpop.f32.mrb[0].mxu0
        %v5713 = vadd.f32 0.0, %v5712
        %v5714 = vpop.f32.mrb[0].mxu0
        %v5715 = vpop.f32.mrb[0].mxu0
        %v5716 = vadd.f32 0.0, %v5715
        %v5717 = vpop.f32.mrb[0].mxu0
        %5718 = vmatprep.mubr.bf16.mxu0 0
        %5719 = vmatmul.mubr.bf16.gmra.mrb[0].mxu0 %v5657
        %v5720 = vpop.f32.mrb[0].mxu0
        %v5721 = vadd.f32 0.0, %v5720
        %v5722 = vpop.f32.mrb[0].mxu0
        %v5723 = vpop.f32.mrb[0].mxu0
        %v5724 = vadd.f32 0.0, %v5723
        %v5725 = vpop.f32.mrb[0].mxu0
        %5726 = vmatprep.mubr.bf16.mxu0 0
        %5727 = vmatmul.mubr.bf16.gmra.mrb[0].mxu0 %v5660
        %v5728 = vpop.f32.mrb[0].mxu0
        %v5729 = vadd.f32 0.0, %v5728
        %v5730 = vpop.f32.mrb[0].mxu0
        %v5731 = vpop.f32.mrb[0].mxu0
        %v5732 = vadd.f32 0.0, %v5731
        %v5733 = vpop.f32.mrb[0].mxu0
        %5734 = vdwg.mxu0
        %v5735 = vadd.f32 %v5532, %v5697
        %v5736 = vadd.f32 %v5533, %v5700
        %v5737 = vadd.f32 %v5534, %v5705
        %v5738 = vadd.f32 %v5535, %v5708
        %v5739 = vadd.f32 %v5536, %v5713
        %v5740 = vadd.f32 %v5537, %v5716
        %v5741 = vadd.f32 %v5538, %v5721
        %v5742 = vadd.f32 %v5539, %v5724
        %v5743 = vadd.f32 %v5540, %v5729
        %v5744 = vadd.f32 %v5541, %v5732
        %v5745 = vld [vmem:[#allocation2 + $0x4] sm:$0xc]
        %s5746 = scalar_lea.vmem %s3, 80
        %v5747 = vld [vmem:[%s5746] sm:$0xf]
        %v5748 = vld [vmem:[%s5746 + $0x4] sm:$0xf]
        %v5749 = vld [vmem:[%s5746 + $0x8] sm:$0xf]
        %v5750 = vld [vmem:[%s5746 + $0xc] sm:$0xf]
        %v5752 = vunpack.c.l.b16 %v5745
        %v5753 = vpack.c.b16 %v5570, %v5752
        %v5754 = vrot.slane %v5753, 2
        %v5755 = vrot.slane %v5581, 2
        %v5756 = vsel %vm2460, %v5754, %v5755
        %v5757 = vrot.slane %v5582, 2
        %v5758 = vsel %vm2460, %v5755, %v5757
        %v5759 = vrot.slane %v5583, 2
        %v5760 = vsel %vm2460, %v5757, %v5759
        %v5761 = vrot.slane %v5584, 2
        %v5762 = vsel %vm2460, %v5759, %v5761
        %v5763 = vrot.slane %v5585, 2
        %v5764 = vsel %vm2460, %v5761, %v5763
        %v5769 = vunpack.c.l.b16 %v5747
        %v5770 = vunpack.c.l.b16 %v5748
        %v5771 = vunpack.c.l.b16 %v5749
        %v5772 = vunpack.c.l.b16 %v5750
        %v5773 = vpack.c.b16 %v5770, %v5769
        %v5774 = vpack.c.b16 %v5772, %v5771
        %v5778 = vsel %vm5067, %v5756, 0
        %v5781 = vsel %vm5067, %v5758, 0
        %v5784 = vsel %vm5067, %v5760, 0
        %v5787 = vsel %vm5067, %v5762, 0
        %v5790 = vsel %vm5067, %v5764, 0
        %5792 = vmatprep.subr.bf16.mxu0 0
        %5793 = vmatpush1.bf16.msra.mxu0 %v5773
        %5794 = vmatprep.subr.bf16.mxu0 0
        %5795 = vmatpush1.bf16.msra.mxu0 %v5774
        %5796 = vmatprep.subr.bf16.mxu0 0
        %5797 = vmatpush1.bf16.msra.mxu0 0
        %5798 = vmatprep.subr.bf16.mxu0 0
        %5799 = vmatpush1.bf16.msra.mxu0 0
        %5800 = vmatprep.subr.bf16.mxu0 0
        %5801 = vmatpush1.bf16.msra.mxu0 0
        %5802 = vmatprep.subr.bf16.mxu0 0
        %5803 = vmatpush1.bf16.msra.mxu0 0
        %5804 = vmatprep.subr.bf16.mxu0 0
        %5805 = vmatpush1.bf16.msra.mxu0 0
        %5806 = vmatprep.subr.bf16.mxu0 0
        %5807 = vmatpush1.bf16.msra.mxu0 0
        %5808 = vmatprep.subr.bf16.mxu0 0
        %5809 = vmatpush1.bf16.msra.mxu0 0
        %5810 = vmatprep.subr.bf16.mxu0 0
        %5811 = vmatpush1.bf16.msra.mxu0 0
        %5812 = vmatprep.subr.bf16.mxu0 0
        %5813 = vmatpush1.bf16.msra.mxu0 0
        %5814 = vmatprep.subr.bf16.mxu0 0
        %5815 = vmatpush1.bf16.msra.mxu0 0
        %5816 = vmatprep.subr.bf16.mxu0 0
        %5817 = vmatpush1.bf16.msra.mxu0 0
        %5818 = vmatprep.subr.bf16.mxu0 0
        %5819 = vmatpush1.bf16.msra.mxu0 0
        %5820 = vmatprep.subr.bf16.mxu0 0
        %5821 = vmatpush1.bf16.msra.mxu0 0
        %5822 = vmatprep.subr.bf16.mxu0 0
        %5823 = vmatpush1.bf16.msra.mxu0 0
        %5824 = vmatprep.mubr.bf16.mxu0 0
        %5825 = vmatmul.mubr.bf16.gmra.mrb[0].mxu0 %v5778
        %v5826 = vpop.f32.mrb[0].mxu0
        %v5827 = vadd.f32 0.0, %v5826
        %v5828 = vpop.f32.mrb[0].mxu0
        %v5829 = vpop.f32.mrb[0].mxu0
        %v5830 = vadd.f32 0.0, %v5829
        %v5831 = vpop.f32.mrb[0].mxu0
        %5832 = vmatprep.mubr.bf16.mxu0 0
        %5833 = vmatmul.mubr.bf16.gmra.mrb[0].mxu0 %v5781
        %v5834 = vpop.f32.mrb[0].mxu0
        %v5835 = vadd.f32 0.0, %v5834
        %v5836 = vpop.f32.mrb[0].mxu0
        %v5837 = vpop.f32.mrb[0].mxu0
        %v5838 = vadd.f32 0.0, %v5837
        %v5839 = vpop.f32.mrb[0].mxu0
        %5840 = vmatprep.mubr.bf16.mxu0 0
        %5841 = vmatmul.mubr.bf16.gmra.mrb[0].mxu0 %v5784
        %v5842 = vpop.f32.mrb[0].mxu0
        %v5843 = vadd.f32 0.0, %v5842
        %v5844 = vpop.f32.mrb[0].mxu0
        %v5845 = vpop.f32.mrb[0].mxu0
        %v5846 = vadd.f32 0.0, %v5845
        %v5847 = vpop.f32.mrb[0].mxu0
        %5848 = vmatprep.mubr.bf16.mxu0 0
        %5849 = vmatmul.mubr.bf16.gmra.mrb[0].mxu0 %v5787
        %v5850 = vpop.f32.mrb[0].mxu0
        %v5851 = vadd.f32 0.0, %v5850
        %v5852 = vpop.f32.mrb[0].mxu0
        %v5853 = vpop.f32.mrb[0].mxu0
        %v5854 = vadd.f32 0.0, %v5853
        %v5855 = vpop.f32.mrb[0].mxu0
        %5856 = vmatprep.mubr.bf16.mxu0 0
        %5857 = vmatmul.mubr.bf16.gmra.mrb[0].mxu0 %v5790
        %v5858 = vpop.f32.mrb[0].mxu0
        %v5859 = vadd.f32 0.0, %v5858
        %v5860 = vpop.f32.mrb[0].mxu0
        %v5861 = vpop.f32.mrb[0].mxu0
        %v5862 = vadd.f32 0.0, %v5861
        %v5863 = vpop.f32.mrb[0].mxu0
        %5864 = vdwg.mxu0
        %v5865 = vadd.f32 %v5735, %v5827
        %v5866 = vadd.f32 %v5736, %v5830
        %v5867 = vadd.f32 %v5737, %v5835
        %v5868 = vadd.f32 %v5738, %v5838
        %v5869 = vadd.f32 %v5739, %v5843
        %v5870 = vadd.f32 %v5740, %v5846
        %v5871 = vadd.f32 %v5741, %v5851
        %v5872 = vadd.f32 %v5742, %v5854
        %v5873 = vadd.f32 %v5743, %v5859
        %v5874 = vadd.f32 %v5744, %v5862
        %v5875 = vld [vmem:[#allocation2 + $0x8] sm:$0xc]
        %v5876 = vld [vmem:[#allocation2 + $0xc] sm:$0xf]
        %v5877 = vld [vmem:[#allocation2 + $0x10] sm:$0xf]
        %v5878 = vld [vmem:[#allocation2 + $0x14] sm:$0xf]
        %v5879 = vld [vmem:[#allocation2 + $0x18] sm:$0xf]
        %v5880 = vld [vmem:[#allocation2 + $0x1c] sm:$0xf]
        %v5881 = vld [vmem:[#allocation2 + $0x20] sm:$0xf]
        %v5882 = vld [vmem:[#allocation2 + $0x24] sm:$0xf]
        %v5883 = vld [vmem:[#allocation2 + $0x28] sm:$0xf]
        %v5884 = vld [vmem:[#allocation2 + $0x2c] sm:$0xf]
        %v5885 = vld [vmem:[#allocation2 + $0x30] sm:$0x1]
        %s5886 = scalar_lea.vmem %s3, 96
        %v5887 = vld [vmem:[%s5886] sm:$0xf]
        %v5888 = vld [vmem:[%s5886 + $0x4] sm:$0xf]
        %v5889 = vld [vmem:[%s5886 + $0x8] sm:$0xf]
        %v5890 = vld [vmem:[%s5886 + $0xc] sm:$0xf]
        %v5902 = vunpack.c.l.b16 %v5875
        %v5903 = vunpack.c.l.b16 %v5876
        %v5904 = vunpack.c.l.b16 %v5877
        %v5905 = vunpack.c.l.b16 %v5878
        %v5906 = vunpack.c.l.b16 %v5879
        %v5907 = vunpack.c.l.b16 %v5880
        %v5908 = vunpack.c.l.b16 %v5881
        %v5909 = vunpack.c.l.b16 %v5882
        %v5910 = vunpack.c.l.b16 %v5883
        %v5911 = vunpack.c.l.b16 %v5884
        %v5912 = vunpack.c.l.b16 %v5885
        %v5913 = vpack.c.b16 %v5903, %v5902
        %v5914 = vpack.c.b16 %v5905, %v5904
        %v5915 = vpack.c.b16 %v5907, %v5906
        %v5916 = vpack.c.b16 %v5909, %v5908
        %v5917 = vpack.c.b16 %v5911, %v5910
        %v5918 = vpack.c.b16 %v5912, %v5912
        %v5919 = vrot.slane %v5913, 2
        %v5920 = vrot.slane %v5914, 2
        %v5921 = vsel %vm2460, %v5919, %v5920
        %v5922 = vrot.slane %v5915, 2
        %v5923 = vsel %vm2460, %v5920, %v5922
        %v5924 = vrot.slane %v5916, 2
        %v5925 = vsel %vm2460, %v5922, %v5924
        %v5926 = vrot.slane %v5917, 2
        %v5927 = vsel %vm2460, %v5924, %v5926
        %v5928 = vrot.slane %v5918, 2
        %v5929 = vsel %vm2460, %v5926, %v5928
        %v5934 = vunpack.c.l.b16 %v5887
        %v5935 = vunpack.c.l.b16 %v5888
        %v5936 = vunpack.c.l.b16 %v5889
        %v5937 = vunpack.c.l.b16 %v5890
        %v5938 = vpack.c.b16 %v5935, %v5934
        %v5939 = vpack.c.b16 %v5937, %v5936
        %v5943 = vsel %vm5067, %v5921, 0
        %v5946 = vsel %vm5067, %v5923, 0
        %v5949 = vsel %vm5067, %v5925, 0
        %v5952 = vsel %vm5067, %v5927, 0
        %v5955 = vsel %vm5067, %v5929, 0
        %5957 = vmatprep.subr.bf16.mxu0 0
        %5958 = vmatpush1.bf16.msra.mxu0 %v5938
        %5959 = vmatprep.subr.bf16.mxu0 0
        %5960 = vmatpush1.bf16.msra.mxu0 %v5939
        %5961 = vmatprep.subr.bf16.mxu0 0
        %5962 = vmatpush1.bf16.msra.mxu0 0
        %5963 = vmatprep.subr.bf16.mxu0 0
        %5964 = vmatpush1.bf16.msra.mxu0 0
        %5965 = vmatprep.subr.bf16.mxu0 0
        %5966 = vmatpush1.bf16.msra.mxu0 0
        %5967 = vmatprep.subr.bf16.mxu0 0
        %5968 = vmatpush1.bf16.msra.mxu0 0
        %5969 = vmatprep.subr.bf16.mxu0 0
        %5970 = vmatpush1.bf16.msra.mxu0 0
        %5971 = vmatprep.subr.bf16.mxu0 0
        %5972 = vmatpush1.bf16.msra.mxu0 0
        %5973 = vmatprep.subr.bf16.mxu0 0
        %5974 = vmatpush1.bf16.msra.mxu0 0
        %5975 = vmatprep.subr.bf16.mxu0 0
        %5976 = vmatpush1.bf16.msra.mxu0 0
        %5977 = vmatprep.subr.bf16.mxu0 0
        %5978 = vmatpush1.bf16.msra.mxu0 0
        %5979 = vmatprep.subr.bf16.mxu0 0
        %5980 = vmatpush1.bf16.msra.mxu0 0
        %5981 = vmatprep.subr.bf16.mxu0 0
        %5982 = vmatpush1.bf16.msra.mxu0 0
        %5983 = vmatprep.subr.bf16.mxu0 0
        %5984 = vmatpush1.bf16.msra.mxu0 0
        %5985 = vmatprep.subr.bf16.mxu0 0
        %5986 = vmatpush1.bf16.msra.mxu0 0
        %5987 = vmatprep.subr.bf16.mxu0 0
        %5988 = vmatpush1.bf16.msra.mxu0 0
        %5989 = vmatprep.mubr.bf16.mxu0 0
        %5990 = vmatmul.mubr.bf16.gmra.mrb[0].mxu0 %v5943
        %v5991 = vpop.f32.mrb[0].mxu0
        %v5992 = vadd.f32 0.0, %v5991
        %v5993 = vpop.f32.mrb[0].mxu0
        %v5994 = vpop.f32.mrb[0].mxu0
        %v5995 = vadd.f32 0.0, %v5994
        %v5996 = vpop.f32.mrb[0].mxu0
        %5997 = vmatprep.mubr.bf16.mxu0 0
        %5998 = vmatmul.mubr.bf16.gmra.mrb[0].mxu0 %v5946
        %v5999 = vpop.f32.mrb[0].mxu0
        %v6000 = vadd.f32 0.0, %v5999
        %v6001 = vpop.f32.mrb[0].mxu0
        %v6002 = vpop.f32.mrb[0].mxu0
        %v6003 = vadd.f32 0.0, %v6002
        %v6004 = vpop.f32.mrb[0].mxu0
        %6005 = vmatprep.mubr.bf16.mxu0 0
        %6006 = vmatmul.mubr.bf16.gmra.mrb[0].mxu0 %v5949
        %v6007 = vpop.f32.mrb[0].mxu0
        %v6008 = vadd.f32 0.0, %v6007
        %v6009 = vpop.f32.mrb[0].mxu0
        %v6010 = vpop.f32.mrb[0].mxu0
        %v6011 = vadd.f32 0.0, %v6010
        %v6012 = vpop.f32.mrb[0].mxu0
        %6013 = vmatprep.mubr.bf16.mxu0 0
        %6014 = vmatmul.mubr.bf16.gmra.mrb[0].mxu0 %v5952
        %v6015 = vpop.f32.mrb[0].mxu0
        %v6016 = vadd.f32 0.0, %v6015
        %v6017 = vpop.f32.mrb[0].mxu0
        %v6018 = vpop.f32.mrb[0].mxu0
        %v6019 = vadd.f32 0.0, %v6018
        %v6020 = vpop.f32.mrb[0].mxu0
        %6021 = vmatprep.mubr.bf16.mxu0 0
        %6022 = vmatmul.mubr.bf16.gmra.mrb[0].mxu0 %v5955
        %v6023 = vpop.f32.mrb[0].mxu0
        %v6024 = vadd.f32 0.0, %v6023
        %v6025 = vpop.f32.mrb[0].mxu0
        %v6026 = vpop.f32.mrb[0].mxu0
        %v6027 = vadd.f32 0.0, %v6026
        %v6028 = vpop.f32.mrb[0].mxu0
        %6029 = vdwg.mxu0
        %v6030 = vadd.f32 %v5865, %v5992
        %v6031 = vadd.f32 %v5866, %v5995
        %v6032 = vadd.f32 %v5867, %v6000
        %v6033 = vadd.f32 %v5868, %v6003
        %v6034 = vadd.f32 %v5869, %v6008
        %v6035 = vadd.f32 %v5870, %v6011
        %v6036 = vadd.f32 %v5871, %v6016
        %v6037 = vadd.f32 %v5872, %v6019
        %v6038 = vadd.f32 %v5873, %v6024
        %v6039 = vadd.f32 %v5874, %v6027
        %v6040 = vld [vmem:[#allocation2 + $0x30] sm:$0x3]
        %s6041 = scalar_lea.vmem %s3, 112
        %v6042 = vld [vmem:[%s6041] sm:$0xf]
        %v6043 = vld [vmem:[%s6041 + $0x4] sm:$0xf]
        %v6044 = vld [vmem:[%s6041 + $0x8] sm:$0xf]
        %v6045 = vld [vmem:[%s6041 + $0xc] sm:$0xf]
        %v6047 = vunpack.c.l.b16 %v6040
        %v6048 = vpack.c.b16 %v6047, %v6047
        %v6050 = vshrl.u32 %v5913, 16
        %v6052 = vrot.slane %v6050, 2
        %v6053 = vshll.u32 %v5913, 16
        %v6055 = vrot.slane %v6053, 3
        %v6056 = vor.u32 %v6052, %v6055
        %v6058 = vshrl.u32 %v5914, 16
        %v6060 = vrot.slane %v6058, 2
        %v6061 = vshll.u32 %v5914, 16
        %v6063 = vrot.slane %v6061, 3
        %v6064 = vor.u32 %v6060, %v6063
        %v6065 = vsel %vm3213, %v6056, %v6064
        %v6067 = vshrl.u32 %v5915, 16
        %v6069 = vrot.slane %v6067, 2
        %v6070 = vshll.u32 %v5915, 16
        %v6072 = vrot.slane %v6070, 3
        %v6073 = vor.u32 %v6069, %v6072
        %v6074 = vsel %vm3213, %v6064, %v6073
        %v6076 = vshrl.u32 %v5916, 16
        %v6078 = vrot.slane %v6076, 2
        %v6079 = vshll.u32 %v5916, 16
        %v6081 = vrot.slane %v6079, 3
        %v6082 = vor.u32 %v6078, %v6081
        %v6083 = vsel %vm3213, %v6073, %v6082
        %v6085 = vshrl.u32 %v5917, 16
        %v6087 = vrot.slane %v6085, 2
        %v6088 = vshll.u32 %v5917, 16
        %v6090 = vrot.slane %v6088, 3
        %v6091 = vor.u32 %v6087, %v6090
        %v6092 = vsel %vm3213, %v6082, %v6091
        %v6094 = vshrl.u32 %v6048, 16
        %v6096 = vrot.slane %v6094, 2
        %v6097 = vshll.u32 %v6048, 16
        %v6099 = vrot.slane %v6097, 3
        %v6100 = vor.u32 %v6096, %v6099
        %v6101 = vsel %vm3213, %v6091, %v6100
        %v6106 = vunpack.c.l.b16 %v6042
        %v6107 = vunpack.c.l.b16 %v6043
        %v6108 = vunpack.c.l.b16 %v6044
        %v6109 = vunpack.c.l.b16 %v6045
        %v6110 = vpack.c.b16 %v6107, %v6106
        %v6111 = vpack.c.b16 %v6109, %v6108
        %v6115 = vsel %vm5067, %v6065, 0
        %v6118 = vsel %vm5067, %v6074, 0
        %v6121 = vsel %vm5067, %v6083, 0
        %v6124 = vsel %vm5067, %v6092, 0
        %v6127 = vsel %vm5067, %v6101, 0
        %6129 = vmatprep.subr.bf16.mxu0 0
        %6130 = vmatpush1.bf16.msra.mxu0 %v6110
        %6131 = vmatprep.subr.bf16.mxu0 0
        %6132 = vmatpush1.bf16.msra.mxu0 %v6111
        %6133 = vmatprep.subr.bf16.mxu0 0
        %6134 = vmatpush1.bf16.msra.mxu0 0
        %6135 = vmatprep.subr.bf16.mxu0 0
        %6136 = vmatpush1.bf16.msra.mxu0 0
        %6137 = vmatprep.subr.bf16.mxu0 0
        %6138 = vmatpush1.bf16.msra.mxu0 0
        %6139 = vmatprep.subr.bf16.mxu0 0
        %6140 = vmatpush1.bf16.msra.mxu0 0
        %6141 = vmatprep.subr.bf16.mxu0 0
        %6142 = vmatpush1.bf16.msra.mxu0 0
        %6143 = vmatprep.subr.bf16.mxu0 0
        %6144 = vmatpush1.bf16.msra.mxu0 0
        %6145 = vmatprep.subr.bf16.mxu0 0
        %6146 = vmatpush1.bf16.msra.mxu0 0
        %6147 = vmatprep.subr.bf16.mxu0 0
        %6148 = vmatpush1.bf16.msra.mxu0 0
        %6149 = vmatprep.subr.bf16.mxu0 0
        %6150 = vmatpush1.bf16.msra.mxu0 0
        %6151 = vmatprep.subr.bf16.mxu0 0
        %6152 = vmatpush1.bf16.msra.mxu0 0
        %6153 = vmatprep.subr.bf16.mxu0 0
        %6154 = vmatpush1.bf16.msra.mxu0 0
        %6155 = vmatprep.subr.bf16.mxu0 0
        %6156 = vmatpush1.bf16.msra.mxu0 0
        %6157 = vmatprep.subr.bf16.mxu0 0
        %6158 = vmatpush1.bf16.msra.mxu0 0
        %6159 = vmatprep.subr.bf16.mxu0 0
        %6160 = vmatpush1.bf16.msra.mxu0 0
        %6161 = vmatprep.mubr.bf16.mxu0 0
        %6162 = vmatmul.mubr.bf16.gmra.mrb[0].mxu0 %v6115
        %v6163 = vpop.f32.mrb[0].mxu0
        %v6164 = vadd.f32 0.0, %v6163
        %v6165 = vpop.f32.mrb[0].mxu0
        %v6166 = vpop.f32.mrb[0].mxu0
        %v6167 = vadd.f32 0.0, %v6166
        %v6168 = vpop.f32.mrb[0].mxu0
        %6169 = vmatprep.mubr.bf16.mxu0 0
        %6170 = vmatmul.mubr.bf16.gmra.mrb[0].mxu0 %v6118
        %v6171 = vpop.f32.mrb[0].mxu0
        %v6172 = vadd.f32 0.0, %v6171
        %v6173 = vpop.f32.mrb[0].mxu0
        %v6174 = vpop.f32.mrb[0].mxu0
        %v6175 = vadd.f32 0.0, %v6174
        %v6176 = vpop.f32.mrb[0].mxu0
        %6177 = vmatprep.mubr.bf16.mxu0 0
        %6178 = vmatmul.mubr.bf16.gmra.mrb[0].mxu0 %v6121
        %v6179 = vpop.f32.mrb[0].mxu0
        %v6180 = vadd.f32 0.0, %v6179
        %v6181 = vpop.f32.mrb[0].mxu0
        %v6182 = vpop.f32.mrb[0].mxu0
        %v6183 = vadd.f32 0.0, %v6182
        %v6184 = vpop.f32.mrb[0].mxu0
        %6185 = vmatprep.mubr.bf16.mxu0 0
        %6186 = vmatmul.mubr.bf16.gmra.mrb[0].mxu0 %v6124
        %v6187 = vpop.f32.mrb[0].mxu0
        %v6188 = vadd.f32 0.0, %v6187
        %v6189 = vpop.f32.mrb[0].mxu0
        %v6190 = vpop.f32.mrb[0].mxu0
        %v6191 = vadd.f32 0.0, %v6190
        %v6192 = vpop.f32.mrb[0].mxu0
        %6193 = vmatprep.mubr.bf16.mxu0 0
        %6194 = vmatmul.mubr.bf16.gmra.mrb[0].mxu0 %v6127
        %v6195 = vpop.f32.mrb[0].mxu0
        %v6196 = vadd.f32 0.0, %v6195
        %v6197 = vpop.f32.mrb[0].mxu0
        %v6198 = vpop.f32.mrb[0].mxu0
        %v6199 = vadd.f32 0.0, %v6198
        %v6200 = vpop.f32.mrb[0].mxu0
        %6201 = vdwg.mxu0
        %v6202 = vadd.f32 %v6030, %v6164
        %v6203 = vadd.f32 %v6031, %v6167
        %v6204 = vadd.f32 %v6032, %v6172
        %v6205 = vadd.f32 %v6033, %v6175
        %v6206 = vadd.f32 %v6034, %v6180
        %v6207 = vadd.f32 %v6035, %v6183
        %v6208 = vadd.f32 %v6036, %v6188
        %v6209 = vadd.f32 %v6037, %v6191
        %v6210 = vadd.f32 %v6038, %v6196
        %v6211 = vadd.f32 %v6039, %v6199
        %v6212 = vld [vmem:[#allocation2 + $0x8] sm:$0x8]
        %s6213 = scalar_lea.vmem %s3, 128
        %v6214 = vld [vmem:[%s6213] sm:$0xf]
        %v6215 = vld [vmem:[%s6213 + $0x4] sm:$0xf]
        %v6216 = vld [vmem:[%s6213 + $0x8] sm:$0xf]
        %v6217 = vld [vmem:[%s6213 + $0xc] sm:$0xf]
        %v6219 = vunpack.c.l.b16 %v6212
        %v6220 = vpack.c.b16 %v5903, %v6219
        %v6221 = vrot.slane %v6220, 3
        %v6222 = vrot.slane %v5914, 3
        %v6223 = vsel %vm3660, %v6221, %v6222
        %v6224 = vrot.slane %v5915, 3
        %v6225 = vsel %vm3660, %v6222, %v6224
        %v6226 = vrot.slane %v5916, 3
        %v6227 = vsel %vm3660, %v6224, %v6226
        %v6228 = vrot.slane %v5917, 3
        %v6229 = vsel %vm3660, %v6226, %v6228
        %v6230 = vrot.slane %v6048, 3
        %v6231 = vsel %vm3660, %v6228, %v6230
        %v6236 = vunpack.c.l.b16 %v6214
        %v6237 = vunpack.c.l.b16 %v6215
        %v6238 = vunpack.c.l.b16 %v6216
        %v6239 = vunpack.c.l.b16 %v6217
        %v6240 = vpack.c.b16 %v6237, %v6236
        %v6241 = vpack.c.b16 %v6239, %v6238
        %v6245 = vsel %vm5067, %v6223, 0
        %v6248 = vsel %vm5067, %v6225, 0
        %v6251 = vsel %vm5067, %v6227, 0
        %v6254 = vsel %vm5067, %v6229, 0
        %v6257 = vsel %vm5067, %v6231, 0
        %6259 = vmatprep.subr.bf16.mxu0 0
        %6260 = vmatpush1.bf16.msra.mxu0 %v6240
        %6261 = vmatprep.subr.bf16.mxu0 0
        %6262 = vmatpush1.bf16.msra.mxu0 %v6241
        %6263 = vmatprep.subr.bf16.mxu0 0
        %6264 = vmatpush1.bf16.msra.mxu0 0
        %6265 = vmatprep.subr.bf16.mxu0 0
        %6266 = vmatpush1.bf16.msra.mxu0 0
        %6267 = vmatprep.subr.bf16.mxu0 0
        %6268 = vmatpush1.bf16.msra.mxu0 0
        %6269 = vmatprep.subr.bf16.mxu0 0
        %6270 = vmatpush1.bf16.msra.mxu0 0
        %6271 = vmatprep.subr.bf16.mxu0 0
        %6272 = vmatpush1.bf16.msra.mxu0 0
        %6273 = vmatprep.subr.bf16.mxu0 0
        %6274 = vmatpush1.bf16.msra.mxu0 0
        %6275 = vmatprep.subr.bf16.mxu0 0
        %6276 = vmatpush1.bf16.msra.mxu0 0
        %6277 = vmatprep.subr.bf16.mxu0 0
        %6278 = vmatpush1.bf16.msra.mxu0 0
        %6279 = vmatprep.subr.bf16.mxu0 0
        %6280 = vmatpush1.bf16.msra.mxu0 0
        %6281 = vmatprep.subr.bf16.mxu0 0
        %6282 = vmatpush1.bf16.msra.mxu0 0
        %6283 = vmatprep.subr.bf16.mxu0 0
        %6284 = vmatpush1.bf16.msra.mxu0 0
        %6285 = vmatprep.subr.bf16.mxu0 0
        %6286 = vmatpush1.bf16.msra.mxu0 0
        %6287 = vmatprep.subr.bf16.mxu0 0
        %6288 = vmatpush1.bf16.msra.mxu0 0
        %6289 = vmatprep.subr.bf16.mxu0 0
        %6290 = vmatpush1.bf16.msra.mxu0 0
        %6291 = vmatprep.mubr.bf16.mxu0 0
        %6292 = vmatmul.mubr.bf16.gmra.mrb[0].mxu0 %v6245
        %v6293 = vpop.f32.mrb[0].mxu0
        %v6294 = vadd.f32 0.0, %v6293
        %v6295 = vpop.f32.mrb[0].mxu0
        %v6296 = vpop.f32.mrb[0].mxu0
        %v6297 = vadd.f32 0.0, %v6296
        %v6298 = vpop.f32.mrb[0].mxu0
        %6299 = vmatprep.mubr.bf16.mxu0 0
        %6300 = vmatmul.mubr.bf16.gmra.mrb[0].mxu0 %v6248
        %v6301 = vpop.f32.mrb[0].mxu0
        %v6302 = vadd.f32 0.0, %v6301
        %v6303 = vpop.f32.mrb[0].mxu0
        %v6304 = vpop.f32.mrb[0].mxu0
        %v6305 = vadd.f32 0.0, %v6304
        %v6306 = vpop.f32.mrb[0].mxu0
        %6307 = vmatprep.mubr.bf16.mxu0 0
        %6308 = vmatmul.mubr.bf16.gmra.mrb[0].mxu0 %v6251
        %v6309 = vpop.f32.mrb[0].mxu0
        %v6310 = vadd.f32 0.0, %v6309
        %v6311 = vpop.f32.mrb[0].mxu0
        %v6312 = vpop.f32.mrb[0].mxu0
        %v6313 = vadd.f32 0.0, %v6312
        %v6314 = vpop.f32.mrb[0].mxu0
        %6315 = vmatprep.mubr.bf16.mxu0 0
        %6316 = vmatmul.mubr.bf16.gmra.mrb[0].mxu0 %v6254
        %v6317 = vpop.f32.mrb[0].mxu0
        %v6318 = vadd.f32 0.0, %v6317
        %v6319 = vpop.f32.mrb[0].mxu0
        %v6320 = vpop.f32.mrb[0].mxu0
        %v6321 = vadd.f32 0.0, %v6320
        %v6322 = vpop.f32.mrb[0].mxu0
        %6323 = vmatprep.mubr.bf16.mxu0 0
        %6324 = vmatmul.mubr.bf16.gmra.mrb[0].mxu0 %v6257
        %v6325 = vpop.f32.mrb[0].mxu0
        %v6326 = vadd.f32 0.0, %v6325
        %v6327 = vpop.f32.mrb[0].mxu0
        %v6328 = vpop.f32.mrb[0].mxu0
        %v6329 = vadd.f32 0.0, %v6328
        %v6330 = vpop.f32.mrb[0].mxu0
        %6331 = vdwg.mxu0
        %v6332 = vadd.f32 %v6202, %v6294
        %v6333 = vadd.f32 %v6203, %v6297
        %v6334 = vadd.f32 %v6204, %v6302
        %v6335 = vadd.f32 %v6205, %v6305
        %v6336 = vadd.f32 %v6206, %v6310
        %v6337 = vadd.f32 %v6207, %v6313
        %v6338 = vadd.f32 %v6208, %v6318
        %v6339 = vadd.f32 %v6209, %v6321
        %v6340 = vadd.f32 %v6210, %v6326
        %v6341 = vadd.f32 %v6211, %v6329
        %v6342 = vld [vmem:[%s4] sm:$0x1]
        %v6344 = vlaneseq
        %v6345 = vshrl.u32 %v6344, 7
        %v6346 = vsub.s32 0, %v6345
        %v6347 = vrot.slane %v6342, %v6346
        %v6349 = vadd.f32 %v6332, %v6347
        %v6350 = vadd.f32 %v6333, %v6347
        %v6351 = vadd.f32 %v6334, %v6347
        %v6352 = vadd.f32 %v6335, %v6347
        %v6353 = vadd.f32 %v6336, %v6347
        %v6354 = vadd.f32 %v6337, %v6347
        %v6355 = vadd.f32 %v6338, %v6347
        %v6356 = vadd.f32 %v6339, %v6347
        %v6357 = vadd.f32 %v6340, %v6347
        %v6358 = vadd.f32 %v6341, %v6347
        %v6359 = vmax.f32 %v6349, 0.0
        %v6360 = vmax.f32 %v6350, 0.0
        %v6361 = vmax.f32 %v6351, 0.0
        %v6362 = vmax.f32 %v6352, 0.0
        %v6363 = vmax.f32 %v6353, 0.0
        %v6364 = vmax.f32 %v6354, 0.0
        %v6365 = vmax.f32 %v6355, 0.0
        %v6366 = vmax.f32 %v6356, 0.0
        %v6367 = vmax.f32 %v6357, 0.0
        %v6368 = vmax.f32 %v6358, 0.0
        %v6371 = vrot.slane %v6360, 2
        %v6372 = vrot.slane %v6361, 2
        %v6373 = vsel %vm4050, %v6371, %v6372
        %v6375 = vmax.f32 %v6359, %v6373
        %v6376 = vsel %vm405, %v6375, -inf
        %v6377 = vrot.slane %v6376, 4
        %v6378 = vmax.f32 %v6376, %v6377
        %v6379 = vrot.slane %v6378, 2
        %v6380 = vmax.f32 %v6378, %v6379
        %v6381 = vrot.slane %v6380, 1
        %v6382 = vmax.f32 %v6380, %v6381
        %vm6383 = vcmask 519169
        %v6384 = vsel %vm6383, %v6375, -inf
        %v6385 = vrot.slane %v6384, 4
        %v6386 = vmax.f32 %v6384, %v6385
        %v6387 = vrot.slane %v6386, 2
        %v6388 = vmax.f32 %v6386, %v6387
        %v6389 = vrot.slane %v6388, 1
        %v6390 = vmax.f32 %v6388, %v6389
        %vm6391 = vcmask 521219
        %v6392 = vsel %vm6391, %v6375, -inf
        %v6393 = vrot.slane %v6392, 4
        %v6394 = vmax.f32 %v6392, %v6393
        %v6395 = vrot.slane %v6394, 2
        %v6396 = vmax.f32 %v6394, %v6395
        %v6397 = vrot.slane %v6396, 1
        %v6398 = vmax.f32 %v6396, %v6397
        %vm6399 = vcmask 523269
        %v6400 = vsel %vm6399, %v6375, -inf
        %v6401 = vrot.slane %v6400, 4
        %v6402 = vmax.f32 %v6400, %v6401
        %v6403 = vrot.slane %v6402, 2
        %v6404 = vmax.f32 %v6402, %v6403
        %v6405 = vrot.slane %v6404, 1
        %v6406 = vmax.f32 %v6404, %v6405
        %v6407 = vsel %vm736, %v6382, %v6390
        %v6408 = vsel %vm737, %v6407, %v6398
        %v6409 = vsel %vm4124, %v6408, %v6406
        %v6410 = vpack.c.bf16 %v6409, %v6409
        %v6412 = vunpack.c.l.b16 %v6410
        %v6413 = vpack.c.b16 %v6412, %v6412
        %v6415 = vshll.u32 %v6413, 16
        %v6417 = vrot.slane %v6415, 5
        %v6418 = vshrl.u32 %v6413, 16
        %v6420 = vrot.slane %v6418, 4
        %v6421 = vor.u32 %v6420, %v6417
        %v6422 = vrot.slane %v6421, 4
        %vm6425 = vcmask 519171
        %vm6426 = vmand %vm6425, %vm4389
        %v6427 = vld [vmem:[#allocation3] sm:$0x8]
        %v6428 = vsel %vm6426, %v6417, %v6427
        %6429 = vst [vmem:[#allocation3] sm:$0x8] %v6428
        %vm6430 = vcmask 517120
        %vm6431 = vmand %vm6430, %vm4155
        %v6432 = vld [vmem:[#allocation3 + $0x4] sm:$0x3]
        %v6433 = vsel %vm6431, %v6422, %v6432
        %6434 = vst [vmem:[#allocation3 + $0x4] sm:$0x3] %v6433
        %v6436 = vrot.slane %v6362, 2
        %v6437 = vsel %vm4050, %v6372, %v6436
        %v6440 = vmax.f32 %v6360, %v6437
        %v6441 = vmax.f32 %v6361, %v6436
        %v6443 = vrot.slane %v6362, 4
        %v6444 = vrot.slane %v6363, 4
        %v6445 = vsel %vm4126, %v6443, %v6444
        %v6448 = vmax.f32 %v6440, %v6445
        %v6449 = vmax.f32 %v6441, %v6444
        %vm6450 = vcmask 519170
        %v6451 = vsel %vm6450, %v6448, -inf
        %v6452 = vrot.slane %v6451, 4
        %v6453 = vmax.f32 %v6451, %v6452
        %v6454 = vrot.slane %v6453, 2
        %v6455 = vmax.f32 %v6453, %v6454
        %v6456 = vrot.slane %v6455, 1
        %v6457 = vmax.f32 %v6455, %v6456
        %v6458 = vsel %vm6391, %v6448, -inf
        %v6459 = vrot.slane %v6458, 4
        %v6460 = vmax.f32 %v6458, %v6459
        %v6461 = vrot.slane %v6460, 2
        %v6462 = vmax.f32 %v6460, %v6461
        %v6463 = vrot.slane %v6462, 1
        %v6464 = vmax.f32 %v6462, %v6463
        %v6465 = vsel %vm6399, %v6448, -inf
        %v6466 = vrot.slane %v6465, 4
        %v6467 = vmax.f32 %v6465, %v6466
        %v6468 = vrot.slane %v6467, 2
        %v6469 = vmax.f32 %v6467, %v6468
        %v6470 = vrot.slane %v6469, 1
        %v6471 = vmax.f32 %v6469, %v6470
        %vm6472 = vcmask 523271
        %v6473 = vsel %vm6472, %v6448, -inf
        %v6474 = vsel %vm405, %v6449, -inf
        %v6475 = vmax.f32 %v6473, %v6474
        %v6476 = vrot.slane %v6475, 4
        %v6477 = vmax.f32 %v6475, %v6476
        %v6478 = vrot.slane %v6477, 2
        %v6479 = vmax.f32 %v6477, %v6478
        %v6480 = vrot.slane %v6479, 1
        %v6481 = vmax.f32 %v6479, %v6480
        %v6482 = vsel %vm736, %v6457, %v6464
        %v6483 = vsel %vm737, %v6482, %v6471
        %v6484 = vsel %vm4124, %v6483, %v6481
        %v6485 = vpack.c.bf16 %v6484, %v6484
        %v6487 = vunpack.c.l.b16 %v6485
        %v6488 = vpack.c.b16 %v6487, %v6487
        %v6490 = vshrl.u32 %v6488, 16
        %v6492 = vrot.slane %v6490, 5
        %v6493 = vshll.u32 %v6488, 16
        %v6495 = vrot.slane %v6493, 6
        %v6496 = vor.u32 %v6492, %v6495
        %v6497 = vrot.slane %v6492, 4
        %vm6500 = vcmask 519170
        %vm6501 = vmand %vm6500, %vm4269
        %v6502 = vld [vmem:[#allocation3 + $0x4] sm:$0xc]
        %v6503 = vsel %vm6501, %v6496, %v6502
        %6504 = vst [vmem:[#allocation3 + $0x4] sm:$0xc] %v6503
        %vm6505 = vcmask 516096
        %vm6506 = vmand %vm6505, %vm4513
        %v6507 = vld [vmem:[#allocation3 + $0x8] sm:$0x1]
        %v6508 = vsel %vm6506, %v6497, %v6507
        %6509 = vst [vmem:[#allocation3 + $0x8] sm:$0x1] %v6508
        %v6511 = vrot.slane %v6364, 2
        %v6513 = vmax.f32 %v6362, %v6511
        %v6514 = vmax.f32 %v6363, %v6511
        %v6517 = vrot.slane %v6365, 4
        %v6518 = vrot.slane %v6366, 4
        %v6519 = vsel %vm4126, %v6517, %v6518
        %v6522 = vmax.f32 %v6513, %v6517
        %v6523 = vmax.f32 %v6514, %v6519
        %vm6524 = vcmask 523270
        %v6525 = vsel %vm6524, %v6522, -inf
        %v6526 = vrot.slane %v6525, 4
        %v6527 = vmax.f32 %v6525, %v6526
        %v6528 = vrot.slane %v6527, 2
        %v6529 = vmax.f32 %v6527, %v6528
        %v6530 = vrot.slane %v6529, 1
        %v6531 = vmax.f32 %v6529, %v6530
        %v6532 = vsel %vm6472, %v6522, -inf
        %v6533 = vsel %vm405, %v6523, -inf
        %v6534 = vmax.f32 %v6532, %v6533
        %v6535 = vrot.slane %v6534, 4
        %v6536 = vmax.f32 %v6534, %v6535
        %v6537 = vrot.slane %v6536, 2
        %v6538 = vmax.f32 %v6536, %v6537
        %v6539 = vrot.slane %v6538, 1
        %v6540 = vmax.f32 %v6538, %v6539
        %v6541 = vsel %vm6383, %v6523, -inf
        %v6542 = vrot.slane %v6541, 4
        %v6543 = vmax.f32 %v6541, %v6542
        %v6544 = vrot.slane %v6543, 2
        %v6545 = vmax.f32 %v6543, %v6544
        %v6546 = vrot.slane %v6545, 1
        %v6547 = vmax.f32 %v6545, %v6546
        %v6548 = vsel %vm6391, %v6523, -inf
        %v6549 = vrot.slane %v6548, 4
        %v6550 = vmax.f32 %v6548, %v6549
        %v6551 = vrot.slane %v6550, 2
        %v6552 = vmax.f32 %v6550, %v6551
        %v6553 = vrot.slane %v6552, 1
        %v6554 = vmax.f32 %v6552, %v6553
        %v6555 = vsel %vm736, %v6531, %v6540
        %v6556 = vsel %vm737, %v6555, %v6547
        %v6557 = vsel %vm4124, %v6556, %v6554
        %v6558 = vpack.c.bf16 %v6557, %v6557
        %v6560 = vunpack.c.l.b16 %v6558
        %v6561 = vpack.c.b16 %v6560, %v6560
        %v6563 = vshrl.u32 %v6561, 16
        %v6565 = vrot.slane %v6563, 6
        %v6566 = vshll.u32 %v6561, 16
        %v6568 = vrot.slane %v6566, 7
        %v6569 = vor.u32 %v6565, %v6568
        %vm6571 = vcmask 519169
        %vm6572 = vsmask.f32 3334
        %vm6573 = vmand %vm6571, %vm6572
        %v6574 = vld [vmem:[#allocation3 + $0x8] sm:$0xe]
        %v6575 = vsel %vm6573, %v6569, %v6574
        %6576 = vst [vmem:[#allocation3 + $0x8] sm:$0xe] %v6575
        %v6578 = vrot.slane %v6366, 2
        %v6579 = vrot.slane %v6367, 2
        %v6580 = vsel %vm4050, %v6578, %v6579
        %v6583 = vmax.f32 %v6365, %v6580
        %v6584 = vmax.f32 %v6366, %v6579
        %v6586 = vrot.slane %v6367, 4
        %v6587 = vrot.slane %v6368, 4
        %v6588 = vsel %vm4126, %v6586, %v6587
        %v6591 = vmax.f32 %v6583, %v6588
        %v6592 = vmax.f32 %v6584, %v6587
        %v6593 = vsel %vm6450, %v6591, -inf
        %v6594 = vrot.slane %v6593, 4
        %v6595 = vmax.f32 %v6593, %v6594
        %v6596 = vrot.slane %v6595, 2
        %v6597 = vmax.f32 %v6595, %v6596
        %v6598 = vrot.slane %v6597, 1
        %v6599 = vmax.f32 %v6597, %v6598
        %v6600 = vsel %vm6391, %v6591, -inf
        %v6601 = vrot.slane %v6600, 4
        %v6602 = vmax.f32 %v6600, %v6601
        %v6603 = vrot.slane %v6602, 2
        %v6604 = vmax.f32 %v6602, %v6603
        %v6605 = vrot.slane %v6604, 1
        %v6606 = vmax.f32 %v6604, %v6605
        %v6607 = vsel %vm6399, %v6591, -inf
        %v6608 = vrot.slane %v6607, 4
        %v6609 = vmax.f32 %v6607, %v6608
        %v6610 = vrot.slane %v6609, 2
        %v6611 = vmax.f32 %v6609, %v6610
        %v6612 = vrot.slane %v6611, 1
        %v6613 = vmax.f32 %v6611, %v6612
        %v6614 = vsel %vm6472, %v6591, -inf
        %v6615 = vsel %vm405, %v6592, -inf
        %v6616 = vmax.f32 %v6614, %v6615
        %v6617 = vrot.slane %v6616, 4
        %v6618 = vmax.f32 %v6616, %v6617
        %v6619 = vrot.slane %v6618, 2
        %v6620 = vmax.f32 %v6618, %v6619
        %v6621 = vrot.slane %v6620, 1
        %v6622 = vmax.f32 %v6620, %v6621
        %v6623 = vsel %vm736, %v6599, %v6606
        %v6624 = vsel %vm737, %v6623, %v6613
        %v6625 = vsel %vm4124, %v6624, %v6622
        %v6626 = vpack.c.bf16 %v6625, %v6625
        %v6628 = vunpack.c.l.b16 %v6626
        %v6629 = vpack.c.b16 %v6628, %v6628
        %v6631 = vshrl.u32 %v6629, 16
        %v6633 = vrot.slane %v6631, 7
        %v6634 = vshll.u32 %v6629, 16
        %v6636 = vor.u32 %v6633, %v6634
        %vm6638 = vcmask 518144
        %vm6639 = vsmask.f32 2306
        %vm6640 = vmand %vm6638, %vm6639
        %v6641 = vld [vmem:[#allocation3 + $0xc] sm:$0x7]
        %v6642 = vsel %vm6640, %v6636, %v6641
        %6643 = vst [vmem:[#allocation3 + $0xc] sm:$0x7] %v6642
        %v6644 = vld [vmem:[#allocation3] sm:$0xf]
        %v6645 = vld [vmem:[#allocation3 + $0x4] sm:$0xf]
        %v6646 = vld [vmem:[#allocation3 + $0x8] sm:$0x7]
        %v6647 = vld [vmem:[%s5] sm:$0xf]
        %v6648 = vld [vmem:[%s5 + $0x4] sm:$0xf]
        %v6649 = vld [vmem:[%s5 + $0x8] sm:$0xf]
        %v6650 = vld [vmem:[%s5 + $0xc] sm:$0xf]
        %v6651 = vld [vmem:[%s5 + $0x10] sm:$0xf]
        %v6652 = vld [vmem:[%s5 + $0x14] sm:$0xf]
        %v6653 = vld [vmem:[%s5 + $0x18] sm:$0xf]
        %v6654 = vld [vmem:[%s5 + $0x1c] sm:$0xf]
        %v6655 = vld [vmem:[#allocation3 + $0x8] sm:$0xf]
        %s6656 = scalar_lea.vmem %s5, 32
        %v6657 = vld [vmem:[%s6656] sm:$0xf]
        %v6658 = vld [vmem:[%s6656 + $0x4] sm:$0xf]
        %v6659 = vld [vmem:[%s6656 + $0x8] sm:$0xf]
        %v6660 = vld [vmem:[%s6656 + $0xc] sm:$0xf]
        %v6661 = vld [vmem:[%s6656 + $0x10] sm:$0xf]
        %v6662 = vld [vmem:[%s6656 + $0x14] sm:$0xf]
        %v6663 = vld [vmem:[%s6656 + $0x18] sm:$0xf]
        %v6664 = vld [vmem:[%s6656 + $0x1c] sm:$0xf]
        %v6668 = vunpack.c.l.b16 %v6644
        %v6669 = vunpack.c.l.b16 %v6645
        %v6670 = vunpack.c.l.b16 %v6655
        %v6671 = vpack.c.b16 %v6669, %v6668
        %v6672 = vpack.c.b16 %v6670, %v6670
        %v6674 = vshrl.u32 %v6671, 16
        %v6676 = vshll.u32 %v6671, 16
        %v6678 = vrot.slane %v6676, 1
        %v6679 = vor.u32 %v6674, %v6678
        %v6681 = vshll.u32 %v6672, 16
        %v6683 = vrot.slane %v6681, 1
        %v6684 = vsel %vm537, %v6679, %v6683
        %v6685 = vshrl.u32 %v6672, 16
        %v6687 = vor.u32 %v6685, %v6683
        %v6696 = vunpack.c.l.b16 %v6657
        %v6697 = vunpack.c.l.b16 %v6658
        %v6698 = vunpack.c.l.b16 %v6659
        %v6699 = vunpack.c.l.b16 %v6660
        %v6700 = vunpack.c.l.b16 %v6661
        %v6701 = vunpack.c.l.b16 %v6662
        %v6702 = vunpack.c.l.b16 %v6663
        %v6703 = vunpack.c.l.b16 %v6664
        %v6704 = vpack.c.b16 %v6697, %v6696
        %v6705 = vpack.c.b16 %v6699, %v6698
        %v6706 = vpack.c.b16 %v6701, %v6700
        %v6707 = vpack.c.b16 %v6703, %v6702
        %vm6712 = vcmask 523264
        %v6714 = vsel %vm6712, %v6684, 0
        %v6717 = vsel %vm6712, %v6687, 0
        %6719 = vmatprep.subr.bf16.mxu0 0
        %6720 = vmatpush1.bf16.msra.mxu0 %v6704
        %6721 = vmatprep.subr.bf16.mxu0 0
        %6722 = vmatpush1.bf16.msra.mxu0 %v6705
        %6723 = vmatprep.subr.bf16.mxu0 0
        %6724 = vmatpush1.bf16.msra.mxu0 %v6706
        %6725 = vmatprep.subr.bf16.mxu0 0
        %6726 = vmatpush1.bf16.msra.mxu0 %v6707
        %6727 = vmatprep.subr.bf16.mxu0 0
        %6728 = vmatpush1.bf16.msra.mxu0 0
        %6729 = vmatprep.subr.bf16.mxu0 0
        %6730 = vmatpush1.bf16.msra.mxu0 0
        %6731 = vmatprep.subr.bf16.mxu0 0
        %6732 = vmatpush1.bf16.msra.mxu0 0
        %6733 = vmatprep.subr.bf16.mxu0 0
        %6734 = vmatpush1.bf16.msra.mxu0 0
        %6735 = vmatprep.subr.bf16.mxu0 0
        %6736 = vmatpush1.bf16.msra.mxu0 0
        %6737 = vmatprep.subr.bf16.mxu0 0
        %6738 = vmatpush1.bf16.msra.mxu0 0
        %6739 = vmatprep.subr.bf16.mxu0 0
        %6740 = vmatpush1.bf16.msra.mxu0 0
        %6741 = vmatprep.subr.bf16.mxu0 0
        %6742 = vmatpush1.bf16.msra.mxu0 0
        %6743 = vmatprep.subr.bf16.mxu0 0
        %6744 = vmatpush1.bf16.msra.mxu0 0
        %6745 = vmatprep.subr.bf16.mxu0 0
        %6746 = vmatpush1.bf16.msra.mxu0 0
        %6747 = vmatprep.subr.bf16.mxu0 0
        %6748 = vmatpush1.bf16.msra.mxu0 0
        %6749 = vmatprep.subr.bf16.mxu0 0
        %6750 = vmatpush1.bf16.msra.mxu0 0
        %6751 = vmatprep.mubr.bf16.mxu0 0
        %6752 = vmatmul.mubr.bf16.gmra.mrb[0].mxu0 %v6714
        %v6753 = vpop.f32.mrb[0].mxu0
        %v6754 = vadd.f32 0.0, %v6753
        %v6755 = vpop.f32.mrb[0].mxu0
        %v6756 = vpop.f32.mrb[0].mxu0
        %v6757 = vadd.f32 0.0, %v6756
        %v6758 = vpop.f32.mrb[0].mxu0
        %6759 = vmatprep.mubr.bf16.mxu0 0
        %6760 = vmatmul.mubr.bf16.gmra.mrb[0].mxu0 %v6717
        %v6761 = vpop.f32.mrb[0].mxu0
        %v6762 = vadd.f32 0.0, %v6761
        %v6763 = vpop.f32.mrb[0].mxu0
        %v6764 = vpop.f32.mrb[0].mxu0
        %v6765 = vpop.f32.mrb[0].mxu0
        %6766 = vdwg.mxu0
        %v6768 = vunpack.c.l.b16 %v6646
        %v6769 = vpack.c.b16 %v6768, %v6768
        %v6778 = vunpack.c.l.b16 %v6647
        %v6779 = vunpack.c.l.b16 %v6648
        %v6780 = vunpack.c.l.b16 %v6649
        %v6781 = vunpack.c.l.b16 %v6650
        %v6782 = vunpack.c.l.b16 %v6651
        %v6783 = vunpack.c.l.b16 %v6652
        %v6784 = vunpack.c.l.b16 %v6653
        %v6785 = vunpack.c.l.b16 %v6654
        %v6786 = vpack.c.b16 %v6779, %v6778
        %v6787 = vpack.c.b16 %v6781, %v6780
        %v6788 = vpack.c.b16 %v6783, %v6782
        %v6789 = vpack.c.b16 %v6785, %v6784
        %v6794 = vsel %vm6712, %v6671, 0
        %v6797 = vsel %vm6712, %v6769, 0
        %6799 = vmatprep.subr.bf16.mxu0 0
        %6800 = vmatpush1.bf16.msra.mxu0 %v6786
        %6801 = vmatprep.subr.bf16.mxu0 0
        %6802 = vmatpush1.bf16.msra.mxu0 %v6787
        %6803 = vmatprep.subr.bf16.mxu0 0
        %6804 = vmatpush1.bf16.msra.mxu0 %v6788
        %6805 = vmatprep.subr.bf16.mxu0 0
        %6806 = vmatpush1.bf16.msra.mxu0 %v6789
        %6807 = vmatprep.subr.bf16.mxu0 0
        %6808 = vmatpush1.bf16.msra.mxu0 0
        %6809 = vmatprep.subr.bf16.mxu0 0
        %6810 = vmatpush1.bf16.msra.mxu0 0
        %6811 = vmatprep.subr.bf16.mxu0 0
        %6812 = vmatpush1.bf16.msra.mxu0 0
        %6813 = vmatprep.subr.bf16.mxu0 0
        %6814 = vmatpush1.bf16.msra.mxu0 0
        %6815 = vmatprep.subr.bf16.mxu0 0
        %6816 = vmatpush1.bf16.msra.mxu0 0
        %6817 = vmatprep.subr.bf16.mxu0 0
        %6818 = vmatpush1.bf16.msra.mxu0 0
        %6819 = vmatprep.subr.bf16.mxu0 0
        %6820 = vmatpush1.bf16.msra.mxu0 0
        %6821 = vmatprep.subr.bf16.mxu0 0
        %6822 = vmatpush1.bf16.msra.mxu0 0
        %6823 = vmatprep.subr.bf16.mxu0 0
        %6824 = vmatpush1.bf16.msra.mxu0 0
        %6825 = vmatprep.subr.bf16.mxu0 0
        %6826 = vmatpush1.bf16.msra.mxu0 0
        %6827 = vmatprep.subr.bf16.mxu0 0
        %6828 = vmatpush1.bf16.msra.mxu0 0
        %6829 = vmatprep.subr.bf16.mxu0 0
        %6830 = vmatpush1.bf16.msra.mxu0 0
        %6831 = vmatprep.mubr.bf16.mxu0 0
        %6832 = vmatmul.mubr.bf16.gmra.mrb[0].mxu0 %v6794
        %v6833 = vpop.f32.mrb[0].mxu0
        %v6834 = vadd.f32 %v6754, %v6833
        %v6835 = vpop.f32.mrb[0].mxu0
        %v6836 = vpop.f32.mrb[0].mxu0
        %v6837 = vadd.f32 %v6757, %v6836
        %v6838 = vpop.f32.mrb[0].mxu0
        %6839 = vmatprep.mubr.bf16.mxu0 0
        %6840 = vmatmul.mubr.bf16.gmra.mrb[0].mxu0 %v6797
        %v6841 = vpop.f32.mrb[0].mxu0
        %v6842 = vadd.f32 %v6762, %v6841
        %v6843 = vpop.f32.mrb[0].mxu0
        %v6844 = vpop.f32.mrb[0].mxu0
        %v6845 = vpop.f32.mrb[0].mxu0
        %6846 = vdwg.mxu0
        %v6847 = vld [vmem:[#allocation3] sm:$0xe]
        %s6848 = scalar_lea.vmem %s5, 64
        %v6849 = vld [vmem:[%s6848] sm:$0xf]
        %v6850 = vld [vmem:[%s6848 + $0x4] sm:$0xf]
        %v6851 = vld [vmem:[%s6848 + $0x8] sm:$0xf]
        %v6852 = vld [vmem:[%s6848 + $0xc] sm:$0xf]
        %v6853 = vld [vmem:[%s6848 + $0x10] sm:$0xf]
        %v6854 = vld [vmem:[%s6848 + $0x14] sm:$0xf]
        %v6855 = vld [vmem:[%s6848 + $0x18] sm:$0xf]
        %v6856 = vld [vmem:[%s6848 + $0x1c] sm:$0xf]
        %v6858 = vunpack.c.l.b16 %v6847
        %v6859 = vpack.c.b16 %v6669, %v6858
        %v6860 = vrot.slane %v6859, 1
        %v6861 = vrot.slane %v6672, 1
        %v6862 = vsel %vm1146, %v6860, %v6861
        %v6871 = vunpack.c.l.b16 %v6849
        %v6872 = vunpack.c.l.b16 %v6850
        %v6873 = vunpack.c.l.b16 %v6851
        %v6874 = vunpack.c.l.b16 %v6852
        %v6875 = vunpack.c.l.b16 %v6853
        %v6876 = vunpack.c.l.b16 %v6854
        %v6877 = vunpack.c.l.b16 %v6855
        %v6878 = vunpack.c.l.b16 %v6856
        %v6879 = vpack.c.b16 %v6872, %v6871
        %v6880 = vpack.c.b16 %v6874, %v6873
        %v6881 = vpack.c.b16 %v6876, %v6875
        %v6882 = vpack.c.b16 %v6878, %v6877
        %v6888 = vsel %vm6712, %v6862, 0
        %v6891 = vsel %vm6712, %v6861, 0
        %6893 = vmatprep.subr.bf16.mxu0 0
        %6894 = vmatpush1.bf16.msra.mxu0 %v6879
        %6895 = vmatprep.subr.bf16.mxu0 0
        %6896 = vmatpush1.bf16.msra.mxu0 %v6880
        %6897 = vmatprep.subr.bf16.mxu0 0
        %6898 = vmatpush1.bf16.msra.mxu0 %v6881
        %6899 = vmatprep.subr.bf16.mxu0 0
        %6900 = vmatpush1.bf16.msra.mxu0 %v6882
        %6901 = vmatprep.subr.bf16.mxu0 0
        %6902 = vmatpush1.bf16.msra.mxu0 0
        %6903 = vmatprep.subr.bf16.mxu0 0
        %6904 = vmatpush1.bf16.msra.mxu0 0
        %6905 = vmatprep.subr.bf16.mxu0 0
        %6906 = vmatpush1.bf16.msra.mxu0 0
        %6907 = vmatprep.subr.bf16.mxu0 0
        %6908 = vmatpush1.bf16.msra.mxu0 0
        %6909 = vmatprep.subr.bf16.mxu0 0
        %6910 = vmatpush1.bf16.msra.mxu0 0
        %6911 = vmatprep.subr.bf16.mxu0 0
        %6912 = vmatpush1.bf16.msra.mxu0 0
        %6913 = vmatprep.subr.bf16.mxu0 0
        %6914 = vmatpush1.bf16.msra.mxu0 0
        %6915 = vmatprep.subr.bf16.mxu0 0
        %6916 = vmatpush1.bf16.msra.mxu0 0
        %6917 = vmatprep.subr.bf16.mxu0 0
        %6918 = vmatpush1.bf16.msra.mxu0 0
        %6919 = vmatprep.subr.bf16.mxu0 0
        %6920 = vmatpush1.bf16.msra.mxu0 0
        %6921 = vmatprep.subr.bf16.mxu0 0
        %6922 = vmatpush1.bf16.msra.mxu0 0
        %6923 = vmatprep.subr.bf16.mxu0 0
        %6924 = vmatpush1.bf16.msra.mxu0 0
        %6925 = vmatprep.mubr.bf16.mxu0 0
        %6926 = vmatmul.mubr.bf16.gmra.mrb[0].mxu0 %v6888
        %v6927 = vpop.f32.mrb[0].mxu0
        %v6928 = vadd.f32 0.0, %v6927
        %v6929 = vpop.f32.mrb[0].mxu0
        %v6930 = vpop.f32.mrb[0].mxu0
        %v6931 = vadd.f32 0.0, %v6930
        %v6932 = vpop.f32.mrb[0].mxu0
        %6933 = vmatprep.mubr.bf16.mxu0 0
        %6934 = vmatmul.mubr.bf16.gmra.mrb[0].mxu0 %v6891
        %v6935 = vpop.f32.mrb[0].mxu0
        %v6936 = vadd.f32 0.0, %v6935
        %v6937 = vpop.f32.mrb[0].mxu0
        %v6938 = vpop.f32.mrb[0].mxu0
        %v6939 = vpop.f32.mrb[0].mxu0
        %6940 = vdwg.mxu0
        %v6941 = vadd.f32 %v6834, %v6928
        %v6942 = vadd.f32 %v6837, %v6931
        %v6943 = vadd.f32 %v6842, %v6936
        %v6944 = vld [vmem:[#allocation3] sm:$0x8]
        %v6945 = vld [vmem:[#allocation3 + $0x4] sm:$0xf]
        %v6946 = vld [vmem:[#allocation3 + $0x8] sm:$0xf]
        %v6947 = vld [vmem:[#allocation3 + $0xc] sm:$0x3]
        %s6948 = scalar_lea.vmem %s5, 96
        %v6949 = vld [vmem:[%s6948] sm:$0xf]
        %v6950 = vld [vmem:[%s6948 + $0x4] sm:$0xf]
        %v6951 = vld [vmem:[%s6948 + $0x8] sm:$0xf]
        %v6952 = vld [vmem:[%s6948 + $0xc] sm:$0xf]
        %v6953 = vld [vmem:[%s6948 + $0x10] sm:$0xf]
        %v6954 = vld [vmem:[%s6948 + $0x14] sm:$0xf]
        %v6955 = vld [vmem:[%s6948 + $0x18] sm:$0xf]
        %v6956 = vld [vmem:[%s6948 + $0x1c] sm:$0xf]
        %v6961 = vunpack.c.l.b16 %v6944
        %v6962 = vunpack.c.l.b16 %v6945
        %v6963 = vunpack.c.l.b16 %v6946
        %v6964 = vunpack.c.l.b16 %v6947
        %v6965 = vpack.c.b16 %v6962, %v6961
        %v6966 = vpack.c.b16 %v6964, %v6963
        %v6967 = vrot.slane %v6965, 3
        %v6968 = vrot.slane %v6966, 3
        %v6969 = vsel %vm3660, %v6967, %v6968
        %v6978 = vunpack.c.l.b16 %v6949
        %v6979 = vunpack.c.l.b16 %v6950
        %v6980 = vunpack.c.l.b16 %v6951
        %v6981 = vunpack.c.l.b16 %v6952
        %v6982 = vunpack.c.l.b16 %v6953
        %v6983 = vunpack.c.l.b16 %v6954
        %v6984 = vunpack.c.l.b16 %v6955
        %v6985 = vunpack.c.l.b16 %v6956
        %v6986 = vpack.c.b16 %v6979, %v6978
        %v6987 = vpack.c.b16 %v6981, %v6980
        %v6988 = vpack.c.b16 %v6983, %v6982
        %v6989 = vpack.c.b16 %v6985, %v6984
        %v6995 = vsel %vm6712, %v6969, 0
        %v6998 = vsel %vm6712, %v6968, 0
        %7000 = vmatprep.subr.bf16.mxu0 0
        %7001 = vmatpush1.bf16.msra.mxu0 %v6986
        %7002 = vmatprep.subr.bf16.mxu0 0
        %7003 = vmatpush1.bf16.msra.mxu0 %v6987
        %7004 = vmatprep.subr.bf16.mxu0 0
        %7005 = vmatpush1.bf16.msra.mxu0 %v6988
        %7006 = vmatprep.subr.bf16.mxu0 0
        %7007 = vmatpush1.bf16.msra.mxu0 %v6989
        %7008 = vmatprep.subr.bf16.mxu0 0
        %7009 = vmatpush1.bf16.msra.mxu0 0
        %7010 = vmatprep.subr.bf16.mxu0 0
        %7011 = vmatpush1.bf16.msra.mxu0 0
        %7012 = vmatprep.subr.bf16.mxu0 0
        %7013 = vmatpush1.bf16.msra.mxu0 0
        %7014 = vmatprep.subr.bf16.mxu0 0
        %7015 = vmatpush1.bf16.msra.mxu0 0
        %7016 = vmatprep.subr.bf16.mxu0 0
        %7017 = vmatpush1.bf16.msra.mxu0 0
        %7018 = vmatprep.subr.bf16.mxu0 0
        %7019 = vmatpush1.bf16.msra.mxu0 0
        %7020 = vmatprep.subr.bf16.mxu0 0
        %7021 = vmatpush1.bf16.msra.mxu0 0
        %7022 = vmatprep.subr.bf16.mxu0 0
        %7023 = vmatpush1.bf16.msra.mxu0 0
        %7024 = vmatprep.subr.bf16.mxu0 0
        %7025 = vmatpush1.bf16.msra.mxu0 0
        %7026 = vmatprep.subr.bf16.mxu0 0
        %7027 = vmatpush1.bf16.msra.mxu0 0
        %7028 = vmatprep.subr.bf16.mxu0 0
        %7029 = vmatpush1.bf16.msra.mxu0 0
        %7030 = vmatprep.subr.bf16.mxu0 0
        %7031 = vmatpush1.bf16.msra.mxu0 0
        %7032 = vmatprep.mubr.bf16.mxu0 0
        %7033 = vmatmul.mubr.bf16.gmra.mrb[0].mxu0 %v6995
        %v7034 = vpop.f32.mrb[0].mxu0
        %v7035 = vadd.f32 0.0, %v7034
        %v7036 = vpop.f32.mrb[0].mxu0
        %v7037 = vpop.f32.mrb[0].mxu0
        %v7038 = vadd.f32 0.0, %v7037
        %v7039 = vpop.f32.mrb[0].mxu0
        %7040 = vmatprep.mubr.bf16.mxu0 0
        %7041 = vmatmul.mubr.bf16.gmra.mrb[0].mxu0 %v6998
        %v7042 = vpop.f32.mrb[0].mxu0
        %v7043 = vadd.f32 0.0, %v7042
        %v7044 = vpop.f32.mrb[0].mxu0
        %v7045 = vpop.f32.mrb[0].mxu0
        %v7046 = vpop.f32.mrb[0].mxu0
        %7047 = vdwg.mxu0
        %v7048 = vadd.f32 %v6941, %v7035
        %v7049 = vadd.f32 %v6942, %v7038
        %v7050 = vadd.f32 %v6943, %v7043
        %v7051 = vld [vmem:[#allocation3 + $0xc] sm:$0x7]
        %s7052 = scalar_lea.vmem %s5, 128
        %v7053 = vld [vmem:[%s7052] sm:$0xf]
        %v7054 = vld [vmem:[%s7052 + $0x4] sm:$0xf]
        %v7055 = vld [vmem:[%s7052 + $0x8] sm:$0xf]
        %v7056 = vld [vmem:[%s7052 + $0xc] sm:$0xf]
        %v7057 = vld [vmem:[%s7052 + $0x10] sm:$0xf]
        %v7058 = vld [vmem:[%s7052 + $0x14] sm:$0xf]
        %v7059 = vld [vmem:[%s7052 + $0x18] sm:$0xf]
        %v7060 = vld [vmem:[%s7052 + $0x1c] sm:$0xf]
        %v7062 = vunpack.c.l.b16 %v7051
        %v7063 = vpack.c.b16 %v7062, %v6963
        %vm7064 = vsmask.f32 4352
        %v7066 = vshrl.u32 %v6965, 16
        %v7068 = vrot.slane %v7066, 3
        %v7069 = vshll.u32 %v6965, 16
        %v7071 = vrot.slane %v7069, 4
        %v7072 = vor.u32 %v7068, %v7071
        %v7074 = vshrl.u32 %v7063, 16
        %v7076 = vrot.slane %v7074, 3
        %v7077 = vshll.u32 %v7063, 16
        %v7079 = vrot.slane %v7077, 4
        %v7080 = vor.u32 %v7076, %v7079
        %v7081 = vsel %vm7064, %v7072, %v7080
        %v7090 = vunpack.c.l.b16 %v7053
        %v7091 = vunpack.c.l.b16 %v7054
        %v7092 = vunpack.c.l.b16 %v7055
        %v7093 = vunpack.c.l.b16 %v7056
        %v7094 = vunpack.c.l.b16 %v7057
        %v7095 = vunpack.c.l.b16 %v7058
        %v7096 = vunpack.c.l.b16 %v7059
        %v7097 = vunpack.c.l.b16 %v7060
        %v7098 = vpack.c.b16 %v7091, %v7090
        %v7099 = vpack.c.b16 %v7093, %v7092
        %v7100 = vpack.c.b16 %v7095, %v7094
        %v7101 = vpack.c.b16 %v7097, %v7096
        %v7107 = vsel %vm6712, %v7081, 0
        %v7110 = vsel %vm6712, %v7080, 0
        %7112 = vmatprep.subr.bf16.mxu0 0
        %7113 = vmatpush1.bf16.msra.mxu0 %v7098
        %7114 = vmatprep.subr.bf16.mxu0 0
        %7115 = vmatpush1.bf16.msra.mxu0 %v7099
        %7116 = vmatprep.subr.bf16.mxu0 0
        %7117 = vmatpush1.bf16.msra.mxu0 %v7100
        %7118 = vmatprep.subr.bf16.mxu0 0
        %7119 = vmatpush1.bf16.msra.mxu0 %v7101
        %7120 = vmatprep.subr.bf16.mxu0 0
        %7121 = vmatpush1.bf16.msra.mxu0 0
        %7122 = vmatprep.subr.bf16.mxu0 0
        %7123 = vmatpush1.bf16.msra.mxu0 0
        %7124 = vmatprep.subr.bf16.mxu0 0
        %7125 = vmatpush1.bf16.msra.mxu0 0
        %7126 = vmatprep.subr.bf16.mxu0 0
        %7127 = vmatpush1.bf16.msra.mxu0 0
        %7128 = vmatprep.subr.bf16.mxu0 0
        %7129 = vmatpush1.bf16.msra.mxu0 0
        %7130 = vmatprep.subr.bf16.mxu0 0
        %7131 = vmatpush1.bf16.msra.mxu0 0
        %7132 = vmatprep.subr.bf16.mxu0 0
        %7133 = vmatpush1.bf16.msra.mxu0 0
        %7134 = vmatprep.subr.bf16.mxu0 0
        %7135 = vmatpush1.bf16.msra.mxu0 0
        %7136 = vmatprep.subr.bf16.mxu0 0
        %7137 = vmatpush1.bf16.msra.mxu0 0
        %7138 = vmatprep.subr.bf16.mxu0 0
        %7139 = vmatpush1.bf16.msra.mxu0 0
        %7140 = vmatprep.subr.bf16.mxu0 0
        %7141 = vmatpush1.bf16.msra.mxu0 0
        %7142 = vmatprep.subr.bf16.mxu0 0
        %7143 = vmatpush1.bf16.msra.mxu0 0
        %7144 = vmatprep.mubr.bf16.mxu0 0
        %7145 = vmatmul.mubr.bf16.gmra.mrb[0].mxu0 %v7107
        %v7146 = vpop.f32.mrb[0].mxu0
        %v7147 = vadd.f32 0.0, %v7146
        %v7148 = vpop.f32.mrb[0].mxu0
        %v7149 = vpop.f32.mrb[0].mxu0
        %v7150 = vadd.f32 0.0, %v7149
        %v7151 = vpop.f32.mrb[0].mxu0
        %7152 = vmatprep.mubr.bf16.mxu0 0
        %7153 = vmatmul.mubr.bf16.gmra.mrb[0].mxu0 %v7110
        %v7154 = vpop.f32.mrb[0].mxu0
        %v7155 = vadd.f32 0.0, %v7154
        %v7156 = vpop.f32.mrb[0].mxu0
        %v7157 = vpop.f32.mrb[0].mxu0
        %v7158 = vpop.f32.mrb[0].mxu0
        %7159 = vdwg.mxu0
        %v7160 = vadd.f32 %v7048, %v7147
        %v7161 = vadd.f32 %v7049, %v7150
        %v7162 = vadd.f32 %v7050, %v7155
        %s7163 = scalar_lea.vmem %s5, 160
        %v7164 = vld [vmem:[%s7163] sm:$0xf]
        %v7165 = vld [vmem:[%s7163 + $0x4] sm:$0xf]
        %v7166 = vld [vmem:[%s7163 + $0x8] sm:$0xf]
        %v7167 = vld [vmem:[%s7163 + $0xc] sm:$0xf]
        %v7168 = vld [vmem:[%s7163 + $0x10] sm:$0xf]
        %v7169 = vld [vmem:[%s7163 + $0x14] sm:$0xf]
        %v7170 = vld [vmem:[%s7163 + $0x18] sm:$0xf]
        %v7171 = vld [vmem:[%s7163 + $0x1c] sm:$0xf]
        %v7172 = vpack.c.b16 %v6963, %v6962
        %v7173 = vpack.c.b16 %v7062, %v7062
        %v7182 = vunpack.c.l.b16 %v7164
        %v7183 = vunpack.c.l.b16 %v7165
        %v7184 = vunpack.c.l.b16 %v7166
        %v7185 = vunpack.c.l.b16 %v7167
        %v7186 = vunpack.c.l.b16 %v7168
        %v7187 = vunpack.c.l.b16 %v7169
        %v7188 = vunpack.c.l.b16 %v7170
        %v7189 = vunpack.c.l.b16 %v7171
        %v7190 = vpack.c.b16 %v7183, %v7182
        %v7191 = vpack.c.b16 %v7185, %v7184
        %v7192 = vpack.c.b16 %v7187, %v7186
        %v7193 = vpack.c.b16 %v7189, %v7188
        %v7199 = vsel %vm6712, %v7172, 0
        %v7202 = vsel %vm6712, %v7173, 0
        %7204 = vmatprep.subr.bf16.mxu0 0
        %7205 = vmatpush1.bf16.msra.mxu0 %v7190
        %7206 = vmatprep.subr.bf16.mxu0 0
        %7207 = vmatpush1.bf16.msra.mxu0 %v7191
        %7208 = vmatprep.subr.bf16.mxu0 0
        %7209 = vmatpush1.bf16.msra.mxu0 %v7192
        %7210 = vmatprep.subr.bf16.mxu0 0
        %7211 = vmatpush1.bf16.msra.mxu0 %v7193
        %7212 = vmatprep.subr.bf16.mxu0 0
        %7213 = vmatpush1.bf16.msra.mxu0 0
        %7214 = vmatprep.subr.bf16.mxu0 0
        %7215 = vmatpush1.bf16.msra.mxu0 0
        %7216 = vmatprep.subr.bf16.mxu0 0
        %7217 = vmatpush1.bf16.msra.mxu0 0
        %7218 = vmatprep.subr.bf16.mxu0 0
        %7219 = vmatpush1.bf16.msra.mxu0 0
        %7220 = vmatprep.subr.bf16.mxu0 0
        %7221 = vmatpush1.bf16.msra.mxu0 0
        %7222 = vmatprep.subr.bf16.mxu0 0
        %7223 = vmatpush1.bf16.msra.mxu0 0
        %7224 = vmatprep.subr.bf16.mxu0 0
        %7225 = vmatpush1.bf16.msra.mxu0 0
        %7226 = vmatprep.subr.bf16.mxu0 0
        %7227 = vmatpush1.bf16.msra.mxu0 0
        %7228 = vmatprep.subr.bf16.mxu0 0
        %7229 = vmatpush1.bf16.msra.mxu0 0
        %7230 = vmatprep.subr.bf16.mxu0 0
        %7231 = vmatpush1.bf16.msra.mxu0 0
        %7232 = vmatprep.subr.bf16.mxu0 0
        %7233 = vmatpush1.bf16.msra.mxu0 0
        %7234 = vmatprep.subr.bf16.mxu0 0
        %7235 = vmatpush1.bf16.msra.mxu0 0
        %7236 = vmatprep.mubr.bf16.mxu0 0
        %7237 = vmatmul.mubr.bf16.gmra.mrb[0].mxu0 %v7199
        %v7238 = vpop.f32.mrb[0].mxu0
        %v7239 = vadd.f32 0.0, %v7238
        %v7240 = vpop.f32.mrb[0].mxu0
        %v7241 = vpop.f32.mrb[0].mxu0
        %v7242 = vadd.f32 0.0, %v7241
        %v7243 = vpop.f32.mrb[0].mxu0
        %7244 = vmatprep.mubr.bf16.mxu0 0
        %7245 = vmatmul.mubr.bf16.gmra.mrb[0].mxu0 %v7202
        %v7246 = vpop.f32.mrb[0].mxu0
        %v7247 = vadd.f32 0.0, %v7246
        %v7248 = vpop.f32.mrb[0].mxu0
        %v7249 = vpop.f32.mrb[0].mxu0
        %v7250 = vpop.f32.mrb[0].mxu0
        %7251 = vdwg.mxu0
        %v7252 = vadd.f32 %v7160, %v7239
        %v7253 = vadd.f32 %v7161, %v7242
        %v7254 = vadd.f32 %v7162, %v7247
        %v7255 = vld [vmem:[#allocation3 + $0x4] sm:$0xc]
        %v7256 = vld [vmem:[#allocation3 + $0x8] sm:$0xf]
        %v7257 = vld [vmem:[#allocation3 + $0xc] sm:$0xf]
        %v7258 = vld [vmem:[#allocation3 + $0x10] sm:$0x1]
        %s7259 = scalar_lea.vmem %s5, 192
        %v7260 = vld [vmem:[%s7259] sm:$0xf]
        %v7261 = vld [vmem:[%s7259 + $0x4] sm:$0xf]
        %v7262 = vld [vmem:[%s7259 + $0x8] sm:$0xf]
        %v7263 = vld [vmem:[%s7259 + $0xc] sm:$0xf]
        %v7264 = vld [vmem:[%s7259 + $0x10] sm:$0xf]
        %v7265 = vld [vmem:[%s7259 + $0x14] sm:$0xf]
        %v7266 = vld [vmem:[%s7259 + $0x18] sm:$0xf]
        %v7267 = vld [vmem:[%s7259 + $0x1c] sm:$0xf]
        %v7272 = vunpack.c.l.b16 %v7255
        %v7273 = vunpack.c.l.b16 %v7256
        %v7274 = vunpack.c.l.b16 %v7257
        %v7275 = vunpack.c.l.b16 %v7258
        %v7276 = vpack.c.b16 %v7273, %v7272
        %v7277 = vpack.c.b16 %v7275, %v7274
        %v7278 = vrot.slane %v7276, 2
        %v7279 = vrot.slane %v7277, 2
        %v7280 = vsel %vm2460, %v7278, %v7279
        %v7289 = vunpack.c.l.b16 %v7260
        %v7290 = vunpack.c.l.b16 %v7261
        %v7291 = vunpack.c.l.b16 %v7262
        %v7292 = vunpack.c.l.b16 %v7263
        %v7293 = vunpack.c.l.b16 %v7264
        %v7294 = vunpack.c.l.b16 %v7265
        %v7295 = vunpack.c.l.b16 %v7266
        %v7296 = vunpack.c.l.b16 %v7267
        %v7297 = vpack.c.b16 %v7290, %v7289
        %v7298 = vpack.c.b16 %v7292, %v7291
        %v7299 = vpack.c.b16 %v7294, %v7293
        %v7300 = vpack.c.b16 %v7296, %v7295
        %v7306 = vsel %vm6712, %v7280, 0
        %v7309 = vsel %vm6712, %v7279, 0
        %7311 = vmatprep.subr.bf16.mxu0 0
        %7312 = vmatpush1.bf16.msra.mxu0 %v7297
        %7313 = vmatprep.subr.bf16.mxu0 0
        %7314 = vmatpush1.bf16.msra.mxu0 %v7298
        %7315 = vmatprep.subr.bf16.mxu0 0
        %7316 = vmatpush1.bf16.msra.mxu0 %v7299
        %7317 = vmatprep.subr.bf16.mxu0 0
        %7318 = vmatpush1.bf16.msra.mxu0 %v7300
        %7319 = vmatprep.subr.bf16.mxu0 0
        %7320 = vmatpush1.bf16.msra.mxu0 0
        %7321 = vmatprep.subr.bf16.mxu0 0
        %7322 = vmatpush1.bf16.msra.mxu0 0
        %7323 = vmatprep.subr.bf16.mxu0 0
        %7324 = vmatpush1.bf16.msra.mxu0 0
        %7325 = vmatprep.subr.bf16.mxu0 0
        %7326 = vmatpush1.bf16.msra.mxu0 0
        %7327 = vmatprep.subr.bf16.mxu0 0
        %7328 = vmatpush1.bf16.msra.mxu0 0
        %7329 = vmatprep.subr.bf16.mxu0 0
        %7330 = vmatpush1.bf16.msra.mxu0 0
        %7331 = vmatprep.subr.bf16.mxu0 0
        %7332 = vmatpush1.bf16.msra.mxu0 0
        %7333 = vmatprep.subr.bf16.mxu0 0
        %7334 = vmatpush1.bf16.msra.mxu0 0
        %7335 = vmatprep.subr.bf16.mxu0 0
        %7336 = vmatpush1.bf16.msra.mxu0 0
        %7337 = vmatprep.subr.bf16.mxu0 0
        %7338 = vmatpush1.bf16.msra.mxu0 0
        %7339 = vmatprep.subr.bf16.mxu0 0
        %7340 = vmatpush1.bf16.msra.mxu0 0
        %7341 = vmatprep.subr.bf16.mxu0 0
        %7342 = vmatpush1.bf16.msra.mxu0 0
        %7343 = vmatprep.mubr.bf16.mxu0 0
        %7344 = vmatmul.mubr.bf16.gmra.mrb[0].mxu0 %v7306
        %v7345 = vpop.f32.mrb[0].mxu0
        %v7346 = vadd.f32 0.0, %v7345
        %v7347 = vpop.f32.mrb[0].mxu0
        %v7348 = vpop.f32.mrb[0].mxu0
        %v7349 = vadd.f32 0.0, %v7348
        %v7350 = vpop.f32.mrb[0].mxu0
        %7351 = vmatprep.mubr.bf16.mxu0 0
        %7352 = vmatmul.mubr.bf16.gmra.mrb[0].mxu0 %v7309
        %v7353 = vpop.f32.mrb[0].mxu0
        %v7354 = vadd.f32 0.0, %v7353
        %v7355 = vpop.f32.mrb[0].mxu0
        %v7356 = vpop.f32.mrb[0].mxu0
        %v7357 = vpop.f32.mrb[0].mxu0
        %7358 = vdwg.mxu0
        %v7359 = vadd.f32 %v7252, %v7346
        %v7360 = vadd.f32 %v7253, %v7349
        %v7361 = vadd.f32 %v7254, %v7354
        %v7362 = vld [vmem:[#allocation3 + $0x10] sm:$0x3]
        %s7363 = scalar_lea.vmem %s5, 224
        %v7364 = vld [vmem:[%s7363] sm:$0xf]
        %v7365 = vld [vmem:[%s7363 + $0x4] sm:$0xf]
        %v7366 = vld [vmem:[%s7363 + $0x8] sm:$0xf]
        %v7367 = vld [vmem:[%s7363 + $0xc] sm:$0xf]
        %v7368 = vld [vmem:[%s7363 + $0x10] sm:$0xf]
        %v7369 = vld [vmem:[%s7363 + $0x14] sm:$0xf]
        %v7370 = vld [vmem:[%s7363 + $0x18] sm:$0xf]
        %v7371 = vld [vmem:[%s7363 + $0x1c] sm:$0xf]
        %v7373 = vunpack.c.l.b16 %v7362
        %v7374 = vpack.c.b16 %v7373, %v7274
        %v7376 = vshrl.u32 %v7276, 16
        %v7378 = vrot.slane %v7376, 2
        %v7379 = vshll.u32 %v7276, 16
        %v7381 = vrot.slane %v7379, 3
        %v7382 = vor.u32 %v7378, %v7381
        %v7384 = vshrl.u32 %v7374, 16
        %v7386 = vrot.slane %v7384, 2
        %v7387 = vshll.u32 %v7374, 16
        %v7389 = vrot.slane %v7387, 3
        %v7390 = vor.u32 %v7386, %v7389
        %v7391 = vsel %vm3213, %v7382, %v7390
        %v7400 = vunpack.c.l.b16 %v7364
        %v7401 = vunpack.c.l.b16 %v7365
        %v7402 = vunpack.c.l.b16 %v7366
        %v7403 = vunpack.c.l.b16 %v7367
        %v7404 = vunpack.c.l.b16 %v7368
        %v7405 = vunpack.c.l.b16 %v7369
        %v7406 = vunpack.c.l.b16 %v7370
        %v7407 = vunpack.c.l.b16 %v7371
        %v7408 = vpack.c.b16 %v7401, %v7400
        %v7409 = vpack.c.b16 %v7403, %v7402
        %v7410 = vpack.c.b16 %v7405, %v7404
        %v7411 = vpack.c.b16 %v7407, %v7406
        %v7417 = vsel %vm6712, %v7391, 0
        %v7420 = vsel %vm6712, %v7390, 0
        %7422 = vmatprep.subr.bf16.mxu0 0
        %7423 = vmatpush1.bf16.msra.mxu0 %v7408
        %7424 = vmatprep.subr.bf16.mxu0 0
        %7425 = vmatpush1.bf16.msra.mxu0 %v7409
        %7426 = vmatprep.subr.bf16.mxu0 0
        %7427 = vmatpush1.bf16.msra.mxu0 %v7410
        %7428 = vmatprep.subr.bf16.mxu0 0
        %7429 = vmatpush1.bf16.msra.mxu0 %v7411
        %7430 = vmatprep.subr.bf16.mxu0 0
        %7431 = vmatpush1.bf16.msra.mxu0 0
        %7432 = vmatprep.subr.bf16.mxu0 0
        %7433 = vmatpush1.bf16.msra.mxu0 0
        %7434 = vmatprep.subr.bf16.mxu0 0
        %7435 = vmatpush1.bf16.msra.mxu0 0
        %7436 = vmatprep.subr.bf16.mxu0 0
        %7437 = vmatpush1.bf16.msra.mxu0 0
        %7438 = vmatprep.subr.bf16.mxu0 0
        %7439 = vmatpush1.bf16.msra.mxu0 0
        %7440 = vmatprep.subr.bf16.mxu0 0
        %7441 = vmatpush1.bf16.msra.mxu0 0
        %7442 = vmatprep.subr.bf16.mxu0 0
        %7443 = vmatpush1.bf16.msra.mxu0 0
        %7444 = vmatprep.subr.bf16.mxu0 0
        %7445 = vmatpush1.bf16.msra.mxu0 0
        %7446 = vmatprep.subr.bf16.mxu0 0
        %7447 = vmatpush1.bf16.msra.mxu0 0
        %7448 = vmatprep.subr.bf16.mxu0 0
        %7449 = vmatpush1.bf16.msra.mxu0 0
        %7450 = vmatprep.subr.bf16.mxu0 0
        %7451 = vmatpush1.bf16.msra.mxu0 0
        %7452 = vmatprep.subr.bf16.mxu0 0
        %7453 = vmatpush1.bf16.msra.mxu0 0
        %7454 = vmatprep.mubr.bf16.mxu0 0
        %7455 = vmatmul.mubr.bf16.gmra.mrb[0].mxu0 %v7417
        %v7456 = vpop.f32.mrb[0].mxu0
        %v7457 = vadd.f32 0.0, %v7456
        %v7458 = vpop.f32.mrb[0].mxu0
        %v7459 = vpop.f32.mrb[0].mxu0
        %v7460 = vadd.f32 0.0, %v7459
        %v7461 = vpop.f32.mrb[0].mxu0
        %7462 = vmatprep.mubr.bf16.mxu0 0
        %7463 = vmatmul.mubr.bf16.gmra.mrb[0].mxu0 %v7420
        %v7464 = vpop.f32.mrb[0].mxu0
        %v7465 = vadd.f32 0.0, %v7464
        %v7466 = vpop.f32.mrb[0].mxu0
        %v7467 = vpop.f32.mrb[0].mxu0
        %v7468 = vpop.f32.mrb[0].mxu0
        %7469 = vdwg.mxu0
        %v7470 = vadd.f32 %v7359, %v7457
        %v7471 = vadd.f32 %v7360, %v7460
        %v7472 = vadd.f32 %v7361, %v7465
        %v7473 = vld [vmem:[#allocation3 + $0x4] sm:$0x8]
        %s7474 = scalar_lea.vmem %s5, 256
        %v7475 = vld [vmem:[%s7474] sm:$0xf]
        %v7476 = vld [vmem:[%s7474 + $0x4] sm:$0xf]
        %v7477 = vld [vmem:[%s7474 + $0x8] sm:$0xf]
        %v7478 = vld [vmem:[%s7474 + $0xc] sm:$0xf]
        %v7479 = vld [vmem:[%s7474 + $0x10] sm:$0xf]
        %v7480 = vld [vmem:[%s7474 + $0x14] sm:$0xf]
        %v7481 = vld [vmem:[%s7474 + $0x18] sm:$0xf]
        %v7482 = vld [vmem:[%s7474 + $0x1c] sm:$0xf]
        %v7484 = vunpack.c.l.b16 %v7473
        %v7485 = vpack.c.b16 %v7273, %v7484
        %v7486 = vrot.slane %v7485, 3
        %v7487 = vrot.slane %v7374, 3
        %v7488 = vsel %vm3660, %v7486, %v7487
        %v7497 = vunpack.c.l.b16 %v7475
        %v7498 = vunpack.c.l.b16 %v7476
        %v7499 = vunpack.c.l.b16 %v7477
        %v7500 = vunpack.c.l.b16 %v7478
        %v7501 = vunpack.c.l.b16 %v7479
        %v7502 = vunpack.c.l.b16 %v7480
        %v7503 = vunpack.c.l.b16 %v7481
        %v7504 = vunpack.c.l.b16 %v7482
        %v7505 = vpack.c.b16 %v7498, %v7497
        %v7506 = vpack.c.b16 %v7500, %v7499
        %v7507 = vpack.c.b16 %v7502, %v7501
        %v7508 = vpack.c.b16 %v7504, %v7503
        %v7514 = vsel %vm6712, %v7488, 0
        %v7517 = vsel %vm6712, %v7487, 0
        %7519 = vmatprep.subr.bf16.mxu0 0
        %7520 = vmatpush1.bf16.msra.mxu0 %v7505
        %7521 = vmatprep.subr.bf16.mxu0 0
        %7522 = vmatpush1.bf16.msra.mxu0 %v7506
        %7523 = vmatprep.subr.bf16.mxu0 0
        %7524 = vmatpush1.bf16.msra.mxu0 %v7507
        %7525 = vmatprep.subr.bf16.mxu0 0
        %7526 = vmatpush1.bf16.msra.mxu0 %v7508
        %7527 = vmatprep.subr.bf16.mxu0 0
        %7528 = vmatpush1.bf16.msra.mxu0 0
        %7529 = vmatprep.subr.bf16.mxu0 0
        %7530 = vmatpush1.bf16.msra.mxu0 0
        %7531 = vmatprep.subr.bf16.mxu0 0
        %7532 = vmatpush1.bf16.msra.mxu0 0
        %7533 = vmatprep.subr.bf16.mxu0 0
        %7534 = vmatpush1.bf16.msra.mxu0 0
        %7535 = vmatprep.subr.bf16.mxu0 0
        %7536 = vmatpush1.bf16.msra.mxu0 0
        %7537 = vmatprep.subr.bf16.mxu0 0
        %7538 = vmatpush1.bf16.msra.mxu0 0
        %7539 = vmatprep.subr.bf16.mxu0 0
        %7540 = vmatpush1.bf16.msra.mxu0 0
        %7541 = vmatprep.subr.bf16.mxu0 0
        %7542 = vmatpush1.bf16.msra.mxu0 0
        %7543 = vmatprep.subr.bf16.mxu0 0
        %7544 = vmatpush1.bf16.msra.mxu0 0
        %7545 = vmatprep.subr.bf16.mxu0 0
        %7546 = vmatpush1.bf16.msra.mxu0 0
        %7547 = vmatprep.subr.bf16.mxu0 0
        %7548 = vmatpush1.bf16.msra.mxu0 0
        %7549 = vmatprep.subr.bf16.mxu0 0
        %7550 = vmatpush1.bf16.msra.mxu0 0
        %7551 = vmatprep.mubr.bf16.mxu0 0
        %7552 = vmatmul.mubr.bf16.gmra.mrb[0].mxu0 %v7514
        %v7553 = vpop.f32.mrb[0].mxu0
        %v7554 = vadd.f32 0.0, %v7553
        %v7555 = vpop.f32.mrb[0].mxu0
        %v7556 = vpop.f32.mrb[0].mxu0
        %v7557 = vadd.f32 0.0, %v7556
        %v7558 = vpop.f32.mrb[0].mxu0
        %7559 = vmatprep.mubr.bf16.mxu0 0
        %7560 = vmatmul.mubr.bf16.gmra.mrb[0].mxu0 %v7517
        %v7561 = vpop.f32.mrb[0].mxu0
        %v7562 = vadd.f32 0.0, %v7561
        %v7563 = vpop.f32.mrb[0].mxu0
        %v7564 = vpop.f32.mrb[0].mxu0
        %v7565 = vpop.f32.mrb[0].mxu0
        %7566 = vdwg.mxu0
        %v7567 = vadd.f32 %v7470, %v7554
        %v7568 = vadd.f32 %v7471, %v7557
        %v7569 = vadd.f32 %v7472, %v7562
        %v7570 = vld [vmem:[%s6] sm:$0x1]
        %v7572 = vlaneseq
        %v7573 = vshrl.u32 %v7572, 7
        %v7574 = vsub.s32 0, %v7573
        %v7575 = vrot.slane %v7570, %v7574
        %v7577 = vadd.f32 %v7567, %v7575
        %v7578 = vadd.f32 %v7568, %v7575
        %v7579 = vadd.f32 %v7569, %v7575
        %v7580 = vmax.f32 %v7577, 0.0
        %v7581 = vmax.f32 %v7578, 0.0
        %v7582 = vmax.f32 %v7579, 0.0
        %v7585 = vrot.slane %v7580, 6
        %v7586 = vrot.slane %v7581, 6
        %v7587 = vsel %vm737, %v7585, %v7586
        %v7589 = vmax.f32 %v7580, %v7587
        %v7590 = vsel %vm737, %v7589, -inf
        %v7591 = vrot.slane %v7590, 4
        %v7592 = vmax.f32 %v7590, %v7591
        %v7593 = vrot.slane %v7592, 2
        %v7594 = vmax.f32 %v7592, %v7593
        %v7595 = vrot.slane %v7594, 1
        %v7596 = vmax.f32 %v7594, %v7595
        %vm7597 = vcmask 1043457
        %v7598 = vsel %vm7597, %v7589, -inf
        %v7599 = vrot.slane %v7598, 4
        %v7600 = vmax.f32 %v7598, %v7599
        %v7601 = vrot.slane %v7600, 2
        %v7602 = vmax.f32 %v7600, %v7601
        %v7603 = vrot.slane %v7602, 1
        %v7604 = vmax.f32 %v7602, %v7603
        %v7605 = vsel %vm736, %v7596, %v7604
        %v7606 = vpack.c.bf16 %v7605, %v7605
        %v7607 = vld [vmem:[%s7] sm:$0xf]
        %v7608 = vld [vmem:[%s7 + $0x4] sm:$0xf]
        %v7609 = vld [vmem:[%s7 + $0x8] sm:$0xf]
        %v7610 = vld [vmem:[%s7 + $0xc] sm:$0xf]
        %v7611 = vld [vmem:[%s7 + $0x10] sm:$0xf]
        %v7612 = vld [vmem:[%s7 + $0x14] sm:$0xf]
        %v7613 = vld [vmem:[%s7 + $0x18] sm:$0xf]
        %v7614 = vld [vmem:[%s7 + $0x1c] sm:$0xf]
        %v7615 = vld [vmem:[%s7 + $0x20] sm:$0xf]
        %v7616 = vld [vmem:[%s7 + $0x24] sm:$0xf]
        %v7617 = vld [vmem:[%s7 + $0x28] sm:$0xf]
        %v7618 = vld [vmem:[%s7 + $0x2c] sm:$0xf]
        %v7619 = vld [vmem:[%s7 + $0x30] sm:$0xf]
        %v7620 = vld [vmem:[%s7 + $0x34] sm:$0xf]
        %v7621 = vld [vmem:[%s7 + $0x38] sm:$0xf]
        %v7622 = vld [vmem:[%s7 + $0x3c] sm:$0xf]
        %v7623 = vld [vmem:[%s8] sm:$0x1]
        %v7625 = vlaneseq
        %v7626 = vshrl.u32 %v7625, 7
        %v7627 = vsub.s32 0, %v7626
        %v7628 = vrot.slane %v7623, %v7627
        %v7646 = vunpack.c.l.b16 %v7607
        %v7647 = vunpack.c.l.b16 %v7608
        %v7648 = vunpack.c.l.b16 %v7609
        %v7649 = vunpack.c.l.b16 %v7610
        %v7650 = vunpack.c.l.b16 %v7611
        %v7651 = vunpack.c.l.b16 %v7612
        %v7652 = vunpack.c.l.b16 %v7613
        %v7653 = vunpack.c.l.b16 %v7614
        %v7654 = vunpack.c.l.b16 %v7615
        %v7655 = vunpack.c.l.b16 %v7616
        %v7656 = vunpack.c.l.b16 %v7617
        %v7657 = vunpack.c.l.b16 %v7618
        %v7658 = vunpack.c.l.b16 %v7619
        %v7659 = vunpack.c.l.b16 %v7620
        %v7660 = vunpack.c.l.b16 %v7621
        %v7661 = vunpack.c.l.b16 %v7622
        %v7662 = vpack.c.b16 %v7647, %v7646
        %v7663 = vpack.c.b16 %v7649, %v7648
        %v7664 = vpack.c.b16 %v7651, %v7650
        %v7665 = vpack.c.b16 %v7653, %v7652
        %v7666 = vpack.c.b16 %v7655, %v7654
        %v7667 = vpack.c.b16 %v7657, %v7656
        %v7668 = vpack.c.b16 %v7659, %v7658
        %v7669 = vpack.c.b16 %v7661, %v7660
        %7678 = vmatprep.subr.bf16.mxu0 0
        %7679 = vmatpush1.bf16.msra.mxu0 %v7662
        %7680 = vmatprep.subr.bf16.mxu0 0
        %7681 = vmatpush1.bf16.msra.mxu0 %v7663
        %7682 = vmatprep.subr.bf16.mxu0 0
        %7683 = vmatpush1.bf16.msra.mxu0 %v7664
        %7684 = vmatprep.subr.bf16.mxu0 0
        %7685 = vmatpush1.bf16.msra.mxu0 %v7665
        %7686 = vmatprep.subr.bf16.mxu0 0
        %7687 = vmatpush1.bf16.msra.mxu0 %v7666
        %7688 = vmatprep.subr.bf16.mxu0 0
        %7689 = vmatpush1.bf16.msra.mxu0 %v7667
        %7690 = vmatprep.subr.bf16.mxu0 0
        %7691 = vmatpush1.bf16.msra.mxu0 %v7668
        %7692 = vmatprep.subr.bf16.mxu0 0
        %7693 = vmatpush1.bf16.msra.mxu0 %v7669
        %7694 = vmatprep.subr.bf16.mxu0 0
        %7695 = vmatpush1.bf16.msra.mxu0 0
        %7696 = vmatprep.subr.bf16.mxu0 0
        %7697 = vmatpush1.bf16.msra.mxu0 0
        %7698 = vmatprep.subr.bf16.mxu0 0
        %7699 = vmatpush1.bf16.msra.mxu0 0
        %7700 = vmatprep.subr.bf16.mxu0 0
        %7701 = vmatpush1.bf16.msra.mxu0 0
        %7702 = vmatprep.subr.bf16.mxu0 0
        %7703 = vmatpush1.bf16.msra.mxu0 0
        %7704 = vmatprep.subr.bf16.mxu0 0
        %7705 = vmatpush1.bf16.msra.mxu0 0
        %7706 = vmatprep.subr.bf16.mxu0 0
        %7707 = vmatpush1.bf16.msra.mxu0 0
        %7708 = vmatprep.subr.bf16.mxu0 0
        %7709 = vmatpush1.bf16.msra.mxu0 0
        %7710 = vmatprep.mubr.bf16.mxu0 0
        %7711 = vmatmul.mubr.bf16.gmra.mrb[0].mxu0 %v7606
        %v7712 = vpop.f32.mrb[0].mxu0
        %v7713 = vadd.f32 %v7628, %v7712
        %v7714 = vpop.f32.mrb[0].mxu0
        %v7715 = vpop.f32.mrb[0].mxu0
        %v7716 = vpop.f32.mrb[0].mxu0
        %7717 = vdwg.mxu0
        %v7718 = vmax.f32 %v7713, 0.0
        %v7719 = vsel %vm405, %v7718, 0.0
        %v7720 = vrot.slane %v7719, 4
        %v7721 = vadd.f32 %v7719, %v7720
        %v7722 = vrot.slane %v7721, 2
        %v7723 = vadd.f32 %v7721, %v7722
        %v7724 = vrot.slane %v7723, 1
        %v7725 = vadd.f32 %v7723, %v7724
        %v7727 = vmax.f32 %v7580, %v7586
        %v7728 = vmax.f32 %v7581, %v7586
        %v7730 = vrot.slane %v7582, 4
        %v7732 = vmax.f32 %v7727, %v7730
        %v7733 = vmax.f32 %v7728, %v7730
        %vm7734 = vcmask 1047558
        %v7735 = vsel %vm7734, %v7732, -inf
        %v7736 = vrot.slane %v7735, 4
        %v7737 = vmax.f32 %v7735, %v7736
        %v7738 = vrot.slane %v7737, 2
        %v7739 = vmax.f32 %v7737, %v7738
        %v7740 = vrot.slane %v7739, 1
        %v7741 = vmax.f32 %v7739, %v7740
        %vm7742 = vcmask 1047559
        %v7743 = vsel %vm7742, %v7732, -inf
        %v7744 = vsel %vm737, %v7733, -inf
        %v7745 = vmax.f32 %v7743, %v7744
        %v7746 = vrot.slane %v7745, 4
        %v7747 = vmax.f32 %v7745, %v7746
        %v7748 = vrot.slane %v7747, 2
        %v7749 = vmax.f32 %v7747, %v7748
        %v7750 = vrot.slane %v7749, 1
        %v7751 = vmax.f32 %v7749, %v7750
        %v7752 = vsel %vm736, %v7741, %v7751
        %v7753 = vpack.c.bf16 %v7752, %v7752
        %7754 = vmatprep.subr.bf16.mxu0 0
        %7755 = vmatpush1.bf16.msra.mxu0 %v7662
        %7756 = vmatprep.subr.bf16.mxu0 0
        %7757 = vmatpush1.bf16.msra.mxu0 %v7663
        %7758 = vmatprep.subr.bf16.mxu0 0
        %7759 = vmatpush1.bf16.msra.mxu0 %v7664
        %7760 = vmatprep.subr.bf16.mxu0 0
        %7761 = vmatpush1.bf16.msra.mxu0 %v7665
        %7762 = vmatprep.subr.bf16.mxu0 0
        %7763 = vmatpush1.bf16.msra.mxu0 %v7666
        %7764 = vmatprep.subr.bf16.mxu0 0
        %7765 = vmatpush1.bf16.msra.mxu0 %v7667
        %7766 = vmatprep.subr.bf16.mxu0 0
        %7767 = vmatpush1.bf16.msra.mxu0 %v7668
        %7768 = vmatprep.subr.bf16.mxu0 0
        %7769 = vmatpush1.bf16.msra.mxu0 %v7669
        %7770 = vmatprep.subr.bf16.mxu0 0
        %7771 = vmatpush1.bf16.msra.mxu0 0
        %7772 = vmatprep.subr.bf16.mxu0 0
        %7773 = vmatpush1.bf16.msra.mxu0 0
        %7774 = vmatprep.subr.bf16.mxu0 0
        %7775 = vmatpush1.bf16.msra.mxu0 0
        %7776 = vmatprep.subr.bf16.mxu0 0
        %7777 = vmatpush1.bf16.msra.mxu0 0
        %7778 = vmatprep.subr.bf16.mxu0 0
        %7779 = vmatpush1.bf16.msra.mxu0 0
        %7780 = vmatprep.subr.bf16.mxu0 0
        %7781 = vmatpush1.bf16.msra.mxu0 0
        %7782 = vmatprep.subr.bf16.mxu0 0
        %7783 = vmatpush1.bf16.msra.mxu0 0
        %7784 = vmatprep.subr.bf16.mxu0 0
        %7785 = vmatpush1.bf16.msra.mxu0 0
        %7786 = vmatprep.mubr.bf16.mxu0 0
        %7787 = vmatmul.mubr.bf16.gmra.mrb[0].mxu0 %v7753
        %v7788 = vpop.f32.mrb[0].mxu0
        %v7789 = vadd.f32 %v7628, %v7788
        %v7790 = vpop.f32.mrb[0].mxu0
        %v7791 = vpop.f32.mrb[0].mxu0
        %v7792 = vpop.f32.mrb[0].mxu0
        %7793 = vdwg.mxu0
        %v7794 = vmax.f32 %v7789, 0.0
        %v7795 = vsel %vm405, %v7794, 0.0
        %v7796 = vrot.slane %v7795, 4
        %v7797 = vadd.f32 %v7795, %v7796
        %v7798 = vrot.slane %v7797, 2
        %v7799 = vadd.f32 %v7797, %v7798
        %v7800 = vrot.slane %v7799, 1
        %v7801 = vadd.f32 %v7799, %v7800
        %v7802 = vadd.f32 %v7725, %v7801
        %v7803 = vmul.f32 %v7802, 0.25
        %v7804 = vpack.c.bf16 %v7803, %v7803
        %v7805 = vld [vmem:[%s9] sm:$0xf]
        %v7806 = vld [vmem:[%s9 + $0x4] sm:$0xf]
        %v7807 = vld [vmem:[%s9 + $0x8] sm:$0xf]
        %v7808 = vld [vmem:[%s9 + $0xc] sm:$0xf]
        %v7809 = vld [vmem:[%s9 + $0x10] sm:$0xf]
        %v7810 = vld [vmem:[%s9 + $0x14] sm:$0xf]
        %v7811 = vld [vmem:[%s9 + $0x18] sm:$0xf]
        %v7812 = vld [vmem:[%s9 + $0x1c] sm:$0xf]
        %v7813 = vld [vmem:[%s10] sm:$0x1]
        %v7822 = vunpack.c.l.b16 %v7805
        %v7823 = vunpack.c.l.b16 %v7806
        %v7824 = vunpack.c.l.b16 %v7807
        %v7825 = vunpack.c.l.b16 %v7808
        %v7826 = vunpack.c.l.b16 %v7809
        %v7827 = vunpack.c.l.b16 %v7810
        %v7828 = vunpack.c.l.b16 %v7811
        %v7829 = vunpack.c.l.b16 %v7812
        %v7830 = vpack.c.b16 %v7823, %v7822
        %v7831 = vpack.c.b16 %v7825, %v7824
        %v7832 = vpack.c.b16 %v7827, %v7826
        %v7833 = vpack.c.b16 %v7829, %v7828
        %v7839 = vsel %vm6712, %v7804, 0
        %7841 = vmatprep.subr.bf16.mxu0 0
        %7842 = vmatpush1.bf16.msra.mxu0 %v7830
        %7843 = vmatprep.subr.bf16.mxu0 0
        %7844 = vmatpush1.bf16.msra.mxu0 %v7831
        %7845 = vmatprep.subr.bf16.mxu0 0
        %7846 = vmatpush1.bf16.msra.mxu0 %v7832
        %7847 = vmatprep.subr.bf16.mxu0 0
        %7848 = vmatpush1.bf16.msra.mxu0 %v7833
        %7849 = vmatprep.subr.bf16.mxu0 0
        %7850 = vmatpush1.bf16.msra.mxu0 0
        %7851 = vmatprep.subr.bf16.mxu0 0
        %7852 = vmatpush1.bf16.msra.mxu0 0
        %7853 = vmatprep.subr.bf16.mxu0 0
        %7854 = vmatpush1.bf16.msra.mxu0 0
        %7855 = vmatprep.subr.bf16.mxu0 0
        %7856 = vmatpush1.bf16.msra.mxu0 0
        %7857 = vmatprep.subr.bf16.mxu0 0
        %7858 = vmatpush1.bf16.msra.mxu0 0
        %7859 = vmatprep.subr.bf16.mxu0 0
        %7860 = vmatpush1.bf16.msra.mxu0 0
        %7861 = vmatprep.subr.bf16.mxu0 0
        %7862 = vmatpush1.bf16.msra.mxu0 0
        %7863 = vmatprep.subr.bf16.mxu0 0
        %7864 = vmatpush1.bf16.msra.mxu0 0
        %7865 = vmatprep.subr.bf16.mxu0 0
        %7866 = vmatpush1.bf16.msra.mxu0 0
        %7867 = vmatprep.subr.bf16.mxu0 0
        %7868 = vmatpush1.bf16.msra.mxu0 0
        %7869 = vmatprep.subr.bf16.mxu0 0
        %7870 = vmatpush1.bf16.msra.mxu0 0
        %7871 = vmatprep.subr.bf16.mxu0 0
        %7872 = vmatpush1.bf16.msra.mxu0 0
        %7873 = vmatprep.mubr.bf16.mxu0 0
        %7874 = vmatmul.mubr.bf16.gmra.mrb[0].mxu0 %v7839
        %v7875 = vpop.f32.mrb[0].mxu0
        %v7876 = vadd.f32 %v7813, %v7875
        %v7877 = vpop.f32.mrb[0].mxu0
        %v7878 = vpop.f32.mrb[0].mxu0
        %v7879 = vpop.f32.mrb[0].mxu0
        %7880 = vdwg.mxu0
        %vm7881 = vcmask 73728
        %7882 = vst.msk [vmem:[%s378] sm:$0x1] %vm7881, %v7876
        %s7883 = sand.u32 %s269, 1
        %s7884 = scalar_lea.sflag [#allocation5], %s7883
        %s7885 = sand.u32 %s269, 1
        %s7886 = scalar_lea.vmem [#allocation4], %s7885
        // Predicated region
        $region65: #{simplenet_forward.1} parent=63 // pred_check
          %p7887 = pneg %p279
        $region66: #{simplenet_forward.1} parent=63 // pred_check_branch
          %7889 = sbr.rel (%p7887) target = $region68
        $region67: #{simplenet_forward.1} parent=63 // pred_region
          %s7891 = ssub.s32 16, 16
          %7892 = vsyncadd %s7884, %s7891
          %s7893 = smul.addr %s25, 16
          %s7894 = scalar_lea.hbm %s11, %s7893
          %s7896 = sshll.u32 %s7886, 4
          %s7897 = int_to_ptr.vmem [resolvable:$true] %s7896
          %7899 = dma.vmem_to_hbm [thread:$0]  %s7897, 16, %s7894, %s7884
        $region68: #{simplenet_forward.1} parent=63 // pred_fallthru
          _
      $region64: #{simplenet_forward.1} parent=5 // pred_fallthru
        _
      %p7900 = scmp.le.s32.totalorder 2, %s20
      // Predicated region
      $region69: #{simplenet_forward.1} parent=5 // pred_check
        %p7901 = pneg %p7900
      $region70: #{simplenet_forward.1} parent=5 // pred_check_branch
        %7903 = sbr.rel (%p7901) target = $region72
      $region71: #{simplenet_forward.1} parent=5 // pred_region
        %s7904 = ssub.s32 %s20, 2
        // Predicated region
        $region73: #{simplenet_forward.1} parent=71 // pred_check
          %p7905 = pneg %p285
        $region74: #{simplenet_forward.1} parent=71 // pred_check_branch
          %7907 = sbr.rel (%p7905) target = $region76
        $region75: #{simplenet_forward.1} parent=71 // pred_region
          %s7908 = sand.u32 %s270, 1
          %s7909 = scalar_lea.sflag [#allocation5], %s7908
          %s7910 = sand.u32 %s270, 1
          %s7911 = scalar_lea.vmem [#allocation4], %s7910
          %7912 = dma.done %s7909, 16
        $region76: #{simplenet_forward.1} parent=71 // pred_fallthru
          _
      $region72: #{simplenet_forward.1} parent=5 // pred_fallthru
        _
    $region6: #{simplenet_forward.1} parent=1 // loop_footer
      %s24 = sadd.s32 1, %s20
    $region7: #{simplenet_forward.1} parent=1 // loop_footer_branch
      %19 = sbr.rel target = $region3
    $region8: #{simplenet_forward.1} parent=1 // loop_exit
      _
    %7913 = vsyncpa [#allocation5], 1
    %s7914 = scalar_lea.sflag [#allocation5], 1
    %7915 = vsyncpa %s7914, 1

</llo_original>
